<compile_context>
chip_gen: v6e
topology: v6e:2x2x1
jax: 0.10.0
libtpu: 0.0.40
codegen_flags: <defaults>
</compile_context>

<pallas_src>
import math
from functools import partial

import jax
import jax.numpy as jnp
from jax.experimental import pallas as pl
from jax.experimental.pallas import tpu as pltpu

OUT_PAD = 128  # lane-dense padding for the final (B, num_et) store


# ------------------------------ fused kernel --------------------------------

def fused_transformer_kernel(
        xe_ref, w_emb_ref, b_emb_ref, pe_ref,
        wqkv_ref, bqkv_ref, wo_ref, bo_ref,
        ln1g_ref, ln1b_ref, w1_ref, b1_ref, w2_ref, b2_ref,
        ln2g_ref, ln2b_ref,
        wp1_ref, bp1_ref, wp2_ref, bp2_ref,
        o_ref,
        *, n_head, d_model, n_layers, batch, seq_len, eps=1e-5):
    B = batch
    S = seq_len
    D = d_model
    NB = 2 * B                       # x-stream and eqp-stream stacked on batch axis
    N = NB * S
    hd = D // n_head
    scale = 1.0 / math.sqrt(hd)

    # ---- Linear(1, D) embedding + positional encoding, both streams at once ----
    xe = xe_ref[...]                                                       # (NB, S)
    emb = xe[:, :, None] * w_emb_ref[...] + b_emb_ref[...] + pe_ref[...]   # (NB, S, D)
    h = emb.reshape(N, D)                                                  # flat rows

    def layer_norm(t, g, b):
        mu = jnp.mean(t, axis=-1, keepdims=True)
        c = t - mu
        var = jnp.mean(c * c, axis=-1, keepdims=True)
        return c * jax.lax.rsqrt(var + eps) * g + b

    # ---- post-norm TransformerEncoder stack (ReLU FFN), static unroll over layers ----
    for l in range(n_layers):
        qkv = jnp.dot(h, wqkv_ref[l], preferred_element_type=jnp.float32) + bqkv_ref[l]
        q3 = qkv[:, 0 * D:1 * D].reshape(NB, S, D)
        k3 = qkv[:, 1 * D:2 * D].reshape(NB, S, D)
        v3 = qkv[:, 2 * D:3 * D].reshape(NB, S, D)
        wo = wo_ref[l]                                                     # (D, D)

        # Per-head attention batched over all 2B sequences (one dot_general per head);
        # head results go straight through their out-proj row-block (no lane concat).
        attn_out = bo_ref[l]                                               # (1, D) bcast
        for hh in range(n_head):
            sl = slice(hh * hd, (hh + 1) * hd)
            qh, kh, vh = q3[:, :, sl], k3[:, :, sl], v3[:, :, sl]          # (NB, S, hd)
            s = jnp.einsum('bik,bjk->bij', qh, kh,
                           preferred_element_type=jnp.float32) * scale     # (NB, S, S)
            s = s - jnp.max(s, axis=-1, keepdims=True)
            p = jnp.exp(s)
            p = p * pl.reciprocal(jnp.sum(p, axis=-1, keepdims=True), approx=True)
            oh = jnp.einsum('bij,bjk->bik', p, vh,
                            preferred_element_type=jnp.float32)            # (NB, S, hd)
            attn_out = attn_out + jnp.dot(oh.reshape(N, hd), wo[sl, :],
                                          preferred_element_type=jnp.float32)

        h1 = layer_norm(h + attn_out, ln1g_ref[l], ln1b_ref[l])

        ff = jnp.maximum(
            jnp.dot(h1, w1_ref[l], preferred_element_type=jnp.float32) + b1_ref[l], 0.0)
        ff = jnp.dot(ff, w2_ref[l], preferred_element_type=jnp.float32) + b2_ref[l]
        h = layer_norm(h1 + ff, ln2g_ref[l], ln2b_ref[l])

    # ---- predictor: z = (z1 + z2)/2 ; Linear -> ReLU -> Linear ----------------
    # (AdaptiveAvgPool1d with equal in/out lengths is an identity.)
    h3 = h.reshape(NB, S, D)
    zc = (h3[0:B] + h3[B:2 * B]) * 0.5                                     # (B, S, D)
    # z.view(B, S*D) @ Wp1 realized as a sum of per-position (D, hidden) blocks,
    # avoiding a sublane->lane reshape inside the kernel.
    acc = bp1_ref[...]                                                     # (1, hidden)
    for s in range(S):
        acc = acc + jnp.dot(zc[:, s, :], wp1_ref[s],
                            preferred_element_type=jnp.float32)            # (B, hidden)
    hmid = jnp.maximum(acc, 0.0)
    # Lane-dense (B, 128) store; wp2/bp2 are zero-padded to 128 lanes in the wrapper.
    o_ref[...] = jnp.dot(hmid, wp2_ref[...],
                         preferred_element_type=jnp.float32) + bp2_ref[...]


# -------------------------------- wrapper ------------------------------------

def _full_spec(a):
    nd = a.ndim
    return pl.BlockSpec(a.shape, lambda *_: (0,) * nd)


@partial(jax.jit, static_argnames=("n_head", "num_et"))
def transformer_forward(x, eqp, params, *, n_head, num_et):
    B, S = x.shape
    D = params["pe3"].shape[-1]
    L = params["wqkv"].shape[0]
    xe = jnp.concatenate([x, eqp], axis=0)                                 # (2B, S)
    args = (xe, params["w_emb3"], params["b_emb3"], params["pe3"],
            params["wqkv"], params["bqkv"], params["wo"], params["bo"],
            params["ln1g"], params["ln1b"], params["w1"], params["b1"],
            params["w2"], params["b2"], params["ln2g"], params["ln2b"],
            params["wp1"], params["bp1"], params["wp2p"], params["bp2p"])
    out_pad = pl.pallas_call(
        partial(fused_transformer_kernel, n_head=n_head, d_model=D,
                n_layers=L, batch=B, seq_len=S),
        out_shape=jax.ShapeDtypeStruct((B, OUT_PAD), jnp.float32),
        grid=(1,),
        in_specs=[_full_spec(a) for a in args],
        out_specs=pl.BlockSpec((B, OUT_PAD), lambda *_: (0, 0)),
        compiler_params=pltpu.CompilerParams(dimension_semantics=("arbitrary",)),
    )(*args)
    return out_pad[:, :num_et]


# ----------------------------- parameter setup --------------------------------

def xavier_uniform(key, shape, gain=1.0):
    fan_out, fan_in = shape  # torch (out, in) convention
    a = gain * math.sqrt(6.0 / (fan_in + fan_out))
    return jax.random.uniform(key, shape, jnp.float32, -a, a)


def positional_encoding(S, D):
    position = jnp.arange(S, dtype=jnp.float32)[:, None]
    div_term = jnp.exp(jnp.arange(0, D, 2, dtype=jnp.float32) * (-math.log(10000.0) / D))
    pe = jnp.zeros((S, D), jnp.float32)
    pe = pe.at[:, 0::2].set(jnp.sin(position * div_term))
    pe = pe.at[:, 1::2].set(jnp.cos(position * div_term))
    return pe


def init_params(key, S, D, n_head, ff, hidden, num_et, n_layers):
    keys = iter(jax.random.split(key, 128))
    hd = D // n_head

    w_emb = xavier_uniform(next(keys), (D, 1)).reshape(D)        # nn.Linear(1, D).weight
    b_emb = jax.random.uniform(next(keys), (D,), jnp.float32, -1.0, 1.0)
    pe = positional_encoding(S, D)
    # NOTE: the reference model adds the positional encoding WITHOUT sqrt(d_model)
    # scaling of the embedding (matches Transformer.forward).

    per_layer = []
    for _ in range(n_layers):
        # custom_init_weights: per-head gains on the Q block of in_proj_weight
        q_blocks = [xavier_uniform(next(keys), (hd, D), gain=0.5 + 0.1 * i)
                    for i in range(n_head)]
        wq = jnp.concatenate(q_blocks, axis=0)
        wk = xavier_uniform(next(keys), (D, D))
        wv = xavier_uniform(next(keys), (D, D))
        in_proj_w = jnp.concatenate([wq, wk, wv], axis=0)        # (3D, D)  torch layout
        in_proj_b = jnp.zeros((3 * D,), jnp.float32)
        out_w = xavier_uniform(next(keys), (D, D))
        out_b = jnp.zeros((D,), jnp.float32)
        ln1g, ln1b = jnp.ones((D,), jnp.float32), jnp.zeros((D,), jnp.float32)
        w1 = xavier_uniform(next(keys), (ff, D))
        b1 = jax.random.uniform(next(keys), (ff,), jnp.float32, -0.1, 0.1)
        w2 = xavier_uniform(next(keys), (D, ff))
        b2 = jax.random.uniform(next(keys), (D,), jnp.float32, -0.1, 0.1)
        ln2g, ln2b = jnp.ones((D,), jnp.float32), jnp.zeros((D,), jnp.float32)
        per_layer.append(dict(
            wqkv=in_proj_w.T, bqkv=in_proj_b.reshape(1, -1),     # (D, 3D), (1, 3D)
            wo=out_w.T, bo=out_b.reshape(1, -1),                 # (D, D),  (1, D)
            ln1g=ln1g.reshape(1, -1), ln1b=ln1b.reshape(1, -1),
            w1=w1.T, b1=b1.reshape(1, -1),                       # (D, FF), (1, FF)
            w2=w2.T, b2=b2.reshape(1, -1),                       # (FF, D), (1, D)
            ln2g=ln2g.reshape(1, -1), ln2b=ln2b.reshape(1, -1)))

    params = {k: jnp.stack([lp[k] for lp in per_layer], axis=0) for k in per_layer[0]}

    wp1 = xavier_uniform(next(keys), (hidden, D * S)).T          # (S*D, hidden)
    bp1 = jax.random.uniform(next(keys), (hidden,), jnp.float32, -0.1, 0.1)
    wp2 = xavier_uniform(next(keys), (num_et, hidden)).T         # (hidden, num_et)
    bp2 = jax.random.uniform(next(keys), (num_et,), jnp.float32, -0.1, 0.1)

    wp2p = jnp.zeros((hidden, OUT_PAD), jnp.float32).at[:, :num_et].set(wp2)
    bp2p = jnp.zeros((1, OUT_PAD), jnp.float32).at[0, :num_et].set(bp2)

    params.update(
        w_emb3=w_emb.reshape(1, 1, D),
        b_emb3=b_emb.reshape(1, 1, D),
        pe3=pe.reshape(1, S, D),
        wp1=wp1.reshape(S, D, hidden),                           # per-position blocks
        bp1=bp1.reshape(1, hidden),
        wp2p=wp2p,
        bp2p=bp2p)
    return params


# ---------------------------------- main --------------------------------------

if __name__ == "__main__":
    # configs: feature_dim=32, n_head=4, dim_feedforward=64, num_encoder_layers=2,
    # hidden_dim=32; input_dim (sequence length) = 8; num_et = 16; batch = 2.
    B, S, D = 2, 8, 32
    n_head, ff, hidden, num_et, n_layers = 4, 64, 32, 16, 2

    key = jax.random.PRNGKey(0)
    kx, keqp, kp = jax.random.split(key, 3)
    x = jax.random.normal(kx, (B, S), jnp.float32)
    eqp = jax.random.normal(keqp, (B, S), jnp.float32)

    params = init_params(kp, S, D, n_head, ff, hidden, num_et, n_layers)

    out = transformer_forward(x, eqp, params, n_head=n_head, num_et=num_et)
    out = jax.block_until_ready(out)
    assert out.shape == (B, num_et) and out.dtype == jnp.float32
    assert bool(jnp.all(jnp.isfinite(out)))
    print("KERNEL_OK")
</pallas_src>

<mosaic_0001>
module attributes {stable_mosaic.version = 11 : i64} {
  func.func @fused_transformer_kernel(%arg0: i32, %arg1: memref<4x8xf32, #tpu.memory_space<vmem>>, %arg2: memref<1x1x32xf32, #tpu.memory_space<vmem>>, %arg3: memref<1x1x32xf32, #tpu.memory_space<vmem>>, %arg4: memref<1x8x32xf32, #tpu.memory_space<vmem>>, %arg5: memref<2x32x96xf32, #tpu.memory_space<vmem>>, %arg6: memref<2x1x96xf32, #tpu.memory_space<vmem>>, %arg7: memref<2x32x32xf32, #tpu.memory_space<vmem>>, %arg8: memref<2x1x32xf32, #tpu.memory_space<vmem>>, %arg9: memref<2x1x32xf32, #tpu.memory_space<vmem>>, %arg10: memref<2x1x32xf32, #tpu.memory_space<vmem>>, %arg11: memref<2x32x64xf32, #tpu.memory_space<vmem>>, %arg12: memref<2x1x64xf32, #tpu.memory_space<vmem>>, %arg13: memref<2x64x32xf32, #tpu.memory_space<vmem>>, %arg14: memref<2x1x32xf32, #tpu.memory_space<vmem>>, %arg15: memref<2x1x32xf32, #tpu.memory_space<vmem>>, %arg16: memref<2x1x32xf32, #tpu.memory_space<vmem>>, %arg17: memref<8x32x32xf32, #tpu.memory_space<vmem>>, %arg18: memref<1x32xf32, #tpu.memory_space<vmem>>, %arg19: memref<32x128xf32, #tpu.memory_space<vmem>>, %arg20: memref<1x128xf32, #tpu.memory_space<vmem>>, %arg21: memref<2x128xf32, #tpu.memory_space<vmem>>) attributes {dimension_semantics = [#tpu.dimension_semantics<arbitrary>], iteration_bounds = array<i64: 1>, scalar_prefetch = 0 : i64, scratch_operands = 0 : i64, tpu.core_type = #tpu.core_type<tc>, window_params = [{pipeline_mode = #tpu.pipeline_mode<synchronous>, transform_indices = @transform_0, window_bounds = array<i64: 4, 8>}, {pipeline_mode = #tpu.pipeline_mode<synchronous>, transform_indices = @transform_1, window_bounds = array<i64: 1, 1, 32>}, {pipeline_mode = #tpu.pipeline_mode<synchronous>, transform_indices = @transform_2, window_bounds = array<i64: 1, 1, 32>}, {pipeline_mode = #tpu.pipeline_mode<synchronous>, transform_indices = @transform_3, window_bounds = array<i64: 1, 8, 32>}, {pipeline_mode = #tpu.pipeline_mode<synchronous>, transform_indices = @transform_4, window_bounds = array<i64: 2, 32, 96>}, {pipeline_mode = #tpu.pipeline_mode<synchronous>, transform_indices = @transform_5, window_bounds = array<i64: 2, 1, 96>}, {pipeline_mode = #tpu.pipeline_mode<synchronous>, transform_indices = @transform_6, window_bounds = array<i64: 2, 32, 32>}, {pipeline_mode = #tpu.pipeline_mode<synchronous>, transform_indices = @transform_7, window_bounds = array<i64: 2, 1, 32>}, {pipeline_mode = #tpu.pipeline_mode<synchronous>, transform_indices = @transform_8, window_bounds = array<i64: 2, 1, 32>}, {pipeline_mode = #tpu.pipeline_mode<synchronous>, transform_indices = @transform_9, window_bounds = array<i64: 2, 1, 32>}, {pipeline_mode = #tpu.pipeline_mode<synchronous>, transform_indices = @transform_10, window_bounds = array<i64: 2, 32, 64>}, {pipeline_mode = #tpu.pipeline_mode<synchronous>, transform_indices = @transform_11, window_bounds = array<i64: 2, 1, 64>}, {pipeline_mode = #tpu.pipeline_mode<synchronous>, transform_indices = @transform_12, window_bounds = array<i64: 2, 64, 32>}, {pipeline_mode = #tpu.pipeline_mode<synchronous>, transform_indices = @transform_13, window_bounds = array<i64: 2, 1, 32>}, {pipeline_mode = #tpu.pipeline_mode<synchronous>, transform_indices = @transform_14, window_bounds = array<i64: 2, 1, 32>}, {pipeline_mode = #tpu.pipeline_mode<synchronous>, transform_indices = @transform_15, window_bounds = array<i64: 2, 1, 32>}, {pipeline_mode = #tpu.pipeline_mode<synchronous>, transform_indices = @transform_16, window_bounds = array<i64: 8, 32, 32>}, {pipeline_mode = #tpu.pipeline_mode<synchronous>, transform_indices = @transform_17, window_bounds = array<i64: 1, 32>}, {pipeline_mode = #tpu.pipeline_mode<synchronous>, transform_indices = @transform_18, window_bounds = array<i64: 32, 128>}, {pipeline_mode = #tpu.pipeline_mode<synchronous>, transform_indices = @transform_19, window_bounds = array<i64: 1, 128>}, {pipeline_mode = #tpu.pipeline_mode<synchronous>, transform_indices = @transform_20, window_bounds = array<i64: 2, 128>}]} {
    %c0 = arith.constant 0 : index
    %c0_0 = arith.constant 0 : index
    %0 = vector.load %arg1[%c0, %c0_0] : memref<4x8xf32, #tpu.memory_space<vmem>>, vector<4x8xf32>
    %1 = vector.shape_cast %0 : vector<4x8xf32> to vector<4x8x1xf32>
    %c0_1 = arith.constant 0 : index
    %c0_2 = arith.constant 0 : index
    %c0_3 = arith.constant 0 : index
    %2 = vector.load %arg2[%c0_1, %c0_2, %c0_3] : memref<1x1x32xf32, #tpu.memory_space<vmem>>, vector<1x1x32xf32>
    %3 = vector.broadcast %1 : vector<4x8x1xf32> to vector<4x8x32xf32>
    %4 = vector.broadcast %2 : vector<1x1x32xf32> to vector<4x8x32xf32>
    %5 = arith.mulf %3, %4 : vector<4x8x32xf32>
    %c0_4 = arith.constant 0 : index
    %c0_5 = arith.constant 0 : index
    %c0_6 = arith.constant 0 : index
    %6 = vector.load %arg3[%c0_4, %c0_5, %c0_6] : memref<1x1x32xf32, #tpu.memory_space<vmem>>, vector<1x1x32xf32>
    %7 = vector.broadcast %6 : vector<1x1x32xf32> to vector<4x8x32xf32>
    %8 = arith.addf %5, %7 : vector<4x8x32xf32>
    %c0_7 = arith.constant 0 : index
    %c0_8 = arith.constant 0 : index
    %c0_9 = arith.constant 0 : index
    %9 = vector.load %arg4[%c0_7, %c0_8, %c0_9] : memref<1x8x32xf32, #tpu.memory_space<vmem>>, vector<1x8x32xf32>
    %10 = vector.broadcast %9 : vector<1x8x32xf32> to vector<4x8x32xf32>
    %11 = arith.addf %8, %10 : vector<4x8x32xf32>
    %12 = vector.shape_cast %11 : vector<4x8x32xf32> to vector<32x32xf32>
    %c0_10 = arith.constant 0 : index
    %c0_11 = arith.constant 0 : index
    %c0_12 = arith.constant 0 : index
    %13 = vector.load %arg5[%c0_10, %c0_11, %c0_12] : memref<2x32x96xf32, #tpu.memory_space<vmem>>, vector<1x32x96xf32>
    %14 = vector.shape_cast %13 : vector<1x32x96xf32> to vector<32x96xf32>
    %cst = arith.constant dense<0.000000e+00> : vector<32x96xf32>
    %15 = tpu.matmul %12, %14, %cst {dimension_numbers = #tpu.dot_dimension_numbers<[1], [0], [0], [1], [0, 0, 1, 1], [], []>} : vector<32x32xf32>, vector<32x96xf32>, vector<32x96xf32> -> vector<32x96xf32>
    %c0_13 = arith.constant 0 : index
    %c0_14 = arith.constant 0 : index
    %c0_15 = arith.constant 0 : index
    %16 = vector.load %arg6[%c0_13, %c0_14, %c0_15] : memref<2x1x96xf32, #tpu.memory_space<vmem>>, vector<1x1x96xf32>
    %17 = vector.shape_cast %16 : vector<1x1x96xf32> to vector<1x96xf32>
    %18 = vector.broadcast %17 : vector<1x96xf32> to vector<32x96xf32>
    %19 = arith.addf %15, %18 : vector<32x96xf32>
    %20 = vector.extract_strided_slice %19 {offsets = [0, 0], sizes = [32, 32], strides = [1, 1]} : vector<32x96xf32> to vector<32x32xf32>
    %21 = vector.shape_cast %20 : vector<32x32xf32> to vector<4x8x32xf32>
    %22 = vector.extract_strided_slice %19 {offsets = [0, 32], sizes = [32, 32], strides = [1, 1]} : vector<32x96xf32> to vector<32x32xf32>
    %23 = vector.shape_cast %22 : vector<32x32xf32> to vector<4x8x32xf32>
    %24 = vector.extract_strided_slice %19 {offsets = [0, 64], sizes = [32, 32], strides = [1, 1]} : vector<32x96xf32> to vector<32x32xf32>
    %25 = vector.shape_cast %24 : vector<32x32xf32> to vector<4x8x32xf32>
    %c0_16 = arith.constant 0 : index
    %c0_17 = arith.constant 0 : index
    %c0_18 = arith.constant 0 : index
    %26 = vector.load %arg7[%c0_16, %c0_17, %c0_18] : memref<2x32x32xf32, #tpu.memory_space<vmem>>, vector<1x32x32xf32>
    %27 = vector.shape_cast %26 : vector<1x32x32xf32> to vector<32x32xf32>
    %c0_19 = arith.constant 0 : index
    %c0_20 = arith.constant 0 : index
    %c0_21 = arith.constant 0 : index
    %28 = vector.load %arg8[%c0_19, %c0_20, %c0_21] : memref<2x1x32xf32, #tpu.memory_space<vmem>>, vector<1x1x32xf32>
    %29 = vector.shape_cast %28 : vector<1x1x32xf32> to vector<1x32xf32>
    %30 = vector.extract_strided_slice %21 {offsets = [0, 0, 0], sizes = [4, 8, 8], strides = [1, 1, 1]} : vector<4x8x32xf32> to vector<4x8x8xf32>
    %31 = vector.extract_strided_slice %23 {offsets = [0, 0, 0], sizes = [4, 8, 8], strides = [1, 1, 1]} : vector<4x8x32xf32> to vector<4x8x8xf32>
    %32 = vector.extract_strided_slice %25 {offsets = [0, 0, 0], sizes = [4, 8, 8], strides = [1, 1, 1]} : vector<4x8x32xf32> to vector<4x8x8xf32>
    "tpu.trace_start"() <{level = 10 : i32, message = "bik,bjk->bij"}> : () -> ()
    %cst_22 = arith.constant dense<0.000000e+00> : vector<4x8x8xf32>
    %33 = tpu.matmul %30, %31, %cst_22 {dimension_numbers = #tpu.dot_dimension_numbers<[2], [2], [1], [1], [0, 0, 0, 1, 1, 1], [0], [0]>} : vector<4x8x8xf32>, vector<4x8x8xf32>, vector<4x8x8xf32> -> vector<4x8x8xf32>
    "tpu.trace_stop"() : () -> ()
    %cst_23 = arith.constant 0.353553385 : f32
    %34 = vector.broadcast %cst_23 : f32 to vector<4x8x8xf32>
    %35 = arith.mulf %33, %34 : vector<4x8x8xf32>
    %cst_24 = arith.constant dense<0xFF800000> : vector<4x8xf32>
    %36 = vector.multi_reduction <maximumf>, %35, %cst_24 [2] : vector<4x8x8xf32> to vector<4x8xf32>
    %37 = vector.shape_cast %36 : vector<4x8xf32> to vector<4x8x1xf32>
    %38 = vector.broadcast %37 : vector<4x8x1xf32> to vector<4x8x8xf32>
    %39 = arith.subf %35, %38 : vector<4x8x8xf32>
    %40 = math.exp %39 : vector<4x8x8xf32>
    %cst_25 = arith.constant dense<0.000000e+00> : vector<4x8xf32>
    %41 = vector.multi_reduction <add>, %40, %cst_25 [2] : vector<4x8x8xf32> to vector<4x8xf32>
    %42 = vector.shape_cast %41 : vector<4x8xf32> to vector<4x8x1xf32>
    %43 = tpu.reciprocal %42 {approx = true} : vector<4x8x1xf32> -> vector<4x8x1xf32>
    %44 = vector.broadcast %43 : vector<4x8x1xf32> to vector<4x8x8xf32>
    %45 = arith.mulf %40, %44 : vector<4x8x8xf32>
    "tpu.trace_start"() <{level = 10 : i32, message = "bij,bjk->bik"}> : () -> ()
    %cst_26 = arith.constant dense<0.000000e+00> : vector<4x8x8xf32>
    %46 = tpu.matmul %45, %32, %cst_26 {dimension_numbers = #tpu.dot_dimension_numbers<[2], [1], [1], [2], [0, 0, 0, 1, 1, 2], [0], [0]>} : vector<4x8x8xf32>, vector<4x8x8xf32>, vector<4x8x8xf32> -> vector<4x8x8xf32>
    "tpu.trace_stop"() : () -> ()
    %47 = vector.shape_cast %46 : vector<4x8x8xf32> to vector<32x8xf32>
    %48 = vector.extract_strided_slice %27 {offsets = [0, 0], sizes = [8, 32], strides = [1, 1]} : vector<32x32xf32> to vector<8x32xf32>
    %cst_27 = arith.constant dense<0.000000e+00> : vector<32x32xf32>
    %49 = tpu.matmul %47, %48, %cst_27 {dimension_numbers = #tpu.dot_dimension_numbers<[1], [0], [0], [1], [0, 0, 1, 1], [], []>} : vector<32x8xf32>, vector<8x32xf32>, vector<32x32xf32> -> vector<32x32xf32>
    %50 = vector.broadcast %29 : vector<1x32xf32> to vector<32x32xf32>
    %51 = arith.addf %50, %49 : vector<32x32xf32>
    %52 = vector.extract_strided_slice %21 {offsets = [0, 0, 8], sizes = [4, 8, 8], strides = [1, 1, 1]} : vector<4x8x32xf32> to vector<4x8x8xf32>
    %53 = vector.extract_strided_slice %23 {offsets = [0, 0, 8], sizes = [4, 8, 8], strides = [1, 1, 1]} : vector<4x8x32xf32> to vector<4x8x8xf32>
    %54 = vector.extract_strided_slice %25 {offsets = [0, 0, 8], sizes = [4, 8, 8], strides = [1, 1, 1]} : vector<4x8x32xf32> to vector<4x8x8xf32>
    "tpu.trace_start"() <{level = 10 : i32, message = "bik,bjk->bij"}> : () -> ()
    %cst_28 = arith.constant dense<0.000000e+00> : vector<4x8x8xf32>
    %55 = tpu.matmul %52, %53, %cst_28 {dimension_numbers = #tpu.dot_dimension_numbers<[2], [2], [1], [1], [0, 0, 0, 1, 1, 1], [0], [0]>} : vector<4x8x8xf32>, vector<4x8x8xf32>, vector<4x8x8xf32> -> vector<4x8x8xf32>
    "tpu.trace_stop"() : () -> ()
    %cst_29 = arith.constant 0.353553385 : f32
    %56 = vector.broadcast %cst_29 : f32 to vector<4x8x8xf32>
    %57 = arith.mulf %55, %56 : vector<4x8x8xf32>
    %cst_30 = arith.constant dense<0xFF800000> : vector<4x8xf32>
    %58 = vector.multi_reduction <maximumf>, %57, %cst_30 [2] : vector<4x8x8xf32> to vector<4x8xf32>
    %59 = vector.shape_cast %58 : vector<4x8xf32> to vector<4x8x1xf32>
    %60 = vector.broadcast %59 : vector<4x8x1xf32> to vector<4x8x8xf32>
    %61 = arith.subf %57, %60 : vector<4x8x8xf32>
    %62 = math.exp %61 : vector<4x8x8xf32>
    %cst_31 = arith.constant dense<0.000000e+00> : vector<4x8xf32>
    %63 = vector.multi_reduction <add>, %62, %cst_31 [2] : vector<4x8x8xf32> to vector<4x8xf32>
    %64 = vector.shape_cast %63 : vector<4x8xf32> to vector<4x8x1xf32>
    %65 = tpu.reciprocal %64 {approx = true} : vector<4x8x1xf32> -> vector<4x8x1xf32>
    %66 = vector.broadcast %65 : vector<4x8x1xf32> to vector<4x8x8xf32>
    %67 = arith.mulf %62, %66 : vector<4x8x8xf32>
    "tpu.trace_start"() <{level = 10 : i32, message = "bij,bjk->bik"}> : () -> ()
    %cst_32 = arith.constant dense<0.000000e+00> : vector<4x8x8xf32>
    %68 = tpu.matmul %67, %54, %cst_32 {dimension_numbers = #tpu.dot_dimension_numbers<[2], [1], [1], [2], [0, 0, 0, 1, 1, 2], [0], [0]>} : vector<4x8x8xf32>, vector<4x8x8xf32>, vector<4x8x8xf32> -> vector<4x8x8xf32>
    "tpu.trace_stop"() : () -> ()
    %69 = vector.shape_cast %68 : vector<4x8x8xf32> to vector<32x8xf32>
    %70 = vector.extract_strided_slice %27 {offsets = [8, 0], sizes = [8, 32], strides = [1, 1]} : vector<32x32xf32> to vector<8x32xf32>
    %cst_33 = arith.constant dense<0.000000e+00> : vector<32x32xf32>
    %71 = tpu.matmul %69, %70, %cst_33 {dimension_numbers = #tpu.dot_dimension_numbers<[1], [0], [0], [1], [0, 0, 1, 1], [], []>} : vector<32x8xf32>, vector<8x32xf32>, vector<32x32xf32> -> vector<32x32xf32>
    %72 = arith.addf %51, %71 : vector<32x32xf32>
    %73 = vector.extract_strided_slice %21 {offsets = [0, 0, 16], sizes = [4, 8, 8], strides = [1, 1, 1]} : vector<4x8x32xf32> to vector<4x8x8xf32>
    %74 = vector.extract_strided_slice %23 {offsets = [0, 0, 16], sizes = [4, 8, 8], strides = [1, 1, 1]} : vector<4x8x32xf32> to vector<4x8x8xf32>
    %75 = vector.extract_strided_slice %25 {offsets = [0, 0, 16], sizes = [4, 8, 8], strides = [1, 1, 1]} : vector<4x8x32xf32> to vector<4x8x8xf32>
    "tpu.trace_start"() <{level = 10 : i32, message = "bik,bjk->bij"}> : () -> ()
    %cst_34 = arith.constant dense<0.000000e+00> : vector<4x8x8xf32>
    %76 = tpu.matmul %73, %74, %cst_34 {dimension_numbers = #tpu.dot_dimension_numbers<[2], [2], [1], [1], [0, 0, 0, 1, 1, 1], [0], [0]>} : vector<4x8x8xf32>, vector<4x8x8xf32>, vector<4x8x8xf32> -> vector<4x8x8xf32>
    "tpu.trace_stop"() : () -> ()
    %cst_35 = arith.constant 0.353553385 : f32
    %77 = vector.broadcast %cst_35 : f32 to vector<4x8x8xf32>
    %78 = arith.mulf %76, %77 : vector<4x8x8xf32>
    %cst_36 = arith.constant dense<0xFF800000> : vector<4x8xf32>
    %79 = vector.multi_reduction <maximumf>, %78, %cst_36 [2] : vector<4x8x8xf32> to vector<4x8xf32>
    %80 = vector.shape_cast %79 : vector<4x8xf32> to vector<4x8x1xf32>
    %81 = vector.broadcast %80 : vector<4x8x1xf32> to vector<4x8x8xf32>
    %82 = arith.subf %78, %81 : vector<4x8x8xf32>
    %83 = math.exp %82 : vector<4x8x8xf32>
    %cst_37 = arith.constant dense<0.000000e+00> : vector<4x8xf32>
    %84 = vector.multi_reduction <add>, %83, %cst_37 [2] : vector<4x8x8xf32> to vector<4x8xf32>
    %85 = vector.shape_cast %84 : vector<4x8xf32> to vector<4x8x1xf32>
    %86 = tpu.reciprocal %85 {approx = true} : vector<4x8x1xf32> -> vector<4x8x1xf32>
    %87 = vector.broadcast %86 : vector<4x8x1xf32> to vector<4x8x8xf32>
    %88 = arith.mulf %83, %87 : vector<4x8x8xf32>
    "tpu.trace_start"() <{level = 10 : i32, message = "bij,bjk->bik"}> : () -> ()
    %cst_38 = arith.constant dense<0.000000e+00> : vector<4x8x8xf32>
    %89 = tpu.matmul %88, %75, %cst_38 {dimension_numbers = #tpu.dot_dimension_numbers<[2], [1], [1], [2], [0, 0, 0, 1, 1, 2], [0], [0]>} : vector<4x8x8xf32>, vector<4x8x8xf32>, vector<4x8x8xf32> -> vector<4x8x8xf32>
    "tpu.trace_stop"() : () -> ()
    %90 = vector.shape_cast %89 : vector<4x8x8xf32> to vector<32x8xf32>
    %91 = vector.extract_strided_slice %27 {offsets = [16, 0], sizes = [8, 32], strides = [1, 1]} : vector<32x32xf32> to vector<8x32xf32>
    %cst_39 = arith.constant dense<0.000000e+00> : vector<32x32xf32>
    %92 = tpu.matmul %90, %91, %cst_39 {dimension_numbers = #tpu.dot_dimension_numbers<[1], [0], [0], [1], [0, 0, 1, 1], [], []>} : vector<32x8xf32>, vector<8x32xf32>, vector<32x32xf32> -> vector<32x32xf32>
    %93 = arith.addf %72, %92 : vector<32x32xf32>
    %94 = vector.extract_strided_slice %21 {offsets = [0, 0, 24], sizes = [4, 8, 8], strides = [1, 1, 1]} : vector<4x8x32xf32> to vector<4x8x8xf32>
    %95 = vector.extract_strided_slice %23 {offsets = [0, 0, 24], sizes = [4, 8, 8], strides = [1, 1, 1]} : vector<4x8x32xf32> to vector<4x8x8xf32>
    %96 = vector.extract_strided_slice %25 {offsets = [0, 0, 24], sizes = [4, 8, 8], strides = [1, 1, 1]} : vector<4x8x32xf32> to vector<4x8x8xf32>
    "tpu.trace_start"() <{level = 10 : i32, message = "bik,bjk->bij"}> : () -> ()
    %cst_40 = arith.constant dense<0.000000e+00> : vector<4x8x8xf32>
    %97 = tpu.matmul %94, %95, %cst_40 {dimension_numbers = #tpu.dot_dimension_numbers<[2], [2], [1], [1], [0, 0, 0, 1, 1, 1], [0], [0]>} : vector<4x8x8xf32>, vector<4x8x8xf32>, vector<4x8x8xf32> -> vector<4x8x8xf32>
    "tpu.trace_stop"() : () -> ()
    %cst_41 = arith.constant 0.353553385 : f32
    %98 = vector.broadcast %cst_41 : f32 to vector<4x8x8xf32>
    %99 = arith.mulf %97, %98 : vector<4x8x8xf32>
    %cst_42 = arith.constant dense<0xFF800000> : vector<4x8xf32>
    %100 = vector.multi_reduction <maximumf>, %99, %cst_42 [2] : vector<4x8x8xf32> to vector<4x8xf32>
    %101 = vector.shape_cast %100 : vector<4x8xf32> to vector<4x8x1xf32>
    %102 = vector.broadcast %101 : vector<4x8x1xf32> to vector<4x8x8xf32>
    %103 = arith.subf %99, %102 : vector<4x8x8xf32>
    %104 = math.exp %103 : vector<4x8x8xf32>
    %cst_43 = arith.constant dense<0.000000e+00> : vector<4x8xf32>
    %105 = vector.multi_reduction <add>, %104, %cst_43 [2] : vector<4x8x8xf32> to vector<4x8xf32>
    %106 = vector.shape_cast %105 : vector<4x8xf32> to vector<4x8x1xf32>
    %107 = tpu.reciprocal %106 {approx = true} : vector<4x8x1xf32> -> vector<4x8x1xf32>
    %108 = vector.broadcast %107 : vector<4x8x1xf32> to vector<4x8x8xf32>
    %109 = arith.mulf %104, %108 : vector<4x8x8xf32>
    "tpu.trace_start"() <{level = 10 : i32, message = "bij,bjk->bik"}> : () -> ()
    %cst_44 = arith.constant dense<0.000000e+00> : vector<4x8x8xf32>
    %110 = tpu.matmul %109, %96, %cst_44 {dimension_numbers = #tpu.dot_dimension_numbers<[2], [1], [1], [2], [0, 0, 0, 1, 1, 2], [0], [0]>} : vector<4x8x8xf32>, vector<4x8x8xf32>, vector<4x8x8xf32> -> vector<4x8x8xf32>
    "tpu.trace_stop"() : () -> ()
    %111 = vector.shape_cast %110 : vector<4x8x8xf32> to vector<32x8xf32>
    %112 = vector.extract_strided_slice %27 {offsets = [24, 0], sizes = [8, 32], strides = [1, 1]} : vector<32x32xf32> to vector<8x32xf32>
    %cst_45 = arith.constant dense<0.000000e+00> : vector<32x32xf32>
    %113 = tpu.matmul %111, %112, %cst_45 {dimension_numbers = #tpu.dot_dimension_numbers<[1], [0], [0], [1], [0, 0, 1, 1], [], []>} : vector<32x8xf32>, vector<8x32xf32>, vector<32x32xf32> -> vector<32x32xf32>
    %114 = arith.addf %93, %113 : vector<32x32xf32>
    %115 = arith.addf %12, %114 : vector<32x32xf32>
    %c0_46 = arith.constant 0 : index
    %c0_47 = arith.constant 0 : index
    %c0_48 = arith.constant 0 : index
    %116 = vector.load %arg9[%c0_46, %c0_47, %c0_48] : memref<2x1x32xf32, #tpu.memory_space<vmem>>, vector<1x1x32xf32>
    %117 = vector.shape_cast %116 : vector<1x1x32xf32> to vector<1x32xf32>
    %c0_49 = arith.constant 0 : index
    %c0_50 = arith.constant 0 : index
    %c0_51 = arith.constant 0 : index
    %118 = vector.load %arg10[%c0_49, %c0_50, %c0_51] : memref<2x1x32xf32, #tpu.memory_space<vmem>>, vector<1x1x32xf32>
    %119 = vector.shape_cast %118 : vector<1x1x32xf32> to vector<1x32xf32>
    %cst_52 = arith.constant dense<0.000000e+00> : vector<32xf32>
    %120 = vector.multi_reduction <add>, %115, %cst_52 [1] : vector<32x32xf32> to vector<32xf32>
    %121 = vector.shape_cast %120 : vector<32xf32> to vector<32x1xf32>
    %cst_53 = arith.constant 3.200000e+01 : f32
    %122 = vector.broadcast %cst_53 : f32 to vector<32x1xf32>
    %123 = arith.divf %121, %122 : vector<32x1xf32>
    %124 = vector.broadcast %123 : vector<32x1xf32> to vector<32x32xf32>
    %125 = arith.subf %115, %124 : vector<32x32xf32>
    %126 = arith.mulf %125, %125 : vector<32x32xf32>
    %cst_54 = arith.constant dense<0.000000e+00> : vector<32xf32>
    %127 = vector.multi_reduction <add>, %126, %cst_54 [1] : vector<32x32xf32> to vector<32xf32>
    %128 = vector.shape_cast %127 : vector<32xf32> to vector<32x1xf32>
    %cst_55 = arith.constant 3.200000e+01 : f32
    %129 = vector.broadcast %cst_55 : f32 to vector<32x1xf32>
    %130 = arith.divf %128, %129 : vector<32x1xf32>
    %cst_56 = arith.constant 9.99999974E-6 : f32
    %131 = vector.broadcast %cst_56 : f32 to vector<32x1xf32>
    %132 = arith.addf %130, %131 : vector<32x1xf32>
    %133 = math.rsqrt %132 : vector<32x1xf32>
    %134 = vector.broadcast %133 : vector<32x1xf32> to vector<32x32xf32>
    %135 = arith.mulf %125, %134 : vector<32x32xf32>
    %136 = vector.broadcast %117 : vector<1x32xf32> to vector<32x32xf32>
    %137 = arith.mulf %135, %136 : vector<32x32xf32>
    %138 = vector.broadcast %119 : vector<1x32xf32> to vector<32x32xf32>
    %139 = arith.addf %137, %138 : vector<32x32xf32>
    %c0_57 = arith.constant 0 : index
    %c0_58 = arith.constant 0 : index
    %c0_59 = arith.constant 0 : index
    %140 = vector.load %arg11[%c0_57, %c0_58, %c0_59] : memref<2x32x64xf32, #tpu.memory_space<vmem>>, vector<1x32x64xf32>
    %141 = vector.shape_cast %140 : vector<1x32x64xf32> to vector<32x64xf32>
    %cst_60 = arith.constant dense<0.000000e+00> : vector<32x64xf32>
    %142 = tpu.matmul %139, %141, %cst_60 {dimension_numbers = #tpu.dot_dimension_numbers<[1], [0], [0], [1], [0, 0, 1, 1], [], []>} : vector<32x32xf32>, vector<32x64xf32>, vector<32x64xf32> -> vector<32x64xf32>
    %c0_61 = arith.constant 0 : index
    %c0_62 = arith.constant 0 : index
    %c0_63 = arith.constant 0 : index
    %143 = vector.load %arg12[%c0_61, %c0_62, %c0_63] : memref<2x1x64xf32, #tpu.memory_space<vmem>>, vector<1x1x64xf32>
    %144 = vector.shape_cast %143 : vector<1x1x64xf32> to vector<1x64xf32>
    %145 = vector.broadcast %144 : vector<1x64xf32> to vector<32x64xf32>
    %146 = arith.addf %142, %145 : vector<32x64xf32>
    %cst_64 = arith.constant 0.000000e+00 : f32
    %147 = vector.broadcast %cst_64 : f32 to vector<32x64xf32>
    %148 = arith.maximumf %146, %147 : vector<32x64xf32>
    %c0_65 = arith.constant 0 : index
    %c0_66 = arith.constant 0 : index
    %c0_67 = arith.constant 0 : index
    %149 = vector.load %arg13[%c0_65, %c0_66, %c0_67] : memref<2x64x32xf32, #tpu.memory_space<vmem>>, vector<1x64x32xf32>
    %150 = vector.shape_cast %149 : vector<1x64x32xf32> to vector<64x32xf32>
    %cst_68 = arith.constant dense<0.000000e+00> : vector<32x32xf32>
    %151 = tpu.matmul %148, %150, %cst_68 {dimension_numbers = #tpu.dot_dimension_numbers<[1], [0], [0], [1], [0, 0, 1, 1], [], []>} : vector<32x64xf32>, vector<64x32xf32>, vector<32x32xf32> -> vector<32x32xf32>
    %c0_69 = arith.constant 0 : index
    %c0_70 = arith.constant 0 : index
    %c0_71 = arith.constant 0 : index
    %152 = vector.load %arg14[%c0_69, %c0_70, %c0_71] : memref<2x1x32xf32, #tpu.memory_space<vmem>>, vector<1x1x32xf32>
    %153 = vector.shape_cast %152 : vector<1x1x32xf32> to vector<1x32xf32>
    %154 = vector.broadcast %153 : vector<1x32xf32> to vector<32x32xf32>
    %155 = arith.addf %151, %154 : vector<32x32xf32>
    %156 = arith.addf %139, %155 : vector<32x32xf32>
    %c0_72 = arith.constant 0 : index
    %c0_73 = arith.constant 0 : index
    %c0_74 = arith.constant 0 : index
    %157 = vector.load %arg15[%c0_72, %c0_73, %c0_74] : memref<2x1x32xf32, #tpu.memory_space<vmem>>, vector<1x1x32xf32>
    %158 = vector.shape_cast %157 : vector<1x1x32xf32> to vector<1x32xf32>
    %c0_75 = arith.constant 0 : index
    %c0_76 = arith.constant 0 : index
    %c0_77 = arith.constant 0 : index
    %159 = vector.load %arg16[%c0_75, %c0_76, %c0_77] : memref<2x1x32xf32, #tpu.memory_space<vmem>>, vector<1x1x32xf32>
    %160 = vector.shape_cast %159 : vector<1x1x32xf32> to vector<1x32xf32>
    %cst_78 = arith.constant dense<0.000000e+00> : vector<32xf32>
    %161 = vector.multi_reduction <add>, %156, %cst_78 [1] : vector<32x32xf32> to vector<32xf32>
    %162 = vector.shape_cast %161 : vector<32xf32> to vector<32x1xf32>
    %cst_79 = arith.constant 3.200000e+01 : f32
    %163 = vector.broadcast %cst_79 : f32 to vector<32x1xf32>
    %164 = arith.divf %162, %163 : vector<32x1xf32>
    %165 = vector.broadcast %164 : vector<32x1xf32> to vector<32x32xf32>
    %166 = arith.subf %156, %165 : vector<32x32xf32>
    %167 = arith.mulf %166, %166 : vector<32x32xf32>
    %cst_80 = arith.constant dense<0.000000e+00> : vector<32xf32>
    %168 = vector.multi_reduction <add>, %167, %cst_80 [1] : vector<32x32xf32> to vector<32xf32>
    %169 = vector.shape_cast %168 : vector<32xf32> to vector<32x1xf32>
    %cst_81 = arith.constant 3.200000e+01 : f32
    %170 = vector.broadcast %cst_81 : f32 to vector<32x1xf32>
    %171 = arith.divf %169, %170 : vector<32x1xf32>
    %cst_82 = arith.constant 9.99999974E-6 : f32
    %172 = vector.broadcast %cst_82 : f32 to vector<32x1xf32>
    %173 = arith.addf %171, %172 : vector<32x1xf32>
    %174 = math.rsqrt %173 : vector<32x1xf32>
    %175 = vector.broadcast %174 : vector<32x1xf32> to vector<32x32xf32>
    %176 = arith.mulf %166, %175 : vector<32x32xf32>
    %177 = vector.broadcast %158 : vector<1x32xf32> to vector<32x32xf32>
    %178 = arith.mulf %176, %177 : vector<32x32xf32>
    %179 = vector.broadcast %160 : vector<1x32xf32> to vector<32x32xf32>
    %180 = arith.addf %178, %179 : vector<32x32xf32>
    %c1 = arith.constant 1 : index
    %c0_83 = arith.constant 0 : index
    %c0_84 = arith.constant 0 : index
    %181 = vector.load %arg5[%c1, %c0_83, %c0_84] : memref<2x32x96xf32, #tpu.memory_space<vmem>>, vector<1x32x96xf32>
    %182 = vector.shape_cast %181 : vector<1x32x96xf32> to vector<32x96xf32>
    %cst_85 = arith.constant dense<0.000000e+00> : vector<32x96xf32>
    %183 = tpu.matmul %180, %182, %cst_85 {dimension_numbers = #tpu.dot_dimension_numbers<[1], [0], [0], [1], [0, 0, 1, 1], [], []>} : vector<32x32xf32>, vector<32x96xf32>, vector<32x96xf32> -> vector<32x96xf32>
    %c1_86 = arith.constant 1 : index
    %c0_87 = arith.constant 0 : index
    %c0_88 = arith.constant 0 : index
    %184 = vector.load %arg6[%c1_86, %c0_87, %c0_88] : memref<2x1x96xf32, #tpu.memory_space<vmem>>, vector<1x1x96xf32>
    %185 = vector.shape_cast %184 : vector<1x1x96xf32> to vector<1x96xf32>
    %186 = vector.broadcast %185 : vector<1x96xf32> to vector<32x96xf32>
    %187 = arith.addf %183, %186 : vector<32x96xf32>
    %188 = vector.extract_strided_slice %187 {offsets = [0, 0], sizes = [32, 32], strides = [1, 1]} : vector<32x96xf32> to vector<32x32xf32>
    %189 = vector.shape_cast %188 : vector<32x32xf32> to vector<4x8x32xf32>
    %190 = vector.extract_strided_slice %187 {offsets = [0, 32], sizes = [32, 32], strides = [1, 1]} : vector<32x96xf32> to vector<32x32xf32>
    %191 = vector.shape_cast %190 : vector<32x32xf32> to vector<4x8x32xf32>
    %192 = vector.extract_strided_slice %187 {offsets = [0, 64], sizes = [32, 32], strides = [1, 1]} : vector<32x96xf32> to vector<32x32xf32>
    %193 = vector.shape_cast %192 : vector<32x32xf32> to vector<4x8x32xf32>
    %c1_89 = arith.constant 1 : index
    %c0_90 = arith.constant 0 : index
    %c0_91 = arith.constant 0 : index
    %194 = vector.load %arg7[%c1_89, %c0_90, %c0_91] : memref<2x32x32xf32, #tpu.memory_space<vmem>>, vector<1x32x32xf32>
    %195 = vector.shape_cast %194 : vector<1x32x32xf32> to vector<32x32xf32>
    %c1_92 = arith.constant 1 : index
    %c0_93 = arith.constant 0 : index
    %c0_94 = arith.constant 0 : index
    %196 = vector.load %arg8[%c1_92, %c0_93, %c0_94] : memref<2x1x32xf32, #tpu.memory_space<vmem>>, vector<1x1x32xf32>
    %197 = vector.shape_cast %196 : vector<1x1x32xf32> to vector<1x32xf32>
    %198 = vector.extract_strided_slice %189 {offsets = [0, 0, 0], sizes = [4, 8, 8], strides = [1, 1, 1]} : vector<4x8x32xf32> to vector<4x8x8xf32>
    %199 = vector.extract_strided_slice %191 {offsets = [0, 0, 0], sizes = [4, 8, 8], strides = [1, 1, 1]} : vector<4x8x32xf32> to vector<4x8x8xf32>
    %200 = vector.extract_strided_slice %193 {offsets = [0, 0, 0], sizes = [4, 8, 8], strides = [1, 1, 1]} : vector<4x8x32xf32> to vector<4x8x8xf32>
    "tpu.trace_start"() <{level = 10 : i32, message = "bik,bjk->bij"}> : () -> ()
    %cst_95 = arith.constant dense<0.000000e+00> : vector<4x8x8xf32>
    %201 = tpu.matmul %198, %199, %cst_95 {dimension_numbers = #tpu.dot_dimension_numbers<[2], [2], [1], [1], [0, 0, 0, 1, 1, 1], [0], [0]>} : vector<4x8x8xf32>, vector<4x8x8xf32>, vector<4x8x8xf32> -> vector<4x8x8xf32>
    "tpu.trace_stop"() : () -> ()
    %cst_96 = arith.constant 0.353553385 : f32
    %202 = vector.broadcast %cst_96 : f32 to vector<4x8x8xf32>
    %203 = arith.mulf %201, %202 : vector<4x8x8xf32>
    %cst_97 = arith.constant dense<0xFF800000> : vector<4x8xf32>
    %204 = vector.multi_reduction <maximumf>, %203, %cst_97 [2] : vector<4x8x8xf32> to vector<4x8xf32>
    %205 = vector.shape_cast %204 : vector<4x8xf32> to vector<4x8x1xf32>
    %206 = vector.broadcast %205 : vector<4x8x1xf32> to vector<4x8x8xf32>
    %207 = arith.subf %203, %206 : vector<4x8x8xf32>
    %208 = math.exp %207 : vector<4x8x8xf32>
    %cst_98 = arith.constant dense<0.000000e+00> : vector<4x8xf32>
    %209 = vector.multi_reduction <add>, %208, %cst_98 [2] : vector<4x8x8xf32> to vector<4x8xf32>
    %210 = vector.shape_cast %209 : vector<4x8xf32> to vector<4x8x1xf32>
    %211 = tpu.reciprocal %210 {approx = true} : vector<4x8x1xf32> -> vector<4x8x1xf32>
    %212 = vector.broadcast %211 : vector<4x8x1xf32> to vector<4x8x8xf32>
    %213 = arith.mulf %208, %212 : vector<4x8x8xf32>
    "tpu.trace_start"() <{level = 10 : i32, message = "bij,bjk->bik"}> : () -> ()
    %cst_99 = arith.constant dense<0.000000e+00> : vector<4x8x8xf32>
    %214 = tpu.matmul %213, %200, %cst_99 {dimension_numbers = #tpu.dot_dimension_numbers<[2], [1], [1], [2], [0, 0, 0, 1, 1, 2], [0], [0]>} : vector<4x8x8xf32>, vector<4x8x8xf32>, vector<4x8x8xf32> -> vector<4x8x8xf32>
    "tpu.trace_stop"() : () -> ()
    %215 = vector.shape_cast %214 : vector<4x8x8xf32> to vector<32x8xf32>
    %216 = vector.extract_strided_slice %195 {offsets = [0, 0], sizes = [8, 32], strides = [1, 1]} : vector<32x32xf32> to vector<8x32xf32>
    %cst_100 = arith.constant dense<0.000000e+00> : vector<32x32xf32>
    %217 = tpu.matmul %215, %216, %cst_100 {dimension_numbers = #tpu.dot_dimension_numbers<[1], [0], [0], [1], [0, 0, 1, 1], [], []>} : vector<32x8xf32>, vector<8x32xf32>, vector<32x32xf32> -> vector<32x32xf32>
    %218 = vector.broadcast %197 : vector<1x32xf32> to vector<32x32xf32>
    %219 = arith.addf %218, %217 : vector<32x32xf32>
    %220 = vector.extract_strided_slice %189 {offsets = [0, 0, 8], sizes = [4, 8, 8], strides = [1, 1, 1]} : vector<4x8x32xf32> to vector<4x8x8xf32>
    %221 = vector.extract_strided_slice %191 {offsets = [0, 0, 8], sizes = [4, 8, 8], strides = [1, 1, 1]} : vector<4x8x32xf32> to vector<4x8x8xf32>
    %222 = vector.extract_strided_slice %193 {offsets = [0, 0, 8], sizes = [4, 8, 8], strides = [1, 1, 1]} : vector<4x8x32xf32> to vector<4x8x8xf32>
    "tpu.trace_start"() <{level = 10 : i32, message = "bik,bjk->bij"}> : () -> ()
    %cst_101 = arith.constant dense<0.000000e+00> : vector<4x8x8xf32>
    %223 = tpu.matmul %220, %221, %cst_101 {dimension_numbers = #tpu.dot_dimension_numbers<[2], [2], [1], [1], [0, 0, 0, 1, 1, 1], [0], [0]>} : vector<4x8x8xf32>, vector<4x8x8xf32>, vector<4x8x8xf32> -> vector<4x8x8xf32>
    "tpu.trace_stop"() : () -> ()
    %cst_102 = arith.constant 0.353553385 : f32
    %224 = vector.broadcast %cst_102 : f32 to vector<4x8x8xf32>
    %225 = arith.mulf %223, %224 : vector<4x8x8xf32>
    %cst_103 = arith.constant dense<0xFF800000> : vector<4x8xf32>
    %226 = vector.multi_reduction <maximumf>, %225, %cst_103 [2] : vector<4x8x8xf32> to vector<4x8xf32>
    %227 = vector.shape_cast %226 : vector<4x8xf32> to vector<4x8x1xf32>
    %228 = vector.broadcast %227 : vector<4x8x1xf32> to vector<4x8x8xf32>
    %229 = arith.subf %225, %228 : vector<4x8x8xf32>
    %230 = math.exp %229 : vector<4x8x8xf32>
    %cst_104 = arith.constant dense<0.000000e+00> : vector<4x8xf32>
    %231 = vector.multi_reduction <add>, %230, %cst_104 [2] : vector<4x8x8xf32> to vector<4x8xf32>
    %232 = vector.shape_cast %231 : vector<4x8xf32> to vector<4x8x1xf32>
    %233 = tpu.reciprocal %232 {approx = true} : vector<4x8x1xf32> -> vector<4x8x1xf32>
    %234 = vector.broadcast %233 : vector<4x8x1xf32> to vector<4x8x8xf32>
    %235 = arith.mulf %230, %234 : vector<4x8x8xf32>
    "tpu.trace_start"() <{level = 10 : i32, message = "bij,bjk->bik"}> : () -> ()
    %cst_105 = arith.constant dense<0.000000e+00> : vector<4x8x8xf32>
    %236 = tpu.matmul %235, %222, %cst_105 {dimension_numbers = #tpu.dot_dimension_numbers<[2], [1], [1], [2], [0, 0, 0, 1, 1, 2], [0], [0]>} : vector<4x8x8xf32>, vector<4x8x8xf32>, vector<4x8x8xf32> -> vector<4x8x8xf32>
    "tpu.trace_stop"() : () -> ()
    %237 = vector.shape_cast %236 : vector<4x8x8xf32> to vector<32x8xf32>
    %238 = vector.extract_strided_slice %195 {offsets = [8, 0], sizes = [8, 32], strides = [1, 1]} : vector<32x32xf32> to vector<8x32xf32>
    %cst_106 = arith.constant dense<0.000000e+00> : vector<32x32xf32>
    %239 = tpu.matmul %237, %238, %cst_106 {dimension_numbers = #tpu.dot_dimension_numbers<[1], [0], [0], [1], [0, 0, 1, 1], [], []>} : vector<32x8xf32>, vector<8x32xf32>, vector<32x32xf32> -> vector<32x32xf32>
    %240 = arith.addf %219, %239 : vector<32x32xf32>
    %241 = vector.extract_strided_slice %189 {offsets = [0, 0, 16], sizes = [4, 8, 8], strides = [1, 1, 1]} : vector<4x8x32xf32> to vector<4x8x8xf32>
    %242 = vector.extract_strided_slice %191 {offsets = [0, 0, 16], sizes = [4, 8, 8], strides = [1, 1, 1]} : vector<4x8x32xf32> to vector<4x8x8xf32>
    %243 = vector.extract_strided_slice %193 {offsets = [0, 0, 16], sizes = [4, 8, 8], strides = [1, 1, 1]} : vector<4x8x32xf32> to vector<4x8x8xf32>
    "tpu.trace_start"() <{level = 10 : i32, message = "bik,bjk->bij"}> : () -> ()
    %cst_107 = arith.constant dense<0.000000e+00> : vector<4x8x8xf32>
    %244 = tpu.matmul %241, %242, %cst_107 {dimension_numbers = #tpu.dot_dimension_numbers<[2], [2], [1], [1], [0, 0, 0, 1, 1, 1], [0], [0]>} : vector<4x8x8xf32>, vector<4x8x8xf32>, vector<4x8x8xf32> -> vector<4x8x8xf32>
    "tpu.trace_stop"() : () -> ()
    %cst_108 = arith.constant 0.353553385 : f32
    %245 = vector.broadcast %cst_108 : f32 to vector<4x8x8xf32>
    %246 = arith.mulf %244, %245 : vector<4x8x8xf32>
    %cst_109 = arith.constant dense<0xFF800000> : vector<4x8xf32>
    %247 = vector.multi_reduction <maximumf>, %246, %cst_109 [2] : vector<4x8x8xf32> to vector<4x8xf32>
    %248 = vector.shape_cast %247 : vector<4x8xf32> to vector<4x8x1xf32>
    %249 = vector.broadcast %248 : vector<4x8x1xf32> to vector<4x8x8xf32>
    %250 = arith.subf %246, %249 : vector<4x8x8xf32>
    %251 = math.exp %250 : vector<4x8x8xf32>
    %cst_110 = arith.constant dense<0.000000e+00> : vector<4x8xf32>
    %252 = vector.multi_reduction <add>, %251, %cst_110 [2] : vector<4x8x8xf32> to vector<4x8xf32>
    %253 = vector.shape_cast %252 : vector<4x8xf32> to vector<4x8x1xf32>
    %254 = tpu.reciprocal %253 {approx = true} : vector<4x8x1xf32> -> vector<4x8x1xf32>
    %255 = vector.broadcast %254 : vector<4x8x1xf32> to vector<4x8x8xf32>
    %256 = arith.mulf %251, %255 : vector<4x8x8xf32>
    "tpu.trace_start"() <{level = 10 : i32, message = "bij,bjk->bik"}> : () -> ()
    %cst_111 = arith.constant dense<0.000000e+00> : vector<4x8x8xf32>
    %257 = tpu.matmul %256, %243, %cst_111 {dimension_numbers = #tpu.dot_dimension_numbers<[2], [1], [1], [2], [0, 0, 0, 1, 1, 2], [0], [0]>} : vector<4x8x8xf32>, vector<4x8x8xf32>, vector<4x8x8xf32> -> vector<4x8x8xf32>
    "tpu.trace_stop"() : () -> ()
    %258 = vector.shape_cast %257 : vector<4x8x8xf32> to vector<32x8xf32>
    %259 = vector.extract_strided_slice %195 {offsets = [16, 0], sizes = [8, 32], strides = [1, 1]} : vector<32x32xf32> to vector<8x32xf32>
    %cst_112 = arith.constant dense<0.000000e+00> : vector<32x32xf32>
    %260 = tpu.matmul %258, %259, %cst_112 {dimension_numbers = #tpu.dot_dimension_numbers<[1], [0], [0], [1], [0, 0, 1, 1], [], []>} : vector<32x8xf32>, vector<8x32xf32>, vector<32x32xf32> -> vector<32x32xf32>
    %261 = arith.addf %240, %260 : vector<32x32xf32>
    %262 = vector.extract_strided_slice %189 {offsets = [0, 0, 24], sizes = [4, 8, 8], strides = [1, 1, 1]} : vector<4x8x32xf32> to vector<4x8x8xf32>
    %263 = vector.extract_strided_slice %191 {offsets = [0, 0, 24], sizes = [4, 8, 8], strides = [1, 1, 1]} : vector<4x8x32xf32> to vector<4x8x8xf32>
    %264 = vector.extract_strided_slice %193 {offsets = [0, 0, 24], sizes = [4, 8, 8], strides = [1, 1, 1]} : vector<4x8x32xf32> to vector<4x8x8xf32>
    "tpu.trace_start"() <{level = 10 : i32, message = "bik,bjk->bij"}> : () -> ()
    %cst_113 = arith.constant dense<0.000000e+00> : vector<4x8x8xf32>
    %265 = tpu.matmul %262, %263, %cst_113 {dimension_numbers = #tpu.dot_dimension_numbers<[2], [2], [1], [1], [0, 0, 0, 1, 1, 1], [0], [0]>} : vector<4x8x8xf32>, vector<4x8x8xf32>, vector<4x8x8xf32> -> vector<4x8x8xf32>
    "tpu.trace_stop"() : () -> ()
    %cst_114 = arith.constant 0.353553385 : f32
    %266 = vector.broadcast %cst_114 : f32 to vector<4x8x8xf32>
    %267 = arith.mulf %265, %266 : vector<4x8x8xf32>
    %cst_115 = arith.constant dense<0xFF800000> : vector<4x8xf32>
    %268 = vector.multi_reduction <maximumf>, %267, %cst_115 [2] : vector<4x8x8xf32> to vector<4x8xf32>
    %269 = vector.shape_cast %268 : vector<4x8xf32> to vector<4x8x1xf32>
    %270 = vector.broadcast %269 : vector<4x8x1xf32> to vector<4x8x8xf32>
    %271 = arith.subf %267, %270 : vector<4x8x8xf32>
    %272 = math.exp %271 : vector<4x8x8xf32>
    %cst_116 = arith.constant dense<0.000000e+00> : vector<4x8xf32>
    %273 = vector.multi_reduction <add>, %272, %cst_116 [2] : vector<4x8x8xf32> to vector<4x8xf32>
    %274 = vector.shape_cast %273 : vector<4x8xf32> to vector<4x8x1xf32>
    %275 = tpu.reciprocal %274 {approx = true} : vector<4x8x1xf32> -> vector<4x8x1xf32>
    %276 = vector.broadcast %275 : vector<4x8x1xf32> to vector<4x8x8xf32>
    %277 = arith.mulf %272, %276 : vector<4x8x8xf32>
    "tpu.trace_start"() <{level = 10 : i32, message = "bij,bjk->bik"}> : () -> ()
    %cst_117 = arith.constant dense<0.000000e+00> : vector<4x8x8xf32>
    %278 = tpu.matmul %277, %264, %cst_117 {dimension_numbers = #tpu.dot_dimension_numbers<[2], [1], [1], [2], [0, 0, 0, 1, 1, 2], [0], [0]>} : vector<4x8x8xf32>, vector<4x8x8xf32>, vector<4x8x8xf32> -> vector<4x8x8xf32>
    "tpu.trace_stop"() : () -> ()
    %279 = vector.shape_cast %278 : vector<4x8x8xf32> to vector<32x8xf32>
    %280 = vector.extract_strided_slice %195 {offsets = [24, 0], sizes = [8, 32], strides = [1, 1]} : vector<32x32xf32> to vector<8x32xf32>
    %cst_118 = arith.constant dense<0.000000e+00> : vector<32x32xf32>
    %281 = tpu.matmul %279, %280, %cst_118 {dimension_numbers = #tpu.dot_dimension_numbers<[1], [0], [0], [1], [0, 0, 1, 1], [], []>} : vector<32x8xf32>, vector<8x32xf32>, vector<32x32xf32> -> vector<32x32xf32>
    %282 = arith.addf %261, %281 : vector<32x32xf32>
    %283 = arith.addf %180, %282 : vector<32x32xf32>
    %c1_119 = arith.constant 1 : index
    %c0_120 = arith.constant 0 : index
    %c0_121 = arith.constant 0 : index
    %284 = vector.load %arg9[%c1_119, %c0_120, %c0_121] : memref<2x1x32xf32, #tpu.memory_space<vmem>>, vector<1x1x32xf32>
    %285 = vector.shape_cast %284 : vector<1x1x32xf32> to vector<1x32xf32>
    %c1_122 = arith.constant 1 : index
    %c0_123 = arith.constant 0 : index
    %c0_124 = arith.constant 0 : index
    %286 = vector.load %arg10[%c1_122, %c0_123, %c0_124] : memref<2x1x32xf32, #tpu.memory_space<vmem>>, vector<1x1x32xf32>
    %287 = vector.shape_cast %286 : vector<1x1x32xf32> to vector<1x32xf32>
    %cst_125 = arith.constant dense<0.000000e+00> : vector<32xf32>
    %288 = vector.multi_reduction <add>, %283, %cst_125 [1] : vector<32x32xf32> to vector<32xf32>
    %289 = vector.shape_cast %288 : vector<32xf32> to vector<32x1xf32>
    %cst_126 = arith.constant 3.200000e+01 : f32
    %290 = vector.broadcast %cst_126 : f32 to vector<32x1xf32>
    %291 = arith.divf %289, %290 : vector<32x1xf32>
    %292 = vector.broadcast %291 : vector<32x1xf32> to vector<32x32xf32>
    %293 = arith.subf %283, %292 : vector<32x32xf32>
    %294 = arith.mulf %293, %293 : vector<32x32xf32>
    %cst_127 = arith.constant dense<0.000000e+00> : vector<32xf32>
    %295 = vector.multi_reduction <add>, %294, %cst_127 [1] : vector<32x32xf32> to vector<32xf32>
    %296 = vector.shape_cast %295 : vector<32xf32> to vector<32x1xf32>
    %cst_128 = arith.constant 3.200000e+01 : f32
    %297 = vector.broadcast %cst_128 : f32 to vector<32x1xf32>
    %298 = arith.divf %296, %297 : vector<32x1xf32>
    %cst_129 = arith.constant 9.99999974E-6 : f32
    %299 = vector.broadcast %cst_129 : f32 to vector<32x1xf32>
    %300 = arith.addf %298, %299 : vector<32x1xf32>
    %301 = math.rsqrt %300 : vector<32x1xf32>
    %302 = vector.broadcast %301 : vector<32x1xf32> to vector<32x32xf32>
    %303 = arith.mulf %293, %302 : vector<32x32xf32>
    %304 = vector.broadcast %285 : vector<1x32xf32> to vector<32x32xf32>
    %305 = arith.mulf %303, %304 : vector<32x32xf32>
    %306 = vector.broadcast %287 : vector<1x32xf32> to vector<32x32xf32>
    %307 = arith.addf %305, %306 : vector<32x32xf32>
    %c1_130 = arith.constant 1 : index
    %c0_131 = arith.constant 0 : index
    %c0_132 = arith.constant 0 : index
    %308 = vector.load %arg11[%c1_130, %c0_131, %c0_132] : memref<2x32x64xf32, #tpu.memory_space<vmem>>, vector<1x32x64xf32>
    %309 = vector.shape_cast %308 : vector<1x32x64xf32> to vector<32x64xf32>
    %cst_133 = arith.constant dense<0.000000e+00> : vector<32x64xf32>
    %310 = tpu.matmul %307, %309, %cst_133 {dimension_numbers = #tpu.dot_dimension_numbers<[1], [0], [0], [1], [0, 0, 1, 1], [], []>} : vector<32x32xf32>, vector<32x64xf32>, vector<32x64xf32> -> vector<32x64xf32>
    %c1_134 = arith.constant 1 : index
    %c0_135 = arith.constant 0 : index
    %c0_136 = arith.constant 0 : index
    %311 = vector.load %arg12[%c1_134, %c0_135, %c0_136] : memref<2x1x64xf32, #tpu.memory_space<vmem>>, vector<1x1x64xf32>
    %312 = vector.shape_cast %311 : vector<1x1x64xf32> to vector<1x64xf32>
    %313 = vector.broadcast %312 : vector<1x64xf32> to vector<32x64xf32>
    %314 = arith.addf %310, %313 : vector<32x64xf32>
    %cst_137 = arith.constant 0.000000e+00 : f32
    %315 = vector.broadcast %cst_137 : f32 to vector<32x64xf32>
    %316 = arith.maximumf %314, %315 : vector<32x64xf32>
    %c1_138 = arith.constant 1 : index
    %c0_139 = arith.constant 0 : index
    %c0_140 = arith.constant 0 : index
    %317 = vector.load %arg13[%c1_138, %c0_139, %c0_140] : memref<2x64x32xf32, #tpu.memory_space<vmem>>, vector<1x64x32xf32>
    %318 = vector.shape_cast %317 : vector<1x64x32xf32> to vector<64x32xf32>
    %cst_141 = arith.constant dense<0.000000e+00> : vector<32x32xf32>
    %319 = tpu.matmul %316, %318, %cst_141 {dimension_numbers = #tpu.dot_dimension_numbers<[1], [0], [0], [1], [0, 0, 1, 1], [], []>} : vector<32x64xf32>, vector<64x32xf32>, vector<32x32xf32> -> vector<32x32xf32>
    %c1_142 = arith.constant 1 : index
    %c0_143 = arith.constant 0 : index
    %c0_144 = arith.constant 0 : index
    %320 = vector.load %arg14[%c1_142, %c0_143, %c0_144] : memref<2x1x32xf32, #tpu.memory_space<vmem>>, vector<1x1x32xf32>
    %321 = vector.shape_cast %320 : vector<1x1x32xf32> to vector<1x32xf32>
    %322 = vector.broadcast %321 : vector<1x32xf32> to vector<32x32xf32>
    %323 = arith.addf %319, %322 : vector<32x32xf32>
    %324 = arith.addf %307, %323 : vector<32x32xf32>
    %c1_145 = arith.constant 1 : index
    %c0_146 = arith.constant 0 : index
    %c0_147 = arith.constant 0 : index
    %325 = vector.load %arg15[%c1_145, %c0_146, %c0_147] : memref<2x1x32xf32, #tpu.memory_space<vmem>>, vector<1x1x32xf32>
    %326 = vector.shape_cast %325 : vector<1x1x32xf32> to vector<1x32xf32>
    %c1_148 = arith.constant 1 : index
    %c0_149 = arith.constant 0 : index
    %c0_150 = arith.constant 0 : index
    %327 = vector.load %arg16[%c1_148, %c0_149, %c0_150] : memref<2x1x32xf32, #tpu.memory_space<vmem>>, vector<1x1x32xf32>
    %328 = vector.shape_cast %327 : vector<1x1x32xf32> to vector<1x32xf32>
    %cst_151 = arith.constant dense<0.000000e+00> : vector<32xf32>
    %329 = vector.multi_reduction <add>, %324, %cst_151 [1] : vector<32x32xf32> to vector<32xf32>
    %330 = vector.shape_cast %329 : vector<32xf32> to vector<32x1xf32>
    %cst_152 = arith.constant 3.200000e+01 : f32
    %331 = vector.broadcast %cst_152 : f32 to vector<32x1xf32>
    %332 = arith.divf %330, %331 : vector<32x1xf32>
    %333 = vector.broadcast %332 : vector<32x1xf32> to vector<32x32xf32>
    %334 = arith.subf %324, %333 : vector<32x32xf32>
    %335 = arith.mulf %334, %334 : vector<32x32xf32>
    %cst_153 = arith.constant dense<0.000000e+00> : vector<32xf32>
    %336 = vector.multi_reduction <add>, %335, %cst_153 [1] : vector<32x32xf32> to vector<32xf32>
    %337 = vector.shape_cast %336 : vector<32xf32> to vector<32x1xf32>
    %cst_154 = arith.constant 3.200000e+01 : f32
    %338 = vector.broadcast %cst_154 : f32 to vector<32x1xf32>
    %339 = arith.divf %337, %338 : vector<32x1xf32>
    %cst_155 = arith.constant 9.99999974E-6 : f32
    %340 = vector.broadcast %cst_155 : f32 to vector<32x1xf32>
    %341 = arith.addf %339, %340 : vector<32x1xf32>
    %342 = math.rsqrt %341 : vector<32x1xf32>
    %343 = vector.broadcast %342 : vector<32x1xf32> to vector<32x32xf32>
    %344 = arith.mulf %334, %343 : vector<32x32xf32>
    %345 = vector.broadcast %326 : vector<1x32xf32> to vector<32x32xf32>
    %346 = arith.mulf %344, %345 : vector<32x32xf32>
    %347 = vector.broadcast %328 : vector<1x32xf32> to vector<32x32xf32>
    %348 = arith.addf %346, %347 : vector<32x32xf32>
    %349 = vector.shape_cast %348 : vector<32x32xf32> to vector<4x8x32xf32>
    %350 = vector.extract_strided_slice %349 {offsets = [0, 0, 0], sizes = [2, 8, 32], strides = [1, 1, 1]} : vector<4x8x32xf32> to vector<2x8x32xf32>
    %351 = vector.extract_strided_slice %349 {offsets = [2, 0, 0], sizes = [2, 8, 32], strides = [1, 1, 1]} : vector<4x8x32xf32> to vector<2x8x32xf32>
    %352 = arith.addf %350, %351 : vector<2x8x32xf32>
    %cst_156 = arith.constant 5.000000e-01 : f32
    %353 = vector.broadcast %cst_156 : f32 to vector<2x8x32xf32>
    %354 = arith.mulf %352, %353 : vector<2x8x32xf32>
    %c0_157 = arith.constant 0 : index
    %c0_158 = arith.constant 0 : index
    %355 = vector.load %arg18[%c0_157, %c0_158] : memref<1x32xf32, #tpu.memory_space<vmem>>, vector<1x32xf32>
    %356 = vector.extract_strided_slice %354 {offsets = [0, 0, 0], sizes = [2, 1, 32], strides = [1, 1, 1]} : vector<2x8x32xf32> to vector<2x1x32xf32>
    %357 = vector.shape_cast %356 : vector<2x1x32xf32> to vector<2x32xf32>
    %c0_159 = arith.constant 0 : index
    %c0_160 = arith.constant 0 : index
    %c0_161 = arith.constant 0 : index
    %358 = vector.load %arg17[%c0_159, %c0_160, %c0_161] : memref<8x32x32xf32, #tpu.memory_space<vmem>>, vector<1x32x32xf32>
    %359 = vector.shape_cast %358 : vector<1x32x32xf32> to vector<32x32xf32>
    %cst_162 = arith.constant dense<0.000000e+00> : vector<2x32xf32>
    %360 = tpu.matmul %357, %359, %cst_162 {dimension_numbers = #tpu.dot_dimension_numbers<[1], [0], [0], [1], [0, 0, 1, 1], [], []>} : vector<2x32xf32>, vector<32x32xf32>, vector<2x32xf32> -> vector<2x32xf32>
    %361 = vector.broadcast %355 : vector<1x32xf32> to vector<2x32xf32>
    %362 = arith.addf %361, %360 : vector<2x32xf32>
    %363 = vector.extract_strided_slice %354 {offsets = [0, 1, 0], sizes = [2, 1, 32], strides = [1, 1, 1]} : vector<2x8x32xf32> to vector<2x1x32xf32>
    %364 = vector.shape_cast %363 : vector<2x1x32xf32> to vector<2x32xf32>
    %c1_163 = arith.constant 1 : index
    %c0_164 = arith.constant 0 : index
    %c0_165 = arith.constant 0 : index
    %365 = vector.load %arg17[%c1_163, %c0_164, %c0_165] : memref<8x32x32xf32, #tpu.memory_space<vmem>>, vector<1x32x32xf32>
    %366 = vector.shape_cast %365 : vector<1x32x32xf32> to vector<32x32xf32>
    %cst_166 = arith.constant dense<0.000000e+00> : vector<2x32xf32>
    %367 = tpu.matmul %364, %366, %cst_166 {dimension_numbers = #tpu.dot_dimension_numbers<[1], [0], [0], [1], [0, 0, 1, 1], [], []>} : vector<2x32xf32>, vector<32x32xf32>, vector<2x32xf32> -> vector<2x32xf32>
    %368 = arith.addf %362, %367 : vector<2x32xf32>
    %369 = vector.extract_strided_slice %354 {offsets = [0, 2, 0], sizes = [2, 1, 32], strides = [1, 1, 1]} : vector<2x8x32xf32> to vector<2x1x32xf32>
    %370 = vector.shape_cast %369 : vector<2x1x32xf32> to vector<2x32xf32>
    %c2 = arith.constant 2 : index
    %c0_167 = arith.constant 0 : index
    %c0_168 = arith.constant 0 : index
    %371 = vector.load %arg17[%c2, %c0_167, %c0_168] : memref<8x32x32xf32, #tpu.memory_space<vmem>>, vector<1x32x32xf32>
    %372 = vector.shape_cast %371 : vector<1x32x32xf32> to vector<32x32xf32>
    %cst_169 = arith.constant dense<0.000000e+00> : vector<2x32xf32>
    %373 = tpu.matmul %370, %372, %cst_169 {dimension_numbers = #tpu.dot_dimension_numbers<[1], [0], [0], [1], [0, 0, 1, 1], [], []>} : vector<2x32xf32>, vector<32x32xf32>, vector<2x32xf32> -> vector<2x32xf32>
    %374 = arith.addf %368, %373 : vector<2x32xf32>
    %375 = vector.extract_strided_slice %354 {offsets = [0, 3, 0], sizes = [2, 1, 32], strides = [1, 1, 1]} : vector<2x8x32xf32> to vector<2x1x32xf32>
    %376 = vector.shape_cast %375 : vector<2x1x32xf32> to vector<2x32xf32>
    %c3 = arith.constant 3 : index
    %c0_170 = arith.constant 0 : index
    %c0_171 = arith.constant 0 : index
    %377 = vector.load %arg17[%c3, %c0_170, %c0_171] : memref<8x32x32xf32, #tpu.memory_space<vmem>>, vector<1x32x32xf32>
    %378 = vector.shape_cast %377 : vector<1x32x32xf32> to vector<32x32xf32>
    %cst_172 = arith.constant dense<0.000000e+00> : vector<2x32xf32>
    %379 = tpu.matmul %376, %378, %cst_172 {dimension_numbers = #tpu.dot_dimension_numbers<[1], [0], [0], [1], [0, 0, 1, 1], [], []>} : vector<2x32xf32>, vector<32x32xf32>, vector<2x32xf32> -> vector<2x32xf32>
    %380 = arith.addf %374, %379 : vector<2x32xf32>
    %381 = vector.extract_strided_slice %354 {offsets = [0, 4, 0], sizes = [2, 1, 32], strides = [1, 1, 1]} : vector<2x8x32xf32> to vector<2x1x32xf32>
    %382 = vector.shape_cast %381 : vector<2x1x32xf32> to vector<2x32xf32>
    %c4 = arith.constant 4 : index
    %c0_173 = arith.constant 0 : index
    %c0_174 = arith.constant 0 : index
    %383 = vector.load %arg17[%c4, %c0_173, %c0_174] : memref<8x32x32xf32, #tpu.memory_space<vmem>>, vector<1x32x32xf32>
    %384 = vector.shape_cast %383 : vector<1x32x32xf32> to vector<32x32xf32>
    %cst_175 = arith.constant dense<0.000000e+00> : vector<2x32xf32>
    %385 = tpu.matmul %382, %384, %cst_175 {dimension_numbers = #tpu.dot_dimension_numbers<[1], [0], [0], [1], [0, 0, 1, 1], [], []>} : vector<2x32xf32>, vector<32x32xf32>, vector<2x32xf32> -> vector<2x32xf32>
    %386 = arith.addf %380, %385 : vector<2x32xf32>
    %387 = vector.extract_strided_slice %354 {offsets = [0, 5, 0], sizes = [2, 1, 32], strides = [1, 1, 1]} : vector<2x8x32xf32> to vector<2x1x32xf32>
    %388 = vector.shape_cast %387 : vector<2x1x32xf32> to vector<2x32xf32>
    %c5 = arith.constant 5 : index
    %c0_176 = arith.constant 0 : index
    %c0_177 = arith.constant 0 : index
    %389 = vector.load %arg17[%c5, %c0_176, %c0_177] : memref<8x32x32xf32, #tpu.memory_space<vmem>>, vector<1x32x32xf32>
    %390 = vector.shape_cast %389 : vector<1x32x32xf32> to vector<32x32xf32>
    %cst_178 = arith.constant dense<0.000000e+00> : vector<2x32xf32>
    %391 = tpu.matmul %388, %390, %cst_178 {dimension_numbers = #tpu.dot_dimension_numbers<[1], [0], [0], [1], [0, 0, 1, 1], [], []>} : vector<2x32xf32>, vector<32x32xf32>, vector<2x32xf32> -> vector<2x32xf32>
    %392 = arith.addf %386, %391 : vector<2x32xf32>
    %393 = vector.extract_strided_slice %354 {offsets = [0, 6, 0], sizes = [2, 1, 32], strides = [1, 1, 1]} : vector<2x8x32xf32> to vector<2x1x32xf32>
    %394 = vector.shape_cast %393 : vector<2x1x32xf32> to vector<2x32xf32>
    %c6 = arith.constant 6 : index
    %c0_179 = arith.constant 0 : index
    %c0_180 = arith.constant 0 : index
    %395 = vector.load %arg17[%c6, %c0_179, %c0_180] : memref<8x32x32xf32, #tpu.memory_space<vmem>>, vector<1x32x32xf32>
    %396 = vector.shape_cast %395 : vector<1x32x32xf32> to vector<32x32xf32>
    %cst_181 = arith.constant dense<0.000000e+00> : vector<2x32xf32>
    %397 = tpu.matmul %394, %396, %cst_181 {dimension_numbers = #tpu.dot_dimension_numbers<[1], [0], [0], [1], [0, 0, 1, 1], [], []>} : vector<2x32xf32>, vector<32x32xf32>, vector<2x32xf32> -> vector<2x32xf32>
    %398 = arith.addf %392, %397 : vector<2x32xf32>
    %399 = vector.extract_strided_slice %354 {offsets = [0, 7, 0], sizes = [2, 1, 32], strides = [1, 1, 1]} : vector<2x8x32xf32> to vector<2x1x32xf32>
    %400 = vector.shape_cast %399 : vector<2x1x32xf32> to vector<2x32xf32>
    %c7 = arith.constant 7 : index
    %c0_182 = arith.constant 0 : index
    %c0_183 = arith.constant 0 : index
    %401 = vector.load %arg17[%c7, %c0_182, %c0_183] : memref<8x32x32xf32, #tpu.memory_space<vmem>>, vector<1x32x32xf32>
    %402 = vector.shape_cast %401 : vector<1x32x32xf32> to vector<32x32xf32>
    %cst_184 = arith.constant dense<0.000000e+00> : vector<2x32xf32>
    %403 = tpu.matmul %400, %402, %cst_184 {dimension_numbers = #tpu.dot_dimension_numbers<[1], [0], [0], [1], [0, 0, 1, 1], [], []>} : vector<2x32xf32>, vector<32x32xf32>, vector<2x32xf32> -> vector<2x32xf32>
    %404 = arith.addf %398, %403 : vector<2x32xf32>
    %cst_185 = arith.constant 0.000000e+00 : f32
    %405 = vector.broadcast %cst_185 : f32 to vector<2x32xf32>
    %406 = arith.maximumf %404, %405 : vector<2x32xf32>
    %c0_186 = arith.constant 0 : index
    %c0_187 = arith.constant 0 : index
    %407 = vector.load %arg19[%c0_186, %c0_187] : memref<32x128xf32, #tpu.memory_space<vmem>>, vector<32x128xf32>
    %cst_188 = arith.constant dense<0.000000e+00> : vector<2x128xf32>
    %408 = tpu.matmul %406, %407, %cst_188 {dimension_numbers = #tpu.dot_dimension_numbers<[1], [0], [0], [1], [0, 0, 1, 1], [], []>} : vector<2x32xf32>, vector<32x128xf32>, vector<2x128xf32> -> vector<2x128xf32>
    %c0_189 = arith.constant 0 : index
    %c0_190 = arith.constant 0 : index
    %409 = vector.load %arg20[%c0_189, %c0_190] : memref<1x128xf32, #tpu.memory_space<vmem>>, vector<1x128xf32>
    %410 = vector.broadcast %409 : vector<1x128xf32> to vector<2x128xf32>
    %411 = arith.addf %408, %410 : vector<2x128xf32>
    %c0_191 = arith.constant 0 : index
    %c0_192 = arith.constant 0 : index
    %412 = vector.load %arg21[%c0_191, %c0_192] : memref<2x128xf32, #tpu.memory_space<vmem>>, vector<2x128xf32>
    tpu.vector_store %arg21[%c0_191, %c0_192], %411 {strides = array<i32>} : memref<2x128xf32, #tpu.memory_space<vmem>>, vector<2x128xf32>,
    return
  }
  func.func @transform_0(%arg0: i32) -> (i32, i32) {
    %c0_i32 = arith.constant 0 : i32
    %c0_i32_0 = arith.constant 0 : i32
    %c0_i32_1 = arith.constant 0 : i32
    return %c0_i32, %c0_i32_0 : i32, i32
  }
  func.func @transform_1(%arg0: i32) -> (i32, i32, i32) {
    %c0_i32 = arith.constant 0 : i32
    %c0_i32_0 = arith.constant 0 : i32
    %c0_i32_1 = arith.constant 0 : i32
    %c0_i32_2 = arith.constant 0 : i32
    return %c0_i32, %c0_i32_0, %c0_i32_1 : i32, i32, i32
  }
  func.func @transform_2(%arg0: i32) -> (i32, i32, i32) {
    %c0_i32 = arith.constant 0 : i32
    %c0_i32_0 = arith.constant 0 : i32
    %c0_i32_1 = arith.constant 0 : i32
    %c0_i32_2 = arith.constant 0 : i32
    return %c0_i32, %c0_i32_0, %c0_i32_1 : i32, i32, i32
  }
  func.func @transform_3(%arg0: i32) -> (i32, i32, i32) {
    %c0_i32 = arith.constant 0 : i32
    %c0_i32_0 = arith.constant 0 : i32
    %c0_i32_1 = arith.constant 0 : i32
    %c0_i32_2 = arith.constant 0 : i32
    return %c0_i32, %c0_i32_0, %c0_i32_1 : i32, i32, i32
  }
  func.func @transform_4(%arg0: i32) -> (i32, i32, i32) {
    %c0_i32 = arith.constant 0 : i32
    %c0_i32_0 = arith.constant 0 : i32
    %c0_i32_1 = arith.constant 0 : i32
    %c0_i32_2 = arith.constant 0 : i32
    return %c0_i32, %c0_i32_0, %c0_i32_1 : i32, i32, i32
  }
  func.func @transform_5(%arg0: i32) -> (i32, i32, i32) {
    %c0_i32 = arith.constant 0 : i32
    %c0_i32_0 = arith.constant 0 : i32
    %c0_i32_1 = arith.constant 0 : i32
    %c0_i32_2 = arith.constant 0 : i32
    return %c0_i32, %c0_i32_0, %c0_i32_1 : i32, i32, i32
  }
  func.func @transform_6(%arg0: i32) -> (i32, i32, i32) {
    %c0_i32 = arith.constant 0 : i32
    %c0_i32_0 = arith.constant 0 : i32
    %c0_i32_1 = arith.constant 0 : i32
    %c0_i32_2 = arith.constant 0 : i32
    return %c0_i32, %c0_i32_0, %c0_i32_1 : i32, i32, i32
  }
  func.func @transform_7(%arg0: i32) -> (i32, i32, i32) {
    %c0_i32 = arith.constant 0 : i32
    %c0_i32_0 = arith.constant 0 : i32
    %c0_i32_1 = arith.constant 0 : i32
    %c0_i32_2 = arith.constant 0 : i32
    return %c0_i32, %c0_i32_0, %c0_i32_1 : i32, i32, i32
  }
  func.func @transform_8(%arg0: i32) -> (i32, i32, i32) {
    %c0_i32 = arith.constant 0 : i32
    %c0_i32_0 = arith.constant 0 : i32
    %c0_i32_1 = arith.constant 0 : i32
    %c0_i32_2 = arith.constant 0 : i32
    return %c0_i32, %c0_i32_0, %c0_i32_1 : i32, i32, i32
  }
  func.func @transform_9(%arg0: i32) -> (i32, i32, i32) {
    %c0_i32 = arith.constant 0 : i32
    %c0_i32_0 = arith.constant 0 : i32
    %c0_i32_1 = arith.constant 0 : i32
    %c0_i32_2 = arith.constant 0 : i32
    return %c0_i32, %c0_i32_0, %c0_i32_1 : i32, i32, i32
  }
  func.func @transform_10(%arg0: i32) -> (i32, i32, i32) {
    %c0_i32 = arith.constant 0 : i32
    %c0_i32_0 = arith.constant 0 : i32
    %c0_i32_1 = arith.constant 0 : i32
    %c0_i32_2 = arith.constant 0 : i32
    return %c0_i32, %c0_i32_0, %c0_i32_1 : i32, i32, i32
  }
  func.func @transform_11(%arg0: i32) -> (i32, i32, i32) {
    %c0_i32 = arith.constant 0 : i32
    %c0_i32_0 = arith.constant 0 : i32
    %c0_i32_1 = arith.constant 0 : i32
    %c0_i32_2 = arith.constant 0 : i32
    return %c0_i32, %c0_i32_0, %c0_i32_1 : i32, i32, i32
  }
  func.func @transform_12(%arg0: i32) -> (i32, i32, i32) {
    %c0_i32 = arith.constant 0 : i32
    %c0_i32_0 = arith.constant 0 : i32
    %c0_i32_1 = arith.constant 0 : i32
    %c0_i32_2 = arith.constant 0 : i32
    return %c0_i32, %c0_i32_0, %c0_i32_1 : i32, i32, i32
  }
  func.func @transform_13(%arg0: i32) -> (i32, i32, i32) {
    %c0_i32 = arith.constant 0 : i32
    %c0_i32_0 = arith.constant 0 : i32
    %c0_i32_1 = arith.constant 0 : i32
    %c0_i32_2 = arith.constant 0 : i32
    return %c0_i32, %c0_i32_0, %c0_i32_1 : i32, i32, i32
  }
  func.func @transform_14(%arg0: i32) -> (i32, i32, i32) {
    %c0_i32 = arith.constant 0 : i32
    %c0_i32_0 = arith.constant 0 : i32
    %c0_i32_1 = arith.constant 0 : i32
    %c0_i32_2 = arith.constant 0 : i32
    return %c0_i32, %c0_i32_0, %c0_i32_1 : i32, i32, i32
  }
  func.func @transform_15(%arg0: i32) -> (i32, i32, i32) {
    %c0_i32 = arith.constant 0 : i32
    %c0_i32_0 = arith.constant 0 : i32
    %c0_i32_1 = arith.constant 0 : i32
    %c0_i32_2 = arith.constant 0 : i32
    return %c0_i32, %c0_i32_0, %c0_i32_1 : i32, i32, i32
  }
  func.func @transform_16(%arg0: i32) -> (i32, i32, i32) {
    %c0_i32 = arith.constant 0 : i32
    %c0_i32_0 = arith.constant 0 : i32
    %c0_i32_1 = arith.constant 0 : i32
    %c0_i32_2 = arith.constant 0 : i32
    return %c0_i32, %c0_i32_0, %c0_i32_1 : i32, i32, i32
  }
  func.func @transform_17(%arg0: i32) -> (i32, i32) {
    %c0_i32 = arith.constant 0 : i32
    %c0_i32_0 = arith.constant 0 : i32
    %c0_i32_1 = arith.constant 0 : i32
    return %c0_i32, %c0_i32_0 : i32, i32
  }
  func.func @transform_18(%arg0: i32) -> (i32, i32) {
    %c0_i32 = arith.constant 0 : i32
    %c0_i32_0 = arith.constant 0 : i32
    %c0_i32_1 = arith.constant 0 : i32
    return %c0_i32, %c0_i32_0 : i32, i32
  }
  func.func @transform_19(%arg0: i32) -> (i32, i32) {
    %c0_i32 = arith.constant 0 : i32
    %c0_i32_0 = arith.constant 0 : i32
    %c0_i32_1 = arith.constant 0 : i32
    return %c0_i32, %c0_i32_0 : i32, i32
  }
  func.func @transform_20(%arg0: i32) -> (i32, i32) {
    %c0_i32 = arith.constant 0 : i32
    %c0_i32_0 = arith.constant 0 : i32
    %c0_i32_1 = arith.constant 0 : i32
    return %c0_i32, %c0_i32_0 : i32, i32
  }
}

</mosaic_0001>

<llo_original>
// kernel: transformer_forward.1
$region0: #{transformer_forward.1}
  #allocation0 [shape = 'u32[]', space=smem, size = 0x4, offset = 0x4, fixed_abs, tag = 'smem constant byte address 0x4 - core index']
  #allocation1 [shape = 'u32[144,128]{1,0:T(1,128)}', space=vmem, size = 0x12000, scoped, tag = 'internal scratch']
  %s0 = inlined_call_operand.vmem [shape: f32[4,8], index: 0, kind: input, shape index: {}]
  %s1 = inlined_call_operand.vmem [shape: f32[1,1,32], index: 1, kind: input, shape index: {}]
  %s2 = inlined_call_operand.hbm [shape: f32[1,1,32], index: 2, kind: input, shape index: {}]
  %s3 = inlined_call_operand.hbm [shape: f32[1,8,32], index: 3, kind: input, shape index: {}]
  %s4 = inlined_call_operand.vmem [shape: f32[2,32,96], index: 4, kind: input, shape index: {}]
  %s5 = inlined_call_operand.hbm [shape: f32[2,1,96], index: 5, kind: input, shape index: {}]
  %s6 = inlined_call_operand.vmem [shape: f32[2,32,32], index: 6, kind: input, shape index: {}]
  %s7 = inlined_call_operand.hbm [shape: f32[2,1,32], index: 7, kind: input, shape index: {}]
  %s8 = inlined_call_operand.hbm [shape: f32[2,1,32], index: 8, kind: input, shape index: {}]
  %s9 = inlined_call_operand.hbm [shape: f32[2,1,32], index: 9, kind: input, shape index: {}]
  %s10 = inlined_call_operand.vmem [shape: f32[2,32,64], index: 10, kind: input, shape index: {}]
  %s11 = inlined_call_operand.hbm [shape: f32[2,1,64], index: 11, kind: input, shape index: {}]
  %s12 = inlined_call_operand.vmem [shape: f32[2,64,32], index: 12, kind: input, shape index: {}]
  %s13 = inlined_call_operand.hbm [shape: f32[2,1,32], index: 13, kind: input, shape index: {}]
  %s14 = inlined_call_operand.hbm [shape: f32[2,1,32], index: 14, kind: input, shape index: {}]
  %s15 = inlined_call_operand.hbm [shape: f32[2,1,32], index: 15, kind: input, shape index: {}]
  %s16 = inlined_call_operand.hbm [shape: f32[8,32,32], index: 16, kind: input, shape index: {}]
  %s17 = inlined_call_operand.hbm [shape: f32[1,32], index: 17, kind: input, shape index: {}]
  %s18 = inlined_call_operand.vmem [shape: f32[32,128], index: 18, kind: input, shape index: {}]
  %s19 = inlined_call_operand.hbm [shape: f32[1,128], index: 19, kind: input, shape index: {}]
  %s20 = inlined_call_operand.hbm [shape: f32[2,128], index: 20, kind: output, shape index: {}]
  %s21 = sld [smem:[#allocation0]]
  $region142: #{transformer_forward.1} parent=0
    _
  %s23 = ssub.s32 1, %s21
  %s24 = scalar_select 0, %s23, %s21
  $region1: #{transformer_forward.1} parent=0
    #allocation2 [shape = 'u8[512]{0}', space=vmem, size = 0x400, scoped, tag = 'input window, operand 2, single buffered']
    #allocation3 [shape = 's32[1]{0}', space=sflag, size = 0x4, scoped, tag = 'scoped memory for transformer_forward.1']
    #allocation4 [shape = 's32[1]{0}', space=sflag, size = 0x4, scoped, tag = 'scoped memory for transformer_forward.1']
    #allocation5 [shape = 'u8[4096]{0}', space=vmem, size = 0x1000, scoped, tag = 'input window, operand 3, single buffered']
    #allocation6 [shape = 's32[1]{0}', space=sflag, size = 0x4, scoped, tag = 'scoped memory for transformer_forward.1']
    #allocation7 [shape = 'u8[1024]{0}', space=vmem, size = 0x400, scoped, tag = 'input window, operand 5, single buffered']
    #allocation8 [shape = 'u8[1024]{0}', space=vmem, size = 0x400, scoped, tag = 'input window, operand 7, single buffered']
    #allocation9 [shape = 's32[1]{0}', space=sflag, size = 0x4, scoped, tag = 'scoped memory for transformer_forward.1']
    #allocation10 [shape = 'u8[1024]{0}', space=vmem, size = 0x400, scoped, tag = 'input window, operand 8, single buffered']
    #allocation11 [shape = 'u8[1024]{0}', space=vmem, size = 0x400, scoped, tag = 'input window, operand 9, single buffered']
    #allocation12 [shape = 's32[1]{0}', space=sflag, size = 0x4, scoped, tag = 'scoped memory for transformer_forward.1']
    #allocation13 [shape = 'u8[1024]{0}', space=vmem, size = 0x400, scoped, tag = 'input window, operand 11, single buffered']
    #allocation14 [shape = 'u8[1024]{0}', space=vmem, size = 0x400, scoped, tag = 'input window, operand 13, single buffered']
    #allocation15 [shape = 's32[1]{0}', space=sflag, size = 0x4, scoped, tag = 'scoped memory for transformer_forward.1']
    #allocation16 [shape = 'u8[1024]{0}', space=vmem, size = 0x400, scoped, tag = 'input window, operand 14, single buffered']
    #allocation17 [shape = 'u8[1024]{0}', space=vmem, size = 0x400, scoped, tag = 'input window, operand 15, single buffered']
    #allocation18 [shape = 's32[1]{0}', space=sflag, size = 0x4, scoped, tag = 'scoped memory for transformer_forward.1']
    #allocation19 [shape = 'u8[131072]{0}', space=vmem, size = 0x20000, scoped, tag = 'input window, operand 16, single buffered']
    #allocation20 [shape = 'u8[512]{0}', space=vmem, size = 0x400, scoped, tag = 'input window, operand 17, single buffered']
    #allocation21 [shape = 's32[1]{0}', space=sflag, size = 0x4, scoped, tag = 'scoped memory for transformer_forward.1']
    #allocation22 [shape = 'u8[512]{0}', space=vmem, size = 0x400, scoped, tag = 'input window, operand 19, single buffered']
    #allocation23 [shape = 'u8[1024]{0}', space=vmem, size = 0x400, scoped, tag = 'output window, operand 0, single buffered']
    %25 = vsyncpa [#allocation3], 0
    %26 = vsyncpa [#allocation6], 0
    %27 = vsyncpa [#allocation9], 0
    %28 = vsyncpa [#allocation12], 0
    %29 = vsyncpa [#allocation15], 0
    %30 = vsyncpa [#allocation18], 0
    %31 = vsyncpa [#allocation21], 0
    %32 = vsyncpa [#allocation4], 0
    // Predicated region
    $region2: #{transformer_forward.1} parent=1 // pred_check
      _
    $region3: #{transformer_forward.1} parent=1 // pred_check_branch
      %34 = sbr.rel (0) target = $region5
    $region4: #{transformer_forward.1} parent=1 // pred_region
      _
    $region5: #{transformer_forward.1} parent=1 // pred_fallthru
      _
    // Predicated region
    $region6: #{transformer_forward.1} parent=1 // pred_check
      _
    $region7: #{transformer_forward.1} parent=1 // pred_check_branch
      %36 = sbr.rel (0) target = $region9
    $region8: #{transformer_forward.1} parent=1 // pred_region
      _
    $region9: #{transformer_forward.1} parent=1 // pred_fallthru
      _
    // Predicated region
    $region10: #{transformer_forward.1} parent=1 // pred_check
      _
    $region11: #{transformer_forward.1} parent=1 // pred_check_branch
      %38 = sbr.rel (0) target = $region13
    $region12: #{transformer_forward.1} parent=1 // pred_region
      %s40 = ssub.s32 16, 16
      %41 = vsyncadd [#allocation3], %s40
      %s43 = sshll.u32 [#allocation2], 4
      %s44 = int_to_ptr.vmem [resolvable:$true] %s43
      %46 = dma.hbm_to_vmem [thread:$0]  %s2, 16, %s44, [#allocation3]
    $region13: #{transformer_forward.1} parent=1 // pred_fallthru
      _
    // Predicated region
    $region14: #{transformer_forward.1} parent=1 // pred_check
      _
    $region15: #{transformer_forward.1} parent=1 // pred_check_branch
      %48 = sbr.rel (0) target = $region17
    $region16: #{transformer_forward.1} parent=1 // pred_region
      %s50 = ssub.s32 128, 128
      %51 = vsyncadd [#allocation6], %s50
      %s53 = sshll.u32 [#allocation5], 4
      %s54 = int_to_ptr.vmem [resolvable:$true] %s53
      %56 = dma.hbm_to_vmem [thread:$0]  %s3, 128, %s54, [#allocation6]
    $region17: #{transformer_forward.1} parent=1 // pred_fallthru
      _
    // Predicated region
    $region18: #{transformer_forward.1} parent=1 // pred_check
      _
    $region19: #{transformer_forward.1} parent=1 // pred_check_branch
      %58 = sbr.rel (0) target = $region21
    $region20: #{transformer_forward.1} parent=1 // pred_region
      _
    $region21: #{transformer_forward.1} parent=1 // pred_fallthru
      _
    // Predicated region
    $region22: #{transformer_forward.1} parent=1 // pred_check
      _
    $region23: #{transformer_forward.1} parent=1 // pred_check_branch
      %60 = sbr.rel (0) target = $region25
    $region24: #{transformer_forward.1} parent=1 // pred_region
      %s62 = ssub.s32 32, 32
      %63 = vsyncadd [#allocation6], %s62
      %s64 = sshll.u32 [#allocation7], 4
      %s65 = int_to_ptr.vmem [resolvable:$true] %s64
      %70 = dma.hbm_to_vmem [thread:$0]  %s5, 32, %s65, [#allocation6], 16, 16, 1
    $region25: #{transformer_forward.1} parent=1 // pred_fallthru
      _
    // Predicated region
    $region26: #{transformer_forward.1} parent=1 // pred_check
      _
    $region27: #{transformer_forward.1} parent=1 // pred_check_branch
      %72 = sbr.rel (0) target = $region29
    $region28: #{transformer_forward.1} parent=1 // pred_region
      _
    $region29: #{transformer_forward.1} parent=1 // pred_fallthru
      _
    // Predicated region
    $region30: #{transformer_forward.1} parent=1 // pred_check
      _
    $region31: #{transformer_forward.1} parent=1 // pred_check_branch
      %74 = sbr.rel (0) target = $region33
    $region32: #{transformer_forward.1} parent=1 // pred_region
      %s76 = ssub.s32 32, 32
      %77 = vsyncadd [#allocation9], %s76
      %s78 = sshll.u32 [#allocation8], 4
      %s79 = int_to_ptr.vmem [resolvable:$true] %s78
      %84 = dma.hbm_to_vmem [thread:$0]  %s7, 32, %s79, [#allocation9], 16, 16, 1
    $region33: #{transformer_forward.1} parent=1 // pred_fallthru
      _
    // Predicated region
    $region34: #{transformer_forward.1} parent=1 // pred_check
      _
    $region35: #{transformer_forward.1} parent=1 // pred_check_branch
      %86 = sbr.rel (0) target = $region37
    $region36: #{transformer_forward.1} parent=1 // pred_region
      %s88 = ssub.s32 32, 32
      %89 = vsyncadd [#allocation9], %s88
      %s90 = sshll.u32 [#allocation10], 4
      %s91 = int_to_ptr.vmem [resolvable:$true] %s90
      %96 = dma.hbm_to_vmem [thread:$0]  %s8, 32, %s91, [#allocation9], 16, 16, 1
    $region37: #{transformer_forward.1} parent=1 // pred_fallthru
      _
    // Predicated region
    $region38: #{transformer_forward.1} parent=1 // pred_check
      _
    $region39: #{transformer_forward.1} parent=1 // pred_check_branch
      %98 = sbr.rel (0) target = $region41
    $region40: #{transformer_forward.1} parent=1 // pred_region
      %s100 = ssub.s32 32, 32
      %101 = vsyncadd [#allocation12], %s100
      %s102 = sshll.u32 [#allocation11], 4
      %s103 = int_to_ptr.vmem [resolvable:$true] %s102
      %108 = dma.hbm_to_vmem [thread:$0]  %s9, 32, %s103, [#allocation12], 16, 16, 1
    $region41: #{transformer_forward.1} parent=1 // pred_fallthru
      _
    // Predicated region
    $region42: #{transformer_forward.1} parent=1 // pred_check
      _
    $region43: #{transformer_forward.1} parent=1 // pred_check_branch
      %110 = sbr.rel (0) target = $region45
    $region44: #{transformer_forward.1} parent=1 // pred_region
      _
    $region45: #{transformer_forward.1} parent=1 // pred_fallthru
      _
    // Predicated region
    $region46: #{transformer_forward.1} parent=1 // pred_check
      _
    $region47: #{transformer_forward.1} parent=1 // pred_check_branch
      %112 = sbr.rel (0) target = $region49
    $region48: #{transformer_forward.1} parent=1 // pred_region
      %s114 = ssub.s32 32, 32
      %115 = vsyncadd [#allocation12], %s114
      %s116 = sshll.u32 [#allocation13], 4
      %s117 = int_to_ptr.vmem [resolvable:$true] %s116
      %122 = dma.hbm_to_vmem [thread:$0]  %s11, 32, %s117, [#allocation12], 16, 16, 1
    $region49: #{transformer_forward.1} parent=1 // pred_fallthru
      _
    // Predicated region
    $region50: #{transformer_forward.1} parent=1 // pred_check
      _
    $region51: #{transformer_forward.1} parent=1 // pred_check_branch
      %124 = sbr.rel (0) target = $region53
    $region52: #{transformer_forward.1} parent=1 // pred_region
      _
    $region53: #{transformer_forward.1} parent=1 // pred_fallthru
      _
    // Predicated region
    $region54: #{transformer_forward.1} parent=1 // pred_check
      _
    $region55: #{transformer_forward.1} parent=1 // pred_check_branch
      %126 = sbr.rel (0) target = $region57
    $region56: #{transformer_forward.1} parent=1 // pred_region
      %s128 = ssub.s32 32, 32
      %129 = vsyncadd [#allocation15], %s128
      %s130 = sshll.u32 [#allocation14], 4
      %s131 = int_to_ptr.vmem [resolvable:$true] %s130
      %136 = dma.hbm_to_vmem [thread:$0]  %s13, 32, %s131, [#allocation15], 16, 16, 1
    $region57: #{transformer_forward.1} parent=1 // pred_fallthru
      _
    // Predicated region
    $region58: #{transformer_forward.1} parent=1 // pred_check
      _
    $region59: #{transformer_forward.1} parent=1 // pred_check_branch
      %138 = sbr.rel (0) target = $region61
    $region60: #{transformer_forward.1} parent=1 // pred_region
      %s140 = ssub.s32 32, 32
      %141 = vsyncadd [#allocation15], %s140
      %s142 = sshll.u32 [#allocation16], 4
      %s143 = int_to_ptr.vmem [resolvable:$true] %s142
      %148 = dma.hbm_to_vmem [thread:$0]  %s14, 32, %s143, [#allocation15], 16, 16, 1
    $region61: #{transformer_forward.1} parent=1 // pred_fallthru
      _
    // Predicated region
    $region62: #{transformer_forward.1} parent=1 // pred_check
      _
    $region63: #{transformer_forward.1} parent=1 // pred_check_branch
      %150 = sbr.rel (0) target = $region65
    $region64: #{transformer_forward.1} parent=1 // pred_region
      %s152 = ssub.s32 32, 32
      %153 = vsyncadd [#allocation18], %s152
      %s154 = sshll.u32 [#allocation17], 4
      %s155 = int_to_ptr.vmem [resolvable:$true] %s154
      %160 = dma.hbm_to_vmem [thread:$0]  %s15, 32, %s155, [#allocation18], 16, 16, 1
    $region65: #{transformer_forward.1} parent=1 // pred_fallthru
      _
    // Predicated region
    $region66: #{transformer_forward.1} parent=1 // pred_check
      _
    $region67: #{transformer_forward.1} parent=1 // pred_check_branch
      %162 = sbr.rel (0) target = $region69
    $region68: #{transformer_forward.1} parent=1 // pred_region
      %s164 = ssub.s32 4096, 4096
      %165 = vsyncadd [#allocation18], %s164
      %s166 = sshll.u32 [#allocation19], 4
      %s167 = int_to_ptr.vmem [resolvable:$true] %s166
      %172 = dma.hbm_to_vmem [thread:$0]  %s16, 4096, %s167, [#allocation18], 128, 128, 8
    $region69: #{transformer_forward.1} parent=1 // pred_fallthru
      _
    // Predicated region
    $region70: #{transformer_forward.1} parent=1 // pred_check
      _
    $region71: #{transformer_forward.1} parent=1 // pred_check_branch
      %174 = sbr.rel (0) target = $region73
    $region72: #{transformer_forward.1} parent=1 // pred_region
      %s176 = ssub.s32 16, 16
      %177 = vsyncadd [#allocation21], %s176
      %s179 = sshll.u32 [#allocation20], 4
      %s180 = int_to_ptr.vmem [resolvable:$true] %s179
      %182 = dma.hbm_to_vmem [thread:$0]  %s17, 16, %s180, [#allocation21]
    $region73: #{transformer_forward.1} parent=1 // pred_fallthru
      _
    // Predicated region
    $region74: #{transformer_forward.1} parent=1 // pred_check
      _
    $region75: #{transformer_forward.1} parent=1 // pred_check_branch
      %184 = sbr.rel (0) target = $region77
    $region76: #{transformer_forward.1} parent=1 // pred_region
      _
    $region77: #{transformer_forward.1} parent=1 // pred_fallthru
      _
    // Predicated region
    $region78: #{transformer_forward.1} parent=1 // pred_check
      _
    $region79: #{transformer_forward.1} parent=1 // pred_check_branch
      %186 = sbr.rel (0) target = $region81
    $region80: #{transformer_forward.1} parent=1 // pred_region
      %s188 = ssub.s32 16, 16
      %189 = vsyncadd [#allocation21], %s188
      %s191 = sshll.u32 [#allocation22], 4
      %s192 = int_to_ptr.vmem [resolvable:$true] %s191
      %194 = dma.hbm_to_vmem [thread:$0]  %s19, 16, %s192, [#allocation21]
    $region81: #{transformer_forward.1} parent=1 // pred_fallthru
      _
    // Predicated region
    $region82: #{transformer_forward.1} parent=1 // pred_check
      _
    $region83: #{transformer_forward.1} parent=1 // pred_check_branch
      %196 = sbr.rel (0) target = $region85
    $region84: #{transformer_forward.1} parent=1 // pred_region
      %197 = dma.done [#allocation3], 16
    $region85: #{transformer_forward.1} parent=1 // pred_fallthru
      _
    // Predicated region
    $region86: #{transformer_forward.1} parent=1 // pred_check
      _
    $region87: #{transformer_forward.1} parent=1 // pred_check_branch
      %199 = sbr.rel (0) target = $region89
    $region88: #{transformer_forward.1} parent=1 // pred_region
      %200 = dma.done [#allocation6], 128
    $region89: #{transformer_forward.1} parent=1 // pred_fallthru
      _
    // Predicated region
    $region90: #{transformer_forward.1} parent=1 // pred_check
      _
    $region91: #{transformer_forward.1} parent=1 // pred_check_branch
      %202 = sbr.rel (0) target = $region93
    $region92: #{transformer_forward.1} parent=1 // pred_region
      %203 = dma.done [#allocation6], 32
    $region93: #{transformer_forward.1} parent=1 // pred_fallthru
      _
    // Predicated region
    $region94: #{transformer_forward.1} parent=1 // pred_check
      _
    $region95: #{transformer_forward.1} parent=1 // pred_check_branch
      %205 = sbr.rel (0) target = $region97
    $region96: #{transformer_forward.1} parent=1 // pred_region
      %206 = dma.done [#allocation9], 32
    $region97: #{transformer_forward.1} parent=1 // pred_fallthru
      _
    // Predicated region
    $region98: #{transformer_forward.1} parent=1 // pred_check
      _
    $region99: #{transformer_forward.1} parent=1 // pred_check_branch
      %208 = sbr.rel (0) target = $region101
    $region100: #{transformer_forward.1} parent=1 // pred_region
      %209 = dma.done [#allocation9], 32
    $region101: #{transformer_forward.1} parent=1 // pred_fallthru
      _
    // Predicated region
    $region102: #{transformer_forward.1} parent=1 // pred_check
      _
    $region103: #{transformer_forward.1} parent=1 // pred_check_branch
      %211 = sbr.rel (0) target = $region105
    $region104: #{transformer_forward.1} parent=1 // pred_region
      %212 = dma.done [#allocation12], 32
    $region105: #{transformer_forward.1} parent=1 // pred_fallthru
      _
    // Predicated region
    $region106: #{transformer_forward.1} parent=1 // pred_check
      _
    $region107: #{transformer_forward.1} parent=1 // pred_check_branch
      %214 = sbr.rel (0) target = $region109
    $region108: #{transformer_forward.1} parent=1 // pred_region
      %215 = dma.done [#allocation12], 32
    $region109: #{transformer_forward.1} parent=1 // pred_fallthru
      _
    // Predicated region
    $region110: #{transformer_forward.1} parent=1 // pred_check
      _
    $region111: #{transformer_forward.1} parent=1 // pred_check_branch
      %217 = sbr.rel (0) target = $region113
    $region112: #{transformer_forward.1} parent=1 // pred_region
      %218 = dma.done [#allocation15], 32
    $region113: #{transformer_forward.1} parent=1 // pred_fallthru
      _
    // Predicated region
    $region114: #{transformer_forward.1} parent=1 // pred_check
      _
    $region115: #{transformer_forward.1} parent=1 // pred_check_branch
      %220 = sbr.rel (0) target = $region117
    $region116: #{transformer_forward.1} parent=1 // pred_region
      %221 = dma.done [#allocation15], 32
    $region117: #{transformer_forward.1} parent=1 // pred_fallthru
      _
    // Predicated region
    $region118: #{transformer_forward.1} parent=1 // pred_check
      _
    $region119: #{transformer_forward.1} parent=1 // pred_check_branch
      %223 = sbr.rel (0) target = $region121
    $region120: #{transformer_forward.1} parent=1 // pred_region
      %224 = dma.done [#allocation18], 32
    $region121: #{transformer_forward.1} parent=1 // pred_fallthru
      _
    // Predicated region
    $region122: #{transformer_forward.1} parent=1 // pred_check
      _
    $region123: #{transformer_forward.1} parent=1 // pred_check_branch
      %226 = sbr.rel (0) target = $region125
    $region124: #{transformer_forward.1} parent=1 // pred_region
      %227 = dma.done [#allocation18], 4096
    $region125: #{transformer_forward.1} parent=1 // pred_fallthru
      _
    // Predicated region
    $region126: #{transformer_forward.1} parent=1 // pred_check
      _
    $region127: #{transformer_forward.1} parent=1 // pred_check_branch
      %229 = sbr.rel (0) target = $region129
    $region128: #{transformer_forward.1} parent=1 // pred_region
      %230 = dma.done [#allocation21], 16
    $region129: #{transformer_forward.1} parent=1 // pred_fallthru
      _
    // Predicated region
    $region130: #{transformer_forward.1} parent=1 // pred_check
      _
    $region131: #{transformer_forward.1} parent=1 // pred_check_branch
      %232 = sbr.rel (0) target = $region133
    $region132: #{transformer_forward.1} parent=1 // pred_region
      %233 = dma.done [#allocation21], 16
    $region133: #{transformer_forward.1} parent=1 // pred_fallthru
      _
    %v234 = vld [vmem:[%s0] sm:$0xf]
    %v235 = vlaneseq
    %v236 = vshrl.u32 %v235, 7
    %v237 = vsub.s32 0, %v236
    %v238 = vrot.slane %v234, %v237
    %240 = vbcast.lane.b32.xlu0 %v238, 256
    %v241 = vpop.permute.xlu0 %240
    %v242 = vlaneseq
    %v243 = vshrl.u32 %v242, 7
    %v244 = vsub.s32 1, %v243
    %v245 = vrot.slane %v234, %v244
    %247 = vbcast.lane.b32.xlu0 %v245, 256
    %v248 = vpop.permute.xlu0 %247
    %v249 = vlaneseq
    %v250 = vshrl.u32 %v249, 7
    %v251 = vsub.s32 2, %v250
    %v252 = vrot.slane %v234, %v251
    %254 = vbcast.lane.b32.xlu0 %v252, 256
    %v255 = vpop.permute.xlu0 %254
    %v256 = vlaneseq
    %v257 = vshrl.u32 %v256, 7
    %v258 = vsub.s32 3, %v257
    %v259 = vrot.slane %v234, %v258
    %261 = vbcast.lane.b32.xlu0 %v259, 256
    %v262 = vpop.permute.xlu0 %261
    %v263 = vld [vmem:[%s1] sm:$0x1]
    %v265 = vlaneseq
    %v266 = vshrl.u32 %v265, 7
    %v267 = vsub.s32 0, %v266
    %v268 = vrot.slane %v263, %v267
    %v270 = vmul.f32 %v241, %v268
    %v271 = vmul.f32 %v248, %v268
    %v272 = vmul.f32 %v255, %v268
    %v273 = vmul.f32 %v262, %v268
    %v274 = vld [vmem:[#allocation2] sm:$0x1]
    %v276 = vlaneseq
    %v277 = vshrl.u32 %v276, 7
    %v278 = vsub.s32 0, %v277
    %v279 = vrot.slane %v274, %v278
    %v281 = vadd.f32 %v270, %v279
    %v282 = vadd.f32 %v271, %v279
    %v283 = vadd.f32 %v272, %v279
    %v284 = vadd.f32 %v273, %v279
    %v285 = vld [vmem:[#allocation5] sm:$0xff]
    %v286 = vadd.f32 %v281, %v285
    %v287 = vadd.f32 %v282, %v285
    %v288 = vadd.f32 %v283, %v285
    %v289 = vadd.f32 %v284, %v285
    %v290 = vld [vmem:[%s4] sm:$0xff]
    %v291 = vld [vmem:[%s4 + $0x8] sm:$0xff]
    %v292 = vld [vmem:[%s4 + $0x10] sm:$0xff]
    %v293 = vld [vmem:[%s4 + $0x18] sm:$0xff]
    %v294 = vld [vmem:[#allocation7] sm:$0x1]
    %v296 = vlaneseq
    %v297 = vshrl.u32 %v296, 7
    %v298 = vsub.s32 0, %v297
    %v299 = vrot.slane %v294, %v298
    %vm301 = vcmask 261120
    %v303 = vsel %vm301, %v286, 0
    %v306 = vsel %vm301, %v287, 0
    %v309 = vsel %vm301, %v288, 0
    %v312 = vsel %vm301, %v289, 0
    %314 = vmatprep.subr.mxu0 0.0
    %315 = vmatpush1.msra.mxu0 0.0
    %316 = vmatprep.subr.mxu0 0.0
    %317 = vmatpush1.msra.mxu0 0.0
    %318 = vmatprep.subr.mxu0 0.0
    %319 = vmatpush1.msra.mxu0 0.0
    %320 = vmatprep.subr.mxu0 0.0
    %321 = vmatpush1.msra.mxu0 0.0
    %322 = vmatprep.subr.mxu0 0.0
    %323 = vmatpush1.msra.mxu0 0.0
    %324 = vmatprep.subr.mxu0 0.0
    %325 = vmatpush1.msra.mxu0 0.0
    %326 = vmatprep.subr.mxu0 0.0
    %327 = vmatpush1.msra.mxu0 0.0
    %328 = vmatprep.subr.mxu0 0.0
    %329 = vmatpush1.msra.mxu0 0.0
    %330 = vmatprep.subr.mxu0 0.0
    %331 = vmatpush1.msra.mxu0 0.0
    %332 = vmatprep.subr.mxu0 0.0
    %333 = vmatpush1.msra.mxu0 0.0
    %334 = vmatprep.subr.mxu0 0.0
    %335 = vmatpush1.msra.mxu0 0.0
    %336 = vmatprep.subr.mxu0 0.0
    %337 = vmatpush1.msra.mxu0 0.0
    %338 = vmatprep.subr.mxu0 0.0
    %339 = vmatpush1.msra.mxu0 %v293
    %340 = vmatprep.subr.mxu0 0.0
    %341 = vmatpush1.msra.mxu0 %v292
    %342 = vmatprep.subr.mxu0 0.0
    %343 = vmatpush1.msra.mxu0 %v291
    %344 = vmatprep.subr.mxu0 0.0
    %345 = vmatpush1.msra.mxu0 %v290
    %346 = vmatprep.subr.mxu0 0.0
    %347 = vmatpush2.msra.mxu0 0.0
    %348 = vmatprep.subr.mxu0 0.0
    %349 = vmatpush2.msra.mxu0 0.0
    %350 = vmatprep.subr.mxu0 0.0
    %351 = vmatpush2.msra.mxu0 0.0
    %352 = vmatprep.subr.mxu0 0.0
    %353 = vmatpush2.msra.mxu0 0.0
    %354 = vmatprep.subr.mxu0 0.0
    %355 = vmatpush2.msra.mxu0 0.0
    %356 = vmatprep.subr.mxu0 0.0
    %357 = vmatpush2.msra.mxu0 0.0
    %358 = vmatprep.subr.mxu0 0.0
    %359 = vmatpush2.msra.mxu0 0.0
    %360 = vmatprep.subr.mxu0 0.0
    %361 = vmatpush2.msra.mxu0 0.0
    %362 = vmatprep.subr.mxu0 0.0
    %363 = vmatpush2.msra.mxu0 0.0
    %364 = vmatprep.subr.mxu0 0.0
    %365 = vmatpush2.msra.mxu0 0.0
    %366 = vmatprep.subr.mxu0 0.0
    %367 = vmatpush2.msra.mxu0 0.0
    %368 = vmatprep.subr.mxu0 0.0
    %369 = vmatpush2.msra.mxu0 0.0
    %370 = vmatprep.subr.mxu0 0.0
    %371 = vmatpush2.msra.mxu0 0.0
    %372 = vmatprep.subr.mxu0 0.0
    %373 = vmatpush2.msra.mxu0 0.0
    %374 = vmatprep.subr.mxu0 0.0
    %375 = vmatpush2.msra.mxu0 0.0
    %376 = vmatprep.subr.mxu0 0.0
    %377 = vmatpush2.msra.mxu0 0.0
    %378 = vmatprep.mubr.f32.mxu0 0.0
    %379 = vmatmul.mubr.f32.gmra.mxu0 %v303
    %v380 = vpop.f32.mrf.mxu0
    %v381 = vadd.f32 %v299, %v380
    %v382 = vpop.f32.mrf.mxu0
    %383 = vmatprep.mubr.f32.mxu0 0.0
    %384 = vmatmul.mubr.f32.gmra.mxu0 %v306
    %v385 = vpop.f32.mrf.mxu0
    %v386 = vadd.f32 %v299, %v385
    %v387 = vpop.f32.mrf.mxu0
    %388 = vmatprep.mubr.f32.mxu0 0.0
    %389 = vmatmul.mubr.f32.gmra.mxu0 %v309
    %v390 = vpop.f32.mrf.mxu0
    %v391 = vadd.f32 %v299, %v390
    %v392 = vpop.f32.mrf.mxu0
    %393 = vmatprep.mubr.f32.mxu0 0.0
    %394 = vmatmul.mubr.f32.gmra.mxu0 %v312
    %v395 = vpop.f32.mrf.mxu0
    %v396 = vadd.f32 %v299, %v395
    %v397 = vpop.f32.mrf.mxu0
    %398 = vdwg.mxu0
    %v399 = vld [vmem:[%s6] sm:$0xff]
    %v400 = vld [vmem:[%s6 + $0x8] sm:$0xff]
    %v401 = vld [vmem:[%s6 + $0x10] sm:$0xff]
    %v402 = vld [vmem:[%s6 + $0x18] sm:$0xff]
    %v403 = vld [vmem:[#allocation8] sm:$0x1]
    %405 = vrot.lane.b32.xlu0 %v381, 96
    %v406 = vpop.permute.xlu0 %405
    %vm407 = vcmask 64512
    %v408 = vsel %vm407, %v381, 0
    %v410 = vsel %vm407, %v406, 0
    %412 = vmatprep.subr.mxu0 0.0
    %413 = vmatpush1.xpose.msra.mxu0 0.0
    %414 = vmatprep.subr.mxu0 0.0
    %415 = vmatpush1.xpose.msra.mxu0 0.0
    %416 = vmatprep.subr.mxu0 0.0
    %417 = vmatpush1.xpose.msra.mxu0 0.0
    %418 = vmatprep.subr.mxu0 0.0
    %419 = vmatpush1.xpose.msra.mxu0 0.0
    %420 = vmatprep.subr.mxu0 0.0
    %421 = vmatpush1.xpose.msra.mxu0 0.0
    %422 = vmatprep.subr.mxu0 0.0
    %423 = vmatpush1.xpose.msra.mxu0 0.0
    %424 = vmatprep.subr.mxu0 0.0
    %425 = vmatpush1.xpose.msra.mxu0 0.0
    %426 = vmatprep.subr.mxu0 0.0
    %427 = vmatpush1.xpose.msra.mxu0 0.0
    %428 = vmatprep.subr.mxu0 0.0
    %429 = vmatpush1.xpose.msra.mxu0 0.0
    %430 = vmatprep.subr.mxu0 0.0
    %431 = vmatpush1.xpose.msra.mxu0 0.0
    %432 = vmatprep.subr.mxu0 0.0
    %433 = vmatpush1.xpose.msra.mxu0 0.0
    %434 = vmatprep.subr.mxu0 0.0
    %435 = vmatpush1.xpose.msra.mxu0 0.0
    %436 = vmatprep.subr.mxu0 0.0
    %437 = vmatpush1.xpose.msra.mxu0 0.0
    %438 = vmatprep.subr.mxu0 0.0
    %439 = vmatpush1.xpose.msra.mxu0 0.0
    %440 = vmatprep.subr.mxu0 0.0
    %441 = vmatpush1.xpose.msra.mxu0 0.0
    %442 = vmatprep.subr.mxu0 0.0
    %443 = vmatpush1.xpose.msra.mxu0 %v410
    %444 = vmatprep.subr.mxu0 0.0
    %445 = vmatpush2.xpose.msra.mxu0 0.0
    %446 = vmatprep.subr.mxu0 0.0
    %447 = vmatpush2.xpose.msra.mxu0 0.0
    %448 = vmatprep.subr.mxu0 0.0
    %449 = vmatpush2.xpose.msra.mxu0 0.0
    %450 = vmatprep.subr.mxu0 0.0
    %451 = vmatpush2.xpose.msra.mxu0 0.0
    %452 = vmatprep.subr.mxu0 0.0
    %453 = vmatpush2.xpose.msra.mxu0 0.0
    %454 = vmatprep.subr.mxu0 0.0
    %455 = vmatpush2.xpose.msra.mxu0 0.0
    %456 = vmatprep.subr.mxu0 0.0
    %457 = vmatpush2.xpose.msra.mxu0 0.0
    %458 = vmatprep.subr.mxu0 0.0
    %459 = vmatpush2.xpose.msra.mxu0 0.0
    %460 = vmatprep.subr.mxu0 0.0
    %461 = vmatpush2.xpose.msra.mxu0 0.0
    %462 = vmatprep.subr.mxu0 0.0
    %463 = vmatpush2.xpose.msra.mxu0 0.0
    %464 = vmatprep.subr.mxu0 0.0
    %465 = vmatpush2.xpose.msra.mxu0 0.0
    %466 = vmatprep.subr.mxu0 0.0
    %467 = vmatpush2.xpose.msra.mxu0 0.0
    %468 = vmatprep.subr.mxu0 0.0
    %469 = vmatpush2.xpose.msra.mxu0 0.0
    %470 = vmatprep.subr.mxu0 0.0
    %471 = vmatpush2.xpose.msra.mxu0 0.0
    %472 = vmatprep.subr.mxu0 0.0
    %473 = vmatpush2.xpose.msra.mxu0 0.0
    %474 = vmatprep.subr.mxu0 0.0
    %475 = vmatpush2.xpose.msra.mxu0 0.0
    %476 = vmatprep.mubr.f32.mxu0 0.0
    %477 = vmatmul.mubr.f32.gmra.mxu0 %v408
    %v478 = vpop.f32.mrf.mxu0
    %v479 = vadd.f32 0.0, %v478
    %v480 = vpop.f32.mrf.mxu0
    %481 = vdwg.mxu0
    %483 = vrot.lane.b32.xlu0 %v386, 96
    %v484 = vpop.permute.xlu0 %483
    %v485 = vsel %vm407, %v386, 0
    %v487 = vsel %vm407, %v484, 0
    %489 = vmatprep.subr.mxu0 0.0
    %490 = vmatpush1.xpose.msra.mxu0 0.0
    %491 = vmatprep.subr.mxu0 0.0
    %492 = vmatpush1.xpose.msra.mxu0 0.0
    %493 = vmatprep.subr.mxu0 0.0
    %494 = vmatpush1.xpose.msra.mxu0 0.0
    %495 = vmatprep.subr.mxu0 0.0
    %496 = vmatpush1.xpose.msra.mxu0 0.0
    %497 = vmatprep.subr.mxu0 0.0
    %498 = vmatpush1.xpose.msra.mxu0 0.0
    %499 = vmatprep.subr.mxu0 0.0
    %500 = vmatpush1.xpose.msra.mxu0 0.0
    %501 = vmatprep.subr.mxu0 0.0
    %502 = vmatpush1.xpose.msra.mxu0 0.0
    %503 = vmatprep.subr.mxu0 0.0
    %504 = vmatpush1.xpose.msra.mxu0 0.0
    %505 = vmatprep.subr.mxu0 0.0
    %506 = vmatpush1.xpose.msra.mxu0 0.0
    %507 = vmatprep.subr.mxu0 0.0
    %508 = vmatpush1.xpose.msra.mxu0 0.0
    %509 = vmatprep.subr.mxu0 0.0
    %510 = vmatpush1.xpose.msra.mxu0 0.0
    %511 = vmatprep.subr.mxu0 0.0
    %512 = vmatpush1.xpose.msra.mxu0 0.0
    %513 = vmatprep.subr.mxu0 0.0
    %514 = vmatpush1.xpose.msra.mxu0 0.0
    %515 = vmatprep.subr.mxu0 0.0
    %516 = vmatpush1.xpose.msra.mxu0 0.0
    %517 = vmatprep.subr.mxu0 0.0
    %518 = vmatpush1.xpose.msra.mxu0 0.0
    %519 = vmatprep.subr.mxu0 0.0
    %520 = vmatpush1.xpose.msra.mxu0 %v487
    %521 = vmatprep.subr.mxu0 0.0
    %522 = vmatpush2.xpose.msra.mxu0 0.0
    %523 = vmatprep.subr.mxu0 0.0
    %524 = vmatpush2.xpose.msra.mxu0 0.0
    %525 = vmatprep.subr.mxu0 0.0
    %526 = vmatpush2.xpose.msra.mxu0 0.0
    %527 = vmatprep.subr.mxu0 0.0
    %528 = vmatpush2.xpose.msra.mxu0 0.0
    %529 = vmatprep.subr.mxu0 0.0
    %530 = vmatpush2.xpose.msra.mxu0 0.0
    %531 = vmatprep.subr.mxu0 0.0
    %532 = vmatpush2.xpose.msra.mxu0 0.0
    %533 = vmatprep.subr.mxu0 0.0
    %534 = vmatpush2.xpose.msra.mxu0 0.0
    %535 = vmatprep.subr.mxu0 0.0
    %536 = vmatpush2.xpose.msra.mxu0 0.0
    %537 = vmatprep.subr.mxu0 0.0
    %538 = vmatpush2.xpose.msra.mxu0 0.0
    %539 = vmatprep.subr.mxu0 0.0
    %540 = vmatpush2.xpose.msra.mxu0 0.0
    %541 = vmatprep.subr.mxu0 0.0
    %542 = vmatpush2.xpose.msra.mxu0 0.0
    %543 = vmatprep.subr.mxu0 0.0
    %544 = vmatpush2.xpose.msra.mxu0 0.0
    %545 = vmatprep.subr.mxu0 0.0
    %546 = vmatpush2.xpose.msra.mxu0 0.0
    %547 = vmatprep.subr.mxu0 0.0
    %548 = vmatpush2.xpose.msra.mxu0 0.0
    %549 = vmatprep.subr.mxu0 0.0
    %550 = vmatpush2.xpose.msra.mxu0 0.0
    %551 = vmatprep.subr.mxu0 0.0
    %552 = vmatpush2.xpose.msra.mxu0 0.0
    %553 = vmatprep.mubr.f32.mxu0 0.0
    %554 = vmatmul.mubr.f32.gmra.mxu0 %v485
    %v555 = vpop.f32.mrf.mxu0
    %v556 = vadd.f32 0.0, %v555
    %v557 = vpop.f32.mrf.mxu0
    %558 = vdwg.mxu0
    %560 = vrot.lane.b32.xlu0 %v391, 96
    %v561 = vpop.permute.xlu0 %560
    %v562 = vsel %vm407, %v391, 0
    %v564 = vsel %vm407, %v561, 0
    %566 = vmatprep.subr.mxu0 0.0
    %567 = vmatpush1.xpose.msra.mxu0 0.0
    %568 = vmatprep.subr.mxu0 0.0
    %569 = vmatpush1.xpose.msra.mxu0 0.0
    %570 = vmatprep.subr.mxu0 0.0
    %571 = vmatpush1.xpose.msra.mxu0 0.0
    %572 = vmatprep.subr.mxu0 0.0
    %573 = vmatpush1.xpose.msra.mxu0 0.0
    %574 = vmatprep.subr.mxu0 0.0
    %575 = vmatpush1.xpose.msra.mxu0 0.0
    %576 = vmatprep.subr.mxu0 0.0
    %577 = vmatpush1.xpose.msra.mxu0 0.0
    %578 = vmatprep.subr.mxu0 0.0
    %579 = vmatpush1.xpose.msra.mxu0 0.0
    %580 = vmatprep.subr.mxu0 0.0
    %581 = vmatpush1.xpose.msra.mxu0 0.0
    %582 = vmatprep.subr.mxu0 0.0
    %583 = vmatpush1.xpose.msra.mxu0 0.0
    %584 = vmatprep.subr.mxu0 0.0
    %585 = vmatpush1.xpose.msra.mxu0 0.0
    %586 = vmatprep.subr.mxu0 0.0
    %587 = vmatpush1.xpose.msra.mxu0 0.0
    %588 = vmatprep.subr.mxu0 0.0
    %589 = vmatpush1.xpose.msra.mxu0 0.0
    %590 = vmatprep.subr.mxu0 0.0
    %591 = vmatpush1.xpose.msra.mxu0 0.0
    %592 = vmatprep.subr.mxu0 0.0
    %593 = vmatpush1.xpose.msra.mxu0 0.0
    %594 = vmatprep.subr.mxu0 0.0
    %595 = vmatpush1.xpose.msra.mxu0 0.0
    %596 = vmatprep.subr.mxu0 0.0
    %597 = vmatpush1.xpose.msra.mxu0 %v564
    %598 = vmatprep.subr.mxu0 0.0
    %599 = vmatpush2.xpose.msra.mxu0 0.0
    %600 = vmatprep.subr.mxu0 0.0
    %601 = vmatpush2.xpose.msra.mxu0 0.0
    %602 = vmatprep.subr.mxu0 0.0
    %603 = vmatpush2.xpose.msra.mxu0 0.0
    %604 = vmatprep.subr.mxu0 0.0
    %605 = vmatpush2.xpose.msra.mxu0 0.0
    %606 = vmatprep.subr.mxu0 0.0
    %607 = vmatpush2.xpose.msra.mxu0 0.0
    %608 = vmatprep.subr.mxu0 0.0
    %609 = vmatpush2.xpose.msra.mxu0 0.0
    %610 = vmatprep.subr.mxu0 0.0
    %611 = vmatpush2.xpose.msra.mxu0 0.0
    %612 = vmatprep.subr.mxu0 0.0
    %613 = vmatpush2.xpose.msra.mxu0 0.0
    %614 = vmatprep.subr.mxu0 0.0
    %615 = vmatpush2.xpose.msra.mxu0 0.0
    %616 = vmatprep.subr.mxu0 0.0
    %617 = vmatpush2.xpose.msra.mxu0 0.0
    %618 = vmatprep.subr.mxu0 0.0
    %619 = vmatpush2.xpose.msra.mxu0 0.0
    %620 = vmatprep.subr.mxu0 0.0
    %621 = vmatpush2.xpose.msra.mxu0 0.0
    %622 = vmatprep.subr.mxu0 0.0
    %623 = vmatpush2.xpose.msra.mxu0 0.0
    %624 = vmatprep.subr.mxu0 0.0
    %625 = vmatpush2.xpose.msra.mxu0 0.0
    %626 = vmatprep.subr.mxu0 0.0
    %627 = vmatpush2.xpose.msra.mxu0 0.0
    %628 = vmatprep.subr.mxu0 0.0
    %629 = vmatpush2.xpose.msra.mxu0 0.0
    %630 = vmatprep.mubr.f32.mxu0 0.0
    %631 = vmatmul.mubr.f32.gmra.mxu0 %v562
    %v632 = vpop.f32.mrf.mxu0
    %v633 = vadd.f32 0.0, %v632
    %v634 = vpop.f32.mrf.mxu0
    %635 = vdwg.mxu0
    %637 = vrot.lane.b32.xlu0 %v396, 96
    %v638 = vpop.permute.xlu0 %637
    %v639 = vsel %vm407, %v396, 0
    %v641 = vsel %vm407, %v638, 0
    %643 = vmatprep.subr.mxu0 0.0
    %644 = vmatpush1.xpose.msra.mxu0 0.0
    %645 = vmatprep.subr.mxu0 0.0
    %646 = vmatpush1.xpose.msra.mxu0 0.0
    %647 = vmatprep.subr.mxu0 0.0
    %648 = vmatpush1.xpose.msra.mxu0 0.0
    %649 = vmatprep.subr.mxu0 0.0
    %650 = vmatpush1.xpose.msra.mxu0 0.0
    %651 = vmatprep.subr.mxu0 0.0
    %652 = vmatpush1.xpose.msra.mxu0 0.0
    %653 = vmatprep.subr.mxu0 0.0
    %654 = vmatpush1.xpose.msra.mxu0 0.0
    %655 = vmatprep.subr.mxu0 0.0
    %656 = vmatpush1.xpose.msra.mxu0 0.0
    %657 = vmatprep.subr.mxu0 0.0
    %658 = vmatpush1.xpose.msra.mxu0 0.0
    %659 = vmatprep.subr.mxu0 0.0
    %660 = vmatpush1.xpose.msra.mxu0 0.0
    %661 = vmatprep.subr.mxu0 0.0
    %662 = vmatpush1.xpose.msra.mxu0 0.0
    %663 = vmatprep.subr.mxu0 0.0
    %664 = vmatpush1.xpose.msra.mxu0 0.0
    %665 = vmatprep.subr.mxu0 0.0
    %666 = vmatpush1.xpose.msra.mxu0 0.0
    %667 = vmatprep.subr.mxu0 0.0
    %668 = vmatpush1.xpose.msra.mxu0 0.0
    %669 = vmatprep.subr.mxu0 0.0
    %670 = vmatpush1.xpose.msra.mxu0 0.0
    %671 = vmatprep.subr.mxu0 0.0
    %672 = vmatpush1.xpose.msra.mxu0 0.0
    %673 = vmatprep.subr.mxu0 0.0
    %674 = vmatpush1.xpose.msra.mxu0 %v641
    %675 = vmatprep.subr.mxu0 0.0
    %676 = vmatpush2.xpose.msra.mxu0 0.0
    %677 = vmatprep.subr.mxu0 0.0
    %678 = vmatpush2.xpose.msra.mxu0 0.0
    %679 = vmatprep.subr.mxu0 0.0
    %680 = vmatpush2.xpose.msra.mxu0 0.0
    %681 = vmatprep.subr.mxu0 0.0
    %682 = vmatpush2.xpose.msra.mxu0 0.0
    %683 = vmatprep.subr.mxu0 0.0
    %684 = vmatpush2.xpose.msra.mxu0 0.0
    %685 = vmatprep.subr.mxu0 0.0
    %686 = vmatpush2.xpose.msra.mxu0 0.0
    %687 = vmatprep.subr.mxu0 0.0
    %688 = vmatpush2.xpose.msra.mxu0 0.0
    %689 = vmatprep.subr.mxu0 0.0
    %690 = vmatpush2.xpose.msra.mxu0 0.0
    %691 = vmatprep.subr.mxu0 0.0
    %692 = vmatpush2.xpose.msra.mxu0 0.0
    %693 = vmatprep.subr.mxu0 0.0
    %694 = vmatpush2.xpose.msra.mxu0 0.0
    %695 = vmatprep.subr.mxu0 0.0
    %696 = vmatpush2.xpose.msra.mxu0 0.0
    %697 = vmatprep.subr.mxu0 0.0
    %698 = vmatpush2.xpose.msra.mxu0 0.0
    %699 = vmatprep.subr.mxu0 0.0
    %700 = vmatpush2.xpose.msra.mxu0 0.0
    %701 = vmatprep.subr.mxu0 0.0
    %702 = vmatpush2.xpose.msra.mxu0 0.0
    %703 = vmatprep.subr.mxu0 0.0
    %704 = vmatpush2.xpose.msra.mxu0 0.0
    %705 = vmatprep.subr.mxu0 0.0
    %706 = vmatpush2.xpose.msra.mxu0 0.0
    %707 = vmatprep.mubr.f32.mxu0 0.0
    %708 = vmatmul.mubr.f32.gmra.mxu0 %v639
    %v709 = vpop.f32.mrf.mxu0
    %v710 = vadd.f32 0.0, %v709
    %v711 = vpop.f32.mrf.mxu0
    %712 = vdwg.mxu0
    %v713 = vmul.f32 %v479, 0.35355338
    %v714 = vmul.f32 %v556, 0.35355338
    %v715 = vmul.f32 %v633, 0.35355338
    %v716 = vmul.f32 %v710, 0.35355338
    %v717 = vsel %vm407, %v713, -inf
    %718 = vmax.xlane.f32.xlu0 %v717
    %v719 = vpop.xlane.xlu0 %718
    %v720 = vsel %vm407, %v714, -inf
    %721 = vmax.xlane.f32.xlu0 %v720
    %v722 = vpop.xlane.xlu0 %721
    %v723 = vsel %vm407, %v715, -inf
    %724 = vmax.xlane.f32.xlu0 %v723
    %v725 = vpop.xlane.xlu0 %724
    %v726 = vsel %vm407, %v716, -inf
    %727 = vmax.xlane.f32.xlu0 %v726
    %v728 = vpop.xlane.xlu0 %727
    %v729 = vsub.f32 %v713, %v719
    %v730 = vsub.f32 %v714, %v722
    %v731 = vsub.f32 %v715, %v725
    %v732 = vsub.f32 %v716, %v728
    %v733 = vmul.f32 %v729, 1.442695
    %v734 = vpow.pop %v733
    %v735 = vmul.f32 %v730, 1.442695
    %v736 = vpow.pop %v735
    %v737 = vmul.f32 %v731, 1.442695
    %v738 = vpow.pop %v737
    %v739 = vmul.f32 %v732, 1.442695
    %v740 = vpow.pop %v739
    %v741 = vsel %vm407, %v734, 0.0
    %742 = vadd.xlane.f32.xlu0 %v741
    %v743 = vpop.xlane.xlu0 %742
    %v744 = vsel %vm407, %v736, 0.0
    %745 = vadd.xlane.f32.xlu0 %v744
    %v746 = vpop.xlane.xlu0 %745
    %v747 = vsel %vm407, %v738, 0.0
    %748 = vadd.xlane.f32.xlu0 %v747
    %v749 = vpop.xlane.xlu0 %748
    %v750 = vsel %vm407, %v740, 0.0
    %751 = vadd.xlane.f32.xlu0 %v750
    %v752 = vpop.xlane.xlu0 %751
    %v753 = vrcp.pop %v743
    %v754 = vrcp.pop %v746
    %v755 = vrcp.pop %v749
    %v756 = vrcp.pop %v752
    %v757 = vmul.f32 %v734, %v753
    %v758 = vmul.f32 %v736, %v754
    %v759 = vmul.f32 %v738, %v755
    %v760 = vmul.f32 %v740, %v756
    %761 = vrot.lane.b32.xlu0 %v381, 64
    %v762 = vpop.permute.xlu0 %761
    %v765 = vsel %vm407, %v757, 0
    %767 = vmatprep.subr.mxu0 0.0
    %768 = vmatpush1.msra.mxu0 0.0
    %769 = vmatprep.subr.mxu0 0.0
    %770 = vmatpush1.msra.mxu0 0.0
    %771 = vmatprep.subr.mxu0 0.0
    %772 = vmatpush1.msra.mxu0 0.0
    %773 = vmatprep.subr.mxu0 0.0
    %774 = vmatpush1.msra.mxu0 0.0
    %775 = vmatprep.subr.mxu0 0.0
    %776 = vmatpush1.msra.mxu0 0.0
    %777 = vmatprep.subr.mxu0 0.0
    %778 = vmatpush1.msra.mxu0 0.0
    %779 = vmatprep.subr.mxu0 0.0
    %780 = vmatpush1.msra.mxu0 0.0
    %781 = vmatprep.subr.mxu0 0.0
    %782 = vmatpush1.msra.mxu0 0.0
    %783 = vmatprep.subr.mxu0 0.0
    %784 = vmatpush1.msra.mxu0 0.0
    %785 = vmatprep.subr.mxu0 0.0
    %786 = vmatpush1.msra.mxu0 0.0
    %787 = vmatprep.subr.mxu0 0.0
    %788 = vmatpush1.msra.mxu0 0.0
    %789 = vmatprep.subr.mxu0 0.0
    %790 = vmatpush1.msra.mxu0 0.0
    %791 = vmatprep.subr.mxu0 0.0
    %792 = vmatpush1.msra.mxu0 0.0
    %793 = vmatprep.subr.mxu0 0.0
    %794 = vmatpush1.msra.mxu0 0.0
    %795 = vmatprep.subr.mxu0 0.0
    %796 = vmatpush1.msra.mxu0 0.0
    %797 = vmatprep.subr.mxu0 0.0
    %798 = vmatpush1.msra.mxu0 %v762
    %799 = vmatprep.subr.mxu0 0.0
    %800 = vmatpush2.msra.mxu0 0.0
    %801 = vmatprep.subr.mxu0 0.0
    %802 = vmatpush2.msra.mxu0 0.0
    %803 = vmatprep.subr.mxu0 0.0
    %804 = vmatpush2.msra.mxu0 0.0
    %805 = vmatprep.subr.mxu0 0.0
    %806 = vmatpush2.msra.mxu0 0.0
    %807 = vmatprep.subr.mxu0 0.0
    %808 = vmatpush2.msra.mxu0 0.0
    %809 = vmatprep.subr.mxu0 0.0
    %810 = vmatpush2.msra.mxu0 0.0
    %811 = vmatprep.subr.mxu0 0.0
    %812 = vmatpush2.msra.mxu0 0.0
    %813 = vmatprep.subr.mxu0 0.0
    %814 = vmatpush2.msra.mxu0 0.0
    %815 = vmatprep.subr.mxu0 0.0
    %816 = vmatpush2.msra.mxu0 0.0
    %817 = vmatprep.subr.mxu0 0.0
    %818 = vmatpush2.msra.mxu0 0.0
    %819 = vmatprep.subr.mxu0 0.0
    %820 = vmatpush2.msra.mxu0 0.0
    %821 = vmatprep.subr.mxu0 0.0
    %822 = vmatpush2.msra.mxu0 0.0
    %823 = vmatprep.subr.mxu0 0.0
    %824 = vmatpush2.msra.mxu0 0.0
    %825 = vmatprep.subr.mxu0 0.0
    %826 = vmatpush2.msra.mxu0 0.0
    %827 = vmatprep.subr.mxu0 0.0
    %828 = vmatpush2.msra.mxu0 0.0
    %829 = vmatprep.subr.mxu0 0.0
    %830 = vmatpush2.msra.mxu0 0.0
    %831 = vmatprep.mubr.f32.mxu0 0.0
    %832 = vmatmul.mubr.f32.gmra.mxu0 %v765
    %v833 = vpop.f32.mrf.mxu0
    %v834 = vadd.f32 0.0, %v833
    %v835 = vpop.f32.mrf.mxu0
    %836 = vdwg.mxu0
    %837 = vrot.lane.b32.xlu0 %v386, 64
    %v838 = vpop.permute.xlu0 %837
    %v841 = vsel %vm407, %v758, 0
    %843 = vmatprep.subr.mxu0 0.0
    %844 = vmatpush1.msra.mxu0 0.0
    %845 = vmatprep.subr.mxu0 0.0
    %846 = vmatpush1.msra.mxu0 0.0
    %847 = vmatprep.subr.mxu0 0.0
    %848 = vmatpush1.msra.mxu0 0.0
    %849 = vmatprep.subr.mxu0 0.0
    %850 = vmatpush1.msra.mxu0 0.0
    %851 = vmatprep.subr.mxu0 0.0
    %852 = vmatpush1.msra.mxu0 0.0
    %853 = vmatprep.subr.mxu0 0.0
    %854 = vmatpush1.msra.mxu0 0.0
    %855 = vmatprep.subr.mxu0 0.0
    %856 = vmatpush1.msra.mxu0 0.0
    %857 = vmatprep.subr.mxu0 0.0
    %858 = vmatpush1.msra.mxu0 0.0
    %859 = vmatprep.subr.mxu0 0.0
    %860 = vmatpush1.msra.mxu0 0.0
    %861 = vmatprep.subr.mxu0 0.0
    %862 = vmatpush1.msra.mxu0 0.0
    %863 = vmatprep.subr.mxu0 0.0
    %864 = vmatpush1.msra.mxu0 0.0
    %865 = vmatprep.subr.mxu0 0.0
    %866 = vmatpush1.msra.mxu0 0.0
    %867 = vmatprep.subr.mxu0 0.0
    %868 = vmatpush1.msra.mxu0 0.0
    %869 = vmatprep.subr.mxu0 0.0
    %870 = vmatpush1.msra.mxu0 0.0
    %871 = vmatprep.subr.mxu0 0.0
    %872 = vmatpush1.msra.mxu0 0.0
    %873 = vmatprep.subr.mxu0 0.0
    %874 = vmatpush1.msra.mxu0 %v838
    %875 = vmatprep.subr.mxu0 0.0
    %876 = vmatpush2.msra.mxu0 0.0
    %877 = vmatprep.subr.mxu0 0.0
    %878 = vmatpush2.msra.mxu0 0.0
    %879 = vmatprep.subr.mxu0 0.0
    %880 = vmatpush2.msra.mxu0 0.0
    %881 = vmatprep.subr.mxu0 0.0
    %882 = vmatpush2.msra.mxu0 0.0
    %883 = vmatprep.subr.mxu0 0.0
    %884 = vmatpush2.msra.mxu0 0.0
    %885 = vmatprep.subr.mxu0 0.0
    %886 = vmatpush2.msra.mxu0 0.0
    %887 = vmatprep.subr.mxu0 0.0
    %888 = vmatpush2.msra.mxu0 0.0
    %889 = vmatprep.subr.mxu0 0.0
    %890 = vmatpush2.msra.mxu0 0.0
    %891 = vmatprep.subr.mxu0 0.0
    %892 = vmatpush2.msra.mxu0 0.0
    %893 = vmatprep.subr.mxu0 0.0
    %894 = vmatpush2.msra.mxu0 0.0
    %895 = vmatprep.subr.mxu0 0.0
    %896 = vmatpush2.msra.mxu0 0.0
    %897 = vmatprep.subr.mxu0 0.0
    %898 = vmatpush2.msra.mxu0 0.0
    %899 = vmatprep.subr.mxu0 0.0
    %900 = vmatpush2.msra.mxu0 0.0
    %901 = vmatprep.subr.mxu0 0.0
    %902 = vmatpush2.msra.mxu0 0.0
    %903 = vmatprep.subr.mxu0 0.0
    %904 = vmatpush2.msra.mxu0 0.0
    %905 = vmatprep.subr.mxu0 0.0
    %906 = vmatpush2.msra.mxu0 0.0
    %907 = vmatprep.mubr.f32.mxu0 0.0
    %908 = vmatmul.mubr.f32.gmra.mxu0 %v841
    %v909 = vpop.f32.mrf.mxu0
    %v910 = vadd.f32 0.0, %v909
    %v911 = vpop.f32.mrf.mxu0
    %912 = vdwg.mxu0
    %913 = vrot.lane.b32.xlu0 %v391, 64
    %v914 = vpop.permute.xlu0 %913
    %v917 = vsel %vm407, %v759, 0
    %919 = vmatprep.subr.mxu0 0.0
    %920 = vmatpush1.msra.mxu0 0.0
    %921 = vmatprep.subr.mxu0 0.0
    %922 = vmatpush1.msra.mxu0 0.0
    %923 = vmatprep.subr.mxu0 0.0
    %924 = vmatpush1.msra.mxu0 0.0
    %925 = vmatprep.subr.mxu0 0.0
    %926 = vmatpush1.msra.mxu0 0.0
    %927 = vmatprep.subr.mxu0 0.0
    %928 = vmatpush1.msra.mxu0 0.0
    %929 = vmatprep.subr.mxu0 0.0
    %930 = vmatpush1.msra.mxu0 0.0
    %931 = vmatprep.subr.mxu0 0.0
    %932 = vmatpush1.msra.mxu0 0.0
    %933 = vmatprep.subr.mxu0 0.0
    %934 = vmatpush1.msra.mxu0 0.0
    %935 = vmatprep.subr.mxu0 0.0
    %936 = vmatpush1.msra.mxu0 0.0
    %937 = vmatprep.subr.mxu0 0.0
    %938 = vmatpush1.msra.mxu0 0.0
    %939 = vmatprep.subr.mxu0 0.0
    %940 = vmatpush1.msra.mxu0 0.0
    %941 = vmatprep.subr.mxu0 0.0
    %942 = vmatpush1.msra.mxu0 0.0
    %943 = vmatprep.subr.mxu0 0.0
    %944 = vmatpush1.msra.mxu0 0.0
    %945 = vmatprep.subr.mxu0 0.0
    %946 = vmatpush1.msra.mxu0 0.0
    %947 = vmatprep.subr.mxu0 0.0
    %948 = vmatpush1.msra.mxu0 0.0
    %949 = vmatprep.subr.mxu0 0.0
    %950 = vmatpush1.msra.mxu0 %v914
    %951 = vmatprep.subr.mxu0 0.0
    %952 = vmatpush2.msra.mxu0 0.0
    %953 = vmatprep.subr.mxu0 0.0
    %954 = vmatpush2.msra.mxu0 0.0
    %955 = vmatprep.subr.mxu0 0.0
    %956 = vmatpush2.msra.mxu0 0.0
    %957 = vmatprep.subr.mxu0 0.0
    %958 = vmatpush2.msra.mxu0 0.0
    %959 = vmatprep.subr.mxu0 0.0
    %960 = vmatpush2.msra.mxu0 0.0
    %961 = vmatprep.subr.mxu0 0.0
    %962 = vmatpush2.msra.mxu0 0.0
    %963 = vmatprep.subr.mxu0 0.0
    %964 = vmatpush2.msra.mxu0 0.0
    %965 = vmatprep.subr.mxu0 0.0
    %966 = vmatpush2.msra.mxu0 0.0
    %967 = vmatprep.subr.mxu0 0.0
    %968 = vmatpush2.msra.mxu0 0.0
    %969 = vmatprep.subr.mxu0 0.0
    %970 = vmatpush2.msra.mxu0 0.0
    %971 = vmatprep.subr.mxu0 0.0
    %972 = vmatpush2.msra.mxu0 0.0
    %973 = vmatprep.subr.mxu0 0.0
    %974 = vmatpush2.msra.mxu0 0.0
    %975 = vmatprep.subr.mxu0 0.0
    %976 = vmatpush2.msra.mxu0 0.0
    %977 = vmatprep.subr.mxu0 0.0
    %978 = vmatpush2.msra.mxu0 0.0
    %979 = vmatprep.subr.mxu0 0.0
    %980 = vmatpush2.msra.mxu0 0.0
    %981 = vmatprep.subr.mxu0 0.0
    %982 = vmatpush2.msra.mxu0 0.0
    %983 = vmatprep.mubr.f32.mxu0 0.0
    %984 = vmatmul.mubr.f32.gmra.mxu0 %v917
    %v985 = vpop.f32.mrf.mxu0
    %v986 = vadd.f32 0.0, %v985
    %v987 = vpop.f32.mrf.mxu0
    %988 = vdwg.mxu0
    %989 = vrot.lane.b32.xlu0 %v396, 64
    %v990 = vpop.permute.xlu0 %989
    %v993 = vsel %vm407, %v760, 0
    %995 = vmatprep.subr.mxu0 0.0
    %996 = vmatpush1.msra.mxu0 0.0
    %997 = vmatprep.subr.mxu0 0.0
    %998 = vmatpush1.msra.mxu0 0.0
    %999 = vmatprep.subr.mxu0 0.0
    %1000 = vmatpush1.msra.mxu0 0.0
    %1001 = vmatprep.subr.mxu0 0.0
    %1002 = vmatpush1.msra.mxu0 0.0
    %1003 = vmatprep.subr.mxu0 0.0
    %1004 = vmatpush1.msra.mxu0 0.0
    %1005 = vmatprep.subr.mxu0 0.0
    %1006 = vmatpush1.msra.mxu0 0.0
    %1007 = vmatprep.subr.mxu0 0.0
    %1008 = vmatpush1.msra.mxu0 0.0
    %1009 = vmatprep.subr.mxu0 0.0
    %1010 = vmatpush1.msra.mxu0 0.0
    %1011 = vmatprep.subr.mxu0 0.0
    %1012 = vmatpush1.msra.mxu0 0.0
    %1013 = vmatprep.subr.mxu0 0.0
    %1014 = vmatpush1.msra.mxu0 0.0
    %1015 = vmatprep.subr.mxu0 0.0
    %1016 = vmatpush1.msra.mxu0 0.0
    %1017 = vmatprep.subr.mxu0 0.0
    %1018 = vmatpush1.msra.mxu0 0.0
    %1019 = vmatprep.subr.mxu0 0.0
    %1020 = vmatpush1.msra.mxu0 0.0
    %1021 = vmatprep.subr.mxu0 0.0
    %1022 = vmatpush1.msra.mxu0 0.0
    %1023 = vmatprep.subr.mxu0 0.0
    %1024 = vmatpush1.msra.mxu0 0.0
    %1025 = vmatprep.subr.mxu0 0.0
    %1026 = vmatpush1.msra.mxu0 %v990
    %1027 = vmatprep.subr.mxu0 0.0
    %1028 = vmatpush2.msra.mxu0 0.0
    %1029 = vmatprep.subr.mxu0 0.0
    %1030 = vmatpush2.msra.mxu0 0.0
    %1031 = vmatprep.subr.mxu0 0.0
    %1032 = vmatpush2.msra.mxu0 0.0
    %1033 = vmatprep.subr.mxu0 0.0
    %1034 = vmatpush2.msra.mxu0 0.0
    %1035 = vmatprep.subr.mxu0 0.0
    %1036 = vmatpush2.msra.mxu0 0.0
    %1037 = vmatprep.subr.mxu0 0.0
    %1038 = vmatpush2.msra.mxu0 0.0
    %1039 = vmatprep.subr.mxu0 0.0
    %1040 = vmatpush2.msra.mxu0 0.0
    %1041 = vmatprep.subr.mxu0 0.0
    %1042 = vmatpush2.msra.mxu0 0.0
    %1043 = vmatprep.subr.mxu0 0.0
    %1044 = vmatpush2.msra.mxu0 0.0
    %1045 = vmatprep.subr.mxu0 0.0
    %1046 = vmatpush2.msra.mxu0 0.0
    %1047 = vmatprep.subr.mxu0 0.0
    %1048 = vmatpush2.msra.mxu0 0.0
    %1049 = vmatprep.subr.mxu0 0.0
    %1050 = vmatpush2.msra.mxu0 0.0
    %1051 = vmatprep.subr.mxu0 0.0
    %1052 = vmatpush2.msra.mxu0 0.0
    %1053 = vmatprep.subr.mxu0 0.0
    %1054 = vmatpush2.msra.mxu0 0.0
    %1055 = vmatprep.subr.mxu0 0.0
    %1056 = vmatpush2.msra.mxu0 0.0
    %1057 = vmatprep.subr.mxu0 0.0
    %1058 = vmatpush2.msra.mxu0 0.0
    %1059 = vmatprep.mubr.f32.mxu0 0.0
    %1060 = vmatmul.mubr.f32.gmra.mxu0 %v993
    %v1061 = vpop.f32.mrf.mxu0
    %v1062 = vadd.f32 0.0, %v1061
    %v1063 = vpop.f32.mrf.mxu0
    %1064 = vdwg.mxu0
    %v1066 = vsel %vm407, %v834, 0
    %v1069 = vsel %vm407, %v910, 0
    %v1072 = vsel %vm407, %v986, 0
    %v1075 = vsel %vm407, %v1062, 0
    %1077 = vmatprep.subr.mxu0 0.0
    %1078 = vmatpush1.msra.mxu0 0.0
    %1079 = vmatprep.subr.mxu0 0.0
    %1080 = vmatpush1.msra.mxu0 0.0
    %1081 = vmatprep.subr.mxu0 0.0
    %1082 = vmatpush1.msra.mxu0 0.0
    %1083 = vmatprep.subr.mxu0 0.0
    %1084 = vmatpush1.msra.mxu0 0.0
    %1085 = vmatprep.subr.mxu0 0.0
    %1086 = vmatpush1.msra.mxu0 0.0
    %1087 = vmatprep.subr.mxu0 0.0
    %1088 = vmatpush1.msra.mxu0 0.0
    %1089 = vmatprep.subr.mxu0 0.0
    %1090 = vmatpush1.msra.mxu0 0.0
    %1091 = vmatprep.subr.mxu0 0.0
    %1092 = vmatpush1.msra.mxu0 0.0
    %1093 = vmatprep.subr.mxu0 0.0
    %1094 = vmatpush1.msra.mxu0 0.0
    %1095 = vmatprep.subr.mxu0 0.0
    %1096 = vmatpush1.msra.mxu0 0.0
    %1097 = vmatprep.subr.mxu0 0.0
    %1098 = vmatpush1.msra.mxu0 0.0
    %1099 = vmatprep.subr.mxu0 0.0
    %1100 = vmatpush1.msra.mxu0 0.0
    %1101 = vmatprep.subr.mxu0 0.0
    %1102 = vmatpush1.msra.mxu0 0.0
    %1103 = vmatprep.subr.mxu0 0.0
    %1104 = vmatpush1.msra.mxu0 0.0
    %1105 = vmatprep.subr.mxu0 0.0
    %1106 = vmatpush1.msra.mxu0 0.0
    %1107 = vmatprep.subr.mxu0 0.0
    %1108 = vmatpush1.msra.mxu0 %v399
    %1109 = vmatprep.subr.mxu0 0.0
    %1110 = vmatpush2.msra.mxu0 0.0
    %1111 = vmatprep.subr.mxu0 0.0
    %1112 = vmatpush2.msra.mxu0 0.0
    %1113 = vmatprep.subr.mxu0 0.0
    %1114 = vmatpush2.msra.mxu0 0.0
    %1115 = vmatprep.subr.mxu0 0.0
    %1116 = vmatpush2.msra.mxu0 0.0
    %1117 = vmatprep.subr.mxu0 0.0
    %1118 = vmatpush2.msra.mxu0 0.0
    %1119 = vmatprep.subr.mxu0 0.0
    %1120 = vmatpush2.msra.mxu0 0.0
    %1121 = vmatprep.subr.mxu0 0.0
    %1122 = vmatpush2.msra.mxu0 0.0
    %1123 = vmatprep.subr.mxu0 0.0
    %1124 = vmatpush2.msra.mxu0 0.0
    %1125 = vmatprep.subr.mxu0 0.0
    %1126 = vmatpush2.msra.mxu0 0.0
    %1127 = vmatprep.subr.mxu0 0.0
    %1128 = vmatpush2.msra.mxu0 0.0
    %1129 = vmatprep.subr.mxu0 0.0
    %1130 = vmatpush2.msra.mxu0 0.0
    %1131 = vmatprep.subr.mxu0 0.0
    %1132 = vmatpush2.msra.mxu0 0.0
    %1133 = vmatprep.subr.mxu0 0.0
    %1134 = vmatpush2.msra.mxu0 0.0
    %1135 = vmatprep.subr.mxu0 0.0
    %1136 = vmatpush2.msra.mxu0 0.0
    %1137 = vmatprep.subr.mxu0 0.0
    %1138 = vmatpush2.msra.mxu0 0.0
    %1139 = vmatprep.subr.mxu0 0.0
    %1140 = vmatpush2.msra.mxu0 0.0
    %1141 = vmatprep.mubr.f32.mxu0 0.0
    %1142 = vmatmul.mubr.f32.gmra.mxu0 %v1066
    %v1143 = vpop.f32.mrf.mxu0
    %v1144 = vadd.f32 0.0, %v1143
    %v1145 = vpop.f32.mrf.mxu0
    %1146 = vmatprep.mubr.f32.mxu0 0.0
    %1147 = vmatmul.mubr.f32.gmra.mxu0 %v1069
    %v1148 = vpop.f32.mrf.mxu0
    %v1149 = vadd.f32 0.0, %v1148
    %v1150 = vpop.f32.mrf.mxu0
    %1151 = vmatprep.mubr.f32.mxu0 0.0
    %1152 = vmatmul.mubr.f32.gmra.mxu0 %v1072
    %v1153 = vpop.f32.mrf.mxu0
    %v1154 = vadd.f32 0.0, %v1153
    %v1155 = vpop.f32.mrf.mxu0
    %1156 = vmatprep.mubr.f32.mxu0 0.0
    %1157 = vmatmul.mubr.f32.gmra.mxu0 %v1075
    %v1158 = vpop.f32.mrf.mxu0
    %v1159 = vadd.f32 0.0, %v1158
    %v1160 = vpop.f32.mrf.mxu0
    %1161 = vdwg.mxu0
    %v1163 = vlaneseq
    %v1164 = vshrl.u32 %v1163, 7
    %v1165 = vsub.s32 0, %v1164
    %v1166 = vrot.slane %v403, %v1165
    %v1168 = vadd.f32 %v1166, %v1144
    %v1169 = vadd.f32 %v1166, %v1149
    %v1170 = vadd.f32 %v1166, %v1154
    %v1171 = vadd.f32 %v1166, %v1159
    %1172 = vrot.lane.b32.xlu0 %v381, 120
    %v1173 = vpop.permute.xlu0 %1172
    %1174 = vrot.lane.b32.xlu0 %v381, 88
    %v1175 = vpop.permute.xlu0 %1174
    %v1176 = vsel %vm407, %v1173, 0
    %v1178 = vsel %vm407, %v1175, 0
    %1180 = vmatprep.subr.mxu0 0.0
    %1181 = vmatpush1.xpose.msra.mxu0 0.0
    %1182 = vmatprep.subr.mxu0 0.0
    %1183 = vmatpush1.xpose.msra.mxu0 0.0
    %1184 = vmatprep.subr.mxu0 0.0
    %1185 = vmatpush1.xpose.msra.mxu0 0.0
    %1186 = vmatprep.subr.mxu0 0.0
    %1187 = vmatpush1.xpose.msra.mxu0 0.0
    %1188 = vmatprep.subr.mxu0 0.0
    %1189 = vmatpush1.xpose.msra.mxu0 0.0
    %1190 = vmatprep.subr.mxu0 0.0
    %1191 = vmatpush1.xpose.msra.mxu0 0.0
    %1192 = vmatprep.subr.mxu0 0.0
    %1193 = vmatpush1.xpose.msra.mxu0 0.0
    %1194 = vmatprep.subr.mxu0 0.0
    %1195 = vmatpush1.xpose.msra.mxu0 0.0
    %1196 = vmatprep.subr.mxu0 0.0
    %1197 = vmatpush1.xpose.msra.mxu0 0.0
    %1198 = vmatprep.subr.mxu0 0.0
    %1199 = vmatpush1.xpose.msra.mxu0 0.0
    %1200 = vmatprep.subr.mxu0 0.0
    %1201 = vmatpush1.xpose.msra.mxu0 0.0
    %1202 = vmatprep.subr.mxu0 0.0
    %1203 = vmatpush1.xpose.msra.mxu0 0.0
    %1204 = vmatprep.subr.mxu0 0.0
    %1205 = vmatpush1.xpose.msra.mxu0 0.0
    %1206 = vmatprep.subr.mxu0 0.0
    %1207 = vmatpush1.xpose.msra.mxu0 0.0
    %1208 = vmatprep.subr.mxu0 0.0
    %1209 = vmatpush1.xpose.msra.mxu0 0.0
    %1210 = vmatprep.subr.mxu0 0.0
    %1211 = vmatpush1.xpose.msra.mxu0 %v1178
    %1212 = vmatprep.subr.mxu0 0.0
    %1213 = vmatpush2.xpose.msra.mxu0 0.0
    %1214 = vmatprep.subr.mxu0 0.0
    %1215 = vmatpush2.xpose.msra.mxu0 0.0
    %1216 = vmatprep.subr.mxu0 0.0
    %1217 = vmatpush2.xpose.msra.mxu0 0.0
    %1218 = vmatprep.subr.mxu0 0.0
    %1219 = vmatpush2.xpose.msra.mxu0 0.0
    %1220 = vmatprep.subr.mxu0 0.0
    %1221 = vmatpush2.xpose.msra.mxu0 0.0
    %1222 = vmatprep.subr.mxu0 0.0
    %1223 = vmatpush2.xpose.msra.mxu0 0.0
    %1224 = vmatprep.subr.mxu0 0.0
    %1225 = vmatpush2.xpose.msra.mxu0 0.0
    %1226 = vmatprep.subr.mxu0 0.0
    %1227 = vmatpush2.xpose.msra.mxu0 0.0
    %1228 = vmatprep.subr.mxu0 0.0
    %1229 = vmatpush2.xpose.msra.mxu0 0.0
    %1230 = vmatprep.subr.mxu0 0.0
    %1231 = vmatpush2.xpose.msra.mxu0 0.0
    %1232 = vmatprep.subr.mxu0 0.0
    %1233 = vmatpush2.xpose.msra.mxu0 0.0
    %1234 = vmatprep.subr.mxu0 0.0
    %1235 = vmatpush2.xpose.msra.mxu0 0.0
    %1236 = vmatprep.subr.mxu0 0.0
    %1237 = vmatpush2.xpose.msra.mxu0 0.0
    %1238 = vmatprep.subr.mxu0 0.0
    %1239 = vmatpush2.xpose.msra.mxu0 0.0
    %1240 = vmatprep.subr.mxu0 0.0
    %1241 = vmatpush2.xpose.msra.mxu0 0.0
    %1242 = vmatprep.subr.mxu0 0.0
    %1243 = vmatpush2.xpose.msra.mxu0 0.0
    %1244 = vmatprep.mubr.f32.mxu0 0.0
    %1245 = vmatmul.mubr.f32.gmra.mxu0 %v1176
    %v1246 = vpop.f32.mrf.mxu0
    %v1247 = vadd.f32 0.0, %v1246
    %v1248 = vpop.f32.mrf.mxu0
    %1249 = vdwg.mxu0
    %1250 = vrot.lane.b32.xlu0 %v386, 120
    %v1251 = vpop.permute.xlu0 %1250
    %1252 = vrot.lane.b32.xlu0 %v386, 88
    %v1253 = vpop.permute.xlu0 %1252
    %v1254 = vsel %vm407, %v1251, 0
    %v1256 = vsel %vm407, %v1253, 0
    %1258 = vmatprep.subr.mxu0 0.0
    %1259 = vmatpush1.xpose.msra.mxu0 0.0
    %1260 = vmatprep.subr.mxu0 0.0
    %1261 = vmatpush1.xpose.msra.mxu0 0.0
    %1262 = vmatprep.subr.mxu0 0.0
    %1263 = vmatpush1.xpose.msra.mxu0 0.0
    %1264 = vmatprep.subr.mxu0 0.0
    %1265 = vmatpush1.xpose.msra.mxu0 0.0
    %1266 = vmatprep.subr.mxu0 0.0
    %1267 = vmatpush1.xpose.msra.mxu0 0.0
    %1268 = vmatprep.subr.mxu0 0.0
    %1269 = vmatpush1.xpose.msra.mxu0 0.0
    %1270 = vmatprep.subr.mxu0 0.0
    %1271 = vmatpush1.xpose.msra.mxu0 0.0
    %1272 = vmatprep.subr.mxu0 0.0
    %1273 = vmatpush1.xpose.msra.mxu0 0.0
    %1274 = vmatprep.subr.mxu0 0.0
    %1275 = vmatpush1.xpose.msra.mxu0 0.0
    %1276 = vmatprep.subr.mxu0 0.0
    %1277 = vmatpush1.xpose.msra.mxu0 0.0
    %1278 = vmatprep.subr.mxu0 0.0
    %1279 = vmatpush1.xpose.msra.mxu0 0.0
    %1280 = vmatprep.subr.mxu0 0.0
    %1281 = vmatpush1.xpose.msra.mxu0 0.0
    %1282 = vmatprep.subr.mxu0 0.0
    %1283 = vmatpush1.xpose.msra.mxu0 0.0
    %1284 = vmatprep.subr.mxu0 0.0
    %1285 = vmatpush1.xpose.msra.mxu0 0.0
    %1286 = vmatprep.subr.mxu0 0.0
    %1287 = vmatpush1.xpose.msra.mxu0 0.0
    %1288 = vmatprep.subr.mxu0 0.0
    %1289 = vmatpush1.xpose.msra.mxu0 %v1256
    %1290 = vmatprep.subr.mxu0 0.0
    %1291 = vmatpush2.xpose.msra.mxu0 0.0
    %1292 = vmatprep.subr.mxu0 0.0
    %1293 = vmatpush2.xpose.msra.mxu0 0.0
    %1294 = vmatprep.subr.mxu0 0.0
    %1295 = vmatpush2.xpose.msra.mxu0 0.0
    %1296 = vmatprep.subr.mxu0 0.0
    %1297 = vmatpush2.xpose.msra.mxu0 0.0
    %1298 = vmatprep.subr.mxu0 0.0
    %1299 = vmatpush2.xpose.msra.mxu0 0.0
    %1300 = vmatprep.subr.mxu0 0.0
    %1301 = vmatpush2.xpose.msra.mxu0 0.0
    %1302 = vmatprep.subr.mxu0 0.0
    %1303 = vmatpush2.xpose.msra.mxu0 0.0
    %1304 = vmatprep.subr.mxu0 0.0
    %1305 = vmatpush2.xpose.msra.mxu0 0.0
    %1306 = vmatprep.subr.mxu0 0.0
    %1307 = vmatpush2.xpose.msra.mxu0 0.0
    %1308 = vmatprep.subr.mxu0 0.0
    %1309 = vmatpush2.xpose.msra.mxu0 0.0
    %1310 = vmatprep.subr.mxu0 0.0
    %1311 = vmatpush2.xpose.msra.mxu0 0.0
    %1312 = vmatprep.subr.mxu0 0.0
    %1313 = vmatpush2.xpose.msra.mxu0 0.0
    %1314 = vmatprep.subr.mxu0 0.0
    %1315 = vmatpush2.xpose.msra.mxu0 0.0
    %1316 = vmatprep.subr.mxu0 0.0
    %1317 = vmatpush2.xpose.msra.mxu0 0.0
    %1318 = vmatprep.subr.mxu0 0.0
    %1319 = vmatpush2.xpose.msra.mxu0 0.0
    %1320 = vmatprep.subr.mxu0 0.0
    %1321 = vmatpush2.xpose.msra.mxu0 0.0
    %1322 = vmatprep.mubr.f32.mxu0 0.0
    %1323 = vmatmul.mubr.f32.gmra.mxu0 %v1254
    %v1324 = vpop.f32.mrf.mxu0
    %v1325 = vadd.f32 0.0, %v1324
    %v1326 = vpop.f32.mrf.mxu0
    %1327 = vdwg.mxu0
    %1328 = vrot.lane.b32.xlu0 %v391, 120
    %v1329 = vpop.permute.xlu0 %1328
    %1330 = vrot.lane.b32.xlu0 %v391, 88
    %v1331 = vpop.permute.xlu0 %1330
    %v1332 = vsel %vm407, %v1329, 0
    %v1334 = vsel %vm407, %v1331, 0
    %1336 = vmatprep.subr.mxu0 0.0
    %1337 = vmatpush1.xpose.msra.mxu0 0.0
    %1338 = vmatprep.subr.mxu0 0.0
    %1339 = vmatpush1.xpose.msra.mxu0 0.0
    %1340 = vmatprep.subr.mxu0 0.0
    %1341 = vmatpush1.xpose.msra.mxu0 0.0
    %1342 = vmatprep.subr.mxu0 0.0
    %1343 = vmatpush1.xpose.msra.mxu0 0.0
    %1344 = vmatprep.subr.mxu0 0.0
    %1345 = vmatpush1.xpose.msra.mxu0 0.0
    %1346 = vmatprep.subr.mxu0 0.0
    %1347 = vmatpush1.xpose.msra.mxu0 0.0
    %1348 = vmatprep.subr.mxu0 0.0
    %1349 = vmatpush1.xpose.msra.mxu0 0.0
    %1350 = vmatprep.subr.mxu0 0.0
    %1351 = vmatpush1.xpose.msra.mxu0 0.0
    %1352 = vmatprep.subr.mxu0 0.0
    %1353 = vmatpush1.xpose.msra.mxu0 0.0
    %1354 = vmatprep.subr.mxu0 0.0
    %1355 = vmatpush1.xpose.msra.mxu0 0.0
    %1356 = vmatprep.subr.mxu0 0.0
    %1357 = vmatpush1.xpose.msra.mxu0 0.0
    %1358 = vmatprep.subr.mxu0 0.0
    %1359 = vmatpush1.xpose.msra.mxu0 0.0
    %1360 = vmatprep.subr.mxu0 0.0
    %1361 = vmatpush1.xpose.msra.mxu0 0.0
    %1362 = vmatprep.subr.mxu0 0.0
    %1363 = vmatpush1.xpose.msra.mxu0 0.0
    %1364 = vmatprep.subr.mxu0 0.0
    %1365 = vmatpush1.xpose.msra.mxu0 0.0
    %1366 = vmatprep.subr.mxu0 0.0
    %1367 = vmatpush1.xpose.msra.mxu0 %v1334
    %1368 = vmatprep.subr.mxu0 0.0
    %1369 = vmatpush2.xpose.msra.mxu0 0.0
    %1370 = vmatprep.subr.mxu0 0.0
    %1371 = vmatpush2.xpose.msra.mxu0 0.0
    %1372 = vmatprep.subr.mxu0 0.0
    %1373 = vmatpush2.xpose.msra.mxu0 0.0
    %1374 = vmatprep.subr.mxu0 0.0
    %1375 = vmatpush2.xpose.msra.mxu0 0.0
    %1376 = vmatprep.subr.mxu0 0.0
    %1377 = vmatpush2.xpose.msra.mxu0 0.0
    %1378 = vmatprep.subr.mxu0 0.0
    %1379 = vmatpush2.xpose.msra.mxu0 0.0
    %1380 = vmatprep.subr.mxu0 0.0
    %1381 = vmatpush2.xpose.msra.mxu0 0.0
    %1382 = vmatprep.subr.mxu0 0.0
    %1383 = vmatpush2.xpose.msra.mxu0 0.0
    %1384 = vmatprep.subr.mxu0 0.0
    %1385 = vmatpush2.xpose.msra.mxu0 0.0
    %1386 = vmatprep.subr.mxu0 0.0
    %1387 = vmatpush2.xpose.msra.mxu0 0.0
    %1388 = vmatprep.subr.mxu0 0.0
    %1389 = vmatpush2.xpose.msra.mxu0 0.0
    %1390 = vmatprep.subr.mxu0 0.0
    %1391 = vmatpush2.xpose.msra.mxu0 0.0
    %1392 = vmatprep.subr.mxu0 0.0
    %1393 = vmatpush2.xpose.msra.mxu0 0.0
    %1394 = vmatprep.subr.mxu0 0.0
    %1395 = vmatpush2.xpose.msra.mxu0 0.0
    %1396 = vmatprep.subr.mxu0 0.0
    %1397 = vmatpush2.xpose.msra.mxu0 0.0
    %1398 = vmatprep.subr.mxu0 0.0
    %1399 = vmatpush2.xpose.msra.mxu0 0.0
    %1400 = vmatprep.mubr.f32.mxu0 0.0
    %1401 = vmatmul.mubr.f32.gmra.mxu0 %v1332
    %v1402 = vpop.f32.mrf.mxu0
    %v1403 = vadd.f32 0.0, %v1402
    %v1404 = vpop.f32.mrf.mxu0
    %1405 = vdwg.mxu0
    %1406 = vrot.lane.b32.xlu0 %v396, 120
    %v1407 = vpop.permute.xlu0 %1406
    %1408 = vrot.lane.b32.xlu0 %v396, 88
    %v1409 = vpop.permute.xlu0 %1408
    %v1410 = vsel %vm407, %v1407, 0
    %v1412 = vsel %vm407, %v1409, 0
    %1414 = vmatprep.subr.mxu0 0.0
    %1415 = vmatpush1.xpose.msra.mxu0 0.0
    %1416 = vmatprep.subr.mxu0 0.0
    %1417 = vmatpush1.xpose.msra.mxu0 0.0
    %1418 = vmatprep.subr.mxu0 0.0
    %1419 = vmatpush1.xpose.msra.mxu0 0.0
    %1420 = vmatprep.subr.mxu0 0.0
    %1421 = vmatpush1.xpose.msra.mxu0 0.0
    %1422 = vmatprep.subr.mxu0 0.0
    %1423 = vmatpush1.xpose.msra.mxu0 0.0
    %1424 = vmatprep.subr.mxu0 0.0
    %1425 = vmatpush1.xpose.msra.mxu0 0.0
    %1426 = vmatprep.subr.mxu0 0.0
    %1427 = vmatpush1.xpose.msra.mxu0 0.0
    %1428 = vmatprep.subr.mxu0 0.0
    %1429 = vmatpush1.xpose.msra.mxu0 0.0
    %1430 = vmatprep.subr.mxu0 0.0
    %1431 = vmatpush1.xpose.msra.mxu0 0.0
    %1432 = vmatprep.subr.mxu0 0.0
    %1433 = vmatpush1.xpose.msra.mxu0 0.0
    %1434 = vmatprep.subr.mxu0 0.0
    %1435 = vmatpush1.xpose.msra.mxu0 0.0
    %1436 = vmatprep.subr.mxu0 0.0
    %1437 = vmatpush1.xpose.msra.mxu0 0.0
    %1438 = vmatprep.subr.mxu0 0.0
    %1439 = vmatpush1.xpose.msra.mxu0 0.0
    %1440 = vmatprep.subr.mxu0 0.0
    %1441 = vmatpush1.xpose.msra.mxu0 0.0
    %1442 = vmatprep.subr.mxu0 0.0
    %1443 = vmatpush1.xpose.msra.mxu0 0.0
    %1444 = vmatprep.subr.mxu0 0.0
    %1445 = vmatpush1.xpose.msra.mxu0 %v1412
    %1446 = vmatprep.subr.mxu0 0.0
    %1447 = vmatpush2.xpose.msra.mxu0 0.0
    %1448 = vmatprep.subr.mxu0 0.0
    %1449 = vmatpush2.xpose.msra.mxu0 0.0
    %1450 = vmatprep.subr.mxu0 0.0
    %1451 = vmatpush2.xpose.msra.mxu0 0.0
    %1452 = vmatprep.subr.mxu0 0.0
    %1453 = vmatpush2.xpose.msra.mxu0 0.0
    %1454 = vmatprep.subr.mxu0 0.0
    %1455 = vmatpush2.xpose.msra.mxu0 0.0
    %1456 = vmatprep.subr.mxu0 0.0
    %1457 = vmatpush2.xpose.msra.mxu0 0.0
    %1458 = vmatprep.subr.mxu0 0.0
    %1459 = vmatpush2.xpose.msra.mxu0 0.0
    %1460 = vmatprep.subr.mxu0 0.0
    %1461 = vmatpush2.xpose.msra.mxu0 0.0
    %1462 = vmatprep.subr.mxu0 0.0
    %1463 = vmatpush2.xpose.msra.mxu0 0.0
    %1464 = vmatprep.subr.mxu0 0.0
    %1465 = vmatpush2.xpose.msra.mxu0 0.0
    %1466 = vmatprep.subr.mxu0 0.0
    %1467 = vmatpush2.xpose.msra.mxu0 0.0
    %1468 = vmatprep.subr.mxu0 0.0
    %1469 = vmatpush2.xpose.msra.mxu0 0.0
    %1470 = vmatprep.subr.mxu0 0.0
    %1471 = vmatpush2.xpose.msra.mxu0 0.0
    %1472 = vmatprep.subr.mxu0 0.0
    %1473 = vmatpush2.xpose.msra.mxu0 0.0
    %1474 = vmatprep.subr.mxu0 0.0
    %1475 = vmatpush2.xpose.msra.mxu0 0.0
    %1476 = vmatprep.subr.mxu0 0.0
    %1477 = vmatpush2.xpose.msra.mxu0 0.0
    %1478 = vmatprep.mubr.f32.mxu0 0.0
    %1479 = vmatmul.mubr.f32.gmra.mxu0 %v1410
    %v1480 = vpop.f32.mrf.mxu0
    %v1481 = vadd.f32 0.0, %v1480
    %v1482 = vpop.f32.mrf.mxu0
    %1483 = vdwg.mxu0
    %v1484 = vmul.f32 %v1247, 0.35355338
    %v1485 = vmul.f32 %v1325, 0.35355338
    %v1486 = vmul.f32 %v1403, 0.35355338
    %v1487 = vmul.f32 %v1481, 0.35355338
    %v1488 = vsel %vm407, %v1484, -inf
    %1489 = vmax.xlane.f32.xlu0 %v1488
    %v1490 = vpop.xlane.xlu0 %1489
    %v1491 = vsel %vm407, %v1485, -inf
    %1492 = vmax.xlane.f32.xlu0 %v1491
    %v1493 = vpop.xlane.xlu0 %1492
    %v1494 = vsel %vm407, %v1486, -inf
    %1495 = vmax.xlane.f32.xlu0 %v1494
    %v1496 = vpop.xlane.xlu0 %1495
    %v1497 = vsel %vm407, %v1487, -inf
    %1498 = vmax.xlane.f32.xlu0 %v1497
    %v1499 = vpop.xlane.xlu0 %1498
    %v1500 = vsub.f32 %v1484, %v1490
    %v1501 = vsub.f32 %v1485, %v1493
    %v1502 = vsub.f32 %v1486, %v1496
    %v1503 = vsub.f32 %v1487, %v1499
    %v1504 = vmul.f32 %v1500, 1.442695
    %v1505 = vpow.pop %v1504
    %v1506 = vmul.f32 %v1501, 1.442695
    %v1507 = vpow.pop %v1506
    %v1508 = vmul.f32 %v1502, 1.442695
    %v1509 = vpow.pop %v1508
    %v1510 = vmul.f32 %v1503, 1.442695
    %v1511 = vpow.pop %v1510
    %v1512 = vsel %vm407, %v1505, 0.0
    %1513 = vadd.xlane.f32.xlu0 %v1512
    %v1514 = vpop.xlane.xlu0 %1513
    %v1515 = vsel %vm407, %v1507, 0.0
    %1516 = vadd.xlane.f32.xlu0 %v1515
    %v1517 = vpop.xlane.xlu0 %1516
    %v1518 = vsel %vm407, %v1509, 0.0
    %1519 = vadd.xlane.f32.xlu0 %v1518
    %v1520 = vpop.xlane.xlu0 %1519
    %v1521 = vsel %vm407, %v1511, 0.0
    %1522 = vadd.xlane.f32.xlu0 %v1521
    %v1523 = vpop.xlane.xlu0 %1522
    %v1524 = vrcp.pop %v1514
    %v1525 = vrcp.pop %v1517
    %v1526 = vrcp.pop %v1520
    %v1527 = vrcp.pop %v1523
    %v1528 = vmul.f32 %v1505, %v1524
    %v1529 = vmul.f32 %v1507, %v1525
    %v1530 = vmul.f32 %v1509, %v1526
    %v1531 = vmul.f32 %v1511, %v1527
    %1532 = vrot.lane.b32.xlu0 %v381, 56
    %v1533 = vpop.permute.xlu0 %1532
    %v1536 = vsel %vm407, %v1528, 0
    %1538 = vmatprep.subr.mxu0 0.0
    %1539 = vmatpush1.msra.mxu0 0.0
    %1540 = vmatprep.subr.mxu0 0.0
    %1541 = vmatpush1.msra.mxu0 0.0
    %1542 = vmatprep.subr.mxu0 0.0
    %1543 = vmatpush1.msra.mxu0 0.0
    %1544 = vmatprep.subr.mxu0 0.0
    %1545 = vmatpush1.msra.mxu0 0.0
    %1546 = vmatprep.subr.mxu0 0.0
    %1547 = vmatpush1.msra.mxu0 0.0
    %1548 = vmatprep.subr.mxu0 0.0
    %1549 = vmatpush1.msra.mxu0 0.0
    %1550 = vmatprep.subr.mxu0 0.0
    %1551 = vmatpush1.msra.mxu0 0.0
    %1552 = vmatprep.subr.mxu0 0.0
    %1553 = vmatpush1.msra.mxu0 0.0
    %1554 = vmatprep.subr.mxu0 0.0
    %1555 = vmatpush1.msra.mxu0 0.0
    %1556 = vmatprep.subr.mxu0 0.0
    %1557 = vmatpush1.msra.mxu0 0.0
    %1558 = vmatprep.subr.mxu0 0.0
    %1559 = vmatpush1.msra.mxu0 0.0
    %1560 = vmatprep.subr.mxu0 0.0
    %1561 = vmatpush1.msra.mxu0 0.0
    %1562 = vmatprep.subr.mxu0 0.0
    %1563 = vmatpush1.msra.mxu0 0.0
    %1564 = vmatprep.subr.mxu0 0.0
    %1565 = vmatpush1.msra.mxu0 0.0
    %1566 = vmatprep.subr.mxu0 0.0
    %1567 = vmatpush1.msra.mxu0 0.0
    %1568 = vmatprep.subr.mxu0 0.0
    %1569 = vmatpush1.msra.mxu0 %v1533
    %1570 = vmatprep.subr.mxu0 0.0
    %1571 = vmatpush2.msra.mxu0 0.0
    %1572 = vmatprep.subr.mxu0 0.0
    %1573 = vmatpush2.msra.mxu0 0.0
    %1574 = vmatprep.subr.mxu0 0.0
    %1575 = vmatpush2.msra.mxu0 0.0
    %1576 = vmatprep.subr.mxu0 0.0
    %1577 = vmatpush2.msra.mxu0 0.0
    %1578 = vmatprep.subr.mxu0 0.0
    %1579 = vmatpush2.msra.mxu0 0.0
    %1580 = vmatprep.subr.mxu0 0.0
    %1581 = vmatpush2.msra.mxu0 0.0
    %1582 = vmatprep.subr.mxu0 0.0
    %1583 = vmatpush2.msra.mxu0 0.0
    %1584 = vmatprep.subr.mxu0 0.0
    %1585 = vmatpush2.msra.mxu0 0.0
    %1586 = vmatprep.subr.mxu0 0.0
    %1587 = vmatpush2.msra.mxu0 0.0
    %1588 = vmatprep.subr.mxu0 0.0
    %1589 = vmatpush2.msra.mxu0 0.0
    %1590 = vmatprep.subr.mxu0 0.0
    %1591 = vmatpush2.msra.mxu0 0.0
    %1592 = vmatprep.subr.mxu0 0.0
    %1593 = vmatpush2.msra.mxu0 0.0
    %1594 = vmatprep.subr.mxu0 0.0
    %1595 = vmatpush2.msra.mxu0 0.0
    %1596 = vmatprep.subr.mxu0 0.0
    %1597 = vmatpush2.msra.mxu0 0.0
    %1598 = vmatprep.subr.mxu0 0.0
    %1599 = vmatpush2.msra.mxu0 0.0
    %1600 = vmatprep.subr.mxu0 0.0
    %1601 = vmatpush2.msra.mxu0 0.0
    %1602 = vmatprep.mubr.f32.mxu0 0.0
    %1603 = vmatmul.mubr.f32.gmra.mxu0 %v1536
    %v1604 = vpop.f32.mrf.mxu0
    %v1605 = vadd.f32 0.0, %v1604
    %v1606 = vpop.f32.mrf.mxu0
    %1607 = vdwg.mxu0
    %1608 = vrot.lane.b32.xlu0 %v386, 56
    %v1609 = vpop.permute.xlu0 %1608
    %v1612 = vsel %vm407, %v1529, 0
    %1614 = vmatprep.subr.mxu0 0.0
    %1615 = vmatpush1.msra.mxu0 0.0
    %1616 = vmatprep.subr.mxu0 0.0
    %1617 = vmatpush1.msra.mxu0 0.0
    %1618 = vmatprep.subr.mxu0 0.0
    %1619 = vmatpush1.msra.mxu0 0.0
    %1620 = vmatprep.subr.mxu0 0.0
    %1621 = vmatpush1.msra.mxu0 0.0
    %1622 = vmatprep.subr.mxu0 0.0
    %1623 = vmatpush1.msra.mxu0 0.0
    %1624 = vmatprep.subr.mxu0 0.0
    %1625 = vmatpush1.msra.mxu0 0.0
    %1626 = vmatprep.subr.mxu0 0.0
    %1627 = vmatpush1.msra.mxu0 0.0
    %1628 = vmatprep.subr.mxu0 0.0
    %1629 = vmatpush1.msra.mxu0 0.0
    %1630 = vmatprep.subr.mxu0 0.0
    %1631 = vmatpush1.msra.mxu0 0.0
    %1632 = vmatprep.subr.mxu0 0.0
    %1633 = vmatpush1.msra.mxu0 0.0
    %1634 = vmatprep.subr.mxu0 0.0
    %1635 = vmatpush1.msra.mxu0 0.0
    %1636 = vmatprep.subr.mxu0 0.0
    %1637 = vmatpush1.msra.mxu0 0.0
    %1638 = vmatprep.subr.mxu0 0.0
    %1639 = vmatpush1.msra.mxu0 0.0
    %1640 = vmatprep.subr.mxu0 0.0
    %1641 = vmatpush1.msra.mxu0 0.0
    %1642 = vmatprep.subr.mxu0 0.0
    %1643 = vmatpush1.msra.mxu0 0.0
    %1644 = vmatprep.subr.mxu0 0.0
    %1645 = vmatpush1.msra.mxu0 %v1609
    %1646 = vmatprep.subr.mxu0 0.0
    %1647 = vmatpush2.msra.mxu0 0.0
    %1648 = vmatprep.subr.mxu0 0.0
    %1649 = vmatpush2.msra.mxu0 0.0
    %1650 = vmatprep.subr.mxu0 0.0
    %1651 = vmatpush2.msra.mxu0 0.0
    %1652 = vmatprep.subr.mxu0 0.0
    %1653 = vmatpush2.msra.mxu0 0.0
    %1654 = vmatprep.subr.mxu0 0.0
    %1655 = vmatpush2.msra.mxu0 0.0
    %1656 = vmatprep.subr.mxu0 0.0
    %1657 = vmatpush2.msra.mxu0 0.0
    %1658 = vmatprep.subr.mxu0 0.0
    %1659 = vmatpush2.msra.mxu0 0.0
    %1660 = vmatprep.subr.mxu0 0.0
    %1661 = vmatpush2.msra.mxu0 0.0
    %1662 = vmatprep.subr.mxu0 0.0
    %1663 = vmatpush2.msra.mxu0 0.0
    %1664 = vmatprep.subr.mxu0 0.0
    %1665 = vmatpush2.msra.mxu0 0.0
    %1666 = vmatprep.subr.mxu0 0.0
    %1667 = vmatpush2.msra.mxu0 0.0
    %1668 = vmatprep.subr.mxu0 0.0
    %1669 = vmatpush2.msra.mxu0 0.0
    %1670 = vmatprep.subr.mxu0 0.0
    %1671 = vmatpush2.msra.mxu0 0.0
    %1672 = vmatprep.subr.mxu0 0.0
    %1673 = vmatpush2.msra.mxu0 0.0
    %1674 = vmatprep.subr.mxu0 0.0
    %1675 = vmatpush2.msra.mxu0 0.0
    %1676 = vmatprep.subr.mxu0 0.0
    %1677 = vmatpush2.msra.mxu0 0.0
    %1678 = vmatprep.mubr.f32.mxu0 0.0
    %1679 = vmatmul.mubr.f32.gmra.mxu0 %v1612
    %v1680 = vpop.f32.mrf.mxu0
    %v1681 = vadd.f32 0.0, %v1680
    %v1682 = vpop.f32.mrf.mxu0
    %1683 = vdwg.mxu0
    %1684 = vrot.lane.b32.xlu0 %v391, 56
    %v1685 = vpop.permute.xlu0 %1684
    %v1688 = vsel %vm407, %v1530, 0
    %1690 = vmatprep.subr.mxu0 0.0
    %1691 = vmatpush1.msra.mxu0 0.0
    %1692 = vmatprep.subr.mxu0 0.0
    %1693 = vmatpush1.msra.mxu0 0.0
    %1694 = vmatprep.subr.mxu0 0.0
    %1695 = vmatpush1.msra.mxu0 0.0
    %1696 = vmatprep.subr.mxu0 0.0
    %1697 = vmatpush1.msra.mxu0 0.0
    %1698 = vmatprep.subr.mxu0 0.0
    %1699 = vmatpush1.msra.mxu0 0.0
    %1700 = vmatprep.subr.mxu0 0.0
    %1701 = vmatpush1.msra.mxu0 0.0
    %1702 = vmatprep.subr.mxu0 0.0
    %1703 = vmatpush1.msra.mxu0 0.0
    %1704 = vmatprep.subr.mxu0 0.0
    %1705 = vmatpush1.msra.mxu0 0.0
    %1706 = vmatprep.subr.mxu0 0.0
    %1707 = vmatpush1.msra.mxu0 0.0
    %1708 = vmatprep.subr.mxu0 0.0
    %1709 = vmatpush1.msra.mxu0 0.0
    %1710 = vmatprep.subr.mxu0 0.0
    %1711 = vmatpush1.msra.mxu0 0.0
    %1712 = vmatprep.subr.mxu0 0.0
    %1713 = vmatpush1.msra.mxu0 0.0
    %1714 = vmatprep.subr.mxu0 0.0
    %1715 = vmatpush1.msra.mxu0 0.0
    %1716 = vmatprep.subr.mxu0 0.0
    %1717 = vmatpush1.msra.mxu0 0.0
    %1718 = vmatprep.subr.mxu0 0.0
    %1719 = vmatpush1.msra.mxu0 0.0
    %1720 = vmatprep.subr.mxu0 0.0
    %1721 = vmatpush1.msra.mxu0 %v1685
    %1722 = vmatprep.subr.mxu0 0.0
    %1723 = vmatpush2.msra.mxu0 0.0
    %1724 = vmatprep.subr.mxu0 0.0
    %1725 = vmatpush2.msra.mxu0 0.0
    %1726 = vmatprep.subr.mxu0 0.0
    %1727 = vmatpush2.msra.mxu0 0.0
    %1728 = vmatprep.subr.mxu0 0.0
    %1729 = vmatpush2.msra.mxu0 0.0
    %1730 = vmatprep.subr.mxu0 0.0
    %1731 = vmatpush2.msra.mxu0 0.0
    %1732 = vmatprep.subr.mxu0 0.0
    %1733 = vmatpush2.msra.mxu0 0.0
    %1734 = vmatprep.subr.mxu0 0.0
    %1735 = vmatpush2.msra.mxu0 0.0
    %1736 = vmatprep.subr.mxu0 0.0
    %1737 = vmatpush2.msra.mxu0 0.0
    %1738 = vmatprep.subr.mxu0 0.0
    %1739 = vmatpush2.msra.mxu0 0.0
    %1740 = vmatprep.subr.mxu0 0.0
    %1741 = vmatpush2.msra.mxu0 0.0
    %1742 = vmatprep.subr.mxu0 0.0
    %1743 = vmatpush2.msra.mxu0 0.0
    %1744 = vmatprep.subr.mxu0 0.0
    %1745 = vmatpush2.msra.mxu0 0.0
    %1746 = vmatprep.subr.mxu0 0.0
    %1747 = vmatpush2.msra.mxu0 0.0
    %1748 = vmatprep.subr.mxu0 0.0
    %1749 = vmatpush2.msra.mxu0 0.0
    %1750 = vmatprep.subr.mxu0 0.0
    %1751 = vmatpush2.msra.mxu0 0.0
    %1752 = vmatprep.subr.mxu0 0.0
    %1753 = vmatpush2.msra.mxu0 0.0
    %1754 = vmatprep.mubr.f32.mxu0 0.0
    %1755 = vmatmul.mubr.f32.gmra.mxu0 %v1688
    %v1756 = vpop.f32.mrf.mxu0
    %v1757 = vadd.f32 0.0, %v1756
    %v1758 = vpop.f32.mrf.mxu0
    %1759 = vdwg.mxu0
    %1760 = vrot.lane.b32.xlu0 %v396, 56
    %v1761 = vpop.permute.xlu0 %1760
    %v1764 = vsel %vm407, %v1531, 0
    %1766 = vmatprep.subr.mxu0 0.0
    %1767 = vmatpush1.msra.mxu0 0.0
    %1768 = vmatprep.subr.mxu0 0.0
    %1769 = vmatpush1.msra.mxu0 0.0
    %1770 = vmatprep.subr.mxu0 0.0
    %1771 = vmatpush1.msra.mxu0 0.0
    %1772 = vmatprep.subr.mxu0 0.0
    %1773 = vmatpush1.msra.mxu0 0.0
    %1774 = vmatprep.subr.mxu0 0.0
    %1775 = vmatpush1.msra.mxu0 0.0
    %1776 = vmatprep.subr.mxu0 0.0
    %1777 = vmatpush1.msra.mxu0 0.0
    %1778 = vmatprep.subr.mxu0 0.0
    %1779 = vmatpush1.msra.mxu0 0.0
    %1780 = vmatprep.subr.mxu0 0.0
    %1781 = vmatpush1.msra.mxu0 0.0
    %1782 = vmatprep.subr.mxu0 0.0
    %1783 = vmatpush1.msra.mxu0 0.0
    %1784 = vmatprep.subr.mxu0 0.0
    %1785 = vmatpush1.msra.mxu0 0.0
    %1786 = vmatprep.subr.mxu0 0.0
    %1787 = vmatpush1.msra.mxu0 0.0
    %1788 = vmatprep.subr.mxu0 0.0
    %1789 = vmatpush1.msra.mxu0 0.0
    %1790 = vmatprep.subr.mxu0 0.0
    %1791 = vmatpush1.msra.mxu0 0.0
    %1792 = vmatprep.subr.mxu0 0.0
    %1793 = vmatpush1.msra.mxu0 0.0
    %1794 = vmatprep.subr.mxu0 0.0
    %1795 = vmatpush1.msra.mxu0 0.0
    %1796 = vmatprep.subr.mxu0 0.0
    %1797 = vmatpush1.msra.mxu0 %v1761
    %1798 = vmatprep.subr.mxu0 0.0
    %1799 = vmatpush2.msra.mxu0 0.0
    %1800 = vmatprep.subr.mxu0 0.0
    %1801 = vmatpush2.msra.mxu0 0.0
    %1802 = vmatprep.subr.mxu0 0.0
    %1803 = vmatpush2.msra.mxu0 0.0
    %1804 = vmatprep.subr.mxu0 0.0
    %1805 = vmatpush2.msra.mxu0 0.0
    %1806 = vmatprep.subr.mxu0 0.0
    %1807 = vmatpush2.msra.mxu0 0.0
    %1808 = vmatprep.subr.mxu0 0.0
    %1809 = vmatpush2.msra.mxu0 0.0
    %1810 = vmatprep.subr.mxu0 0.0
    %1811 = vmatpush2.msra.mxu0 0.0
    %1812 = vmatprep.subr.mxu0 0.0
    %1813 = vmatpush2.msra.mxu0 0.0
    %1814 = vmatprep.subr.mxu0 0.0
    %1815 = vmatpush2.msra.mxu0 0.0
    %1816 = vmatprep.subr.mxu0 0.0
    %1817 = vmatpush2.msra.mxu0 0.0
    %1818 = vmatprep.subr.mxu0 0.0
    %1819 = vmatpush2.msra.mxu0 0.0
    %1820 = vmatprep.subr.mxu0 0.0
    %1821 = vmatpush2.msra.mxu0 0.0
    %1822 = vmatprep.subr.mxu0 0.0
    %1823 = vmatpush2.msra.mxu0 0.0
    %1824 = vmatprep.subr.mxu0 0.0
    %1825 = vmatpush2.msra.mxu0 0.0
    %1826 = vmatprep.subr.mxu0 0.0
    %1827 = vmatpush2.msra.mxu0 0.0
    %1828 = vmatprep.subr.mxu0 0.0
    %1829 = vmatpush2.msra.mxu0 0.0
    %1830 = vmatprep.mubr.f32.mxu0 0.0
    %1831 = vmatmul.mubr.f32.gmra.mxu0 %v1764
    %v1832 = vpop.f32.mrf.mxu0
    %v1833 = vadd.f32 0.0, %v1832
    %v1834 = vpop.f32.mrf.mxu0
    %1835 = vdwg.mxu0
    %v1837 = vsel %vm407, %v1605, 0
    %v1840 = vsel %vm407, %v1681, 0
    %v1843 = vsel %vm407, %v1757, 0
    %v1846 = vsel %vm407, %v1833, 0
    %1848 = vmatprep.subr.mxu0 0.0
    %1849 = vmatpush1.msra.mxu0 0.0
    %1850 = vmatprep.subr.mxu0 0.0
    %1851 = vmatpush1.msra.mxu0 0.0
    %1852 = vmatprep.subr.mxu0 0.0
    %1853 = vmatpush1.msra.mxu0 0.0
    %1854 = vmatprep.subr.mxu0 0.0
    %1855 = vmatpush1.msra.mxu0 0.0
    %1856 = vmatprep.subr.mxu0 0.0
    %1857 = vmatpush1.msra.mxu0 0.0
    %1858 = vmatprep.subr.mxu0 0.0
    %1859 = vmatpush1.msra.mxu0 0.0
    %1860 = vmatprep.subr.mxu0 0.0
    %1861 = vmatpush1.msra.mxu0 0.0
    %1862 = vmatprep.subr.mxu0 0.0
    %1863 = vmatpush1.msra.mxu0 0.0
    %1864 = vmatprep.subr.mxu0 0.0
    %1865 = vmatpush1.msra.mxu0 0.0
    %1866 = vmatprep.subr.mxu0 0.0
    %1867 = vmatpush1.msra.mxu0 0.0
    %1868 = vmatprep.subr.mxu0 0.0
    %1869 = vmatpush1.msra.mxu0 0.0
    %1870 = vmatprep.subr.mxu0 0.0
    %1871 = vmatpush1.msra.mxu0 0.0
    %1872 = vmatprep.subr.mxu0 0.0
    %1873 = vmatpush1.msra.mxu0 0.0
    %1874 = vmatprep.subr.mxu0 0.0
    %1875 = vmatpush1.msra.mxu0 0.0
    %1876 = vmatprep.subr.mxu0 0.0
    %1877 = vmatpush1.msra.mxu0 0.0
    %1878 = vmatprep.subr.mxu0 0.0
    %1879 = vmatpush1.msra.mxu0 %v400
    %1880 = vmatprep.subr.mxu0 0.0
    %1881 = vmatpush2.msra.mxu0 0.0
    %1882 = vmatprep.subr.mxu0 0.0
    %1883 = vmatpush2.msra.mxu0 0.0
    %1884 = vmatprep.subr.mxu0 0.0
    %1885 = vmatpush2.msra.mxu0 0.0
    %1886 = vmatprep.subr.mxu0 0.0
    %1887 = vmatpush2.msra.mxu0 0.0
    %1888 = vmatprep.subr.mxu0 0.0
    %1889 = vmatpush2.msra.mxu0 0.0
    %1890 = vmatprep.subr.mxu0 0.0
    %1891 = vmatpush2.msra.mxu0 0.0
    %1892 = vmatprep.subr.mxu0 0.0
    %1893 = vmatpush2.msra.mxu0 0.0
    %1894 = vmatprep.subr.mxu0 0.0
    %1895 = vmatpush2.msra.mxu0 0.0
    %1896 = vmatprep.subr.mxu0 0.0
    %1897 = vmatpush2.msra.mxu0 0.0
    %1898 = vmatprep.subr.mxu0 0.0
    %1899 = vmatpush2.msra.mxu0 0.0
    %1900 = vmatprep.subr.mxu0 0.0
    %1901 = vmatpush2.msra.mxu0 0.0
    %1902 = vmatprep.subr.mxu0 0.0
    %1903 = vmatpush2.msra.mxu0 0.0
    %1904 = vmatprep.subr.mxu0 0.0
    %1905 = vmatpush2.msra.mxu0 0.0
    %1906 = vmatprep.subr.mxu0 0.0
    %1907 = vmatpush2.msra.mxu0 0.0
    %1908 = vmatprep.subr.mxu0 0.0
    %1909 = vmatpush2.msra.mxu0 0.0
    %1910 = vmatprep.subr.mxu0 0.0
    %1911 = vmatpush2.msra.mxu0 0.0
    %1912 = vmatprep.mubr.f32.mxu0 0.0
    %1913 = vmatmul.mubr.f32.gmra.mxu0 %v1837
    %v1914 = vpop.f32.mrf.mxu0
    %v1915 = vadd.f32 0.0, %v1914
    %v1916 = vpop.f32.mrf.mxu0
    %1917 = vmatprep.mubr.f32.mxu0 0.0
    %1918 = vmatmul.mubr.f32.gmra.mxu0 %v1840
    %v1919 = vpop.f32.mrf.mxu0
    %v1920 = vadd.f32 0.0, %v1919
    %v1921 = vpop.f32.mrf.mxu0
    %1922 = vmatprep.mubr.f32.mxu0 0.0
    %1923 = vmatmul.mubr.f32.gmra.mxu0 %v1843
    %v1924 = vpop.f32.mrf.mxu0
    %v1925 = vadd.f32 0.0, %v1924
    %v1926 = vpop.f32.mrf.mxu0
    %1927 = vmatprep.mubr.f32.mxu0 0.0
    %1928 = vmatmul.mubr.f32.gmra.mxu0 %v1846
    %v1929 = vpop.f32.mrf.mxu0
    %v1930 = vadd.f32 0.0, %v1929
    %v1931 = vpop.f32.mrf.mxu0
    %1932 = vdwg.mxu0
    %v1933 = vadd.f32 %v1168, %v1915
    %v1934 = vadd.f32 %v1169, %v1920
    %v1935 = vadd.f32 %v1170, %v1925
    %v1936 = vadd.f32 %v1171, %v1930
    %1937 = vrot.lane.b32.xlu0 %v381, 112
    %v1938 = vpop.permute.xlu0 %1937
    %1939 = vrot.lane.b32.xlu0 %v381, 80
    %v1940 = vpop.permute.xlu0 %1939
    %v1941 = vsel %vm407, %v1938, 0
    %v1943 = vsel %vm407, %v1940, 0
    %1945 = vmatprep.subr.mxu0 0.0
    %1946 = vmatpush1.xpose.msra.mxu0 0.0
    %1947 = vmatprep.subr.mxu0 0.0
    %1948 = vmatpush1.xpose.msra.mxu0 0.0
    %1949 = vmatprep.subr.mxu0 0.0
    %1950 = vmatpush1.xpose.msra.mxu0 0.0
    %1951 = vmatprep.subr.mxu0 0.0
    %1952 = vmatpush1.xpose.msra.mxu0 0.0
    %1953 = vmatprep.subr.mxu0 0.0
    %1954 = vmatpush1.xpose.msra.mxu0 0.0
    %1955 = vmatprep.subr.mxu0 0.0
    %1956 = vmatpush1.xpose.msra.mxu0 0.0
    %1957 = vmatprep.subr.mxu0 0.0
    %1958 = vmatpush1.xpose.msra.mxu0 0.0
    %1959 = vmatprep.subr.mxu0 0.0
    %1960 = vmatpush1.xpose.msra.mxu0 0.0
    %1961 = vmatprep.subr.mxu0 0.0
    %1962 = vmatpush1.xpose.msra.mxu0 0.0
    %1963 = vmatprep.subr.mxu0 0.0
    %1964 = vmatpush1.xpose.msra.mxu0 0.0
    %1965 = vmatprep.subr.mxu0 0.0
    %1966 = vmatpush1.xpose.msra.mxu0 0.0
    %1967 = vmatprep.subr.mxu0 0.0
    %1968 = vmatpush1.xpose.msra.mxu0 0.0
    %1969 = vmatprep.subr.mxu0 0.0
    %1970 = vmatpush1.xpose.msra.mxu0 0.0
    %1971 = vmatprep.subr.mxu0 0.0
    %1972 = vmatpush1.xpose.msra.mxu0 0.0
    %1973 = vmatprep.subr.mxu0 0.0
    %1974 = vmatpush1.xpose.msra.mxu0 0.0
    %1975 = vmatprep.subr.mxu0 0.0
    %1976 = vmatpush1.xpose.msra.mxu0 %v1943
    %1977 = vmatprep.subr.mxu0 0.0
    %1978 = vmatpush2.xpose.msra.mxu0 0.0
    %1979 = vmatprep.subr.mxu0 0.0
    %1980 = vmatpush2.xpose.msra.mxu0 0.0
    %1981 = vmatprep.subr.mxu0 0.0
    %1982 = vmatpush2.xpose.msra.mxu0 0.0
    %1983 = vmatprep.subr.mxu0 0.0
    %1984 = vmatpush2.xpose.msra.mxu0 0.0
    %1985 = vmatprep.subr.mxu0 0.0
    %1986 = vmatpush2.xpose.msra.mxu0 0.0
    %1987 = vmatprep.subr.mxu0 0.0
    %1988 = vmatpush2.xpose.msra.mxu0 0.0
    %1989 = vmatprep.subr.mxu0 0.0
    %1990 = vmatpush2.xpose.msra.mxu0 0.0
    %1991 = vmatprep.subr.mxu0 0.0
    %1992 = vmatpush2.xpose.msra.mxu0 0.0
    %1993 = vmatprep.subr.mxu0 0.0
    %1994 = vmatpush2.xpose.msra.mxu0 0.0
    %1995 = vmatprep.subr.mxu0 0.0
    %1996 = vmatpush2.xpose.msra.mxu0 0.0
    %1997 = vmatprep.subr.mxu0 0.0
    %1998 = vmatpush2.xpose.msra.mxu0 0.0
    %1999 = vmatprep.subr.mxu0 0.0
    %2000 = vmatpush2.xpose.msra.mxu0 0.0
    %2001 = vmatprep.subr.mxu0 0.0
    %2002 = vmatpush2.xpose.msra.mxu0 0.0
    %2003 = vmatprep.subr.mxu0 0.0
    %2004 = vmatpush2.xpose.msra.mxu0 0.0
    %2005 = vmatprep.subr.mxu0 0.0
    %2006 = vmatpush2.xpose.msra.mxu0 0.0
    %2007 = vmatprep.subr.mxu0 0.0
    %2008 = vmatpush2.xpose.msra.mxu0 0.0
    %2009 = vmatprep.mubr.f32.mxu0 0.0
    %2010 = vmatmul.mubr.f32.gmra.mxu0 %v1941
    %v2011 = vpop.f32.mrf.mxu0
    %v2012 = vadd.f32 0.0, %v2011
    %v2013 = vpop.f32.mrf.mxu0
    %2014 = vdwg.mxu0
    %2015 = vrot.lane.b32.xlu0 %v386, 112
    %v2016 = vpop.permute.xlu0 %2015
    %2017 = vrot.lane.b32.xlu0 %v386, 80
    %v2018 = vpop.permute.xlu0 %2017
    %v2019 = vsel %vm407, %v2016, 0
    %v2021 = vsel %vm407, %v2018, 0
    %2023 = vmatprep.subr.mxu0 0.0
    %2024 = vmatpush1.xpose.msra.mxu0 0.0
    %2025 = vmatprep.subr.mxu0 0.0
    %2026 = vmatpush1.xpose.msra.mxu0 0.0
    %2027 = vmatprep.subr.mxu0 0.0
    %2028 = vmatpush1.xpose.msra.mxu0 0.0
    %2029 = vmatprep.subr.mxu0 0.0
    %2030 = vmatpush1.xpose.msra.mxu0 0.0
    %2031 = vmatprep.subr.mxu0 0.0
    %2032 = vmatpush1.xpose.msra.mxu0 0.0
    %2033 = vmatprep.subr.mxu0 0.0
    %2034 = vmatpush1.xpose.msra.mxu0 0.0
    %2035 = vmatprep.subr.mxu0 0.0
    %2036 = vmatpush1.xpose.msra.mxu0 0.0
    %2037 = vmatprep.subr.mxu0 0.0
    %2038 = vmatpush1.xpose.msra.mxu0 0.0
    %2039 = vmatprep.subr.mxu0 0.0
    %2040 = vmatpush1.xpose.msra.mxu0 0.0
    %2041 = vmatprep.subr.mxu0 0.0
    %2042 = vmatpush1.xpose.msra.mxu0 0.0
    %2043 = vmatprep.subr.mxu0 0.0
    %2044 = vmatpush1.xpose.msra.mxu0 0.0
    %2045 = vmatprep.subr.mxu0 0.0
    %2046 = vmatpush1.xpose.msra.mxu0 0.0
    %2047 = vmatprep.subr.mxu0 0.0
    %2048 = vmatpush1.xpose.msra.mxu0 0.0
    %2049 = vmatprep.subr.mxu0 0.0
    %2050 = vmatpush1.xpose.msra.mxu0 0.0
    %2051 = vmatprep.subr.mxu0 0.0
    %2052 = vmatpush1.xpose.msra.mxu0 0.0
    %2053 = vmatprep.subr.mxu0 0.0
    %2054 = vmatpush1.xpose.msra.mxu0 %v2021
    %2055 = vmatprep.subr.mxu0 0.0
    %2056 = vmatpush2.xpose.msra.mxu0 0.0
    %2057 = vmatprep.subr.mxu0 0.0
    %2058 = vmatpush2.xpose.msra.mxu0 0.0
    %2059 = vmatprep.subr.mxu0 0.0
    %2060 = vmatpush2.xpose.msra.mxu0 0.0
    %2061 = vmatprep.subr.mxu0 0.0
    %2062 = vmatpush2.xpose.msra.mxu0 0.0
    %2063 = vmatprep.subr.mxu0 0.0
    %2064 = vmatpush2.xpose.msra.mxu0 0.0
    %2065 = vmatprep.subr.mxu0 0.0
    %2066 = vmatpush2.xpose.msra.mxu0 0.0
    %2067 = vmatprep.subr.mxu0 0.0
    %2068 = vmatpush2.xpose.msra.mxu0 0.0
    %2069 = vmatprep.subr.mxu0 0.0
    %2070 = vmatpush2.xpose.msra.mxu0 0.0
    %2071 = vmatprep.subr.mxu0 0.0
    %2072 = vmatpush2.xpose.msra.mxu0 0.0
    %2073 = vmatprep.subr.mxu0 0.0
    %2074 = vmatpush2.xpose.msra.mxu0 0.0
    %2075 = vmatprep.subr.mxu0 0.0
    %2076 = vmatpush2.xpose.msra.mxu0 0.0
    %2077 = vmatprep.subr.mxu0 0.0
    %2078 = vmatpush2.xpose.msra.mxu0 0.0
    %2079 = vmatprep.subr.mxu0 0.0
    %2080 = vmatpush2.xpose.msra.mxu0 0.0
    %2081 = vmatprep.subr.mxu0 0.0
    %2082 = vmatpush2.xpose.msra.mxu0 0.0
    %2083 = vmatprep.subr.mxu0 0.0
    %2084 = vmatpush2.xpose.msra.mxu0 0.0
    %2085 = vmatprep.subr.mxu0 0.0
    %2086 = vmatpush2.xpose.msra.mxu0 0.0
    %2087 = vmatprep.mubr.f32.mxu0 0.0
    %2088 = vmatmul.mubr.f32.gmra.mxu0 %v2019
    %v2089 = vpop.f32.mrf.mxu0
    %v2090 = vadd.f32 0.0, %v2089
    %v2091 = vpop.f32.mrf.mxu0
    %2092 = vdwg.mxu0
    %2093 = vrot.lane.b32.xlu0 %v391, 112
    %v2094 = vpop.permute.xlu0 %2093
    %2095 = vrot.lane.b32.xlu0 %v391, 80
    %v2096 = vpop.permute.xlu0 %2095
    %v2097 = vsel %vm407, %v2094, 0
    %v2099 = vsel %vm407, %v2096, 0
    %2101 = vmatprep.subr.mxu0 0.0
    %2102 = vmatpush1.xpose.msra.mxu0 0.0
    %2103 = vmatprep.subr.mxu0 0.0
    %2104 = vmatpush1.xpose.msra.mxu0 0.0
    %2105 = vmatprep.subr.mxu0 0.0
    %2106 = vmatpush1.xpose.msra.mxu0 0.0
    %2107 = vmatprep.subr.mxu0 0.0
    %2108 = vmatpush1.xpose.msra.mxu0 0.0
    %2109 = vmatprep.subr.mxu0 0.0
    %2110 = vmatpush1.xpose.msra.mxu0 0.0
    %2111 = vmatprep.subr.mxu0 0.0
    %2112 = vmatpush1.xpose.msra.mxu0 0.0
    %2113 = vmatprep.subr.mxu0 0.0
    %2114 = vmatpush1.xpose.msra.mxu0 0.0
    %2115 = vmatprep.subr.mxu0 0.0
    %2116 = vmatpush1.xpose.msra.mxu0 0.0
    %2117 = vmatprep.subr.mxu0 0.0
    %2118 = vmatpush1.xpose.msra.mxu0 0.0
    %2119 = vmatprep.subr.mxu0 0.0
    %2120 = vmatpush1.xpose.msra.mxu0 0.0
    %2121 = vmatprep.subr.mxu0 0.0
    %2122 = vmatpush1.xpose.msra.mxu0 0.0
    %2123 = vmatprep.subr.mxu0 0.0
    %2124 = vmatpush1.xpose.msra.mxu0 0.0
    %2125 = vmatprep.subr.mxu0 0.0
    %2126 = vmatpush1.xpose.msra.mxu0 0.0
    %2127 = vmatprep.subr.mxu0 0.0
    %2128 = vmatpush1.xpose.msra.mxu0 0.0
    %2129 = vmatprep.subr.mxu0 0.0
    %2130 = vmatpush1.xpose.msra.mxu0 0.0
    %2131 = vmatprep.subr.mxu0 0.0
    %2132 = vmatpush1.xpose.msra.mxu0 %v2099
    %2133 = vmatprep.subr.mxu0 0.0
    %2134 = vmatpush2.xpose.msra.mxu0 0.0
    %2135 = vmatprep.subr.mxu0 0.0
    %2136 = vmatpush2.xpose.msra.mxu0 0.0
    %2137 = vmatprep.subr.mxu0 0.0
    %2138 = vmatpush2.xpose.msra.mxu0 0.0
    %2139 = vmatprep.subr.mxu0 0.0
    %2140 = vmatpush2.xpose.msra.mxu0 0.0
    %2141 = vmatprep.subr.mxu0 0.0
    %2142 = vmatpush2.xpose.msra.mxu0 0.0
    %2143 = vmatprep.subr.mxu0 0.0
    %2144 = vmatpush2.xpose.msra.mxu0 0.0
    %2145 = vmatprep.subr.mxu0 0.0
    %2146 = vmatpush2.xpose.msra.mxu0 0.0
    %2147 = vmatprep.subr.mxu0 0.0
    %2148 = vmatpush2.xpose.msra.mxu0 0.0
    %2149 = vmatprep.subr.mxu0 0.0
    %2150 = vmatpush2.xpose.msra.mxu0 0.0
    %2151 = vmatprep.subr.mxu0 0.0
    %2152 = vmatpush2.xpose.msra.mxu0 0.0
    %2153 = vmatprep.subr.mxu0 0.0
    %2154 = vmatpush2.xpose.msra.mxu0 0.0
    %2155 = vmatprep.subr.mxu0 0.0
    %2156 = vmatpush2.xpose.msra.mxu0 0.0
    %2157 = vmatprep.subr.mxu0 0.0
    %2158 = vmatpush2.xpose.msra.mxu0 0.0
    %2159 = vmatprep.subr.mxu0 0.0
    %2160 = vmatpush2.xpose.msra.mxu0 0.0
    %2161 = vmatprep.subr.mxu0 0.0
    %2162 = vmatpush2.xpose.msra.mxu0 0.0
    %2163 = vmatprep.subr.mxu0 0.0
    %2164 = vmatpush2.xpose.msra.mxu0 0.0
    %2165 = vmatprep.mubr.f32.mxu0 0.0
    %2166 = vmatmul.mubr.f32.gmra.mxu0 %v2097
    %v2167 = vpop.f32.mrf.mxu0
    %v2168 = vadd.f32 0.0, %v2167
    %v2169 = vpop.f32.mrf.mxu0
    %2170 = vdwg.mxu0
    %2171 = vrot.lane.b32.xlu0 %v396, 112
    %v2172 = vpop.permute.xlu0 %2171
    %2173 = vrot.lane.b32.xlu0 %v396, 80
    %v2174 = vpop.permute.xlu0 %2173
    %v2175 = vsel %vm407, %v2172, 0
    %v2177 = vsel %vm407, %v2174, 0
    %2179 = vmatprep.subr.mxu0 0.0
    %2180 = vmatpush1.xpose.msra.mxu0 0.0
    %2181 = vmatprep.subr.mxu0 0.0
    %2182 = vmatpush1.xpose.msra.mxu0 0.0
    %2183 = vmatprep.subr.mxu0 0.0
    %2184 = vmatpush1.xpose.msra.mxu0 0.0
    %2185 = vmatprep.subr.mxu0 0.0
    %2186 = vmatpush1.xpose.msra.mxu0 0.0
    %2187 = vmatprep.subr.mxu0 0.0
    %2188 = vmatpush1.xpose.msra.mxu0 0.0
    %2189 = vmatprep.subr.mxu0 0.0
    %2190 = vmatpush1.xpose.msra.mxu0 0.0
    %2191 = vmatprep.subr.mxu0 0.0
    %2192 = vmatpush1.xpose.msra.mxu0 0.0
    %2193 = vmatprep.subr.mxu0 0.0
    %2194 = vmatpush1.xpose.msra.mxu0 0.0
    %2195 = vmatprep.subr.mxu0 0.0
    %2196 = vmatpush1.xpose.msra.mxu0 0.0
    %2197 = vmatprep.subr.mxu0 0.0
    %2198 = vmatpush1.xpose.msra.mxu0 0.0
    %2199 = vmatprep.subr.mxu0 0.0
    %2200 = vmatpush1.xpose.msra.mxu0 0.0
    %2201 = vmatprep.subr.mxu0 0.0
    %2202 = vmatpush1.xpose.msra.mxu0 0.0
    %2203 = vmatprep.subr.mxu0 0.0
    %2204 = vmatpush1.xpose.msra.mxu0 0.0
    %2205 = vmatprep.subr.mxu0 0.0
    %2206 = vmatpush1.xpose.msra.mxu0 0.0
    %2207 = vmatprep.subr.mxu0 0.0
    %2208 = vmatpush1.xpose.msra.mxu0 0.0
    %2209 = vmatprep.subr.mxu0 0.0
    %2210 = vmatpush1.xpose.msra.mxu0 %v2177
    %2211 = vmatprep.subr.mxu0 0.0
    %2212 = vmatpush2.xpose.msra.mxu0 0.0
    %2213 = vmatprep.subr.mxu0 0.0
    %2214 = vmatpush2.xpose.msra.mxu0 0.0
    %2215 = vmatprep.subr.mxu0 0.0
    %2216 = vmatpush2.xpose.msra.mxu0 0.0
    %2217 = vmatprep.subr.mxu0 0.0
    %2218 = vmatpush2.xpose.msra.mxu0 0.0
    %2219 = vmatprep.subr.mxu0 0.0
    %2220 = vmatpush2.xpose.msra.mxu0 0.0
    %2221 = vmatprep.subr.mxu0 0.0
    %2222 = vmatpush2.xpose.msra.mxu0 0.0
    %2223 = vmatprep.subr.mxu0 0.0
    %2224 = vmatpush2.xpose.msra.mxu0 0.0
    %2225 = vmatprep.subr.mxu0 0.0
    %2226 = vmatpush2.xpose.msra.mxu0 0.0
    %2227 = vmatprep.subr.mxu0 0.0
    %2228 = vmatpush2.xpose.msra.mxu0 0.0
    %2229 = vmatprep.subr.mxu0 0.0
    %2230 = vmatpush2.xpose.msra.mxu0 0.0
    %2231 = vmatprep.subr.mxu0 0.0
    %2232 = vmatpush2.xpose.msra.mxu0 0.0
    %2233 = vmatprep.subr.mxu0 0.0
    %2234 = vmatpush2.xpose.msra.mxu0 0.0
    %2235 = vmatprep.subr.mxu0 0.0
    %2236 = vmatpush2.xpose.msra.mxu0 0.0
    %2237 = vmatprep.subr.mxu0 0.0
    %2238 = vmatpush2.xpose.msra.mxu0 0.0
    %2239 = vmatprep.subr.mxu0 0.0
    %2240 = vmatpush2.xpose.msra.mxu0 0.0
    %2241 = vmatprep.subr.mxu0 0.0
    %2242 = vmatpush2.xpose.msra.mxu0 0.0
    %2243 = vmatprep.mubr.f32.mxu0 0.0
    %2244 = vmatmul.mubr.f32.gmra.mxu0 %v2175
    %v2245 = vpop.f32.mrf.mxu0
    %v2246 = vadd.f32 0.0, %v2245
    %v2247 = vpop.f32.mrf.mxu0
    %2248 = vdwg.mxu0
    %v2249 = vmul.f32 %v2012, 0.35355338
    %v2250 = vmul.f32 %v2090, 0.35355338
    %v2251 = vmul.f32 %v2168, 0.35355338
    %v2252 = vmul.f32 %v2246, 0.35355338
    %v2253 = vsel %vm407, %v2249, -inf
    %2254 = vmax.xlane.f32.xlu0 %v2253
    %v2255 = vpop.xlane.xlu0 %2254
    %v2256 = vsel %vm407, %v2250, -inf
    %2257 = vmax.xlane.f32.xlu0 %v2256
    %v2258 = vpop.xlane.xlu0 %2257
    %v2259 = vsel %vm407, %v2251, -inf
    %2260 = vmax.xlane.f32.xlu0 %v2259
    %v2261 = vpop.xlane.xlu0 %2260
    %v2262 = vsel %vm407, %v2252, -inf
    %2263 = vmax.xlane.f32.xlu0 %v2262
    %v2264 = vpop.xlane.xlu0 %2263
    %v2265 = vsub.f32 %v2249, %v2255
    %v2266 = vsub.f32 %v2250, %v2258
    %v2267 = vsub.f32 %v2251, %v2261
    %v2268 = vsub.f32 %v2252, %v2264
    %v2269 = vmul.f32 %v2265, 1.442695
    %v2270 = vpow.pop %v2269
    %v2271 = vmul.f32 %v2266, 1.442695
    %v2272 = vpow.pop %v2271
    %v2273 = vmul.f32 %v2267, 1.442695
    %v2274 = vpow.pop %v2273
    %v2275 = vmul.f32 %v2268, 1.442695
    %v2276 = vpow.pop %v2275
    %v2277 = vsel %vm407, %v2270, 0.0
    %2278 = vadd.xlane.f32.xlu0 %v2277
    %v2279 = vpop.xlane.xlu0 %2278
    %v2280 = vsel %vm407, %v2272, 0.0
    %2281 = vadd.xlane.f32.xlu0 %v2280
    %v2282 = vpop.xlane.xlu0 %2281
    %v2283 = vsel %vm407, %v2274, 0.0
    %2284 = vadd.xlane.f32.xlu0 %v2283
    %v2285 = vpop.xlane.xlu0 %2284
    %v2286 = vsel %vm407, %v2276, 0.0
    %2287 = vadd.xlane.f32.xlu0 %v2286
    %v2288 = vpop.xlane.xlu0 %2287
    %v2289 = vrcp.pop %v2279
    %v2290 = vrcp.pop %v2282
    %v2291 = vrcp.pop %v2285
    %v2292 = vrcp.pop %v2288
    %v2293 = vmul.f32 %v2270, %v2289
    %v2294 = vmul.f32 %v2272, %v2290
    %v2295 = vmul.f32 %v2274, %v2291
    %v2296 = vmul.f32 %v2276, %v2292
    %2297 = vrot.lane.b32.xlu0 %v381, 48
    %v2298 = vpop.permute.xlu0 %2297
    %v2301 = vsel %vm407, %v2293, 0
    %2303 = vmatprep.subr.mxu0 0.0
    %2304 = vmatpush1.msra.mxu0 0.0
    %2305 = vmatprep.subr.mxu0 0.0
    %2306 = vmatpush1.msra.mxu0 0.0
    %2307 = vmatprep.subr.mxu0 0.0
    %2308 = vmatpush1.msra.mxu0 0.0
    %2309 = vmatprep.subr.mxu0 0.0
    %2310 = vmatpush1.msra.mxu0 0.0
    %2311 = vmatprep.subr.mxu0 0.0
    %2312 = vmatpush1.msra.mxu0 0.0
    %2313 = vmatprep.subr.mxu0 0.0
    %2314 = vmatpush1.msra.mxu0 0.0
    %2315 = vmatprep.subr.mxu0 0.0
    %2316 = vmatpush1.msra.mxu0 0.0
    %2317 = vmatprep.subr.mxu0 0.0
    %2318 = vmatpush1.msra.mxu0 0.0
    %2319 = vmatprep.subr.mxu0 0.0
    %2320 = vmatpush1.msra.mxu0 0.0
    %2321 = vmatprep.subr.mxu0 0.0
    %2322 = vmatpush1.msra.mxu0 0.0
    %2323 = vmatprep.subr.mxu0 0.0
    %2324 = vmatpush1.msra.mxu0 0.0
    %2325 = vmatprep.subr.mxu0 0.0
    %2326 = vmatpush1.msra.mxu0 0.0
    %2327 = vmatprep.subr.mxu0 0.0
    %2328 = vmatpush1.msra.mxu0 0.0
    %2329 = vmatprep.subr.mxu0 0.0
    %2330 = vmatpush1.msra.mxu0 0.0
    %2331 = vmatprep.subr.mxu0 0.0
    %2332 = vmatpush1.msra.mxu0 0.0
    %2333 = vmatprep.subr.mxu0 0.0
    %2334 = vmatpush1.msra.mxu0 %v2298
    %2335 = vmatprep.subr.mxu0 0.0
    %2336 = vmatpush2.msra.mxu0 0.0
    %2337 = vmatprep.subr.mxu0 0.0
    %2338 = vmatpush2.msra.mxu0 0.0
    %2339 = vmatprep.subr.mxu0 0.0
    %2340 = vmatpush2.msra.mxu0 0.0
    %2341 = vmatprep.subr.mxu0 0.0
    %2342 = vmatpush2.msra.mxu0 0.0
    %2343 = vmatprep.subr.mxu0 0.0
    %2344 = vmatpush2.msra.mxu0 0.0
    %2345 = vmatprep.subr.mxu0 0.0
    %2346 = vmatpush2.msra.mxu0 0.0
    %2347 = vmatprep.subr.mxu0 0.0
    %2348 = vmatpush2.msra.mxu0 0.0
    %2349 = vmatprep.subr.mxu0 0.0
    %2350 = vmatpush2.msra.mxu0 0.0
    %2351 = vmatprep.subr.mxu0 0.0
    %2352 = vmatpush2.msra.mxu0 0.0
    %2353 = vmatprep.subr.mxu0 0.0
    %2354 = vmatpush2.msra.mxu0 0.0
    %2355 = vmatprep.subr.mxu0 0.0
    %2356 = vmatpush2.msra.mxu0 0.0
    %2357 = vmatprep.subr.mxu0 0.0
    %2358 = vmatpush2.msra.mxu0 0.0
    %2359 = vmatprep.subr.mxu0 0.0
    %2360 = vmatpush2.msra.mxu0 0.0
    %2361 = vmatprep.subr.mxu0 0.0
    %2362 = vmatpush2.msra.mxu0 0.0
    %2363 = vmatprep.subr.mxu0 0.0
    %2364 = vmatpush2.msra.mxu0 0.0
    %2365 = vmatprep.subr.mxu0 0.0
    %2366 = vmatpush2.msra.mxu0 0.0
    %2367 = vmatprep.mubr.f32.mxu0 0.0
    %2368 = vmatmul.mubr.f32.gmra.mxu0 %v2301
    %v2369 = vpop.f32.mrf.mxu0
    %v2370 = vadd.f32 0.0, %v2369
    %v2371 = vpop.f32.mrf.mxu0
    %2372 = vdwg.mxu0
    %2373 = vrot.lane.b32.xlu0 %v386, 48
    %v2374 = vpop.permute.xlu0 %2373
    %v2377 = vsel %vm407, %v2294, 0
    %2379 = vmatprep.subr.mxu0 0.0
    %2380 = vmatpush1.msra.mxu0 0.0
    %2381 = vmatprep.subr.mxu0 0.0
    %2382 = vmatpush1.msra.mxu0 0.0
    %2383 = vmatprep.subr.mxu0 0.0
    %2384 = vmatpush1.msra.mxu0 0.0
    %2385 = vmatprep.subr.mxu0 0.0
    %2386 = vmatpush1.msra.mxu0 0.0
    %2387 = vmatprep.subr.mxu0 0.0
    %2388 = vmatpush1.msra.mxu0 0.0
    %2389 = vmatprep.subr.mxu0 0.0
    %2390 = vmatpush1.msra.mxu0 0.0
    %2391 = vmatprep.subr.mxu0 0.0
    %2392 = vmatpush1.msra.mxu0 0.0
    %2393 = vmatprep.subr.mxu0 0.0
    %2394 = vmatpush1.msra.mxu0 0.0
    %2395 = vmatprep.subr.mxu0 0.0
    %2396 = vmatpush1.msra.mxu0 0.0
    %2397 = vmatprep.subr.mxu0 0.0
    %2398 = vmatpush1.msra.mxu0 0.0
    %2399 = vmatprep.subr.mxu0 0.0
    %2400 = vmatpush1.msra.mxu0 0.0
    %2401 = vmatprep.subr.mxu0 0.0
    %2402 = vmatpush1.msra.mxu0 0.0
    %2403 = vmatprep.subr.mxu0 0.0
    %2404 = vmatpush1.msra.mxu0 0.0
    %2405 = vmatprep.subr.mxu0 0.0
    %2406 = vmatpush1.msra.mxu0 0.0
    %2407 = vmatprep.subr.mxu0 0.0
    %2408 = vmatpush1.msra.mxu0 0.0
    %2409 = vmatprep.subr.mxu0 0.0
    %2410 = vmatpush1.msra.mxu0 %v2374
    %2411 = vmatprep.subr.mxu0 0.0
    %2412 = vmatpush2.msra.mxu0 0.0
    %2413 = vmatprep.subr.mxu0 0.0
    %2414 = vmatpush2.msra.mxu0 0.0
    %2415 = vmatprep.subr.mxu0 0.0
    %2416 = vmatpush2.msra.mxu0 0.0
    %2417 = vmatprep.subr.mxu0 0.0
    %2418 = vmatpush2.msra.mxu0 0.0
    %2419 = vmatprep.subr.mxu0 0.0
    %2420 = vmatpush2.msra.mxu0 0.0
    %2421 = vmatprep.subr.mxu0 0.0
    %2422 = vmatpush2.msra.mxu0 0.0
    %2423 = vmatprep.subr.mxu0 0.0
    %2424 = vmatpush2.msra.mxu0 0.0
    %2425 = vmatprep.subr.mxu0 0.0
    %2426 = vmatpush2.msra.mxu0 0.0
    %2427 = vmatprep.subr.mxu0 0.0
    %2428 = vmatpush2.msra.mxu0 0.0
    %2429 = vmatprep.subr.mxu0 0.0
    %2430 = vmatpush2.msra.mxu0 0.0
    %2431 = vmatprep.subr.mxu0 0.0
    %2432 = vmatpush2.msra.mxu0 0.0
    %2433 = vmatprep.subr.mxu0 0.0
    %2434 = vmatpush2.msra.mxu0 0.0
    %2435 = vmatprep.subr.mxu0 0.0
    %2436 = vmatpush2.msra.mxu0 0.0
    %2437 = vmatprep.subr.mxu0 0.0
    %2438 = vmatpush2.msra.mxu0 0.0
    %2439 = vmatprep.subr.mxu0 0.0
    %2440 = vmatpush2.msra.mxu0 0.0
    %2441 = vmatprep.subr.mxu0 0.0
    %2442 = vmatpush2.msra.mxu0 0.0
    %2443 = vmatprep.mubr.f32.mxu0 0.0
    %2444 = vmatmul.mubr.f32.gmra.mxu0 %v2377
    %v2445 = vpop.f32.mrf.mxu0
    %v2446 = vadd.f32 0.0, %v2445
    %v2447 = vpop.f32.mrf.mxu0
    %2448 = vdwg.mxu0
    %2449 = vrot.lane.b32.xlu0 %v391, 48
    %v2450 = vpop.permute.xlu0 %2449
    %v2453 = vsel %vm407, %v2295, 0
    %2455 = vmatprep.subr.mxu0 0.0
    %2456 = vmatpush1.msra.mxu0 0.0
    %2457 = vmatprep.subr.mxu0 0.0
    %2458 = vmatpush1.msra.mxu0 0.0
    %2459 = vmatprep.subr.mxu0 0.0
    %2460 = vmatpush1.msra.mxu0 0.0
    %2461 = vmatprep.subr.mxu0 0.0
    %2462 = vmatpush1.msra.mxu0 0.0
    %2463 = vmatprep.subr.mxu0 0.0
    %2464 = vmatpush1.msra.mxu0 0.0
    %2465 = vmatprep.subr.mxu0 0.0
    %2466 = vmatpush1.msra.mxu0 0.0
    %2467 = vmatprep.subr.mxu0 0.0
    %2468 = vmatpush1.msra.mxu0 0.0
    %2469 = vmatprep.subr.mxu0 0.0
    %2470 = vmatpush1.msra.mxu0 0.0
    %2471 = vmatprep.subr.mxu0 0.0
    %2472 = vmatpush1.msra.mxu0 0.0
    %2473 = vmatprep.subr.mxu0 0.0
    %2474 = vmatpush1.msra.mxu0 0.0
    %2475 = vmatprep.subr.mxu0 0.0
    %2476 = vmatpush1.msra.mxu0 0.0
    %2477 = vmatprep.subr.mxu0 0.0
    %2478 = vmatpush1.msra.mxu0 0.0
    %2479 = vmatprep.subr.mxu0 0.0
    %2480 = vmatpush1.msra.mxu0 0.0
    %2481 = vmatprep.subr.mxu0 0.0
    %2482 = vmatpush1.msra.mxu0 0.0
    %2483 = vmatprep.subr.mxu0 0.0
    %2484 = vmatpush1.msra.mxu0 0.0
    %2485 = vmatprep.subr.mxu0 0.0
    %2486 = vmatpush1.msra.mxu0 %v2450
    %2487 = vmatprep.subr.mxu0 0.0
    %2488 = vmatpush2.msra.mxu0 0.0
    %2489 = vmatprep.subr.mxu0 0.0
    %2490 = vmatpush2.msra.mxu0 0.0
    %2491 = vmatprep.subr.mxu0 0.0
    %2492 = vmatpush2.msra.mxu0 0.0
    %2493 = vmatprep.subr.mxu0 0.0
    %2494 = vmatpush2.msra.mxu0 0.0
    %2495 = vmatprep.subr.mxu0 0.0
    %2496 = vmatpush2.msra.mxu0 0.0
    %2497 = vmatprep.subr.mxu0 0.0
    %2498 = vmatpush2.msra.mxu0 0.0
    %2499 = vmatprep.subr.mxu0 0.0
    %2500 = vmatpush2.msra.mxu0 0.0
    %2501 = vmatprep.subr.mxu0 0.0
    %2502 = vmatpush2.msra.mxu0 0.0
    %2503 = vmatprep.subr.mxu0 0.0
    %2504 = vmatpush2.msra.mxu0 0.0
    %2505 = vmatprep.subr.mxu0 0.0
    %2506 = vmatpush2.msra.mxu0 0.0
    %2507 = vmatprep.subr.mxu0 0.0
    %2508 = vmatpush2.msra.mxu0 0.0
    %2509 = vmatprep.subr.mxu0 0.0
    %2510 = vmatpush2.msra.mxu0 0.0
    %2511 = vmatprep.subr.mxu0 0.0
    %2512 = vmatpush2.msra.mxu0 0.0
    %2513 = vmatprep.subr.mxu0 0.0
    %2514 = vmatpush2.msra.mxu0 0.0
    %2515 = vmatprep.subr.mxu0 0.0
    %2516 = vmatpush2.msra.mxu0 0.0
    %2517 = vmatprep.subr.mxu0 0.0
    %2518 = vmatpush2.msra.mxu0 0.0
    %2519 = vmatprep.mubr.f32.mxu0 0.0
    %2520 = vmatmul.mubr.f32.gmra.mxu0 %v2453
    %v2521 = vpop.f32.mrf.mxu0
    %v2522 = vadd.f32 0.0, %v2521
    %v2523 = vpop.f32.mrf.mxu0
    %2524 = vdwg.mxu0
    %2525 = vrot.lane.b32.xlu0 %v396, 48
    %v2526 = vpop.permute.xlu0 %2525
    %v2529 = vsel %vm407, %v2296, 0
    %2531 = vmatprep.subr.mxu0 0.0
    %2532 = vmatpush1.msra.mxu0 0.0
    %2533 = vmatprep.subr.mxu0 0.0
    %2534 = vmatpush1.msra.mxu0 0.0
    %2535 = vmatprep.subr.mxu0 0.0
    %2536 = vmatpush1.msra.mxu0 0.0
    %2537 = vmatprep.subr.mxu0 0.0
    %2538 = vmatpush1.msra.mxu0 0.0
    %2539 = vmatprep.subr.mxu0 0.0
    %2540 = vmatpush1.msra.mxu0 0.0
    %2541 = vmatprep.subr.mxu0 0.0
    %2542 = vmatpush1.msra.mxu0 0.0
    %2543 = vmatprep.subr.mxu0 0.0
    %2544 = vmatpush1.msra.mxu0 0.0
    %2545 = vmatprep.subr.mxu0 0.0
    %2546 = vmatpush1.msra.mxu0 0.0
    %2547 = vmatprep.subr.mxu0 0.0
    %2548 = vmatpush1.msra.mxu0 0.0
    %2549 = vmatprep.subr.mxu0 0.0
    %2550 = vmatpush1.msra.mxu0 0.0
    %2551 = vmatprep.subr.mxu0 0.0
    %2552 = vmatpush1.msra.mxu0 0.0
    %2553 = vmatprep.subr.mxu0 0.0
    %2554 = vmatpush1.msra.mxu0 0.0
    %2555 = vmatprep.subr.mxu0 0.0
    %2556 = vmatpush1.msra.mxu0 0.0
    %2557 = vmatprep.subr.mxu0 0.0
    %2558 = vmatpush1.msra.mxu0 0.0
    %2559 = vmatprep.subr.mxu0 0.0
    %2560 = vmatpush1.msra.mxu0 0.0
    %2561 = vmatprep.subr.mxu0 0.0
    %2562 = vmatpush1.msra.mxu0 %v2526
    %2563 = vmatprep.subr.mxu0 0.0
    %2564 = vmatpush2.msra.mxu0 0.0
    %2565 = vmatprep.subr.mxu0 0.0
    %2566 = vmatpush2.msra.mxu0 0.0
    %2567 = vmatprep.subr.mxu0 0.0
    %2568 = vmatpush2.msra.mxu0 0.0
    %2569 = vmatprep.subr.mxu0 0.0
    %2570 = vmatpush2.msra.mxu0 0.0
    %2571 = vmatprep.subr.mxu0 0.0
    %2572 = vmatpush2.msra.mxu0 0.0
    %2573 = vmatprep.subr.mxu0 0.0
    %2574 = vmatpush2.msra.mxu0 0.0
    %2575 = vmatprep.subr.mxu0 0.0
    %2576 = vmatpush2.msra.mxu0 0.0
    %2577 = vmatprep.subr.mxu0 0.0
    %2578 = vmatpush2.msra.mxu0 0.0
    %2579 = vmatprep.subr.mxu0 0.0
    %2580 = vmatpush2.msra.mxu0 0.0
    %2581 = vmatprep.subr.mxu0 0.0
    %2582 = vmatpush2.msra.mxu0 0.0
    %2583 = vmatprep.subr.mxu0 0.0
    %2584 = vmatpush2.msra.mxu0 0.0
    %2585 = vmatprep.subr.mxu0 0.0
    %2586 = vmatpush2.msra.mxu0 0.0
    %2587 = vmatprep.subr.mxu0 0.0
    %2588 = vmatpush2.msra.mxu0 0.0
    %2589 = vmatprep.subr.mxu0 0.0
    %2590 = vmatpush2.msra.mxu0 0.0
    %2591 = vmatprep.subr.mxu0 0.0
    %2592 = vmatpush2.msra.mxu0 0.0
    %2593 = vmatprep.subr.mxu0 0.0
    %2594 = vmatpush2.msra.mxu0 0.0
    %2595 = vmatprep.mubr.f32.mxu0 0.0
    %2596 = vmatmul.mubr.f32.gmra.mxu0 %v2529
    %v2597 = vpop.f32.mrf.mxu0
    %v2598 = vadd.f32 0.0, %v2597
    %v2599 = vpop.f32.mrf.mxu0
    %2600 = vdwg.mxu0
    %v2602 = vsel %vm407, %v2370, 0
    %v2605 = vsel %vm407, %v2446, 0
    %v2608 = vsel %vm407, %v2522, 0
    %v2611 = vsel %vm407, %v2598, 0
    %2613 = vmatprep.subr.mxu0 0.0
    %2614 = vmatpush1.msra.mxu0 0.0
    %2615 = vmatprep.subr.mxu0 0.0
    %2616 = vmatpush1.msra.mxu0 0.0
    %2617 = vmatprep.subr.mxu0 0.0
    %2618 = vmatpush1.msra.mxu0 0.0
    %2619 = vmatprep.subr.mxu0 0.0
    %2620 = vmatpush1.msra.mxu0 0.0
    %2621 = vmatprep.subr.mxu0 0.0
    %2622 = vmatpush1.msra.mxu0 0.0
    %2623 = vmatprep.subr.mxu0 0.0
    %2624 = vmatpush1.msra.mxu0 0.0
    %2625 = vmatprep.subr.mxu0 0.0
    %2626 = vmatpush1.msra.mxu0 0.0
    %2627 = vmatprep.subr.mxu0 0.0
    %2628 = vmatpush1.msra.mxu0 0.0
    %2629 = vmatprep.subr.mxu0 0.0
    %2630 = vmatpush1.msra.mxu0 0.0
    %2631 = vmatprep.subr.mxu0 0.0
    %2632 = vmatpush1.msra.mxu0 0.0
    %2633 = vmatprep.subr.mxu0 0.0
    %2634 = vmatpush1.msra.mxu0 0.0
    %2635 = vmatprep.subr.mxu0 0.0
    %2636 = vmatpush1.msra.mxu0 0.0
    %2637 = vmatprep.subr.mxu0 0.0
    %2638 = vmatpush1.msra.mxu0 0.0
    %2639 = vmatprep.subr.mxu0 0.0
    %2640 = vmatpush1.msra.mxu0 0.0
    %2641 = vmatprep.subr.mxu0 0.0
    %2642 = vmatpush1.msra.mxu0 0.0
    %2643 = vmatprep.subr.mxu0 0.0
    %2644 = vmatpush1.msra.mxu0 %v401
    %2645 = vmatprep.subr.mxu0 0.0
    %2646 = vmatpush2.msra.mxu0 0.0
    %2647 = vmatprep.subr.mxu0 0.0
    %2648 = vmatpush2.msra.mxu0 0.0
    %2649 = vmatprep.subr.mxu0 0.0
    %2650 = vmatpush2.msra.mxu0 0.0
    %2651 = vmatprep.subr.mxu0 0.0
    %2652 = vmatpush2.msra.mxu0 0.0
    %2653 = vmatprep.subr.mxu0 0.0
    %2654 = vmatpush2.msra.mxu0 0.0
    %2655 = vmatprep.subr.mxu0 0.0
    %2656 = vmatpush2.msra.mxu0 0.0
    %2657 = vmatprep.subr.mxu0 0.0
    %2658 = vmatpush2.msra.mxu0 0.0
    %2659 = vmatprep.subr.mxu0 0.0
    %2660 = vmatpush2.msra.mxu0 0.0
    %2661 = vmatprep.subr.mxu0 0.0
    %2662 = vmatpush2.msra.mxu0 0.0
    %2663 = vmatprep.subr.mxu0 0.0
    %2664 = vmatpush2.msra.mxu0 0.0
    %2665 = vmatprep.subr.mxu0 0.0
    %2666 = vmatpush2.msra.mxu0 0.0
    %2667 = vmatprep.subr.mxu0 0.0
    %2668 = vmatpush2.msra.mxu0 0.0
    %2669 = vmatprep.subr.mxu0 0.0
    %2670 = vmatpush2.msra.mxu0 0.0
    %2671 = vmatprep.subr.mxu0 0.0
    %2672 = vmatpush2.msra.mxu0 0.0
    %2673 = vmatprep.subr.mxu0 0.0
    %2674 = vmatpush2.msra.mxu0 0.0
    %2675 = vmatprep.subr.mxu0 0.0
    %2676 = vmatpush2.msra.mxu0 0.0
    %2677 = vmatprep.mubr.f32.mxu0 0.0
    %2678 = vmatmul.mubr.f32.gmra.mxu0 %v2602
    %v2679 = vpop.f32.mrf.mxu0
    %v2680 = vadd.f32 0.0, %v2679
    %v2681 = vpop.f32.mrf.mxu0
    %2682 = vmatprep.mubr.f32.mxu0 0.0
    %2683 = vmatmul.mubr.f32.gmra.mxu0 %v2605
    %v2684 = vpop.f32.mrf.mxu0
    %v2685 = vadd.f32 0.0, %v2684
    %v2686 = vpop.f32.mrf.mxu0
    %2687 = vmatprep.mubr.f32.mxu0 0.0
    %2688 = vmatmul.mubr.f32.gmra.mxu0 %v2608
    %v2689 = vpop.f32.mrf.mxu0
    %v2690 = vadd.f32 0.0, %v2689
    %v2691 = vpop.f32.mrf.mxu0
    %2692 = vmatprep.mubr.f32.mxu0 0.0
    %2693 = vmatmul.mubr.f32.gmra.mxu0 %v2611
    %v2694 = vpop.f32.mrf.mxu0
    %v2695 = vadd.f32 0.0, %v2694
    %v2696 = vpop.f32.mrf.mxu0
    %2697 = vdwg.mxu0
    %v2698 = vadd.f32 %v1933, %v2680
    %v2699 = vadd.f32 %v1934, %v2685
    %v2700 = vadd.f32 %v1935, %v2690
    %v2701 = vadd.f32 %v1936, %v2695
    %2702 = vrot.lane.b32.xlu0 %v381, 104
    %v2703 = vpop.permute.xlu0 %2702
    %2704 = vrot.lane.b32.xlu0 %v381, 72
    %v2705 = vpop.permute.xlu0 %2704
    %v2706 = vsel %vm407, %v2703, 0
    %v2708 = vsel %vm407, %v2705, 0
    %2710 = vmatprep.subr.mxu0 0.0
    %2711 = vmatpush1.xpose.msra.mxu0 0.0
    %2712 = vmatprep.subr.mxu0 0.0
    %2713 = vmatpush1.xpose.msra.mxu0 0.0
    %2714 = vmatprep.subr.mxu0 0.0
    %2715 = vmatpush1.xpose.msra.mxu0 0.0
    %2716 = vmatprep.subr.mxu0 0.0
    %2717 = vmatpush1.xpose.msra.mxu0 0.0
    %2718 = vmatprep.subr.mxu0 0.0
    %2719 = vmatpush1.xpose.msra.mxu0 0.0
    %2720 = vmatprep.subr.mxu0 0.0
    %2721 = vmatpush1.xpose.msra.mxu0 0.0
    %2722 = vmatprep.subr.mxu0 0.0
    %2723 = vmatpush1.xpose.msra.mxu0 0.0
    %2724 = vmatprep.subr.mxu0 0.0
    %2725 = vmatpush1.xpose.msra.mxu0 0.0
    %2726 = vmatprep.subr.mxu0 0.0
    %2727 = vmatpush1.xpose.msra.mxu0 0.0
    %2728 = vmatprep.subr.mxu0 0.0
    %2729 = vmatpush1.xpose.msra.mxu0 0.0
    %2730 = vmatprep.subr.mxu0 0.0
    %2731 = vmatpush1.xpose.msra.mxu0 0.0
    %2732 = vmatprep.subr.mxu0 0.0
    %2733 = vmatpush1.xpose.msra.mxu0 0.0
    %2734 = vmatprep.subr.mxu0 0.0
    %2735 = vmatpush1.xpose.msra.mxu0 0.0
    %2736 = vmatprep.subr.mxu0 0.0
    %2737 = vmatpush1.xpose.msra.mxu0 0.0
    %2738 = vmatprep.subr.mxu0 0.0
    %2739 = vmatpush1.xpose.msra.mxu0 0.0
    %2740 = vmatprep.subr.mxu0 0.0
    %2741 = vmatpush1.xpose.msra.mxu0 %v2708
    %2742 = vmatprep.subr.mxu0 0.0
    %2743 = vmatpush2.xpose.msra.mxu0 0.0
    %2744 = vmatprep.subr.mxu0 0.0
    %2745 = vmatpush2.xpose.msra.mxu0 0.0
    %2746 = vmatprep.subr.mxu0 0.0
    %2747 = vmatpush2.xpose.msra.mxu0 0.0
    %2748 = vmatprep.subr.mxu0 0.0
    %2749 = vmatpush2.xpose.msra.mxu0 0.0
    %2750 = vmatprep.subr.mxu0 0.0
    %2751 = vmatpush2.xpose.msra.mxu0 0.0
    %2752 = vmatprep.subr.mxu0 0.0
    %2753 = vmatpush2.xpose.msra.mxu0 0.0
    %2754 = vmatprep.subr.mxu0 0.0
    %2755 = vmatpush2.xpose.msra.mxu0 0.0
    %2756 = vmatprep.subr.mxu0 0.0
    %2757 = vmatpush2.xpose.msra.mxu0 0.0
    %2758 = vmatprep.subr.mxu0 0.0
    %2759 = vmatpush2.xpose.msra.mxu0 0.0
    %2760 = vmatprep.subr.mxu0 0.0
    %2761 = vmatpush2.xpose.msra.mxu0 0.0
    %2762 = vmatprep.subr.mxu0 0.0
    %2763 = vmatpush2.xpose.msra.mxu0 0.0
    %2764 = vmatprep.subr.mxu0 0.0
    %2765 = vmatpush2.xpose.msra.mxu0 0.0
    %2766 = vmatprep.subr.mxu0 0.0
    %2767 = vmatpush2.xpose.msra.mxu0 0.0
    %2768 = vmatprep.subr.mxu0 0.0
    %2769 = vmatpush2.xpose.msra.mxu0 0.0
    %2770 = vmatprep.subr.mxu0 0.0
    %2771 = vmatpush2.xpose.msra.mxu0 0.0
    %2772 = vmatprep.subr.mxu0 0.0
    %2773 = vmatpush2.xpose.msra.mxu0 0.0
    %2774 = vmatprep.mubr.f32.mxu0 0.0
    %2775 = vmatmul.mubr.f32.gmra.mxu0 %v2706
    %v2776 = vpop.f32.mrf.mxu0
    %v2777 = vadd.f32 0.0, %v2776
    %v2778 = vpop.f32.mrf.mxu0
    %2779 = vdwg.mxu0
    %2780 = vrot.lane.b32.xlu0 %v386, 104
    %v2781 = vpop.permute.xlu0 %2780
    %2782 = vrot.lane.b32.xlu0 %v386, 72
    %v2783 = vpop.permute.xlu0 %2782
    %v2784 = vsel %vm407, %v2781, 0
    %v2786 = vsel %vm407, %v2783, 0
    %2788 = vmatprep.subr.mxu0 0.0
    %2789 = vmatpush1.xpose.msra.mxu0 0.0
    %2790 = vmatprep.subr.mxu0 0.0
    %2791 = vmatpush1.xpose.msra.mxu0 0.0
    %2792 = vmatprep.subr.mxu0 0.0
    %2793 = vmatpush1.xpose.msra.mxu0 0.0
    %2794 = vmatprep.subr.mxu0 0.0
    %2795 = vmatpush1.xpose.msra.mxu0 0.0
    %2796 = vmatprep.subr.mxu0 0.0
    %2797 = vmatpush1.xpose.msra.mxu0 0.0
    %2798 = vmatprep.subr.mxu0 0.0
    %2799 = vmatpush1.xpose.msra.mxu0 0.0
    %2800 = vmatprep.subr.mxu0 0.0
    %2801 = vmatpush1.xpose.msra.mxu0 0.0
    %2802 = vmatprep.subr.mxu0 0.0
    %2803 = vmatpush1.xpose.msra.mxu0 0.0
    %2804 = vmatprep.subr.mxu0 0.0
    %2805 = vmatpush1.xpose.msra.mxu0 0.0
    %2806 = vmatprep.subr.mxu0 0.0
    %2807 = vmatpush1.xpose.msra.mxu0 0.0
    %2808 = vmatprep.subr.mxu0 0.0
    %2809 = vmatpush1.xpose.msra.mxu0 0.0
    %2810 = vmatprep.subr.mxu0 0.0
    %2811 = vmatpush1.xpose.msra.mxu0 0.0
    %2812 = vmatprep.subr.mxu0 0.0
    %2813 = vmatpush1.xpose.msra.mxu0 0.0
    %2814 = vmatprep.subr.mxu0 0.0
    %2815 = vmatpush1.xpose.msra.mxu0 0.0
    %2816 = vmatprep.subr.mxu0 0.0
    %2817 = vmatpush1.xpose.msra.mxu0 0.0
    %2818 = vmatprep.subr.mxu0 0.0
    %2819 = vmatpush1.xpose.msra.mxu0 %v2786
    %2820 = vmatprep.subr.mxu0 0.0
    %2821 = vmatpush2.xpose.msra.mxu0 0.0
    %2822 = vmatprep.subr.mxu0 0.0
    %2823 = vmatpush2.xpose.msra.mxu0 0.0
    %2824 = vmatprep.subr.mxu0 0.0
    %2825 = vmatpush2.xpose.msra.mxu0 0.0
    %2826 = vmatprep.subr.mxu0 0.0
    %2827 = vmatpush2.xpose.msra.mxu0 0.0
    %2828 = vmatprep.subr.mxu0 0.0
    %2829 = vmatpush2.xpose.msra.mxu0 0.0
    %2830 = vmatprep.subr.mxu0 0.0
    %2831 = vmatpush2.xpose.msra.mxu0 0.0
    %2832 = vmatprep.subr.mxu0 0.0
    %2833 = vmatpush2.xpose.msra.mxu0 0.0
    %2834 = vmatprep.subr.mxu0 0.0
    %2835 = vmatpush2.xpose.msra.mxu0 0.0
    %2836 = vmatprep.subr.mxu0 0.0
    %2837 = vmatpush2.xpose.msra.mxu0 0.0
    %2838 = vmatprep.subr.mxu0 0.0
    %2839 = vmatpush2.xpose.msra.mxu0 0.0
    %2840 = vmatprep.subr.mxu0 0.0
    %2841 = vmatpush2.xpose.msra.mxu0 0.0
    %2842 = vmatprep.subr.mxu0 0.0
    %2843 = vmatpush2.xpose.msra.mxu0 0.0
    %2844 = vmatprep.subr.mxu0 0.0
    %2845 = vmatpush2.xpose.msra.mxu0 0.0
    %2846 = vmatprep.subr.mxu0 0.0
    %2847 = vmatpush2.xpose.msra.mxu0 0.0
    %2848 = vmatprep.subr.mxu0 0.0
    %2849 = vmatpush2.xpose.msra.mxu0 0.0
    %2850 = vmatprep.subr.mxu0 0.0
    %2851 = vmatpush2.xpose.msra.mxu0 0.0
    %2852 = vmatprep.mubr.f32.mxu0 0.0
    %2853 = vmatmul.mubr.f32.gmra.mxu0 %v2784
    %v2854 = vpop.f32.mrf.mxu0
    %v2855 = vadd.f32 0.0, %v2854
    %v2856 = vpop.f32.mrf.mxu0
    %2857 = vdwg.mxu0
    %2858 = vrot.lane.b32.xlu0 %v391, 104
    %v2859 = vpop.permute.xlu0 %2858
    %2860 = vrot.lane.b32.xlu0 %v391, 72
    %v2861 = vpop.permute.xlu0 %2860
    %v2862 = vsel %vm407, %v2859, 0
    %v2864 = vsel %vm407, %v2861, 0
    %2866 = vmatprep.subr.mxu0 0.0
    %2867 = vmatpush1.xpose.msra.mxu0 0.0
    %2868 = vmatprep.subr.mxu0 0.0
    %2869 = vmatpush1.xpose.msra.mxu0 0.0
    %2870 = vmatprep.subr.mxu0 0.0
    %2871 = vmatpush1.xpose.msra.mxu0 0.0
    %2872 = vmatprep.subr.mxu0 0.0
    %2873 = vmatpush1.xpose.msra.mxu0 0.0
    %2874 = vmatprep.subr.mxu0 0.0
    %2875 = vmatpush1.xpose.msra.mxu0 0.0
    %2876 = vmatprep.subr.mxu0 0.0
    %2877 = vmatpush1.xpose.msra.mxu0 0.0
    %2878 = vmatprep.subr.mxu0 0.0
    %2879 = vmatpush1.xpose.msra.mxu0 0.0
    %2880 = vmatprep.subr.mxu0 0.0
    %2881 = vmatpush1.xpose.msra.mxu0 0.0
    %2882 = vmatprep.subr.mxu0 0.0
    %2883 = vmatpush1.xpose.msra.mxu0 0.0
    %2884 = vmatprep.subr.mxu0 0.0
    %2885 = vmatpush1.xpose.msra.mxu0 0.0
    %2886 = vmatprep.subr.mxu0 0.0
    %2887 = vmatpush1.xpose.msra.mxu0 0.0
    %2888 = vmatprep.subr.mxu0 0.0
    %2889 = vmatpush1.xpose.msra.mxu0 0.0
    %2890 = vmatprep.subr.mxu0 0.0
    %2891 = vmatpush1.xpose.msra.mxu0 0.0
    %2892 = vmatprep.subr.mxu0 0.0
    %2893 = vmatpush1.xpose.msra.mxu0 0.0
    %2894 = vmatprep.subr.mxu0 0.0
    %2895 = vmatpush1.xpose.msra.mxu0 0.0
    %2896 = vmatprep.subr.mxu0 0.0
    %2897 = vmatpush1.xpose.msra.mxu0 %v2864
    %2898 = vmatprep.subr.mxu0 0.0
    %2899 = vmatpush2.xpose.msra.mxu0 0.0
    %2900 = vmatprep.subr.mxu0 0.0
    %2901 = vmatpush2.xpose.msra.mxu0 0.0
    %2902 = vmatprep.subr.mxu0 0.0
    %2903 = vmatpush2.xpose.msra.mxu0 0.0
    %2904 = vmatprep.subr.mxu0 0.0
    %2905 = vmatpush2.xpose.msra.mxu0 0.0
    %2906 = vmatprep.subr.mxu0 0.0
    %2907 = vmatpush2.xpose.msra.mxu0 0.0
    %2908 = vmatprep.subr.mxu0 0.0
    %2909 = vmatpush2.xpose.msra.mxu0 0.0
    %2910 = vmatprep.subr.mxu0 0.0
    %2911 = vmatpush2.xpose.msra.mxu0 0.0
    %2912 = vmatprep.subr.mxu0 0.0
    %2913 = vmatpush2.xpose.msra.mxu0 0.0
    %2914 = vmatprep.subr.mxu0 0.0
    %2915 = vmatpush2.xpose.msra.mxu0 0.0
    %2916 = vmatprep.subr.mxu0 0.0
    %2917 = vmatpush2.xpose.msra.mxu0 0.0
    %2918 = vmatprep.subr.mxu0 0.0
    %2919 = vmatpush2.xpose.msra.mxu0 0.0
    %2920 = vmatprep.subr.mxu0 0.0
    %2921 = vmatpush2.xpose.msra.mxu0 0.0
    %2922 = vmatprep.subr.mxu0 0.0
    %2923 = vmatpush2.xpose.msra.mxu0 0.0
    %2924 = vmatprep.subr.mxu0 0.0
    %2925 = vmatpush2.xpose.msra.mxu0 0.0
    %2926 = vmatprep.subr.mxu0 0.0
    %2927 = vmatpush2.xpose.msra.mxu0 0.0
    %2928 = vmatprep.subr.mxu0 0.0
    %2929 = vmatpush2.xpose.msra.mxu0 0.0
    %2930 = vmatprep.mubr.f32.mxu0 0.0
    %2931 = vmatmul.mubr.f32.gmra.mxu0 %v2862
    %v2932 = vpop.f32.mrf.mxu0
    %v2933 = vadd.f32 0.0, %v2932
    %v2934 = vpop.f32.mrf.mxu0
    %2935 = vdwg.mxu0
    %2936 = vrot.lane.b32.xlu0 %v396, 104
    %v2937 = vpop.permute.xlu0 %2936
    %2938 = vrot.lane.b32.xlu0 %v396, 72
    %v2939 = vpop.permute.xlu0 %2938
    %v2940 = vsel %vm407, %v2937, 0
    %v2942 = vsel %vm407, %v2939, 0
    %2944 = vmatprep.subr.mxu0 0.0
    %2945 = vmatpush1.xpose.msra.mxu0 0.0
    %2946 = vmatprep.subr.mxu0 0.0
    %2947 = vmatpush1.xpose.msra.mxu0 0.0
    %2948 = vmatprep.subr.mxu0 0.0
    %2949 = vmatpush1.xpose.msra.mxu0 0.0
    %2950 = vmatprep.subr.mxu0 0.0
    %2951 = vmatpush1.xpose.msra.mxu0 0.0
    %2952 = vmatprep.subr.mxu0 0.0
    %2953 = vmatpush1.xpose.msra.mxu0 0.0
    %2954 = vmatprep.subr.mxu0 0.0
    %2955 = vmatpush1.xpose.msra.mxu0 0.0
    %2956 = vmatprep.subr.mxu0 0.0
    %2957 = vmatpush1.xpose.msra.mxu0 0.0
    %2958 = vmatprep.subr.mxu0 0.0
    %2959 = vmatpush1.xpose.msra.mxu0 0.0
    %2960 = vmatprep.subr.mxu0 0.0
    %2961 = vmatpush1.xpose.msra.mxu0 0.0
    %2962 = vmatprep.subr.mxu0 0.0
    %2963 = vmatpush1.xpose.msra.mxu0 0.0
    %2964 = vmatprep.subr.mxu0 0.0
    %2965 = vmatpush1.xpose.msra.mxu0 0.0
    %2966 = vmatprep.subr.mxu0 0.0
    %2967 = vmatpush1.xpose.msra.mxu0 0.0
    %2968 = vmatprep.subr.mxu0 0.0
    %2969 = vmatpush1.xpose.msra.mxu0 0.0
    %2970 = vmatprep.subr.mxu0 0.0
    %2971 = vmatpush1.xpose.msra.mxu0 0.0
    %2972 = vmatprep.subr.mxu0 0.0
    %2973 = vmatpush1.xpose.msra.mxu0 0.0
    %2974 = vmatprep.subr.mxu0 0.0
    %2975 = vmatpush1.xpose.msra.mxu0 %v2942
    %2976 = vmatprep.subr.mxu0 0.0
    %2977 = vmatpush2.xpose.msra.mxu0 0.0
    %2978 = vmatprep.subr.mxu0 0.0
    %2979 = vmatpush2.xpose.msra.mxu0 0.0
    %2980 = vmatprep.subr.mxu0 0.0
    %2981 = vmatpush2.xpose.msra.mxu0 0.0
    %2982 = vmatprep.subr.mxu0 0.0
    %2983 = vmatpush2.xpose.msra.mxu0 0.0
    %2984 = vmatprep.subr.mxu0 0.0
    %2985 = vmatpush2.xpose.msra.mxu0 0.0
    %2986 = vmatprep.subr.mxu0 0.0
    %2987 = vmatpush2.xpose.msra.mxu0 0.0
    %2988 = vmatprep.subr.mxu0 0.0
    %2989 = vmatpush2.xpose.msra.mxu0 0.0
    %2990 = vmatprep.subr.mxu0 0.0
    %2991 = vmatpush2.xpose.msra.mxu0 0.0
    %2992 = vmatprep.subr.mxu0 0.0
    %2993 = vmatpush2.xpose.msra.mxu0 0.0
    %2994 = vmatprep.subr.mxu0 0.0
    %2995 = vmatpush2.xpose.msra.mxu0 0.0
    %2996 = vmatprep.subr.mxu0 0.0
    %2997 = vmatpush2.xpose.msra.mxu0 0.0
    %2998 = vmatprep.subr.mxu0 0.0
    %2999 = vmatpush2.xpose.msra.mxu0 0.0
    %3000 = vmatprep.subr.mxu0 0.0
    %3001 = vmatpush2.xpose.msra.mxu0 0.0
    %3002 = vmatprep.subr.mxu0 0.0
    %3003 = vmatpush2.xpose.msra.mxu0 0.0
    %3004 = vmatprep.subr.mxu0 0.0
    %3005 = vmatpush2.xpose.msra.mxu0 0.0
    %3006 = vmatprep.subr.mxu0 0.0
    %3007 = vmatpush2.xpose.msra.mxu0 0.0
    %3008 = vmatprep.mubr.f32.mxu0 0.0
    %3009 = vmatmul.mubr.f32.gmra.mxu0 %v2940
    %v3010 = vpop.f32.mrf.mxu0
    %v3011 = vadd.f32 0.0, %v3010
    %v3012 = vpop.f32.mrf.mxu0
    %3013 = vdwg.mxu0
    %v3014 = vmul.f32 %v2777, 0.35355338
    %v3015 = vmul.f32 %v2855, 0.35355338
    %v3016 = vmul.f32 %v2933, 0.35355338
    %v3017 = vmul.f32 %v3011, 0.35355338
    %v3018 = vsel %vm407, %v3014, -inf
    %3019 = vmax.xlane.f32.xlu0 %v3018
    %v3020 = vpop.xlane.xlu0 %3019
    %v3021 = vsel %vm407, %v3015, -inf
    %3022 = vmax.xlane.f32.xlu0 %v3021
    %v3023 = vpop.xlane.xlu0 %3022
    %v3024 = vsel %vm407, %v3016, -inf
    %3025 = vmax.xlane.f32.xlu0 %v3024
    %v3026 = vpop.xlane.xlu0 %3025
    %v3027 = vsel %vm407, %v3017, -inf
    %3028 = vmax.xlane.f32.xlu0 %v3027
    %v3029 = vpop.xlane.xlu0 %3028
    %v3030 = vsub.f32 %v3014, %v3020
    %v3031 = vsub.f32 %v3015, %v3023
    %v3032 = vsub.f32 %v3016, %v3026
    %v3033 = vsub.f32 %v3017, %v3029
    %v3034 = vmul.f32 %v3030, 1.442695
    %v3035 = vpow.pop %v3034
    %v3036 = vmul.f32 %v3031, 1.442695
    %v3037 = vpow.pop %v3036
    %v3038 = vmul.f32 %v3032, 1.442695
    %v3039 = vpow.pop %v3038
    %v3040 = vmul.f32 %v3033, 1.442695
    %v3041 = vpow.pop %v3040
    %v3042 = vsel %vm407, %v3035, 0.0
    %3043 = vadd.xlane.f32.xlu0 %v3042
    %v3044 = vpop.xlane.xlu0 %3043
    %v3045 = vsel %vm407, %v3037, 0.0
    %3046 = vadd.xlane.f32.xlu0 %v3045
    %v3047 = vpop.xlane.xlu0 %3046
    %v3048 = vsel %vm407, %v3039, 0.0
    %3049 = vadd.xlane.f32.xlu0 %v3048
    %v3050 = vpop.xlane.xlu0 %3049
    %v3051 = vsel %vm407, %v3041, 0.0
    %3052 = vadd.xlane.f32.xlu0 %v3051
    %v3053 = vpop.xlane.xlu0 %3052
    %v3054 = vrcp.pop %v3044
    %v3055 = vrcp.pop %v3047
    %v3056 = vrcp.pop %v3050
    %v3057 = vrcp.pop %v3053
    %v3058 = vmul.f32 %v3035, %v3054
    %v3059 = vmul.f32 %v3037, %v3055
    %v3060 = vmul.f32 %v3039, %v3056
    %v3061 = vmul.f32 %v3041, %v3057
    %3062 = vrot.lane.b32.xlu0 %v381, 40
    %v3063 = vpop.permute.xlu0 %3062
    %v3066 = vsel %vm407, %v3058, 0
    %3068 = vmatprep.subr.mxu0 0.0
    %3069 = vmatpush1.msra.mxu0 0.0
    %3070 = vmatprep.subr.mxu0 0.0
    %3071 = vmatpush1.msra.mxu0 0.0
    %3072 = vmatprep.subr.mxu0 0.0
    %3073 = vmatpush1.msra.mxu0 0.0
    %3074 = vmatprep.subr.mxu0 0.0
    %3075 = vmatpush1.msra.mxu0 0.0
    %3076 = vmatprep.subr.mxu0 0.0
    %3077 = vmatpush1.msra.mxu0 0.0
    %3078 = vmatprep.subr.mxu0 0.0
    %3079 = vmatpush1.msra.mxu0 0.0
    %3080 = vmatprep.subr.mxu0 0.0
    %3081 = vmatpush1.msra.mxu0 0.0
    %3082 = vmatprep.subr.mxu0 0.0
    %3083 = vmatpush1.msra.mxu0 0.0
    %3084 = vmatprep.subr.mxu0 0.0
    %3085 = vmatpush1.msra.mxu0 0.0
    %3086 = vmatprep.subr.mxu0 0.0
    %3087 = vmatpush1.msra.mxu0 0.0
    %3088 = vmatprep.subr.mxu0 0.0
    %3089 = vmatpush1.msra.mxu0 0.0
    %3090 = vmatprep.subr.mxu0 0.0
    %3091 = vmatpush1.msra.mxu0 0.0
    %3092 = vmatprep.subr.mxu0 0.0
    %3093 = vmatpush1.msra.mxu0 0.0
    %3094 = vmatprep.subr.mxu0 0.0
    %3095 = vmatpush1.msra.mxu0 0.0
    %3096 = vmatprep.subr.mxu0 0.0
    %3097 = vmatpush1.msra.mxu0 0.0
    %3098 = vmatprep.subr.mxu0 0.0
    %3099 = vmatpush1.msra.mxu0 %v3063
    %3100 = vmatprep.subr.mxu0 0.0
    %3101 = vmatpush2.msra.mxu0 0.0
    %3102 = vmatprep.subr.mxu0 0.0
    %3103 = vmatpush2.msra.mxu0 0.0
    %3104 = vmatprep.subr.mxu0 0.0
    %3105 = vmatpush2.msra.mxu0 0.0
    %3106 = vmatprep.subr.mxu0 0.0
    %3107 = vmatpush2.msra.mxu0 0.0
    %3108 = vmatprep.subr.mxu0 0.0
    %3109 = vmatpush2.msra.mxu0 0.0
    %3110 = vmatprep.subr.mxu0 0.0
    %3111 = vmatpush2.msra.mxu0 0.0
    %3112 = vmatprep.subr.mxu0 0.0
    %3113 = vmatpush2.msra.mxu0 0.0
    %3114 = vmatprep.subr.mxu0 0.0
    %3115 = vmatpush2.msra.mxu0 0.0
    %3116 = vmatprep.subr.mxu0 0.0
    %3117 = vmatpush2.msra.mxu0 0.0
    %3118 = vmatprep.subr.mxu0 0.0
    %3119 = vmatpush2.msra.mxu0 0.0
    %3120 = vmatprep.subr.mxu0 0.0
    %3121 = vmatpush2.msra.mxu0 0.0
    %3122 = vmatprep.subr.mxu0 0.0
    %3123 = vmatpush2.msra.mxu0 0.0
    %3124 = vmatprep.subr.mxu0 0.0
    %3125 = vmatpush2.msra.mxu0 0.0
    %3126 = vmatprep.subr.mxu0 0.0
    %3127 = vmatpush2.msra.mxu0 0.0
    %3128 = vmatprep.subr.mxu0 0.0
    %3129 = vmatpush2.msra.mxu0 0.0
    %3130 = vmatprep.subr.mxu0 0.0
    %3131 = vmatpush2.msra.mxu0 0.0
    %3132 = vmatprep.mubr.f32.mxu0 0.0
    %3133 = vmatmul.mubr.f32.gmra.mxu0 %v3066
    %v3134 = vpop.f32.mrf.mxu0
    %v3135 = vadd.f32 0.0, %v3134
    %v3136 = vpop.f32.mrf.mxu0
    %3137 = vdwg.mxu0
    %3138 = vrot.lane.b32.xlu0 %v386, 40
    %v3139 = vpop.permute.xlu0 %3138
    %v3142 = vsel %vm407, %v3059, 0
    %3144 = vmatprep.subr.mxu0 0.0
    %3145 = vmatpush1.msra.mxu0 0.0
    %3146 = vmatprep.subr.mxu0 0.0
    %3147 = vmatpush1.msra.mxu0 0.0
    %3148 = vmatprep.subr.mxu0 0.0
    %3149 = vmatpush1.msra.mxu0 0.0
    %3150 = vmatprep.subr.mxu0 0.0
    %3151 = vmatpush1.msra.mxu0 0.0
    %3152 = vmatprep.subr.mxu0 0.0
    %3153 = vmatpush1.msra.mxu0 0.0
    %3154 = vmatprep.subr.mxu0 0.0
    %3155 = vmatpush1.msra.mxu0 0.0
    %3156 = vmatprep.subr.mxu0 0.0
    %3157 = vmatpush1.msra.mxu0 0.0
    %3158 = vmatprep.subr.mxu0 0.0
    %3159 = vmatpush1.msra.mxu0 0.0
    %3160 = vmatprep.subr.mxu0 0.0
    %3161 = vmatpush1.msra.mxu0 0.0
    %3162 = vmatprep.subr.mxu0 0.0
    %3163 = vmatpush1.msra.mxu0 0.0
    %3164 = vmatprep.subr.mxu0 0.0
    %3165 = vmatpush1.msra.mxu0 0.0
    %3166 = vmatprep.subr.mxu0 0.0
    %3167 = vmatpush1.msra.mxu0 0.0
    %3168 = vmatprep.subr.mxu0 0.0
    %3169 = vmatpush1.msra.mxu0 0.0
    %3170 = vmatprep.subr.mxu0 0.0
    %3171 = vmatpush1.msra.mxu0 0.0
    %3172 = vmatprep.subr.mxu0 0.0
    %3173 = vmatpush1.msra.mxu0 0.0
    %3174 = vmatprep.subr.mxu0 0.0
    %3175 = vmatpush1.msra.mxu0 %v3139
    %3176 = vmatprep.subr.mxu0 0.0
    %3177 = vmatpush2.msra.mxu0 0.0
    %3178 = vmatprep.subr.mxu0 0.0
    %3179 = vmatpush2.msra.mxu0 0.0
    %3180 = vmatprep.subr.mxu0 0.0
    %3181 = vmatpush2.msra.mxu0 0.0
    %3182 = vmatprep.subr.mxu0 0.0
    %3183 = vmatpush2.msra.mxu0 0.0
    %3184 = vmatprep.subr.mxu0 0.0
    %3185 = vmatpush2.msra.mxu0 0.0
    %3186 = vmatprep.subr.mxu0 0.0
    %3187 = vmatpush2.msra.mxu0 0.0
    %3188 = vmatprep.subr.mxu0 0.0
    %3189 = vmatpush2.msra.mxu0 0.0
    %3190 = vmatprep.subr.mxu0 0.0
    %3191 = vmatpush2.msra.mxu0 0.0
    %3192 = vmatprep.subr.mxu0 0.0
    %3193 = vmatpush2.msra.mxu0 0.0
    %3194 = vmatprep.subr.mxu0 0.0
    %3195 = vmatpush2.msra.mxu0 0.0
    %3196 = vmatprep.subr.mxu0 0.0
    %3197 = vmatpush2.msra.mxu0 0.0
    %3198 = vmatprep.subr.mxu0 0.0
    %3199 = vmatpush2.msra.mxu0 0.0
    %3200 = vmatprep.subr.mxu0 0.0
    %3201 = vmatpush2.msra.mxu0 0.0
    %3202 = vmatprep.subr.mxu0 0.0
    %3203 = vmatpush2.msra.mxu0 0.0
    %3204 = vmatprep.subr.mxu0 0.0
    %3205 = vmatpush2.msra.mxu0 0.0
    %3206 = vmatprep.subr.mxu0 0.0
    %3207 = vmatpush2.msra.mxu0 0.0
    %3208 = vmatprep.mubr.f32.mxu0 0.0
    %3209 = vmatmul.mubr.f32.gmra.mxu0 %v3142
    %v3210 = vpop.f32.mrf.mxu0
    %v3211 = vadd.f32 0.0, %v3210
    %v3212 = vpop.f32.mrf.mxu0
    %3213 = vdwg.mxu0
    %3214 = vrot.lane.b32.xlu0 %v391, 40
    %v3215 = vpop.permute.xlu0 %3214
    %v3218 = vsel %vm407, %v3060, 0
    %3220 = vmatprep.subr.mxu0 0.0
    %3221 = vmatpush1.msra.mxu0 0.0
    %3222 = vmatprep.subr.mxu0 0.0
    %3223 = vmatpush1.msra.mxu0 0.0
    %3224 = vmatprep.subr.mxu0 0.0
    %3225 = vmatpush1.msra.mxu0 0.0
    %3226 = vmatprep.subr.mxu0 0.0
    %3227 = vmatpush1.msra.mxu0 0.0
    %3228 = vmatprep.subr.mxu0 0.0
    %3229 = vmatpush1.msra.mxu0 0.0
    %3230 = vmatprep.subr.mxu0 0.0
    %3231 = vmatpush1.msra.mxu0 0.0
    %3232 = vmatprep.subr.mxu0 0.0
    %3233 = vmatpush1.msra.mxu0 0.0
    %3234 = vmatprep.subr.mxu0 0.0
    %3235 = vmatpush1.msra.mxu0 0.0
    %3236 = vmatprep.subr.mxu0 0.0
    %3237 = vmatpush1.msra.mxu0 0.0
    %3238 = vmatprep.subr.mxu0 0.0
    %3239 = vmatpush1.msra.mxu0 0.0
    %3240 = vmatprep.subr.mxu0 0.0
    %3241 = vmatpush1.msra.mxu0 0.0
    %3242 = vmatprep.subr.mxu0 0.0
    %3243 = vmatpush1.msra.mxu0 0.0
    %3244 = vmatprep.subr.mxu0 0.0
    %3245 = vmatpush1.msra.mxu0 0.0
    %3246 = vmatprep.subr.mxu0 0.0
    %3247 = vmatpush1.msra.mxu0 0.0
    %3248 = vmatprep.subr.mxu0 0.0
    %3249 = vmatpush1.msra.mxu0 0.0
    %3250 = vmatprep.subr.mxu0 0.0
    %3251 = vmatpush1.msra.mxu0 %v3215
    %3252 = vmatprep.subr.mxu0 0.0
    %3253 = vmatpush2.msra.mxu0 0.0
    %3254 = vmatprep.subr.mxu0 0.0
    %3255 = vmatpush2.msra.mxu0 0.0
    %3256 = vmatprep.subr.mxu0 0.0
    %3257 = vmatpush2.msra.mxu0 0.0
    %3258 = vmatprep.subr.mxu0 0.0
    %3259 = vmatpush2.msra.mxu0 0.0
    %3260 = vmatprep.subr.mxu0 0.0
    %3261 = vmatpush2.msra.mxu0 0.0
    %3262 = vmatprep.subr.mxu0 0.0
    %3263 = vmatpush2.msra.mxu0 0.0
    %3264 = vmatprep.subr.mxu0 0.0
    %3265 = vmatpush2.msra.mxu0 0.0
    %3266 = vmatprep.subr.mxu0 0.0
    %3267 = vmatpush2.msra.mxu0 0.0
    %3268 = vmatprep.subr.mxu0 0.0
    %3269 = vmatpush2.msra.mxu0 0.0
    %3270 = vmatprep.subr.mxu0 0.0
    %3271 = vmatpush2.msra.mxu0 0.0
    %3272 = vmatprep.subr.mxu0 0.0
    %3273 = vmatpush2.msra.mxu0 0.0
    %3274 = vmatprep.subr.mxu0 0.0
    %3275 = vmatpush2.msra.mxu0 0.0
    %3276 = vmatprep.subr.mxu0 0.0
    %3277 = vmatpush2.msra.mxu0 0.0
    %3278 = vmatprep.subr.mxu0 0.0
    %3279 = vmatpush2.msra.mxu0 0.0
    %3280 = vmatprep.subr.mxu0 0.0
    %3281 = vmatpush2.msra.mxu0 0.0
    %3282 = vmatprep.subr.mxu0 0.0
    %3283 = vmatpush2.msra.mxu0 0.0
    %3284 = vmatprep.mubr.f32.mxu0 0.0
    %3285 = vmatmul.mubr.f32.gmra.mxu0 %v3218
    %v3286 = vpop.f32.mrf.mxu0
    %v3287 = vadd.f32 0.0, %v3286
    %v3288 = vpop.f32.mrf.mxu0
    %3289 = vdwg.mxu0
    %3290 = vrot.lane.b32.xlu0 %v396, 40
    %v3291 = vpop.permute.xlu0 %3290
    %v3294 = vsel %vm407, %v3061, 0
    %3296 = vmatprep.subr.mxu0 0.0
    %3297 = vmatpush1.msra.mxu0 0.0
    %3298 = vmatprep.subr.mxu0 0.0
    %3299 = vmatpush1.msra.mxu0 0.0
    %3300 = vmatprep.subr.mxu0 0.0
    %3301 = vmatpush1.msra.mxu0 0.0
    %3302 = vmatprep.subr.mxu0 0.0
    %3303 = vmatpush1.msra.mxu0 0.0
    %3304 = vmatprep.subr.mxu0 0.0
    %3305 = vmatpush1.msra.mxu0 0.0
    %3306 = vmatprep.subr.mxu0 0.0
    %3307 = vmatpush1.msra.mxu0 0.0
    %3308 = vmatprep.subr.mxu0 0.0
    %3309 = vmatpush1.msra.mxu0 0.0
    %3310 = vmatprep.subr.mxu0 0.0
    %3311 = vmatpush1.msra.mxu0 0.0
    %3312 = vmatprep.subr.mxu0 0.0
    %3313 = vmatpush1.msra.mxu0 0.0
    %3314 = vmatprep.subr.mxu0 0.0
    %3315 = vmatpush1.msra.mxu0 0.0
    %3316 = vmatprep.subr.mxu0 0.0
    %3317 = vmatpush1.msra.mxu0 0.0
    %3318 = vmatprep.subr.mxu0 0.0
    %3319 = vmatpush1.msra.mxu0 0.0
    %3320 = vmatprep.subr.mxu0 0.0
    %3321 = vmatpush1.msra.mxu0 0.0
    %3322 = vmatprep.subr.mxu0 0.0
    %3323 = vmatpush1.msra.mxu0 0.0
    %3324 = vmatprep.subr.mxu0 0.0
    %3325 = vmatpush1.msra.mxu0 0.0
    %3326 = vmatprep.subr.mxu0 0.0
    %3327 = vmatpush1.msra.mxu0 %v3291
    %3328 = vmatprep.subr.mxu0 0.0
    %3329 = vmatpush2.msra.mxu0 0.0
    %3330 = vmatprep.subr.mxu0 0.0
    %3331 = vmatpush2.msra.mxu0 0.0
    %3332 = vmatprep.subr.mxu0 0.0
    %3333 = vmatpush2.msra.mxu0 0.0
    %3334 = vmatprep.subr.mxu0 0.0
    %3335 = vmatpush2.msra.mxu0 0.0
    %3336 = vmatprep.subr.mxu0 0.0
    %3337 = vmatpush2.msra.mxu0 0.0
    %3338 = vmatprep.subr.mxu0 0.0
    %3339 = vmatpush2.msra.mxu0 0.0
    %3340 = vmatprep.subr.mxu0 0.0
    %3341 = vmatpush2.msra.mxu0 0.0
    %3342 = vmatprep.subr.mxu0 0.0
    %3343 = vmatpush2.msra.mxu0 0.0
    %3344 = vmatprep.subr.mxu0 0.0
    %3345 = vmatpush2.msra.mxu0 0.0
    %3346 = vmatprep.subr.mxu0 0.0
    %3347 = vmatpush2.msra.mxu0 0.0
    %3348 = vmatprep.subr.mxu0 0.0
    %3349 = vmatpush2.msra.mxu0 0.0
    %3350 = vmatprep.subr.mxu0 0.0
    %3351 = vmatpush2.msra.mxu0 0.0
    %3352 = vmatprep.subr.mxu0 0.0
    %3353 = vmatpush2.msra.mxu0 0.0
    %3354 = vmatprep.subr.mxu0 0.0
    %3355 = vmatpush2.msra.mxu0 0.0
    %3356 = vmatprep.subr.mxu0 0.0
    %3357 = vmatpush2.msra.mxu0 0.0
    %3358 = vmatprep.subr.mxu0 0.0
    %3359 = vmatpush2.msra.mxu0 0.0
    %3360 = vmatprep.mubr.f32.mxu0 0.0
    %3361 = vmatmul.mubr.f32.gmra.mxu0 %v3294
    %v3362 = vpop.f32.mrf.mxu0
    %v3363 = vadd.f32 0.0, %v3362
    %v3364 = vpop.f32.mrf.mxu0
    %3365 = vdwg.mxu0
    %v3367 = vsel %vm407, %v3135, 0
    %v3370 = vsel %vm407, %v3211, 0
    %v3373 = vsel %vm407, %v3287, 0
    %v3376 = vsel %vm407, %v3363, 0
    %3378 = vmatprep.subr.mxu0 0.0
    %3379 = vmatpush1.msra.mxu0 0.0
    %3380 = vmatprep.subr.mxu0 0.0
    %3381 = vmatpush1.msra.mxu0 0.0
    %3382 = vmatprep.subr.mxu0 0.0
    %3383 = vmatpush1.msra.mxu0 0.0
    %3384 = vmatprep.subr.mxu0 0.0
    %3385 = vmatpush1.msra.mxu0 0.0
    %3386 = vmatprep.subr.mxu0 0.0
    %3387 = vmatpush1.msra.mxu0 0.0
    %3388 = vmatprep.subr.mxu0 0.0
    %3389 = vmatpush1.msra.mxu0 0.0
    %3390 = vmatprep.subr.mxu0 0.0
    %3391 = vmatpush1.msra.mxu0 0.0
    %3392 = vmatprep.subr.mxu0 0.0
    %3393 = vmatpush1.msra.mxu0 0.0
    %3394 = vmatprep.subr.mxu0 0.0
    %3395 = vmatpush1.msra.mxu0 0.0
    %3396 = vmatprep.subr.mxu0 0.0
    %3397 = vmatpush1.msra.mxu0 0.0
    %3398 = vmatprep.subr.mxu0 0.0
    %3399 = vmatpush1.msra.mxu0 0.0
    %3400 = vmatprep.subr.mxu0 0.0
    %3401 = vmatpush1.msra.mxu0 0.0
    %3402 = vmatprep.subr.mxu0 0.0
    %3403 = vmatpush1.msra.mxu0 0.0
    %3404 = vmatprep.subr.mxu0 0.0
    %3405 = vmatpush1.msra.mxu0 0.0
    %3406 = vmatprep.subr.mxu0 0.0
    %3407 = vmatpush1.msra.mxu0 0.0
    %3408 = vmatprep.subr.mxu0 0.0
    %3409 = vmatpush1.msra.mxu0 %v402
    %3410 = vmatprep.subr.mxu0 0.0
    %3411 = vmatpush2.msra.mxu0 0.0
    %3412 = vmatprep.subr.mxu0 0.0
    %3413 = vmatpush2.msra.mxu0 0.0
    %3414 = vmatprep.subr.mxu0 0.0
    %3415 = vmatpush2.msra.mxu0 0.0
    %3416 = vmatprep.subr.mxu0 0.0
    %3417 = vmatpush2.msra.mxu0 0.0
    %3418 = vmatprep.subr.mxu0 0.0
    %3419 = vmatpush2.msra.mxu0 0.0
    %3420 = vmatprep.subr.mxu0 0.0
    %3421 = vmatpush2.msra.mxu0 0.0
    %3422 = vmatprep.subr.mxu0 0.0
    %3423 = vmatpush2.msra.mxu0 0.0
    %3424 = vmatprep.subr.mxu0 0.0
    %3425 = vmatpush2.msra.mxu0 0.0
    %3426 = vmatprep.subr.mxu0 0.0
    %3427 = vmatpush2.msra.mxu0 0.0
    %3428 = vmatprep.subr.mxu0 0.0
    %3429 = vmatpush2.msra.mxu0 0.0
    %3430 = vmatprep.subr.mxu0 0.0
    %3431 = vmatpush2.msra.mxu0 0.0
    %3432 = vmatprep.subr.mxu0 0.0
    %3433 = vmatpush2.msra.mxu0 0.0
    %3434 = vmatprep.subr.mxu0 0.0
    %3435 = vmatpush2.msra.mxu0 0.0
    %3436 = vmatprep.subr.mxu0 0.0
    %3437 = vmatpush2.msra.mxu0 0.0
    %3438 = vmatprep.subr.mxu0 0.0
    %3439 = vmatpush2.msra.mxu0 0.0
    %3440 = vmatprep.subr.mxu0 0.0
    %3441 = vmatpush2.msra.mxu0 0.0
    %3442 = vmatprep.mubr.f32.mxu0 0.0
    %3443 = vmatmul.mubr.f32.gmra.mxu0 %v3367
    %v3444 = vpop.f32.mrf.mxu0
    %v3445 = vadd.f32 0.0, %v3444
    %v3446 = vpop.f32.mrf.mxu0
    %3447 = vmatprep.mubr.f32.mxu0 0.0
    %3448 = vmatmul.mubr.f32.gmra.mxu0 %v3370
    %v3449 = vpop.f32.mrf.mxu0
    %v3450 = vadd.f32 0.0, %v3449
    %v3451 = vpop.f32.mrf.mxu0
    %3452 = vmatprep.mubr.f32.mxu0 0.0
    %3453 = vmatmul.mubr.f32.gmra.mxu0 %v3373
    %v3454 = vpop.f32.mrf.mxu0
    %v3455 = vadd.f32 0.0, %v3454
    %v3456 = vpop.f32.mrf.mxu0
    %3457 = vmatprep.mubr.f32.mxu0 0.0
    %3458 = vmatmul.mubr.f32.gmra.mxu0 %v3376
    %v3459 = vpop.f32.mrf.mxu0
    %v3460 = vadd.f32 0.0, %v3459
    %v3461 = vpop.f32.mrf.mxu0
    %3462 = vdwg.mxu0
    %v3463 = vadd.f32 %v2698, %v3445
    %v3464 = vadd.f32 %v2699, %v3450
    %v3465 = vadd.f32 %v2700, %v3455
    %v3466 = vadd.f32 %v2701, %v3460
    %v3467 = vadd.f32 %v286, %v3463
    %v3468 = vadd.f32 %v287, %v3464
    %v3469 = vadd.f32 %v288, %v3465
    %v3470 = vadd.f32 %v289, %v3466
    %v3471 = vld [vmem:[#allocation10] sm:$0x1]
    %v3472 = vld [vmem:[#allocation11] sm:$0x1]
    %v3473 = vsel %vm301, %v3467, 0.0
    %3474 = vadd.xlane.f32.xlu0 %v3473
    %v3475 = vpop.xlane.xlu0 %3474
    %v3476 = vsel %vm301, %v3468, 0.0
    %3477 = vadd.xlane.f32.xlu0 %v3476
    %v3478 = vpop.xlane.xlu0 %3477
    %v3479 = vsel %vm301, %v3469, 0.0
    %3480 = vadd.xlane.f32.xlu0 %v3479
    %v3481 = vpop.xlane.xlu0 %3480
    %v3482 = vsel %vm301, %v3470, 0.0
    %3483 = vadd.xlane.f32.xlu0 %v3482
    %v3484 = vpop.xlane.xlu0 %3483
    %v3485 = vrcp.pop 32.0
    %v3486 = vmul.f32 %v3475, %v3485
    %v3487 = vmul.f32 %v3478, %v3485
    %v3488 = vmul.f32 %v3481, %v3485
    %v3489 = vmul.f32 %v3484, %v3485
    %v3490 = vsub.f32 %v3467, %v3486
    %v3491 = vsub.f32 %v3468, %v3487
    %v3492 = vsub.f32 %v3469, %v3488
    %v3493 = vsub.f32 %v3470, %v3489
    %v3494 = vmul.f32 %v3490, %v3490
    %v3495 = vmul.f32 %v3491, %v3491
    %v3496 = vmul.f32 %v3492, %v3492
    %v3497 = vmul.f32 %v3493, %v3493
    %v3498 = vsel %vm301, %v3494, 0.0
    %3499 = vadd.xlane.f32.xlu0 %v3498
    %v3500 = vpop.xlane.xlu0 %3499
    %v3501 = vsel %vm301, %v3495, 0.0
    %3502 = vadd.xlane.f32.xlu0 %v3501
    %v3503 = vpop.xlane.xlu0 %3502
    %v3504 = vsel %vm301, %v3496, 0.0
    %3505 = vadd.xlane.f32.xlu0 %v3504
    %v3506 = vpop.xlane.xlu0 %3505
    %v3507 = vsel %vm301, %v3497, 0.0
    %3508 = vadd.xlane.f32.xlu0 %v3507
    %v3509 = vpop.xlane.xlu0 %3508
    %v3510 = vmul.f32 %v3500, %v3485
    %v3511 = vmul.f32 %v3503, %v3485
    %v3512 = vmul.f32 %v3506, %v3485
    %v3513 = vmul.f32 %v3509, %v3485
    %v3514 = vadd.f32 %v3510, 1e-05
    %v3515 = vadd.f32 %v3511, 1e-05
    %v3516 = vadd.f32 %v3512, 1e-05
    %v3517 = vadd.f32 %v3513, 1e-05
    %v3518 = vrsqrt.pop %v3514
    %v3519 = vrsqrt.pop %v3515
    %v3520 = vrsqrt.pop %v3516
    %v3521 = vrsqrt.pop %v3517
    %v3522 = vmul.f32 %v3490, %v3518
    %v3523 = vmul.f32 %v3491, %v3519
    %v3524 = vmul.f32 %v3492, %v3520
    %v3525 = vmul.f32 %v3493, %v3521
    %v3527 = vlaneseq
    %v3528 = vshrl.u32 %v3527, 7
    %v3529 = vsub.s32 0, %v3528
    %v3530 = vrot.slane %v3471, %v3529
    %v3532 = vmul.f32 %v3522, %v3530
    %v3533 = vmul.f32 %v3523, %v3530
    %v3534 = vmul.f32 %v3524, %v3530
    %v3535 = vmul.f32 %v3525, %v3530
    %v3537 = vlaneseq
    %v3538 = vshrl.u32 %v3537, 7
    %v3539 = vsub.s32 0, %v3538
    %v3540 = vrot.slane %v3472, %v3539
    %v3542 = vadd.f32 %v3532, %v3540
    %v3543 = vadd.f32 %v3533, %v3540
    %v3544 = vadd.f32 %v3534, %v3540
    %v3545 = vadd.f32 %v3535, %v3540
    %v3546 = vld [vmem:[%s10] sm:$0xff]
    %v3547 = vld [vmem:[%s10 + $0x8] sm:$0xff]
    %v3548 = vld [vmem:[%s10 + $0x10] sm:$0xff]
    %v3549 = vld [vmem:[%s10 + $0x18] sm:$0xff]
    %v3550 = vld [vmem:[#allocation13] sm:$0x1]
    %v3552 = vlaneseq
    %v3553 = vshrl.u32 %v3552, 7
    %v3554 = vsub.s32 0, %v3553
    %v3555 = vrot.slane %v3550, %v3554
    %v3558 = vsel %vm301, %v3542, 0
    %v3561 = vsel %vm301, %v3543, 0
    %v3564 = vsel %vm301, %v3544, 0
    %v3567 = vsel %vm301, %v3545, 0
    %3569 = vmatprep.subr.mxu0 0.0
    %3570 = vmatpush1.msra.mxu0 0.0
    %3571 = vmatprep.subr.mxu0 0.0
    %3572 = vmatpush1.msra.mxu0 0.0
    %3573 = vmatprep.subr.mxu0 0.0
    %3574 = vmatpush1.msra.mxu0 0.0
    %3575 = vmatprep.subr.mxu0 0.0
    %3576 = vmatpush1.msra.mxu0 0.0
    %3577 = vmatprep.subr.mxu0 0.0
    %3578 = vmatpush1.msra.mxu0 0.0
    %3579 = vmatprep.subr.mxu0 0.0
    %3580 = vmatpush1.msra.mxu0 0.0
    %3581 = vmatprep.subr.mxu0 0.0
    %3582 = vmatpush1.msra.mxu0 0.0
    %3583 = vmatprep.subr.mxu0 0.0
    %3584 = vmatpush1.msra.mxu0 0.0
    %3585 = vmatprep.subr.mxu0 0.0
    %3586 = vmatpush1.msra.mxu0 0.0
    %3587 = vmatprep.subr.mxu0 0.0
    %3588 = vmatpush1.msra.mxu0 0.0
    %3589 = vmatprep.subr.mxu0 0.0
    %3590 = vmatpush1.msra.mxu0 0.0
    %3591 = vmatprep.subr.mxu0 0.0
    %3592 = vmatpush1.msra.mxu0 0.0
    %3593 = vmatprep.subr.mxu0 0.0
    %3594 = vmatpush1.msra.mxu0 %v3549
    %3595 = vmatprep.subr.mxu0 0.0
    %3596 = vmatpush1.msra.mxu0 %v3548
    %3597 = vmatprep.subr.mxu0 0.0
    %3598 = vmatpush1.msra.mxu0 %v3547
    %3599 = vmatprep.subr.mxu0 0.0
    %3600 = vmatpush1.msra.mxu0 %v3546
    %3601 = vmatprep.subr.mxu0 0.0
    %3602 = vmatpush2.msra.mxu0 0.0
    %3603 = vmatprep.subr.mxu0 0.0
    %3604 = vmatpush2.msra.mxu0 0.0
    %3605 = vmatprep.subr.mxu0 0.0
    %3606 = vmatpush2.msra.mxu0 0.0
    %3607 = vmatprep.subr.mxu0 0.0
    %3608 = vmatpush2.msra.mxu0 0.0
    %3609 = vmatprep.subr.mxu0 0.0
    %3610 = vmatpush2.msra.mxu0 0.0
    %3611 = vmatprep.subr.mxu0 0.0
    %3612 = vmatpush2.msra.mxu0 0.0
    %3613 = vmatprep.subr.mxu0 0.0
    %3614 = vmatpush2.msra.mxu0 0.0
    %3615 = vmatprep.subr.mxu0 0.0
    %3616 = vmatpush2.msra.mxu0 0.0
    %3617 = vmatprep.subr.mxu0 0.0
    %3618 = vmatpush2.msra.mxu0 0.0
    %3619 = vmatprep.subr.mxu0 0.0
    %3620 = vmatpush2.msra.mxu0 0.0
    %3621 = vmatprep.subr.mxu0 0.0
    %3622 = vmatpush2.msra.mxu0 0.0
    %3623 = vmatprep.subr.mxu0 0.0
    %3624 = vmatpush2.msra.mxu0 0.0
    %3625 = vmatprep.subr.mxu0 0.0
    %3626 = vmatpush2.msra.mxu0 0.0
    %3627 = vmatprep.subr.mxu0 0.0
    %3628 = vmatpush2.msra.mxu0 0.0
    %3629 = vmatprep.subr.mxu0 0.0
    %3630 = vmatpush2.msra.mxu0 0.0
    %3631 = vmatprep.subr.mxu0 0.0
    %3632 = vmatpush2.msra.mxu0 0.0
    %3633 = vmatprep.mubr.f32.mxu0 0.0
    %3634 = vmatmul.mubr.f32.gmra.mxu0 %v3558
    %v3635 = vpop.f32.mrf.mxu0
    %v3636 = vadd.f32 %v3555, %v3635
    %v3637 = vpop.f32.mrf.mxu0
    %3638 = vmatprep.mubr.f32.mxu0 0.0
    %3639 = vmatmul.mubr.f32.gmra.mxu0 %v3561
    %v3640 = vpop.f32.mrf.mxu0
    %v3641 = vadd.f32 %v3555, %v3640
    %v3642 = vpop.f32.mrf.mxu0
    %3643 = vmatprep.mubr.f32.mxu0 0.0
    %3644 = vmatmul.mubr.f32.gmra.mxu0 %v3564
    %v3645 = vpop.f32.mrf.mxu0
    %v3646 = vadd.f32 %v3555, %v3645
    %v3647 = vpop.f32.mrf.mxu0
    %3648 = vmatprep.mubr.f32.mxu0 0.0
    %3649 = vmatmul.mubr.f32.gmra.mxu0 %v3567
    %v3650 = vpop.f32.mrf.mxu0
    %v3651 = vadd.f32 %v3555, %v3650
    %v3652 = vpop.f32.mrf.mxu0
    %3653 = vdwg.mxu0
    %v3654 = vmax.f32 %v3636, 0.0
    %v3655 = vmax.f32 %v3641, 0.0
    %v3656 = vmax.f32 %v3646, 0.0
    %v3657 = vmax.f32 %v3651, 0.0
    %v3658 = vld [vmem:[%s12] sm:$0xff]
    %v3659 = vld [vmem:[%s12 + $0x8] sm:$0xff]
    %v3660 = vld [vmem:[%s12 + $0x10] sm:$0xff]
    %v3661 = vld [vmem:[%s12 + $0x18] sm:$0xff]
    %v3662 = vld [vmem:[%s12 + $0x20] sm:$0xff]
    %v3663 = vld [vmem:[%s12 + $0x28] sm:$0xff]
    %v3664 = vld [vmem:[%s12 + $0x30] sm:$0xff]
    %v3665 = vld [vmem:[%s12 + $0x38] sm:$0xff]
    %v3666 = vld [vmem:[#allocation14] sm:$0x1]
    %v3668 = vlaneseq
    %v3669 = vshrl.u32 %v3668, 7
    %v3670 = vsub.s32 0, %v3669
    %v3671 = vrot.slane %v3666, %v3670
    %vm3673 = vcmask 523264
    %v3675 = vsel %vm3673, %v3654, 0
    %v3678 = vsel %vm3673, %v3655, 0
    %v3681 = vsel %vm3673, %v3656, 0
    %v3684 = vsel %vm3673, %v3657, 0
    %3686 = vmatprep.subr.mxu0 0.0
    %3687 = vmatpush1.msra.mxu0 0.0
    %3688 = vmatprep.subr.mxu0 0.0
    %3689 = vmatpush1.msra.mxu0 0.0
    %3690 = vmatprep.subr.mxu0 0.0
    %3691 = vmatpush1.msra.mxu0 0.0
    %3692 = vmatprep.subr.mxu0 0.0
    %3693 = vmatpush1.msra.mxu0 0.0
    %3694 = vmatprep.subr.mxu0 0.0
    %3695 = vmatpush1.msra.mxu0 0.0
    %3696 = vmatprep.subr.mxu0 0.0
    %3697 = vmatpush1.msra.mxu0 0.0
    %3698 = vmatprep.subr.mxu0 0.0
    %3699 = vmatpush1.msra.mxu0 0.0
    %3700 = vmatprep.subr.mxu0 0.0
    %3701 = vmatpush1.msra.mxu0 0.0
    %3702 = vmatprep.subr.mxu0 0.0
    %3703 = vmatpush1.msra.mxu0 %v3665
    %3704 = vmatprep.subr.mxu0 0.0
    %3705 = vmatpush1.msra.mxu0 %v3664
    %3706 = vmatprep.subr.mxu0 0.0
    %3707 = vmatpush1.msra.mxu0 %v3663
    %3708 = vmatprep.subr.mxu0 0.0
    %3709 = vmatpush1.msra.mxu0 %v3662
    %3710 = vmatprep.subr.mxu0 0.0
    %3711 = vmatpush1.msra.mxu0 %v3661
    %3712 = vmatprep.subr.mxu0 0.0
    %3713 = vmatpush1.msra.mxu0 %v3660
    %3714 = vmatprep.subr.mxu0 0.0
    %3715 = vmatpush1.msra.mxu0 %v3659
    %3716 = vmatprep.subr.mxu0 0.0
    %3717 = vmatpush1.msra.mxu0 %v3658
    %3718 = vmatprep.subr.mxu0 0.0
    %3719 = vmatpush2.msra.mxu0 0.0
    %3720 = vmatprep.subr.mxu0 0.0
    %3721 = vmatpush2.msra.mxu0 0.0
    %3722 = vmatprep.subr.mxu0 0.0
    %3723 = vmatpush2.msra.mxu0 0.0
    %3724 = vmatprep.subr.mxu0 0.0
    %3725 = vmatpush2.msra.mxu0 0.0
    %3726 = vmatprep.subr.mxu0 0.0
    %3727 = vmatpush2.msra.mxu0 0.0
    %3728 = vmatprep.subr.mxu0 0.0
    %3729 = vmatpush2.msra.mxu0 0.0
    %3730 = vmatprep.subr.mxu0 0.0
    %3731 = vmatpush2.msra.mxu0 0.0
    %3732 = vmatprep.subr.mxu0 0.0
    %3733 = vmatpush2.msra.mxu0 0.0
    %3734 = vmatprep.subr.mxu0 0.0
    %3735 = vmatpush2.msra.mxu0 0.0
    %3736 = vmatprep.subr.mxu0 0.0
    %3737 = vmatpush2.msra.mxu0 0.0
    %3738 = vmatprep.subr.mxu0 0.0
    %3739 = vmatpush2.msra.mxu0 0.0
    %3740 = vmatprep.subr.mxu0 0.0
    %3741 = vmatpush2.msra.mxu0 0.0
    %3742 = vmatprep.subr.mxu0 0.0
    %3743 = vmatpush2.msra.mxu0 0.0
    %3744 = vmatprep.subr.mxu0 0.0
    %3745 = vmatpush2.msra.mxu0 0.0
    %3746 = vmatprep.subr.mxu0 0.0
    %3747 = vmatpush2.msra.mxu0 0.0
    %3748 = vmatprep.subr.mxu0 0.0
    %3749 = vmatpush2.msra.mxu0 0.0
    %3750 = vmatprep.mubr.f32.mxu0 0.0
    %3751 = vmatmul.mubr.f32.gmra.mxu0 %v3675
    %v3752 = vpop.f32.mrf.mxu0
    %v3753 = vadd.f32 %v3671, %v3752
    %v3754 = vpop.f32.mrf.mxu0
    %3755 = vmatprep.mubr.f32.mxu0 0.0
    %3756 = vmatmul.mubr.f32.gmra.mxu0 %v3678
    %v3757 = vpop.f32.mrf.mxu0
    %v3758 = vadd.f32 %v3671, %v3757
    %v3759 = vpop.f32.mrf.mxu0
    %3760 = vmatprep.mubr.f32.mxu0 0.0
    %3761 = vmatmul.mubr.f32.gmra.mxu0 %v3681
    %v3762 = vpop.f32.mrf.mxu0
    %v3763 = vadd.f32 %v3671, %v3762
    %v3764 = vpop.f32.mrf.mxu0
    %3765 = vmatprep.mubr.f32.mxu0 0.0
    %3766 = vmatmul.mubr.f32.gmra.mxu0 %v3684
    %v3767 = vpop.f32.mrf.mxu0
    %v3768 = vadd.f32 %v3671, %v3767
    %v3769 = vpop.f32.mrf.mxu0
    %3770 = vdwg.mxu0
    %v3771 = vadd.f32 %v3542, %v3753
    %v3772 = vadd.f32 %v3543, %v3758
    %v3773 = vadd.f32 %v3544, %v3763
    %v3774 = vadd.f32 %v3545, %v3768
    %v3775 = vld [vmem:[#allocation16] sm:$0x1]
    %v3776 = vld [vmem:[#allocation17] sm:$0x1]
    %v3777 = vsel %vm301, %v3771, 0.0
    %3778 = vadd.xlane.f32.xlu0 %v3777
    %v3779 = vpop.xlane.xlu0 %3778
    %v3780 = vsel %vm301, %v3772, 0.0
    %3781 = vadd.xlane.f32.xlu0 %v3780
    %v3782 = vpop.xlane.xlu0 %3781
    %v3783 = vsel %vm301, %v3773, 0.0
    %3784 = vadd.xlane.f32.xlu0 %v3783
    %v3785 = vpop.xlane.xlu0 %3784
    %v3786 = vsel %vm301, %v3774, 0.0
    %3787 = vadd.xlane.f32.xlu0 %v3786
    %v3788 = vpop.xlane.xlu0 %3787
    %v3789 = vmul.f32 %v3779, %v3485
    %v3790 = vmul.f32 %v3782, %v3485
    %v3791 = vmul.f32 %v3785, %v3485
    %v3792 = vmul.f32 %v3788, %v3485
    %v3793 = vsub.f32 %v3771, %v3789
    %v3794 = vsub.f32 %v3772, %v3790
    %v3795 = vsub.f32 %v3773, %v3791
    %v3796 = vsub.f32 %v3774, %v3792
    %v3797 = vmul.f32 %v3793, %v3793
    %v3798 = vmul.f32 %v3794, %v3794
    %v3799 = vmul.f32 %v3795, %v3795
    %v3800 = vmul.f32 %v3796, %v3796
    %v3801 = vsel %vm301, %v3797, 0.0
    %3802 = vadd.xlane.f32.xlu0 %v3801
    %v3803 = vpop.xlane.xlu0 %3802
    %v3804 = vsel %vm301, %v3798, 0.0
    %3805 = vadd.xlane.f32.xlu0 %v3804
    %v3806 = vpop.xlane.xlu0 %3805
    %v3807 = vsel %vm301, %v3799, 0.0
    %3808 = vadd.xlane.f32.xlu0 %v3807
    %v3809 = vpop.xlane.xlu0 %3808
    %v3810 = vsel %vm301, %v3800, 0.0
    %3811 = vadd.xlane.f32.xlu0 %v3810
    %v3812 = vpop.xlane.xlu0 %3811
    %v3813 = vmul.f32 %v3803, %v3485
    %v3814 = vmul.f32 %v3806, %v3485
    %v3815 = vmul.f32 %v3809, %v3485
    %v3816 = vmul.f32 %v3812, %v3485
    %v3817 = vadd.f32 %v3813, 1e-05
    %v3818 = vadd.f32 %v3814, 1e-05
    %v3819 = vadd.f32 %v3815, 1e-05
    %v3820 = vadd.f32 %v3816, 1e-05
    %v3821 = vrsqrt.pop %v3817
    %v3822 = vrsqrt.pop %v3818
    %v3823 = vrsqrt.pop %v3819
    %v3824 = vrsqrt.pop %v3820
    %v3825 = vmul.f32 %v3793, %v3821
    %v3826 = vmul.f32 %v3794, %v3822
    %v3827 = vmul.f32 %v3795, %v3823
    %v3828 = vmul.f32 %v3796, %v3824
    %v3830 = vlaneseq
    %v3831 = vshrl.u32 %v3830, 7
    %v3832 = vsub.s32 0, %v3831
    %v3833 = vrot.slane %v3775, %v3832
    %v3835 = vmul.f32 %v3825, %v3833
    %v3836 = vmul.f32 %v3826, %v3833
    %v3837 = vmul.f32 %v3827, %v3833
    %v3838 = vmul.f32 %v3828, %v3833
    %v3840 = vlaneseq
    %v3841 = vshrl.u32 %v3840, 7
    %v3842 = vsub.s32 0, %v3841
    %v3843 = vrot.slane %v3776, %v3842
    %v3845 = vadd.f32 %v3835, %v3843
    %v3846 = vadd.f32 %v3836, %v3843
    %v3847 = vadd.f32 %v3837, %v3843
    %v3848 = vadd.f32 %v3838, %v3843
    %s3849 = scalar_lea.vmem %s4, 32
    %v3850 = vld [vmem:[%s3849] sm:$0xff]
    %v3851 = vld [vmem:[%s3849 + $0x8] sm:$0xff]
    %v3852 = vld [vmem:[%s3849 + $0x10] sm:$0xff]
    %v3853 = vld [vmem:[%s3849 + $0x18] sm:$0xff]
    %s3854 = scalar_lea.vmem [#allocation7], 1
    %v3855 = vld [vmem:[%s3854] sm:$0x1]
    %v3857 = vlaneseq
    %v3858 = vshrl.u32 %v3857, 7
    %v3859 = vsub.s32 0, %v3858
    %v3860 = vrot.slane %v3855, %v3859
    %v3863 = vsel %vm301, %v3845, 0
    %v3866 = vsel %vm301, %v3846, 0
    %v3869 = vsel %vm301, %v3847, 0
    %v3872 = vsel %vm301, %v3848, 0
    %3874 = vmatprep.subr.mxu0 0.0
    %3875 = vmatpush1.msra.mxu0 0.0
    %3876 = vmatprep.subr.mxu0 0.0
    %3877 = vmatpush1.msra.mxu0 0.0
    %3878 = vmatprep.subr.mxu0 0.0
    %3879 = vmatpush1.msra.mxu0 0.0
    %3880 = vmatprep.subr.mxu0 0.0
    %3881 = vmatpush1.msra.mxu0 0.0
    %3882 = vmatprep.subr.mxu0 0.0
    %3883 = vmatpush1.msra.mxu0 0.0
    %3884 = vmatprep.subr.mxu0 0.0
    %3885 = vmatpush1.msra.mxu0 0.0
    %3886 = vmatprep.subr.mxu0 0.0
    %3887 = vmatpush1.msra.mxu0 0.0
    %3888 = vmatprep.subr.mxu0 0.0
    %3889 = vmatpush1.msra.mxu0 0.0
    %3890 = vmatprep.subr.mxu0 0.0
    %3891 = vmatpush1.msra.mxu0 0.0
    %3892 = vmatprep.subr.mxu0 0.0
    %3893 = vmatpush1.msra.mxu0 0.0
    %3894 = vmatprep.subr.mxu0 0.0
    %3895 = vmatpush1.msra.mxu0 0.0
    %3896 = vmatprep.subr.mxu0 0.0
    %3897 = vmatpush1.msra.mxu0 0.0
    %3898 = vmatprep.subr.mxu0 0.0
    %3899 = vmatpush1.msra.mxu0 %v3853
    %3900 = vmatprep.subr.mxu0 0.0
    %3901 = vmatpush1.msra.mxu0 %v3852
    %3902 = vmatprep.subr.mxu0 0.0
    %3903 = vmatpush1.msra.mxu0 %v3851
    %3904 = vmatprep.subr.mxu0 0.0
    %3905 = vmatpush1.msra.mxu0 %v3850
    %3906 = vmatprep.subr.mxu0 0.0
    %3907 = vmatpush2.msra.mxu0 0.0
    %3908 = vmatprep.subr.mxu0 0.0
    %3909 = vmatpush2.msra.mxu0 0.0
    %3910 = vmatprep.subr.mxu0 0.0
    %3911 = vmatpush2.msra.mxu0 0.0
    %3912 = vmatprep.subr.mxu0 0.0
    %3913 = vmatpush2.msra.mxu0 0.0
    %3914 = vmatprep.subr.mxu0 0.0
    %3915 = vmatpush2.msra.mxu0 0.0
    %3916 = vmatprep.subr.mxu0 0.0
    %3917 = vmatpush2.msra.mxu0 0.0
    %3918 = vmatprep.subr.mxu0 0.0
    %3919 = vmatpush2.msra.mxu0 0.0
    %3920 = vmatprep.subr.mxu0 0.0
    %3921 = vmatpush2.msra.mxu0 0.0
    %3922 = vmatprep.subr.mxu0 0.0
    %3923 = vmatpush2.msra.mxu0 0.0
    %3924 = vmatprep.subr.mxu0 0.0
    %3925 = vmatpush2.msra.mxu0 0.0
    %3926 = vmatprep.subr.mxu0 0.0
    %3927 = vmatpush2.msra.mxu0 0.0
    %3928 = vmatprep.subr.mxu0 0.0
    %3929 = vmatpush2.msra.mxu0 0.0
    %3930 = vmatprep.subr.mxu0 0.0
    %3931 = vmatpush2.msra.mxu0 0.0
    %3932 = vmatprep.subr.mxu0 0.0
    %3933 = vmatpush2.msra.mxu0 0.0
    %3934 = vmatprep.subr.mxu0 0.0
    %3935 = vmatpush2.msra.mxu0 0.0
    %3936 = vmatprep.subr.mxu0 0.0
    %3937 = vmatpush2.msra.mxu0 0.0
    %3938 = vmatprep.mubr.f32.mxu0 0.0
    %3939 = vmatmul.mubr.f32.gmra.mxu0 %v3863
    %v3940 = vpop.f32.mrf.mxu0
    %v3941 = vadd.f32 %v3860, %v3940
    %v3942 = vpop.f32.mrf.mxu0
    %3943 = vmatprep.mubr.f32.mxu0 0.0
    %3944 = vmatmul.mubr.f32.gmra.mxu0 %v3866
    %v3945 = vpop.f32.mrf.mxu0
    %v3946 = vadd.f32 %v3860, %v3945
    %v3947 = vpop.f32.mrf.mxu0
    %3948 = vmatprep.mubr.f32.mxu0 0.0
    %3949 = vmatmul.mubr.f32.gmra.mxu0 %v3869
    %v3950 = vpop.f32.mrf.mxu0
    %v3951 = vadd.f32 %v3860, %v3950
    %v3952 = vpop.f32.mrf.mxu0
    %3953 = vmatprep.mubr.f32.mxu0 0.0
    %3954 = vmatmul.mubr.f32.gmra.mxu0 %v3872
    %v3955 = vpop.f32.mrf.mxu0
    %v3956 = vadd.f32 %v3860, %v3955
    %v3957 = vpop.f32.mrf.mxu0
    %3958 = vdwg.mxu0
    %s3959 = scalar_lea.vmem %s6, 32
    %v3960 = vld [vmem:[%s3959] sm:$0xff]
    %v3961 = vld [vmem:[%s3959 + $0x8] sm:$0xff]
    %v3962 = vld [vmem:[%s3959 + $0x10] sm:$0xff]
    %v3963 = vld [vmem:[%s3959 + $0x18] sm:$0xff]
    %s3964 = scalar_lea.vmem [#allocation8], 1
    %v3965 = vld [vmem:[%s3964] sm:$0x1]
    %3967 = vrot.lane.b32.xlu0 %v3941, 96
    %v3968 = vpop.permute.xlu0 %3967
    %v3969 = vsel %vm407, %v3941, 0
    %v3971 = vsel %vm407, %v3968, 0
    %3973 = vmatprep.subr.mxu0 0.0
    %3974 = vmatpush1.xpose.msra.mxu0 0.0
    %3975 = vmatprep.subr.mxu0 0.0
    %3976 = vmatpush1.xpose.msra.mxu0 0.0
    %3977 = vmatprep.subr.mxu0 0.0
    %3978 = vmatpush1.xpose.msra.mxu0 0.0
    %3979 = vmatprep.subr.mxu0 0.0
    %3980 = vmatpush1.xpose.msra.mxu0 0.0
    %3981 = vmatprep.subr.mxu0 0.0
    %3982 = vmatpush1.xpose.msra.mxu0 0.0
    %3983 = vmatprep.subr.mxu0 0.0
    %3984 = vmatpush1.xpose.msra.mxu0 0.0
    %3985 = vmatprep.subr.mxu0 0.0
    %3986 = vmatpush1.xpose.msra.mxu0 0.0
    %3987 = vmatprep.subr.mxu0 0.0
    %3988 = vmatpush1.xpose.msra.mxu0 0.0
    %3989 = vmatprep.subr.mxu0 0.0
    %3990 = vmatpush1.xpose.msra.mxu0 0.0
    %3991 = vmatprep.subr.mxu0 0.0
    %3992 = vmatpush1.xpose.msra.mxu0 0.0
    %3993 = vmatprep.subr.mxu0 0.0
    %3994 = vmatpush1.xpose.msra.mxu0 0.0
    %3995 = vmatprep.subr.mxu0 0.0
    %3996 = vmatpush1.xpose.msra.mxu0 0.0
    %3997 = vmatprep.subr.mxu0 0.0
    %3998 = vmatpush1.xpose.msra.mxu0 0.0
    %3999 = vmatprep.subr.mxu0 0.0
    %4000 = vmatpush1.xpose.msra.mxu0 0.0
    %4001 = vmatprep.subr.mxu0 0.0
    %4002 = vmatpush1.xpose.msra.mxu0 0.0
    %4003 = vmatprep.subr.mxu0 0.0
    %4004 = vmatpush1.xpose.msra.mxu0 %v3971
    %4005 = vmatprep.subr.mxu0 0.0
    %4006 = vmatpush2.xpose.msra.mxu0 0.0
    %4007 = vmatprep.subr.mxu0 0.0
    %4008 = vmatpush2.xpose.msra.mxu0 0.0
    %4009 = vmatprep.subr.mxu0 0.0
    %4010 = vmatpush2.xpose.msra.mxu0 0.0
    %4011 = vmatprep.subr.mxu0 0.0
    %4012 = vmatpush2.xpose.msra.mxu0 0.0
    %4013 = vmatprep.subr.mxu0 0.0
    %4014 = vmatpush2.xpose.msra.mxu0 0.0
    %4015 = vmatprep.subr.mxu0 0.0
    %4016 = vmatpush2.xpose.msra.mxu0 0.0
    %4017 = vmatprep.subr.mxu0 0.0
    %4018 = vmatpush2.xpose.msra.mxu0 0.0
    %4019 = vmatprep.subr.mxu0 0.0
    %4020 = vmatpush2.xpose.msra.mxu0 0.0
    %4021 = vmatprep.subr.mxu0 0.0
    %4022 = vmatpush2.xpose.msra.mxu0 0.0
    %4023 = vmatprep.subr.mxu0 0.0
    %4024 = vmatpush2.xpose.msra.mxu0 0.0
    %4025 = vmatprep.subr.mxu0 0.0
    %4026 = vmatpush2.xpose.msra.mxu0 0.0
    %4027 = vmatprep.subr.mxu0 0.0
    %4028 = vmatpush2.xpose.msra.mxu0 0.0
    %4029 = vmatprep.subr.mxu0 0.0
    %4030 = vmatpush2.xpose.msra.mxu0 0.0
    %4031 = vmatprep.subr.mxu0 0.0
    %4032 = vmatpush2.xpose.msra.mxu0 0.0
    %4033 = vmatprep.subr.mxu0 0.0
    %4034 = vmatpush2.xpose.msra.mxu0 0.0
    %4035 = vmatprep.subr.mxu0 0.0
    %4036 = vmatpush2.xpose.msra.mxu0 0.0
    %4037 = vmatprep.mubr.f32.mxu0 0.0
    %4038 = vmatmul.mubr.f32.gmra.mxu0 %v3969
    %v4039 = vpop.f32.mrf.mxu0
    %v4040 = vadd.f32 0.0, %v4039
    %v4041 = vpop.f32.mrf.mxu0
    %4042 = vdwg.mxu0
    %4044 = vrot.lane.b32.xlu0 %v3946, 96
    %v4045 = vpop.permute.xlu0 %4044
    %v4046 = vsel %vm407, %v3946, 0
    %v4048 = vsel %vm407, %v4045, 0
    %4050 = vmatprep.subr.mxu0 0.0
    %4051 = vmatpush1.xpose.msra.mxu0 0.0
    %4052 = vmatprep.subr.mxu0 0.0
    %4053 = vmatpush1.xpose.msra.mxu0 0.0
    %4054 = vmatprep.subr.mxu0 0.0
    %4055 = vmatpush1.xpose.msra.mxu0 0.0
    %4056 = vmatprep.subr.mxu0 0.0
    %4057 = vmatpush1.xpose.msra.mxu0 0.0
    %4058 = vmatprep.subr.mxu0 0.0
    %4059 = vmatpush1.xpose.msra.mxu0 0.0
    %4060 = vmatprep.subr.mxu0 0.0
    %4061 = vmatpush1.xpose.msra.mxu0 0.0
    %4062 = vmatprep.subr.mxu0 0.0
    %4063 = vmatpush1.xpose.msra.mxu0 0.0
    %4064 = vmatprep.subr.mxu0 0.0
    %4065 = vmatpush1.xpose.msra.mxu0 0.0
    %4066 = vmatprep.subr.mxu0 0.0
    %4067 = vmatpush1.xpose.msra.mxu0 0.0
    %4068 = vmatprep.subr.mxu0 0.0
    %4069 = vmatpush1.xpose.msra.mxu0 0.0
    %4070 = vmatprep.subr.mxu0 0.0
    %4071 = vmatpush1.xpose.msra.mxu0 0.0
    %4072 = vmatprep.subr.mxu0 0.0
    %4073 = vmatpush1.xpose.msra.mxu0 0.0
    %4074 = vmatprep.subr.mxu0 0.0
    %4075 = vmatpush1.xpose.msra.mxu0 0.0
    %4076 = vmatprep.subr.mxu0 0.0
    %4077 = vmatpush1.xpose.msra.mxu0 0.0
    %4078 = vmatprep.subr.mxu0 0.0
    %4079 = vmatpush1.xpose.msra.mxu0 0.0
    %4080 = vmatprep.subr.mxu0 0.0
    %4081 = vmatpush1.xpose.msra.mxu0 %v4048
    %4082 = vmatprep.subr.mxu0 0.0
    %4083 = vmatpush2.xpose.msra.mxu0 0.0
    %4084 = vmatprep.subr.mxu0 0.0
    %4085 = vmatpush2.xpose.msra.mxu0 0.0
    %4086 = vmatprep.subr.mxu0 0.0
    %4087 = vmatpush2.xpose.msra.mxu0 0.0
    %4088 = vmatprep.subr.mxu0 0.0
    %4089 = vmatpush2.xpose.msra.mxu0 0.0
    %4090 = vmatprep.subr.mxu0 0.0
    %4091 = vmatpush2.xpose.msra.mxu0 0.0
    %4092 = vmatprep.subr.mxu0 0.0
    %4093 = vmatpush2.xpose.msra.mxu0 0.0
    %4094 = vmatprep.subr.mxu0 0.0
    %4095 = vmatpush2.xpose.msra.mxu0 0.0
    %4096 = vmatprep.subr.mxu0 0.0
    %4097 = vmatpush2.xpose.msra.mxu0 0.0
    %4098 = vmatprep.subr.mxu0 0.0
    %4099 = vmatpush2.xpose.msra.mxu0 0.0
    %4100 = vmatprep.subr.mxu0 0.0
    %4101 = vmatpush2.xpose.msra.mxu0 0.0
    %4102 = vmatprep.subr.mxu0 0.0
    %4103 = vmatpush2.xpose.msra.mxu0 0.0
    %4104 = vmatprep.subr.mxu0 0.0
    %4105 = vmatpush2.xpose.msra.mxu0 0.0
    %4106 = vmatprep.subr.mxu0 0.0
    %4107 = vmatpush2.xpose.msra.mxu0 0.0
    %4108 = vmatprep.subr.mxu0 0.0
    %4109 = vmatpush2.xpose.msra.mxu0 0.0
    %4110 = vmatprep.subr.mxu0 0.0
    %4111 = vmatpush2.xpose.msra.mxu0 0.0
    %4112 = vmatprep.subr.mxu0 0.0
    %4113 = vmatpush2.xpose.msra.mxu0 0.0
    %4114 = vmatprep.mubr.f32.mxu0 0.0
    %4115 = vmatmul.mubr.f32.gmra.mxu0 %v4046
    %v4116 = vpop.f32.mrf.mxu0
    %v4117 = vadd.f32 0.0, %v4116
    %v4118 = vpop.f32.mrf.mxu0
    %4119 = vdwg.mxu0
    %4121 = vrot.lane.b32.xlu0 %v3951, 96
    %v4122 = vpop.permute.xlu0 %4121
    %v4123 = vsel %vm407, %v3951, 0
    %v4125 = vsel %vm407, %v4122, 0
    %4127 = vmatprep.subr.mxu0 0.0
    %4128 = vmatpush1.xpose.msra.mxu0 0.0
    %4129 = vmatprep.subr.mxu0 0.0
    %4130 = vmatpush1.xpose.msra.mxu0 0.0
    %4131 = vmatprep.subr.mxu0 0.0
    %4132 = vmatpush1.xpose.msra.mxu0 0.0
    %4133 = vmatprep.subr.mxu0 0.0
    %4134 = vmatpush1.xpose.msra.mxu0 0.0
    %4135 = vmatprep.subr.mxu0 0.0
    %4136 = vmatpush1.xpose.msra.mxu0 0.0
    %4137 = vmatprep.subr.mxu0 0.0
    %4138 = vmatpush1.xpose.msra.mxu0 0.0
    %4139 = vmatprep.subr.mxu0 0.0
    %4140 = vmatpush1.xpose.msra.mxu0 0.0
    %4141 = vmatprep.subr.mxu0 0.0
    %4142 = vmatpush1.xpose.msra.mxu0 0.0
    %4143 = vmatprep.subr.mxu0 0.0
    %4144 = vmatpush1.xpose.msra.mxu0 0.0
    %4145 = vmatprep.subr.mxu0 0.0
    %4146 = vmatpush1.xpose.msra.mxu0 0.0
    %4147 = vmatprep.subr.mxu0 0.0
    %4148 = vmatpush1.xpose.msra.mxu0 0.0
    %4149 = vmatprep.subr.mxu0 0.0
    %4150 = vmatpush1.xpose.msra.mxu0 0.0
    %4151 = vmatprep.subr.mxu0 0.0
    %4152 = vmatpush1.xpose.msra.mxu0 0.0
    %4153 = vmatprep.subr.mxu0 0.0
    %4154 = vmatpush1.xpose.msra.mxu0 0.0
    %4155 = vmatprep.subr.mxu0 0.0
    %4156 = vmatpush1.xpose.msra.mxu0 0.0
    %4157 = vmatprep.subr.mxu0 0.0
    %4158 = vmatpush1.xpose.msra.mxu0 %v4125
    %4159 = vmatprep.subr.mxu0 0.0
    %4160 = vmatpush2.xpose.msra.mxu0 0.0
    %4161 = vmatprep.subr.mxu0 0.0
    %4162 = vmatpush2.xpose.msra.mxu0 0.0
    %4163 = vmatprep.subr.mxu0 0.0
    %4164 = vmatpush2.xpose.msra.mxu0 0.0
    %4165 = vmatprep.subr.mxu0 0.0
    %4166 = vmatpush2.xpose.msra.mxu0 0.0
    %4167 = vmatprep.subr.mxu0 0.0
    %4168 = vmatpush2.xpose.msra.mxu0 0.0
    %4169 = vmatprep.subr.mxu0 0.0
    %4170 = vmatpush2.xpose.msra.mxu0 0.0
    %4171 = vmatprep.subr.mxu0 0.0
    %4172 = vmatpush2.xpose.msra.mxu0 0.0
    %4173 = vmatprep.subr.mxu0 0.0
    %4174 = vmatpush2.xpose.msra.mxu0 0.0
    %4175 = vmatprep.subr.mxu0 0.0
    %4176 = vmatpush2.xpose.msra.mxu0 0.0
    %4177 = vmatprep.subr.mxu0 0.0
    %4178 = vmatpush2.xpose.msra.mxu0 0.0
    %4179 = vmatprep.subr.mxu0 0.0
    %4180 = vmatpush2.xpose.msra.mxu0 0.0
    %4181 = vmatprep.subr.mxu0 0.0
    %4182 = vmatpush2.xpose.msra.mxu0 0.0
    %4183 = vmatprep.subr.mxu0 0.0
    %4184 = vmatpush2.xpose.msra.mxu0 0.0
    %4185 = vmatprep.subr.mxu0 0.0
    %4186 = vmatpush2.xpose.msra.mxu0 0.0
    %4187 = vmatprep.subr.mxu0 0.0
    %4188 = vmatpush2.xpose.msra.mxu0 0.0
    %4189 = vmatprep.subr.mxu0 0.0
    %4190 = vmatpush2.xpose.msra.mxu0 0.0
    %4191 = vmatprep.mubr.f32.mxu0 0.0
    %4192 = vmatmul.mubr.f32.gmra.mxu0 %v4123
    %v4193 = vpop.f32.mrf.mxu0
    %v4194 = vadd.f32 0.0, %v4193
    %v4195 = vpop.f32.mrf.mxu0
    %4196 = vdwg.mxu0
    %4198 = vrot.lane.b32.xlu0 %v3956, 96
    %v4199 = vpop.permute.xlu0 %4198
    %v4200 = vsel %vm407, %v3956, 0
    %v4202 = vsel %vm407, %v4199, 0
    %4204 = vmatprep.subr.mxu0 0.0
    %4205 = vmatpush1.xpose.msra.mxu0 0.0
    %4206 = vmatprep.subr.mxu0 0.0
    %4207 = vmatpush1.xpose.msra.mxu0 0.0
    %4208 = vmatprep.subr.mxu0 0.0
    %4209 = vmatpush1.xpose.msra.mxu0 0.0
    %4210 = vmatprep.subr.mxu0 0.0
    %4211 = vmatpush1.xpose.msra.mxu0 0.0
    %4212 = vmatprep.subr.mxu0 0.0
    %4213 = vmatpush1.xpose.msra.mxu0 0.0
    %4214 = vmatprep.subr.mxu0 0.0
    %4215 = vmatpush1.xpose.msra.mxu0 0.0
    %4216 = vmatprep.subr.mxu0 0.0
    %4217 = vmatpush1.xpose.msra.mxu0 0.0
    %4218 = vmatprep.subr.mxu0 0.0
    %4219 = vmatpush1.xpose.msra.mxu0 0.0
    %4220 = vmatprep.subr.mxu0 0.0
    %4221 = vmatpush1.xpose.msra.mxu0 0.0
    %4222 = vmatprep.subr.mxu0 0.0
    %4223 = vmatpush1.xpose.msra.mxu0 0.0
    %4224 = vmatprep.subr.mxu0 0.0
    %4225 = vmatpush1.xpose.msra.mxu0 0.0
    %4226 = vmatprep.subr.mxu0 0.0
    %4227 = vmatpush1.xpose.msra.mxu0 0.0
    %4228 = vmatprep.subr.mxu0 0.0
    %4229 = vmatpush1.xpose.msra.mxu0 0.0
    %4230 = vmatprep.subr.mxu0 0.0
    %4231 = vmatpush1.xpose.msra.mxu0 0.0
    %4232 = vmatprep.subr.mxu0 0.0
    %4233 = vmatpush1.xpose.msra.mxu0 0.0
    %4234 = vmatprep.subr.mxu0 0.0
    %4235 = vmatpush1.xpose.msra.mxu0 %v4202
    %4236 = vmatprep.subr.mxu0 0.0
    %4237 = vmatpush2.xpose.msra.mxu0 0.0
    %4238 = vmatprep.subr.mxu0 0.0
    %4239 = vmatpush2.xpose.msra.mxu0 0.0
    %4240 = vmatprep.subr.mxu0 0.0
    %4241 = vmatpush2.xpose.msra.mxu0 0.0
    %4242 = vmatprep.subr.mxu0 0.0
    %4243 = vmatpush2.xpose.msra.mxu0 0.0
    %4244 = vmatprep.subr.mxu0 0.0
    %4245 = vmatpush2.xpose.msra.mxu0 0.0
    %4246 = vmatprep.subr.mxu0 0.0
    %4247 = vmatpush2.xpose.msra.mxu0 0.0
    %4248 = vmatprep.subr.mxu0 0.0
    %4249 = vmatpush2.xpose.msra.mxu0 0.0
    %4250 = vmatprep.subr.mxu0 0.0
    %4251 = vmatpush2.xpose.msra.mxu0 0.0
    %4252 = vmatprep.subr.mxu0 0.0
    %4253 = vmatpush2.xpose.msra.mxu0 0.0
    %4254 = vmatprep.subr.mxu0 0.0
    %4255 = vmatpush2.xpose.msra.mxu0 0.0
    %4256 = vmatprep.subr.mxu0 0.0
    %4257 = vmatpush2.xpose.msra.mxu0 0.0
    %4258 = vmatprep.subr.mxu0 0.0
    %4259 = vmatpush2.xpose.msra.mxu0 0.0
    %4260 = vmatprep.subr.mxu0 0.0
    %4261 = vmatpush2.xpose.msra.mxu0 0.0
    %4262 = vmatprep.subr.mxu0 0.0
    %4263 = vmatpush2.xpose.msra.mxu0 0.0
    %4264 = vmatprep.subr.mxu0 0.0
    %4265 = vmatpush2.xpose.msra.mxu0 0.0
    %4266 = vmatprep.subr.mxu0 0.0
    %4267 = vmatpush2.xpose.msra.mxu0 0.0
    %4268 = vmatprep.mubr.f32.mxu0 0.0
    %4269 = vmatmul.mubr.f32.gmra.mxu0 %v4200
    %v4270 = vpop.f32.mrf.mxu0
    %v4271 = vadd.f32 0.0, %v4270
    %v4272 = vpop.f32.mrf.mxu0
    %4273 = vdwg.mxu0
    %v4274 = vmul.f32 %v4040, 0.35355338
    %v4275 = vmul.f32 %v4117, 0.35355338
    %v4276 = vmul.f32 %v4194, 0.35355338
    %v4277 = vmul.f32 %v4271, 0.35355338
    %v4278 = vsel %vm407, %v4274, -inf
    %4279 = vmax.xlane.f32.xlu0 %v4278
    %v4280 = vpop.xlane.xlu0 %4279
    %v4281 = vsel %vm407, %v4275, -inf
    %4282 = vmax.xlane.f32.xlu0 %v4281
    %v4283 = vpop.xlane.xlu0 %4282
    %v4284 = vsel %vm407, %v4276, -inf
    %4285 = vmax.xlane.f32.xlu0 %v4284
    %v4286 = vpop.xlane.xlu0 %4285
    %v4287 = vsel %vm407, %v4277, -inf
    %4288 = vmax.xlane.f32.xlu0 %v4287
    %v4289 = vpop.xlane.xlu0 %4288
    %v4290 = vsub.f32 %v4274, %v4280
    %v4291 = vsub.f32 %v4275, %v4283
    %v4292 = vsub.f32 %v4276, %v4286
    %v4293 = vsub.f32 %v4277, %v4289
    %v4294 = vmul.f32 %v4290, 1.442695
    %v4295 = vpow.pop %v4294
    %v4296 = vmul.f32 %v4291, 1.442695
    %v4297 = vpow.pop %v4296
    %v4298 = vmul.f32 %v4292, 1.442695
    %v4299 = vpow.pop %v4298
    %v4300 = vmul.f32 %v4293, 1.442695
    %v4301 = vpow.pop %v4300
    %v4302 = vsel %vm407, %v4295, 0.0
    %4303 = vadd.xlane.f32.xlu0 %v4302
    %v4304 = vpop.xlane.xlu0 %4303
    %v4305 = vsel %vm407, %v4297, 0.0
    %4306 = vadd.xlane.f32.xlu0 %v4305
    %v4307 = vpop.xlane.xlu0 %4306
    %v4308 = vsel %vm407, %v4299, 0.0
    %4309 = vadd.xlane.f32.xlu0 %v4308
    %v4310 = vpop.xlane.xlu0 %4309
    %v4311 = vsel %vm407, %v4301, 0.0
    %4312 = vadd.xlane.f32.xlu0 %v4311
    %v4313 = vpop.xlane.xlu0 %4312
    %v4314 = vrcp.pop %v4304
    %v4315 = vrcp.pop %v4307
    %v4316 = vrcp.pop %v4310
    %v4317 = vrcp.pop %v4313
    %v4318 = vmul.f32 %v4295, %v4314
    %v4319 = vmul.f32 %v4297, %v4315
    %v4320 = vmul.f32 %v4299, %v4316
    %v4321 = vmul.f32 %v4301, %v4317
    %4322 = vrot.lane.b32.xlu0 %v3941, 64
    %v4323 = vpop.permute.xlu0 %4322
    %v4326 = vsel %vm407, %v4318, 0
    %4328 = vmatprep.subr.mxu0 0.0
    %4329 = vmatpush1.msra.mxu0 0.0
    %4330 = vmatprep.subr.mxu0 0.0
    %4331 = vmatpush1.msra.mxu0 0.0
    %4332 = vmatprep.subr.mxu0 0.0
    %4333 = vmatpush1.msra.mxu0 0.0
    %4334 = vmatprep.subr.mxu0 0.0
    %4335 = vmatpush1.msra.mxu0 0.0
    %4336 = vmatprep.subr.mxu0 0.0
    %4337 = vmatpush1.msra.mxu0 0.0
    %4338 = vmatprep.subr.mxu0 0.0
    %4339 = vmatpush1.msra.mxu0 0.0
    %4340 = vmatprep.subr.mxu0 0.0
    %4341 = vmatpush1.msra.mxu0 0.0
    %4342 = vmatprep.subr.mxu0 0.0
    %4343 = vmatpush1.msra.mxu0 0.0
    %4344 = vmatprep.subr.mxu0 0.0
    %4345 = vmatpush1.msra.mxu0 0.0
    %4346 = vmatprep.subr.mxu0 0.0
    %4347 = vmatpush1.msra.mxu0 0.0
    %4348 = vmatprep.subr.mxu0 0.0
    %4349 = vmatpush1.msra.mxu0 0.0
    %4350 = vmatprep.subr.mxu0 0.0
    %4351 = vmatpush1.msra.mxu0 0.0
    %4352 = vmatprep.subr.mxu0 0.0
    %4353 = vmatpush1.msra.mxu0 0.0
    %4354 = vmatprep.subr.mxu0 0.0
    %4355 = vmatpush1.msra.mxu0 0.0
    %4356 = vmatprep.subr.mxu0 0.0
    %4357 = vmatpush1.msra.mxu0 0.0
    %4358 = vmatprep.subr.mxu0 0.0
    %4359 = vmatpush1.msra.mxu0 %v4323
    %4360 = vmatprep.subr.mxu0 0.0
    %4361 = vmatpush2.msra.mxu0 0.0
    %4362 = vmatprep.subr.mxu0 0.0
    %4363 = vmatpush2.msra.mxu0 0.0
    %4364 = vmatprep.subr.mxu0 0.0
    %4365 = vmatpush2.msra.mxu0 0.0
    %4366 = vmatprep.subr.mxu0 0.0
    %4367 = vmatpush2.msra.mxu0 0.0
    %4368 = vmatprep.subr.mxu0 0.0
    %4369 = vmatpush2.msra.mxu0 0.0
    %4370 = vmatprep.subr.mxu0 0.0
    %4371 = vmatpush2.msra.mxu0 0.0
    %4372 = vmatprep.subr.mxu0 0.0
    %4373 = vmatpush2.msra.mxu0 0.0
    %4374 = vmatprep.subr.mxu0 0.0
    %4375 = vmatpush2.msra.mxu0 0.0
    %4376 = vmatprep.subr.mxu0 0.0
    %4377 = vmatpush2.msra.mxu0 0.0
    %4378 = vmatprep.subr.mxu0 0.0
    %4379 = vmatpush2.msra.mxu0 0.0
    %4380 = vmatprep.subr.mxu0 0.0
    %4381 = vmatpush2.msra.mxu0 0.0
    %4382 = vmatprep.subr.mxu0 0.0
    %4383 = vmatpush2.msra.mxu0 0.0
    %4384 = vmatprep.subr.mxu0 0.0
    %4385 = vmatpush2.msra.mxu0 0.0
    %4386 = vmatprep.subr.mxu0 0.0
    %4387 = vmatpush2.msra.mxu0 0.0
    %4388 = vmatprep.subr.mxu0 0.0
    %4389 = vmatpush2.msra.mxu0 0.0
    %4390 = vmatprep.subr.mxu0 0.0
    %4391 = vmatpush2.msra.mxu0 0.0
    %4392 = vmatprep.mubr.f32.mxu0 0.0
    %4393 = vmatmul.mubr.f32.gmra.mxu0 %v4326
    %v4394 = vpop.f32.mrf.mxu0
    %v4395 = vadd.f32 0.0, %v4394
    %v4396 = vpop.f32.mrf.mxu0
    %4397 = vdwg.mxu0
    %4398 = vrot.lane.b32.xlu0 %v3946, 64
    %v4399 = vpop.permute.xlu0 %4398
    %v4402 = vsel %vm407, %v4319, 0
    %4404 = vmatprep.subr.mxu0 0.0
    %4405 = vmatpush1.msra.mxu0 0.0
    %4406 = vmatprep.subr.mxu0 0.0
    %4407 = vmatpush1.msra.mxu0 0.0
    %4408 = vmatprep.subr.mxu0 0.0
    %4409 = vmatpush1.msra.mxu0 0.0
    %4410 = vmatprep.subr.mxu0 0.0
    %4411 = vmatpush1.msra.mxu0 0.0
    %4412 = vmatprep.subr.mxu0 0.0
    %4413 = vmatpush1.msra.mxu0 0.0
    %4414 = vmatprep.subr.mxu0 0.0
    %4415 = vmatpush1.msra.mxu0 0.0
    %4416 = vmatprep.subr.mxu0 0.0
    %4417 = vmatpush1.msra.mxu0 0.0
    %4418 = vmatprep.subr.mxu0 0.0
    %4419 = vmatpush1.msra.mxu0 0.0
    %4420 = vmatprep.subr.mxu0 0.0
    %4421 = vmatpush1.msra.mxu0 0.0
    %4422 = vmatprep.subr.mxu0 0.0
    %4423 = vmatpush1.msra.mxu0 0.0
    %4424 = vmatprep.subr.mxu0 0.0
    %4425 = vmatpush1.msra.mxu0 0.0
    %4426 = vmatprep.subr.mxu0 0.0
    %4427 = vmatpush1.msra.mxu0 0.0
    %4428 = vmatprep.subr.mxu0 0.0
    %4429 = vmatpush1.msra.mxu0 0.0
    %4430 = vmatprep.subr.mxu0 0.0
    %4431 = vmatpush1.msra.mxu0 0.0
    %4432 = vmatprep.subr.mxu0 0.0
    %4433 = vmatpush1.msra.mxu0 0.0
    %4434 = vmatprep.subr.mxu0 0.0
    %4435 = vmatpush1.msra.mxu0 %v4399
    %4436 = vmatprep.subr.mxu0 0.0
    %4437 = vmatpush2.msra.mxu0 0.0
    %4438 = vmatprep.subr.mxu0 0.0
    %4439 = vmatpush2.msra.mxu0 0.0
    %4440 = vmatprep.subr.mxu0 0.0
    %4441 = vmatpush2.msra.mxu0 0.0
    %4442 = vmatprep.subr.mxu0 0.0
    %4443 = vmatpush2.msra.mxu0 0.0
    %4444 = vmatprep.subr.mxu0 0.0
    %4445 = vmatpush2.msra.mxu0 0.0
    %4446 = vmatprep.subr.mxu0 0.0
    %4447 = vmatpush2.msra.mxu0 0.0
    %4448 = vmatprep.subr.mxu0 0.0
    %4449 = vmatpush2.msra.mxu0 0.0
    %4450 = vmatprep.subr.mxu0 0.0
    %4451 = vmatpush2.msra.mxu0 0.0
    %4452 = vmatprep.subr.mxu0 0.0
    %4453 = vmatpush2.msra.mxu0 0.0
    %4454 = vmatprep.subr.mxu0 0.0
    %4455 = vmatpush2.msra.mxu0 0.0
    %4456 = vmatprep.subr.mxu0 0.0
    %4457 = vmatpush2.msra.mxu0 0.0
    %4458 = vmatprep.subr.mxu0 0.0
    %4459 = vmatpush2.msra.mxu0 0.0
    %4460 = vmatprep.subr.mxu0 0.0
    %4461 = vmatpush2.msra.mxu0 0.0
    %4462 = vmatprep.subr.mxu0 0.0
    %4463 = vmatpush2.msra.mxu0 0.0
    %4464 = vmatprep.subr.mxu0 0.0
    %4465 = vmatpush2.msra.mxu0 0.0
    %4466 = vmatprep.subr.mxu0 0.0
    %4467 = vmatpush2.msra.mxu0 0.0
    %4468 = vmatprep.mubr.f32.mxu0 0.0
    %4469 = vmatmul.mubr.f32.gmra.mxu0 %v4402
    %v4470 = vpop.f32.mrf.mxu0
    %v4471 = vadd.f32 0.0, %v4470
    %v4472 = vpop.f32.mrf.mxu0
    %4473 = vdwg.mxu0
    %4474 = vrot.lane.b32.xlu0 %v3951, 64
    %v4475 = vpop.permute.xlu0 %4474
    %v4478 = vsel %vm407, %v4320, 0
    %4480 = vmatprep.subr.mxu0 0.0
    %4481 = vmatpush1.msra.mxu0 0.0
    %4482 = vmatprep.subr.mxu0 0.0
    %4483 = vmatpush1.msra.mxu0 0.0
    %4484 = vmatprep.subr.mxu0 0.0
    %4485 = vmatpush1.msra.mxu0 0.0
    %4486 = vmatprep.subr.mxu0 0.0
    %4487 = vmatpush1.msra.mxu0 0.0
    %4488 = vmatprep.subr.mxu0 0.0
    %4489 = vmatpush1.msra.mxu0 0.0
    %4490 = vmatprep.subr.mxu0 0.0
    %4491 = vmatpush1.msra.mxu0 0.0
    %4492 = vmatprep.subr.mxu0 0.0
    %4493 = vmatpush1.msra.mxu0 0.0
    %4494 = vmatprep.subr.mxu0 0.0
    %4495 = vmatpush1.msra.mxu0 0.0
    %4496 = vmatprep.subr.mxu0 0.0
    %4497 = vmatpush1.msra.mxu0 0.0
    %4498 = vmatprep.subr.mxu0 0.0
    %4499 = vmatpush1.msra.mxu0 0.0
    %4500 = vmatprep.subr.mxu0 0.0
    %4501 = vmatpush1.msra.mxu0 0.0
    %4502 = vmatprep.subr.mxu0 0.0
    %4503 = vmatpush1.msra.mxu0 0.0
    %4504 = vmatprep.subr.mxu0 0.0
    %4505 = vmatpush1.msra.mxu0 0.0
    %4506 = vmatprep.subr.mxu0 0.0
    %4507 = vmatpush1.msra.mxu0 0.0
    %4508 = vmatprep.subr.mxu0 0.0
    %4509 = vmatpush1.msra.mxu0 0.0
    %4510 = vmatprep.subr.mxu0 0.0
    %4511 = vmatpush1.msra.mxu0 %v4475
    %4512 = vmatprep.subr.mxu0 0.0
    %4513 = vmatpush2.msra.mxu0 0.0
    %4514 = vmatprep.subr.mxu0 0.0
    %4515 = vmatpush2.msra.mxu0 0.0
    %4516 = vmatprep.subr.mxu0 0.0
    %4517 = vmatpush2.msra.mxu0 0.0
    %4518 = vmatprep.subr.mxu0 0.0
    %4519 = vmatpush2.msra.mxu0 0.0
    %4520 = vmatprep.subr.mxu0 0.0
    %4521 = vmatpush2.msra.mxu0 0.0
    %4522 = vmatprep.subr.mxu0 0.0
    %4523 = vmatpush2.msra.mxu0 0.0
    %4524 = vmatprep.subr.mxu0 0.0
    %4525 = vmatpush2.msra.mxu0 0.0
    %4526 = vmatprep.subr.mxu0 0.0
    %4527 = vmatpush2.msra.mxu0 0.0
    %4528 = vmatprep.subr.mxu0 0.0
    %4529 = vmatpush2.msra.mxu0 0.0
    %4530 = vmatprep.subr.mxu0 0.0
    %4531 = vmatpush2.msra.mxu0 0.0
    %4532 = vmatprep.subr.mxu0 0.0
    %4533 = vmatpush2.msra.mxu0 0.0
    %4534 = vmatprep.subr.mxu0 0.0
    %4535 = vmatpush2.msra.mxu0 0.0
    %4536 = vmatprep.subr.mxu0 0.0
    %4537 = vmatpush2.msra.mxu0 0.0
    %4538 = vmatprep.subr.mxu0 0.0
    %4539 = vmatpush2.msra.mxu0 0.0
    %4540 = vmatprep.subr.mxu0 0.0
    %4541 = vmatpush2.msra.mxu0 0.0
    %4542 = vmatprep.subr.mxu0 0.0
    %4543 = vmatpush2.msra.mxu0 0.0
    %4544 = vmatprep.mubr.f32.mxu0 0.0
    %4545 = vmatmul.mubr.f32.gmra.mxu0 %v4478
    %v4546 = vpop.f32.mrf.mxu0
    %v4547 = vadd.f32 0.0, %v4546
    %v4548 = vpop.f32.mrf.mxu0
    %4549 = vdwg.mxu0
    %4550 = vrot.lane.b32.xlu0 %v3956, 64
    %v4551 = vpop.permute.xlu0 %4550
    %v4554 = vsel %vm407, %v4321, 0
    %4556 = vmatprep.subr.mxu0 0.0
    %4557 = vmatpush1.msra.mxu0 0.0
    %4558 = vmatprep.subr.mxu0 0.0
    %4559 = vmatpush1.msra.mxu0 0.0
    %4560 = vmatprep.subr.mxu0 0.0
    %4561 = vmatpush1.msra.mxu0 0.0
    %4562 = vmatprep.subr.mxu0 0.0
    %4563 = vmatpush1.msra.mxu0 0.0
    %4564 = vmatprep.subr.mxu0 0.0
    %4565 = vmatpush1.msra.mxu0 0.0
    %4566 = vmatprep.subr.mxu0 0.0
    %4567 = vmatpush1.msra.mxu0 0.0
    %4568 = vmatprep.subr.mxu0 0.0
    %4569 = vmatpush1.msra.mxu0 0.0
    %4570 = vmatprep.subr.mxu0 0.0
    %4571 = vmatpush1.msra.mxu0 0.0
    %4572 = vmatprep.subr.mxu0 0.0
    %4573 = vmatpush1.msra.mxu0 0.0
    %4574 = vmatprep.subr.mxu0 0.0
    %4575 = vmatpush1.msra.mxu0 0.0
    %4576 = vmatprep.subr.mxu0 0.0
    %4577 = vmatpush1.msra.mxu0 0.0
    %4578 = vmatprep.subr.mxu0 0.0
    %4579 = vmatpush1.msra.mxu0 0.0
    %4580 = vmatprep.subr.mxu0 0.0
    %4581 = vmatpush1.msra.mxu0 0.0
    %4582 = vmatprep.subr.mxu0 0.0
    %4583 = vmatpush1.msra.mxu0 0.0
    %4584 = vmatprep.subr.mxu0 0.0
    %4585 = vmatpush1.msra.mxu0 0.0
    %4586 = vmatprep.subr.mxu0 0.0
    %4587 = vmatpush1.msra.mxu0 %v4551
    %4588 = vmatprep.subr.mxu0 0.0
    %4589 = vmatpush2.msra.mxu0 0.0
    %4590 = vmatprep.subr.mxu0 0.0
    %4591 = vmatpush2.msra.mxu0 0.0
    %4592 = vmatprep.subr.mxu0 0.0
    %4593 = vmatpush2.msra.mxu0 0.0
    %4594 = vmatprep.subr.mxu0 0.0
    %4595 = vmatpush2.msra.mxu0 0.0
    %4596 = vmatprep.subr.mxu0 0.0
    %4597 = vmatpush2.msra.mxu0 0.0
    %4598 = vmatprep.subr.mxu0 0.0
    %4599 = vmatpush2.msra.mxu0 0.0
    %4600 = vmatprep.subr.mxu0 0.0
    %4601 = vmatpush2.msra.mxu0 0.0
    %4602 = vmatprep.subr.mxu0 0.0
    %4603 = vmatpush2.msra.mxu0 0.0
    %4604 = vmatprep.subr.mxu0 0.0
    %4605 = vmatpush2.msra.mxu0 0.0
    %4606 = vmatprep.subr.mxu0 0.0
    %4607 = vmatpush2.msra.mxu0 0.0
    %4608 = vmatprep.subr.mxu0 0.0
    %4609 = vmatpush2.msra.mxu0 0.0
    %4610 = vmatprep.subr.mxu0 0.0
    %4611 = vmatpush2.msra.mxu0 0.0
    %4612 = vmatprep.subr.mxu0 0.0
    %4613 = vmatpush2.msra.mxu0 0.0
    %4614 = vmatprep.subr.mxu0 0.0
    %4615 = vmatpush2.msra.mxu0 0.0
    %4616 = vmatprep.subr.mxu0 0.0
    %4617 = vmatpush2.msra.mxu0 0.0
    %4618 = vmatprep.subr.mxu0 0.0
    %4619 = vmatpush2.msra.mxu0 0.0
    %4620 = vmatprep.mubr.f32.mxu0 0.0
    %4621 = vmatmul.mubr.f32.gmra.mxu0 %v4554
    %v4622 = vpop.f32.mrf.mxu0
    %v4623 = vadd.f32 0.0, %v4622
    %v4624 = vpop.f32.mrf.mxu0
    %4625 = vdwg.mxu0
    %v4627 = vsel %vm407, %v4395, 0
    %v4630 = vsel %vm407, %v4471, 0
    %v4633 = vsel %vm407, %v4547, 0
    %v4636 = vsel %vm407, %v4623, 0
    %4638 = vmatprep.subr.mxu0 0.0
    %4639 = vmatpush1.msra.mxu0 0.0
    %4640 = vmatprep.subr.mxu0 0.0
    %4641 = vmatpush1.msra.mxu0 0.0
    %4642 = vmatprep.subr.mxu0 0.0
    %4643 = vmatpush1.msra.mxu0 0.0
    %4644 = vmatprep.subr.mxu0 0.0
    %4645 = vmatpush1.msra.mxu0 0.0
    %4646 = vmatprep.subr.mxu0 0.0
    %4647 = vmatpush1.msra.mxu0 0.0
    %4648 = vmatprep.subr.mxu0 0.0
    %4649 = vmatpush1.msra.mxu0 0.0
    %4650 = vmatprep.subr.mxu0 0.0
    %4651 = vmatpush1.msra.mxu0 0.0
    %4652 = vmatprep.subr.mxu0 0.0
    %4653 = vmatpush1.msra.mxu0 0.0
    %4654 = vmatprep.subr.mxu0 0.0
    %4655 = vmatpush1.msra.mxu0 0.0
    %4656 = vmatprep.subr.mxu0 0.0
    %4657 = vmatpush1.msra.mxu0 0.0
    %4658 = vmatprep.subr.mxu0 0.0
    %4659 = vmatpush1.msra.mxu0 0.0
    %4660 = vmatprep.subr.mxu0 0.0
    %4661 = vmatpush1.msra.mxu0 0.0
    %4662 = vmatprep.subr.mxu0 0.0
    %4663 = vmatpush1.msra.mxu0 0.0
    %4664 = vmatprep.subr.mxu0 0.0
    %4665 = vmatpush1.msra.mxu0 0.0
    %4666 = vmatprep.subr.mxu0 0.0
    %4667 = vmatpush1.msra.mxu0 0.0
    %4668 = vmatprep.subr.mxu0 0.0
    %4669 = vmatpush1.msra.mxu0 %v3960
    %4670 = vmatprep.subr.mxu0 0.0
    %4671 = vmatpush2.msra.mxu0 0.0
    %4672 = vmatprep.subr.mxu0 0.0
    %4673 = vmatpush2.msra.mxu0 0.0
    %4674 = vmatprep.subr.mxu0 0.0
    %4675 = vmatpush2.msra.mxu0 0.0
    %4676 = vmatprep.subr.mxu0 0.0
    %4677 = vmatpush2.msra.mxu0 0.0
    %4678 = vmatprep.subr.mxu0 0.0
    %4679 = vmatpush2.msra.mxu0 0.0
    %4680 = vmatprep.subr.mxu0 0.0
    %4681 = vmatpush2.msra.mxu0 0.0
    %4682 = vmatprep.subr.mxu0 0.0
    %4683 = vmatpush2.msra.mxu0 0.0
    %4684 = vmatprep.subr.mxu0 0.0
    %4685 = vmatpush2.msra.mxu0 0.0
    %4686 = vmatprep.subr.mxu0 0.0
    %4687 = vmatpush2.msra.mxu0 0.0
    %4688 = vmatprep.subr.mxu0 0.0
    %4689 = vmatpush2.msra.mxu0 0.0
    %4690 = vmatprep.subr.mxu0 0.0
    %4691 = vmatpush2.msra.mxu0 0.0
    %4692 = vmatprep.subr.mxu0 0.0
    %4693 = vmatpush2.msra.mxu0 0.0
    %4694 = vmatprep.subr.mxu0 0.0
    %4695 = vmatpush2.msra.mxu0 0.0
    %4696 = vmatprep.subr.mxu0 0.0
    %4697 = vmatpush2.msra.mxu0 0.0
    %4698 = vmatprep.subr.mxu0 0.0
    %4699 = vmatpush2.msra.mxu0 0.0
    %4700 = vmatprep.subr.mxu0 0.0
    %4701 = vmatpush2.msra.mxu0 0.0
    %4702 = vmatprep.mubr.f32.mxu0 0.0
    %4703 = vmatmul.mubr.f32.gmra.mxu0 %v4627
    %v4704 = vpop.f32.mrf.mxu0
    %v4705 = vadd.f32 0.0, %v4704
    %v4706 = vpop.f32.mrf.mxu0
    %4707 = vmatprep.mubr.f32.mxu0 0.0
    %4708 = vmatmul.mubr.f32.gmra.mxu0 %v4630
    %v4709 = vpop.f32.mrf.mxu0
    %v4710 = vadd.f32 0.0, %v4709
    %v4711 = vpop.f32.mrf.mxu0
    %4712 = vmatprep.mubr.f32.mxu0 0.0
    %4713 = vmatmul.mubr.f32.gmra.mxu0 %v4633
    %v4714 = vpop.f32.mrf.mxu0
    %v4715 = vadd.f32 0.0, %v4714
    %v4716 = vpop.f32.mrf.mxu0
    %4717 = vmatprep.mubr.f32.mxu0 0.0
    %4718 = vmatmul.mubr.f32.gmra.mxu0 %v4636
    %v4719 = vpop.f32.mrf.mxu0
    %v4720 = vadd.f32 0.0, %v4719
    %v4721 = vpop.f32.mrf.mxu0
    %4722 = vdwg.mxu0
    %v4724 = vlaneseq
    %v4725 = vshrl.u32 %v4724, 7
    %v4726 = vsub.s32 0, %v4725
    %v4727 = vrot.slane %v3965, %v4726
    %v4729 = vadd.f32 %v4727, %v4705
    %v4730 = vadd.f32 %v4727, %v4710
    %v4731 = vadd.f32 %v4727, %v4715
    %v4732 = vadd.f32 %v4727, %v4720
    %4733 = vrot.lane.b32.xlu0 %v3941, 120
    %v4734 = vpop.permute.xlu0 %4733
    %4735 = vrot.lane.b32.xlu0 %v3941, 88
    %v4736 = vpop.permute.xlu0 %4735
    %v4737 = vsel %vm407, %v4734, 0
    %v4739 = vsel %vm407, %v4736, 0
    %4741 = vmatprep.subr.mxu0 0.0
    %4742 = vmatpush1.xpose.msra.mxu0 0.0
    %4743 = vmatprep.subr.mxu0 0.0
    %4744 = vmatpush1.xpose.msra.mxu0 0.0
    %4745 = vmatprep.subr.mxu0 0.0
    %4746 = vmatpush1.xpose.msra.mxu0 0.0
    %4747 = vmatprep.subr.mxu0 0.0
    %4748 = vmatpush1.xpose.msra.mxu0 0.0
    %4749 = vmatprep.subr.mxu0 0.0
    %4750 = vmatpush1.xpose.msra.mxu0 0.0
    %4751 = vmatprep.subr.mxu0 0.0
    %4752 = vmatpush1.xpose.msra.mxu0 0.0
    %4753 = vmatprep.subr.mxu0 0.0
    %4754 = vmatpush1.xpose.msra.mxu0 0.0
    %4755 = vmatprep.subr.mxu0 0.0
    %4756 = vmatpush1.xpose.msra.mxu0 0.0
    %4757 = vmatprep.subr.mxu0 0.0
    %4758 = vmatpush1.xpose.msra.mxu0 0.0
    %4759 = vmatprep.subr.mxu0 0.0
    %4760 = vmatpush1.xpose.msra.mxu0 0.0
    %4761 = vmatprep.subr.mxu0 0.0
    %4762 = vmatpush1.xpose.msra.mxu0 0.0
    %4763 = vmatprep.subr.mxu0 0.0
    %4764 = vmatpush1.xpose.msra.mxu0 0.0
    %4765 = vmatprep.subr.mxu0 0.0
    %4766 = vmatpush1.xpose.msra.mxu0 0.0
    %4767 = vmatprep.subr.mxu0 0.0
    %4768 = vmatpush1.xpose.msra.mxu0 0.0
    %4769 = vmatprep.subr.mxu0 0.0
    %4770 = vmatpush1.xpose.msra.mxu0 0.0
    %4771 = vmatprep.subr.mxu0 0.0
    %4772 = vmatpush1.xpose.msra.mxu0 %v4739
    %4773 = vmatprep.subr.mxu0 0.0
    %4774 = vmatpush2.xpose.msra.mxu0 0.0
    %4775 = vmatprep.subr.mxu0 0.0
    %4776 = vmatpush2.xpose.msra.mxu0 0.0
    %4777 = vmatprep.subr.mxu0 0.0
    %4778 = vmatpush2.xpose.msra.mxu0 0.0
    %4779 = vmatprep.subr.mxu0 0.0
    %4780 = vmatpush2.xpose.msra.mxu0 0.0
    %4781 = vmatprep.subr.mxu0 0.0
    %4782 = vmatpush2.xpose.msra.mxu0 0.0
    %4783 = vmatprep.subr.mxu0 0.0
    %4784 = vmatpush2.xpose.msra.mxu0 0.0
    %4785 = vmatprep.subr.mxu0 0.0
    %4786 = vmatpush2.xpose.msra.mxu0 0.0
    %4787 = vmatprep.subr.mxu0 0.0
    %4788 = vmatpush2.xpose.msra.mxu0 0.0
    %4789 = vmatprep.subr.mxu0 0.0
    %4790 = vmatpush2.xpose.msra.mxu0 0.0
    %4791 = vmatprep.subr.mxu0 0.0
    %4792 = vmatpush2.xpose.msra.mxu0 0.0
    %4793 = vmatprep.subr.mxu0 0.0
    %4794 = vmatpush2.xpose.msra.mxu0 0.0
    %4795 = vmatprep.subr.mxu0 0.0
    %4796 = vmatpush2.xpose.msra.mxu0 0.0
    %4797 = vmatprep.subr.mxu0 0.0
    %4798 = vmatpush2.xpose.msra.mxu0 0.0
    %4799 = vmatprep.subr.mxu0 0.0
    %4800 = vmatpush2.xpose.msra.mxu0 0.0
    %4801 = vmatprep.subr.mxu0 0.0
    %4802 = vmatpush2.xpose.msra.mxu0 0.0
    %4803 = vmatprep.subr.mxu0 0.0
    %4804 = vmatpush2.xpose.msra.mxu0 0.0
    %4805 = vmatprep.mubr.f32.mxu0 0.0
    %4806 = vmatmul.mubr.f32.gmra.mxu0 %v4737
    %v4807 = vpop.f32.mrf.mxu0
    %v4808 = vadd.f32 0.0, %v4807
    %v4809 = vpop.f32.mrf.mxu0
    %4810 = vdwg.mxu0
    %4811 = vrot.lane.b32.xlu0 %v3946, 120
    %v4812 = vpop.permute.xlu0 %4811
    %4813 = vrot.lane.b32.xlu0 %v3946, 88
    %v4814 = vpop.permute.xlu0 %4813
    %v4815 = vsel %vm407, %v4812, 0
    %v4817 = vsel %vm407, %v4814, 0
    %4819 = vmatprep.subr.mxu0 0.0
    %4820 = vmatpush1.xpose.msra.mxu0 0.0
    %4821 = vmatprep.subr.mxu0 0.0
    %4822 = vmatpush1.xpose.msra.mxu0 0.0
    %4823 = vmatprep.subr.mxu0 0.0
    %4824 = vmatpush1.xpose.msra.mxu0 0.0
    %4825 = vmatprep.subr.mxu0 0.0
    %4826 = vmatpush1.xpose.msra.mxu0 0.0
    %4827 = vmatprep.subr.mxu0 0.0
    %4828 = vmatpush1.xpose.msra.mxu0 0.0
    %4829 = vmatprep.subr.mxu0 0.0
    %4830 = vmatpush1.xpose.msra.mxu0 0.0
    %4831 = vmatprep.subr.mxu0 0.0
    %4832 = vmatpush1.xpose.msra.mxu0 0.0
    %4833 = vmatprep.subr.mxu0 0.0
    %4834 = vmatpush1.xpose.msra.mxu0 0.0
    %4835 = vmatprep.subr.mxu0 0.0
    %4836 = vmatpush1.xpose.msra.mxu0 0.0
    %4837 = vmatprep.subr.mxu0 0.0
    %4838 = vmatpush1.xpose.msra.mxu0 0.0
    %4839 = vmatprep.subr.mxu0 0.0
    %4840 = vmatpush1.xpose.msra.mxu0 0.0
    %4841 = vmatprep.subr.mxu0 0.0
    %4842 = vmatpush1.xpose.msra.mxu0 0.0
    %4843 = vmatprep.subr.mxu0 0.0
    %4844 = vmatpush1.xpose.msra.mxu0 0.0
    %4845 = vmatprep.subr.mxu0 0.0
    %4846 = vmatpush1.xpose.msra.mxu0 0.0
    %4847 = vmatprep.subr.mxu0 0.0
    %4848 = vmatpush1.xpose.msra.mxu0 0.0
    %4849 = vmatprep.subr.mxu0 0.0
    %4850 = vmatpush1.xpose.msra.mxu0 %v4817
    %4851 = vmatprep.subr.mxu0 0.0
    %4852 = vmatpush2.xpose.msra.mxu0 0.0
    %4853 = vmatprep.subr.mxu0 0.0
    %4854 = vmatpush2.xpose.msra.mxu0 0.0
    %4855 = vmatprep.subr.mxu0 0.0
    %4856 = vmatpush2.xpose.msra.mxu0 0.0
    %4857 = vmatprep.subr.mxu0 0.0
    %4858 = vmatpush2.xpose.msra.mxu0 0.0
    %4859 = vmatprep.subr.mxu0 0.0
    %4860 = vmatpush2.xpose.msra.mxu0 0.0
    %4861 = vmatprep.subr.mxu0 0.0
    %4862 = vmatpush2.xpose.msra.mxu0 0.0
    %4863 = vmatprep.subr.mxu0 0.0
    %4864 = vmatpush2.xpose.msra.mxu0 0.0
    %4865 = vmatprep.subr.mxu0 0.0
    %4866 = vmatpush2.xpose.msra.mxu0 0.0
    %4867 = vmatprep.subr.mxu0 0.0
    %4868 = vmatpush2.xpose.msra.mxu0 0.0
    %4869 = vmatprep.subr.mxu0 0.0
    %4870 = vmatpush2.xpose.msra.mxu0 0.0
    %4871 = vmatprep.subr.mxu0 0.0
    %4872 = vmatpush2.xpose.msra.mxu0 0.0
    %4873 = vmatprep.subr.mxu0 0.0
    %4874 = vmatpush2.xpose.msra.mxu0 0.0
    %4875 = vmatprep.subr.mxu0 0.0
    %4876 = vmatpush2.xpose.msra.mxu0 0.0
    %4877 = vmatprep.subr.mxu0 0.0
    %4878 = vmatpush2.xpose.msra.mxu0 0.0
    %4879 = vmatprep.subr.mxu0 0.0
    %4880 = vmatpush2.xpose.msra.mxu0 0.0
    %4881 = vmatprep.subr.mxu0 0.0
    %4882 = vmatpush2.xpose.msra.mxu0 0.0
    %4883 = vmatprep.mubr.f32.mxu0 0.0
    %4884 = vmatmul.mubr.f32.gmra.mxu0 %v4815
    %v4885 = vpop.f32.mrf.mxu0
    %v4886 = vadd.f32 0.0, %v4885
    %v4887 = vpop.f32.mrf.mxu0
    %4888 = vdwg.mxu0
    %4889 = vrot.lane.b32.xlu0 %v3951, 120
    %v4890 = vpop.permute.xlu0 %4889
    %4891 = vrot.lane.b32.xlu0 %v3951, 88
    %v4892 = vpop.permute.xlu0 %4891
    %v4893 = vsel %vm407, %v4890, 0
    %v4895 = vsel %vm407, %v4892, 0
    %4897 = vmatprep.subr.mxu0 0.0
    %4898 = vmatpush1.xpose.msra.mxu0 0.0
    %4899 = vmatprep.subr.mxu0 0.0
    %4900 = vmatpush1.xpose.msra.mxu0 0.0
    %4901 = vmatprep.subr.mxu0 0.0
    %4902 = vmatpush1.xpose.msra.mxu0 0.0
    %4903 = vmatprep.subr.mxu0 0.0
    %4904 = vmatpush1.xpose.msra.mxu0 0.0
    %4905 = vmatprep.subr.mxu0 0.0
    %4906 = vmatpush1.xpose.msra.mxu0 0.0
    %4907 = vmatprep.subr.mxu0 0.0
    %4908 = vmatpush1.xpose.msra.mxu0 0.0
    %4909 = vmatprep.subr.mxu0 0.0
    %4910 = vmatpush1.xpose.msra.mxu0 0.0
    %4911 = vmatprep.subr.mxu0 0.0
    %4912 = vmatpush1.xpose.msra.mxu0 0.0
    %4913 = vmatprep.subr.mxu0 0.0
    %4914 = vmatpush1.xpose.msra.mxu0 0.0
    %4915 = vmatprep.subr.mxu0 0.0
    %4916 = vmatpush1.xpose.msra.mxu0 0.0
    %4917 = vmatprep.subr.mxu0 0.0
    %4918 = vmatpush1.xpose.msra.mxu0 0.0
    %4919 = vmatprep.subr.mxu0 0.0
    %4920 = vmatpush1.xpose.msra.mxu0 0.0
    %4921 = vmatprep.subr.mxu0 0.0
    %4922 = vmatpush1.xpose.msra.mxu0 0.0
    %4923 = vmatprep.subr.mxu0 0.0
    %4924 = vmatpush1.xpose.msra.mxu0 0.0
    %4925 = vmatprep.subr.mxu0 0.0
    %4926 = vmatpush1.xpose.msra.mxu0 0.0
    %4927 = vmatprep.subr.mxu0 0.0
    %4928 = vmatpush1.xpose.msra.mxu0 %v4895
    %4929 = vmatprep.subr.mxu0 0.0
    %4930 = vmatpush2.xpose.msra.mxu0 0.0
    %4931 = vmatprep.subr.mxu0 0.0
    %4932 = vmatpush2.xpose.msra.mxu0 0.0
    %4933 = vmatprep.subr.mxu0 0.0
    %4934 = vmatpush2.xpose.msra.mxu0 0.0
    %4935 = vmatprep.subr.mxu0 0.0
    %4936 = vmatpush2.xpose.msra.mxu0 0.0
    %4937 = vmatprep.subr.mxu0 0.0
    %4938 = vmatpush2.xpose.msra.mxu0 0.0
    %4939 = vmatprep.subr.mxu0 0.0
    %4940 = vmatpush2.xpose.msra.mxu0 0.0
    %4941 = vmatprep.subr.mxu0 0.0
    %4942 = vmatpush2.xpose.msra.mxu0 0.0
    %4943 = vmatprep.subr.mxu0 0.0
    %4944 = vmatpush2.xpose.msra.mxu0 0.0
    %4945 = vmatprep.subr.mxu0 0.0
    %4946 = vmatpush2.xpose.msra.mxu0 0.0
    %4947 = vmatprep.subr.mxu0 0.0
    %4948 = vmatpush2.xpose.msra.mxu0 0.0
    %4949 = vmatprep.subr.mxu0 0.0
    %4950 = vmatpush2.xpose.msra.mxu0 0.0
    %4951 = vmatprep.subr.mxu0 0.0
    %4952 = vmatpush2.xpose.msra.mxu0 0.0
    %4953 = vmatprep.subr.mxu0 0.0
    %4954 = vmatpush2.xpose.msra.mxu0 0.0
    %4955 = vmatprep.subr.mxu0 0.0
    %4956 = vmatpush2.xpose.msra.mxu0 0.0
    %4957 = vmatprep.subr.mxu0 0.0
    %4958 = vmatpush2.xpose.msra.mxu0 0.0
    %4959 = vmatprep.subr.mxu0 0.0
    %4960 = vmatpush2.xpose.msra.mxu0 0.0
    %4961 = vmatprep.mubr.f32.mxu0 0.0
    %4962 = vmatmul.mubr.f32.gmra.mxu0 %v4893
    %v4963 = vpop.f32.mrf.mxu0
    %v4964 = vadd.f32 0.0, %v4963
    %v4965 = vpop.f32.mrf.mxu0
    %4966 = vdwg.mxu0
    %4967 = vrot.lane.b32.xlu0 %v3956, 120
    %v4968 = vpop.permute.xlu0 %4967
    %4969 = vrot.lane.b32.xlu0 %v3956, 88
    %v4970 = vpop.permute.xlu0 %4969
    %v4971 = vsel %vm407, %v4968, 0
    %v4973 = vsel %vm407, %v4970, 0
    %4975 = vmatprep.subr.mxu0 0.0
    %4976 = vmatpush1.xpose.msra.mxu0 0.0
    %4977 = vmatprep.subr.mxu0 0.0
    %4978 = vmatpush1.xpose.msra.mxu0 0.0
    %4979 = vmatprep.subr.mxu0 0.0
    %4980 = vmatpush1.xpose.msra.mxu0 0.0
    %4981 = vmatprep.subr.mxu0 0.0
    %4982 = vmatpush1.xpose.msra.mxu0 0.0
    %4983 = vmatprep.subr.mxu0 0.0
    %4984 = vmatpush1.xpose.msra.mxu0 0.0
    %4985 = vmatprep.subr.mxu0 0.0
    %4986 = vmatpush1.xpose.msra.mxu0 0.0
    %4987 = vmatprep.subr.mxu0 0.0
    %4988 = vmatpush1.xpose.msra.mxu0 0.0
    %4989 = vmatprep.subr.mxu0 0.0
    %4990 = vmatpush1.xpose.msra.mxu0 0.0
    %4991 = vmatprep.subr.mxu0 0.0
    %4992 = vmatpush1.xpose.msra.mxu0 0.0
    %4993 = vmatprep.subr.mxu0 0.0
    %4994 = vmatpush1.xpose.msra.mxu0 0.0
    %4995 = vmatprep.subr.mxu0 0.0
    %4996 = vmatpush1.xpose.msra.mxu0 0.0
    %4997 = vmatprep.subr.mxu0 0.0
    %4998 = vmatpush1.xpose.msra.mxu0 0.0
    %4999 = vmatprep.subr.mxu0 0.0
    %5000 = vmatpush1.xpose.msra.mxu0 0.0
    %5001 = vmatprep.subr.mxu0 0.0
    %5002 = vmatpush1.xpose.msra.mxu0 0.0
    %5003 = vmatprep.subr.mxu0 0.0
    %5004 = vmatpush1.xpose.msra.mxu0 0.0
    %5005 = vmatprep.subr.mxu0 0.0
    %5006 = vmatpush1.xpose.msra.mxu0 %v4973
    %5007 = vmatprep.subr.mxu0 0.0
    %5008 = vmatpush2.xpose.msra.mxu0 0.0
    %5009 = vmatprep.subr.mxu0 0.0
    %5010 = vmatpush2.xpose.msra.mxu0 0.0
    %5011 = vmatprep.subr.mxu0 0.0
    %5012 = vmatpush2.xpose.msra.mxu0 0.0
    %5013 = vmatprep.subr.mxu0 0.0
    %5014 = vmatpush2.xpose.msra.mxu0 0.0
    %5015 = vmatprep.subr.mxu0 0.0
    %5016 = vmatpush2.xpose.msra.mxu0 0.0
    %5017 = vmatprep.subr.mxu0 0.0
    %5018 = vmatpush2.xpose.msra.mxu0 0.0
    %5019 = vmatprep.subr.mxu0 0.0
    %5020 = vmatpush2.xpose.msra.mxu0 0.0
    %5021 = vmatprep.subr.mxu0 0.0
    %5022 = vmatpush2.xpose.msra.mxu0 0.0
    %5023 = vmatprep.subr.mxu0 0.0
    %5024 = vmatpush2.xpose.msra.mxu0 0.0
    %5025 = vmatprep.subr.mxu0 0.0
    %5026 = vmatpush2.xpose.msra.mxu0 0.0
    %5027 = vmatprep.subr.mxu0 0.0
    %5028 = vmatpush2.xpose.msra.mxu0 0.0
    %5029 = vmatprep.subr.mxu0 0.0
    %5030 = vmatpush2.xpose.msra.mxu0 0.0
    %5031 = vmatprep.subr.mxu0 0.0
    %5032 = vmatpush2.xpose.msra.mxu0 0.0
    %5033 = vmatprep.subr.mxu0 0.0
    %5034 = vmatpush2.xpose.msra.mxu0 0.0
    %5035 = vmatprep.subr.mxu0 0.0
    %5036 = vmatpush2.xpose.msra.mxu0 0.0
    %5037 = vmatprep.subr.mxu0 0.0
    %5038 = vmatpush2.xpose.msra.mxu0 0.0
    %5039 = vmatprep.mubr.f32.mxu0 0.0
    %5040 = vmatmul.mubr.f32.gmra.mxu0 %v4971
    %v5041 = vpop.f32.mrf.mxu0
    %v5042 = vadd.f32 0.0, %v5041
    %v5043 = vpop.f32.mrf.mxu0
    %5044 = vdwg.mxu0
    %v5045 = vmul.f32 %v4808, 0.35355338
    %v5046 = vmul.f32 %v4886, 0.35355338
    %v5047 = vmul.f32 %v4964, 0.35355338
    %v5048 = vmul.f32 %v5042, 0.35355338
    %v5049 = vsel %vm407, %v5045, -inf
    %5050 = vmax.xlane.f32.xlu0 %v5049
    %v5051 = vpop.xlane.xlu0 %5050
    %v5052 = vsel %vm407, %v5046, -inf
    %5053 = vmax.xlane.f32.xlu0 %v5052
    %v5054 = vpop.xlane.xlu0 %5053
    %v5055 = vsel %vm407, %v5047, -inf
    %5056 = vmax.xlane.f32.xlu0 %v5055
    %v5057 = vpop.xlane.xlu0 %5056
    %v5058 = vsel %vm407, %v5048, -inf
    %5059 = vmax.xlane.f32.xlu0 %v5058
    %v5060 = vpop.xlane.xlu0 %5059
    %v5061 = vsub.f32 %v5045, %v5051
    %v5062 = vsub.f32 %v5046, %v5054
    %v5063 = vsub.f32 %v5047, %v5057
    %v5064 = vsub.f32 %v5048, %v5060
    %v5065 = vmul.f32 %v5061, 1.442695
    %v5066 = vpow.pop %v5065
    %v5067 = vmul.f32 %v5062, 1.442695
    %v5068 = vpow.pop %v5067
    %v5069 = vmul.f32 %v5063, 1.442695
    %v5070 = vpow.pop %v5069
    %v5071 = vmul.f32 %v5064, 1.442695
    %v5072 = vpow.pop %v5071
    %v5073 = vsel %vm407, %v5066, 0.0
    %5074 = vadd.xlane.f32.xlu0 %v5073
    %v5075 = vpop.xlane.xlu0 %5074
    %v5076 = vsel %vm407, %v5068, 0.0
    %5077 = vadd.xlane.f32.xlu0 %v5076
    %v5078 = vpop.xlane.xlu0 %5077
    %v5079 = vsel %vm407, %v5070, 0.0
    %5080 = vadd.xlane.f32.xlu0 %v5079
    %v5081 = vpop.xlane.xlu0 %5080
    %v5082 = vsel %vm407, %v5072, 0.0
    %5083 = vadd.xlane.f32.xlu0 %v5082
    %v5084 = vpop.xlane.xlu0 %5083
    %v5085 = vrcp.pop %v5075
    %v5086 = vrcp.pop %v5078
    %v5087 = vrcp.pop %v5081
    %v5088 = vrcp.pop %v5084
    %v5089 = vmul.f32 %v5066, %v5085
    %v5090 = vmul.f32 %v5068, %v5086
    %v5091 = vmul.f32 %v5070, %v5087
    %v5092 = vmul.f32 %v5072, %v5088
    %5093 = vrot.lane.b32.xlu0 %v3941, 56
    %v5094 = vpop.permute.xlu0 %5093
    %v5097 = vsel %vm407, %v5089, 0
    %5099 = vmatprep.subr.mxu0 0.0
    %5100 = vmatpush1.msra.mxu0 0.0
    %5101 = vmatprep.subr.mxu0 0.0
    %5102 = vmatpush1.msra.mxu0 0.0
    %5103 = vmatprep.subr.mxu0 0.0
    %5104 = vmatpush1.msra.mxu0 0.0
    %5105 = vmatprep.subr.mxu0 0.0
    %5106 = vmatpush1.msra.mxu0 0.0
    %5107 = vmatprep.subr.mxu0 0.0
    %5108 = vmatpush1.msra.mxu0 0.0
    %5109 = vmatprep.subr.mxu0 0.0
    %5110 = vmatpush1.msra.mxu0 0.0
    %5111 = vmatprep.subr.mxu0 0.0
    %5112 = vmatpush1.msra.mxu0 0.0
    %5113 = vmatprep.subr.mxu0 0.0
    %5114 = vmatpush1.msra.mxu0 0.0
    %5115 = vmatprep.subr.mxu0 0.0
    %5116 = vmatpush1.msra.mxu0 0.0
    %5117 = vmatprep.subr.mxu0 0.0
    %5118 = vmatpush1.msra.mxu0 0.0
    %5119 = vmatprep.subr.mxu0 0.0
    %5120 = vmatpush1.msra.mxu0 0.0
    %5121 = vmatprep.subr.mxu0 0.0
    %5122 = vmatpush1.msra.mxu0 0.0
    %5123 = vmatprep.subr.mxu0 0.0
    %5124 = vmatpush1.msra.mxu0 0.0
    %5125 = vmatprep.subr.mxu0 0.0
    %5126 = vmatpush1.msra.mxu0 0.0
    %5127 = vmatprep.subr.mxu0 0.0
    %5128 = vmatpush1.msra.mxu0 0.0
    %5129 = vmatprep.subr.mxu0 0.0
    %5130 = vmatpush1.msra.mxu0 %v5094
    %5131 = vmatprep.subr.mxu0 0.0
    %5132 = vmatpush2.msra.mxu0 0.0
    %5133 = vmatprep.subr.mxu0 0.0
    %5134 = vmatpush2.msra.mxu0 0.0
    %5135 = vmatprep.subr.mxu0 0.0
    %5136 = vmatpush2.msra.mxu0 0.0
    %5137 = vmatprep.subr.mxu0 0.0
    %5138 = vmatpush2.msra.mxu0 0.0
    %5139 = vmatprep.subr.mxu0 0.0
    %5140 = vmatpush2.msra.mxu0 0.0
    %5141 = vmatprep.subr.mxu0 0.0
    %5142 = vmatpush2.msra.mxu0 0.0
    %5143 = vmatprep.subr.mxu0 0.0
    %5144 = vmatpush2.msra.mxu0 0.0
    %5145 = vmatprep.subr.mxu0 0.0
    %5146 = vmatpush2.msra.mxu0 0.0
    %5147 = vmatprep.subr.mxu0 0.0
    %5148 = vmatpush2.msra.mxu0 0.0
    %5149 = vmatprep.subr.mxu0 0.0
    %5150 = vmatpush2.msra.mxu0 0.0
    %5151 = vmatprep.subr.mxu0 0.0
    %5152 = vmatpush2.msra.mxu0 0.0
    %5153 = vmatprep.subr.mxu0 0.0
    %5154 = vmatpush2.msra.mxu0 0.0
    %5155 = vmatprep.subr.mxu0 0.0
    %5156 = vmatpush2.msra.mxu0 0.0
    %5157 = vmatprep.subr.mxu0 0.0
    %5158 = vmatpush2.msra.mxu0 0.0
    %5159 = vmatprep.subr.mxu0 0.0
    %5160 = vmatpush2.msra.mxu0 0.0
    %5161 = vmatprep.subr.mxu0 0.0
    %5162 = vmatpush2.msra.mxu0 0.0
    %5163 = vmatprep.mubr.f32.mxu0 0.0
    %5164 = vmatmul.mubr.f32.gmra.mxu0 %v5097
    %v5165 = vpop.f32.mrf.mxu0
    %v5166 = vadd.f32 0.0, %v5165
    %v5167 = vpop.f32.mrf.mxu0
    %5168 = vdwg.mxu0
    %5169 = vrot.lane.b32.xlu0 %v3946, 56
    %v5170 = vpop.permute.xlu0 %5169
    %v5173 = vsel %vm407, %v5090, 0
    %5175 = vmatprep.subr.mxu0 0.0
    %5176 = vmatpush1.msra.mxu0 0.0
    %5177 = vmatprep.subr.mxu0 0.0
    %5178 = vmatpush1.msra.mxu0 0.0
    %5179 = vmatprep.subr.mxu0 0.0
    %5180 = vmatpush1.msra.mxu0 0.0
    %5181 = vmatprep.subr.mxu0 0.0
    %5182 = vmatpush1.msra.mxu0 0.0
    %5183 = vmatprep.subr.mxu0 0.0
    %5184 = vmatpush1.msra.mxu0 0.0
    %5185 = vmatprep.subr.mxu0 0.0
    %5186 = vmatpush1.msra.mxu0 0.0
    %5187 = vmatprep.subr.mxu0 0.0
    %5188 = vmatpush1.msra.mxu0 0.0
    %5189 = vmatprep.subr.mxu0 0.0
    %5190 = vmatpush1.msra.mxu0 0.0
    %5191 = vmatprep.subr.mxu0 0.0
    %5192 = vmatpush1.msra.mxu0 0.0
    %5193 = vmatprep.subr.mxu0 0.0
    %5194 = vmatpush1.msra.mxu0 0.0
    %5195 = vmatprep.subr.mxu0 0.0
    %5196 = vmatpush1.msra.mxu0 0.0
    %5197 = vmatprep.subr.mxu0 0.0
    %5198 = vmatpush1.msra.mxu0 0.0
    %5199 = vmatprep.subr.mxu0 0.0
    %5200 = vmatpush1.msra.mxu0 0.0
    %5201 = vmatprep.subr.mxu0 0.0
    %5202 = vmatpush1.msra.mxu0 0.0
    %5203 = vmatprep.subr.mxu0 0.0
    %5204 = vmatpush1.msra.mxu0 0.0
    %5205 = vmatprep.subr.mxu0 0.0
    %5206 = vmatpush1.msra.mxu0 %v5170
    %5207 = vmatprep.subr.mxu0 0.0
    %5208 = vmatpush2.msra.mxu0 0.0
    %5209 = vmatprep.subr.mxu0 0.0
    %5210 = vmatpush2.msra.mxu0 0.0
    %5211 = vmatprep.subr.mxu0 0.0
    %5212 = vmatpush2.msra.mxu0 0.0
    %5213 = vmatprep.subr.mxu0 0.0
    %5214 = vmatpush2.msra.mxu0 0.0
    %5215 = vmatprep.subr.mxu0 0.0
    %5216 = vmatpush2.msra.mxu0 0.0
    %5217 = vmatprep.subr.mxu0 0.0
    %5218 = vmatpush2.msra.mxu0 0.0
    %5219 = vmatprep.subr.mxu0 0.0
    %5220 = vmatpush2.msra.mxu0 0.0
    %5221 = vmatprep.subr.mxu0 0.0
    %5222 = vmatpush2.msra.mxu0 0.0
    %5223 = vmatprep.subr.mxu0 0.0
    %5224 = vmatpush2.msra.mxu0 0.0
    %5225 = vmatprep.subr.mxu0 0.0
    %5226 = vmatpush2.msra.mxu0 0.0
    %5227 = vmatprep.subr.mxu0 0.0
    %5228 = vmatpush2.msra.mxu0 0.0
    %5229 = vmatprep.subr.mxu0 0.0
    %5230 = vmatpush2.msra.mxu0 0.0
    %5231 = vmatprep.subr.mxu0 0.0
    %5232 = vmatpush2.msra.mxu0 0.0
    %5233 = vmatprep.subr.mxu0 0.0
    %5234 = vmatpush2.msra.mxu0 0.0
    %5235 = vmatprep.subr.mxu0 0.0
    %5236 = vmatpush2.msra.mxu0 0.0
    %5237 = vmatprep.subr.mxu0 0.0
    %5238 = vmatpush2.msra.mxu0 0.0
    %5239 = vmatprep.mubr.f32.mxu0 0.0
    %5240 = vmatmul.mubr.f32.gmra.mxu0 %v5173
    %v5241 = vpop.f32.mrf.mxu0
    %v5242 = vadd.f32 0.0, %v5241
    %v5243 = vpop.f32.mrf.mxu0
    %5244 = vdwg.mxu0
    %5245 = vrot.lane.b32.xlu0 %v3951, 56
    %v5246 = vpop.permute.xlu0 %5245
    %v5249 = vsel %vm407, %v5091, 0
    %5251 = vmatprep.subr.mxu0 0.0
    %5252 = vmatpush1.msra.mxu0 0.0
    %5253 = vmatprep.subr.mxu0 0.0
    %5254 = vmatpush1.msra.mxu0 0.0
    %5255 = vmatprep.subr.mxu0 0.0
    %5256 = vmatpush1.msra.mxu0 0.0
    %5257 = vmatprep.subr.mxu0 0.0
    %5258 = vmatpush1.msra.mxu0 0.0
    %5259 = vmatprep.subr.mxu0 0.0
    %5260 = vmatpush1.msra.mxu0 0.0
    %5261 = vmatprep.subr.mxu0 0.0
    %5262 = vmatpush1.msra.mxu0 0.0
    %5263 = vmatprep.subr.mxu0 0.0
    %5264 = vmatpush1.msra.mxu0 0.0
    %5265 = vmatprep.subr.mxu0 0.0
    %5266 = vmatpush1.msra.mxu0 0.0
    %5267 = vmatprep.subr.mxu0 0.0
    %5268 = vmatpush1.msra.mxu0 0.0
    %5269 = vmatprep.subr.mxu0 0.0
    %5270 = vmatpush1.msra.mxu0 0.0
    %5271 = vmatprep.subr.mxu0 0.0
    %5272 = vmatpush1.msra.mxu0 0.0
    %5273 = vmatprep.subr.mxu0 0.0
    %5274 = vmatpush1.msra.mxu0 0.0
    %5275 = vmatprep.subr.mxu0 0.0
    %5276 = vmatpush1.msra.mxu0 0.0
    %5277 = vmatprep.subr.mxu0 0.0
    %5278 = vmatpush1.msra.mxu0 0.0
    %5279 = vmatprep.subr.mxu0 0.0
    %5280 = vmatpush1.msra.mxu0 0.0
    %5281 = vmatprep.subr.mxu0 0.0
    %5282 = vmatpush1.msra.mxu0 %v5246
    %5283 = vmatprep.subr.mxu0 0.0
    %5284 = vmatpush2.msra.mxu0 0.0
    %5285 = vmatprep.subr.mxu0 0.0
    %5286 = vmatpush2.msra.mxu0 0.0
    %5287 = vmatprep.subr.mxu0 0.0
    %5288 = vmatpush2.msra.mxu0 0.0
    %5289 = vmatprep.subr.mxu0 0.0
    %5290 = vmatpush2.msra.mxu0 0.0
    %5291 = vmatprep.subr.mxu0 0.0
    %5292 = vmatpush2.msra.mxu0 0.0
    %5293 = vmatprep.subr.mxu0 0.0
    %5294 = vmatpush2.msra.mxu0 0.0
    %5295 = vmatprep.subr.mxu0 0.0
    %5296 = vmatpush2.msra.mxu0 0.0
    %5297 = vmatprep.subr.mxu0 0.0
    %5298 = vmatpush2.msra.mxu0 0.0
    %5299 = vmatprep.subr.mxu0 0.0
    %5300 = vmatpush2.msra.mxu0 0.0
    %5301 = vmatprep.subr.mxu0 0.0
    %5302 = vmatpush2.msra.mxu0 0.0
    %5303 = vmatprep.subr.mxu0 0.0
    %5304 = vmatpush2.msra.mxu0 0.0
    %5305 = vmatprep.subr.mxu0 0.0
    %5306 = vmatpush2.msra.mxu0 0.0
    %5307 = vmatprep.subr.mxu0 0.0
    %5308 = vmatpush2.msra.mxu0 0.0
    %5309 = vmatprep.subr.mxu0 0.0
    %5310 = vmatpush2.msra.mxu0 0.0
    %5311 = vmatprep.subr.mxu0 0.0
    %5312 = vmatpush2.msra.mxu0 0.0
    %5313 = vmatprep.subr.mxu0 0.0
    %5314 = vmatpush2.msra.mxu0 0.0
    %5315 = vmatprep.mubr.f32.mxu0 0.0
    %5316 = vmatmul.mubr.f32.gmra.mxu0 %v5249
    %v5317 = vpop.f32.mrf.mxu0
    %v5318 = vadd.f32 0.0, %v5317
    %v5319 = vpop.f32.mrf.mxu0
    %5320 = vdwg.mxu0
    %5321 = vrot.lane.b32.xlu0 %v3956, 56
    %v5322 = vpop.permute.xlu0 %5321
    %v5325 = vsel %vm407, %v5092, 0
    %5327 = vmatprep.subr.mxu0 0.0
    %5328 = vmatpush1.msra.mxu0 0.0
    %5329 = vmatprep.subr.mxu0 0.0
    %5330 = vmatpush1.msra.mxu0 0.0
    %5331 = vmatprep.subr.mxu0 0.0
    %5332 = vmatpush1.msra.mxu0 0.0
    %5333 = vmatprep.subr.mxu0 0.0
    %5334 = vmatpush1.msra.mxu0 0.0
    %5335 = vmatprep.subr.mxu0 0.0
    %5336 = vmatpush1.msra.mxu0 0.0
    %5337 = vmatprep.subr.mxu0 0.0
    %5338 = vmatpush1.msra.mxu0 0.0
    %5339 = vmatprep.subr.mxu0 0.0
    %5340 = vmatpush1.msra.mxu0 0.0
    %5341 = vmatprep.subr.mxu0 0.0
    %5342 = vmatpush1.msra.mxu0 0.0
    %5343 = vmatprep.subr.mxu0 0.0
    %5344 = vmatpush1.msra.mxu0 0.0
    %5345 = vmatprep.subr.mxu0 0.0
    %5346 = vmatpush1.msra.mxu0 0.0
    %5347 = vmatprep.subr.mxu0 0.0
    %5348 = vmatpush1.msra.mxu0 0.0
    %5349 = vmatprep.subr.mxu0 0.0
    %5350 = vmatpush1.msra.mxu0 0.0
    %5351 = vmatprep.subr.mxu0 0.0
    %5352 = vmatpush1.msra.mxu0 0.0
    %5353 = vmatprep.subr.mxu0 0.0
    %5354 = vmatpush1.msra.mxu0 0.0
    %5355 = vmatprep.subr.mxu0 0.0
    %5356 = vmatpush1.msra.mxu0 0.0
    %5357 = vmatprep.subr.mxu0 0.0
    %5358 = vmatpush1.msra.mxu0 %v5322
    %5359 = vmatprep.subr.mxu0 0.0
    %5360 = vmatpush2.msra.mxu0 0.0
    %5361 = vmatprep.subr.mxu0 0.0
    %5362 = vmatpush2.msra.mxu0 0.0
    %5363 = vmatprep.subr.mxu0 0.0
    %5364 = vmatpush2.msra.mxu0 0.0
    %5365 = vmatprep.subr.mxu0 0.0
    %5366 = vmatpush2.msra.mxu0 0.0
    %5367 = vmatprep.subr.mxu0 0.0
    %5368 = vmatpush2.msra.mxu0 0.0
    %5369 = vmatprep.subr.mxu0 0.0
    %5370 = vmatpush2.msra.mxu0 0.0
    %5371 = vmatprep.subr.mxu0 0.0
    %5372 = vmatpush2.msra.mxu0 0.0
    %5373 = vmatprep.subr.mxu0 0.0
    %5374 = vmatpush2.msra.mxu0 0.0
    %5375 = vmatprep.subr.mxu0 0.0
    %5376 = vmatpush2.msra.mxu0 0.0
    %5377 = vmatprep.subr.mxu0 0.0
    %5378 = vmatpush2.msra.mxu0 0.0
    %5379 = vmatprep.subr.mxu0 0.0
    %5380 = vmatpush2.msra.mxu0 0.0
    %5381 = vmatprep.subr.mxu0 0.0
    %5382 = vmatpush2.msra.mxu0 0.0
    %5383 = vmatprep.subr.mxu0 0.0
    %5384 = vmatpush2.msra.mxu0 0.0
    %5385 = vmatprep.subr.mxu0 0.0
    %5386 = vmatpush2.msra.mxu0 0.0
    %5387 = vmatprep.subr.mxu0 0.0
    %5388 = vmatpush2.msra.mxu0 0.0
    %5389 = vmatprep.subr.mxu0 0.0
    %5390 = vmatpush2.msra.mxu0 0.0
    %5391 = vmatprep.mubr.f32.mxu0 0.0
    %5392 = vmatmul.mubr.f32.gmra.mxu0 %v5325
    %v5393 = vpop.f32.mrf.mxu0
    %v5394 = vadd.f32 0.0, %v5393
    %v5395 = vpop.f32.mrf.mxu0
    %5396 = vdwg.mxu0
    %v5398 = vsel %vm407, %v5166, 0
    %v5401 = vsel %vm407, %v5242, 0
    %v5404 = vsel %vm407, %v5318, 0
    %v5407 = vsel %vm407, %v5394, 0
    %5409 = vmatprep.subr.mxu0 0.0
    %5410 = vmatpush1.msra.mxu0 0.0
    %5411 = vmatprep.subr.mxu0 0.0
    %5412 = vmatpush1.msra.mxu0 0.0
    %5413 = vmatprep.subr.mxu0 0.0
    %5414 = vmatpush1.msra.mxu0 0.0
    %5415 = vmatprep.subr.mxu0 0.0
    %5416 = vmatpush1.msra.mxu0 0.0
    %5417 = vmatprep.subr.mxu0 0.0
    %5418 = vmatpush1.msra.mxu0 0.0
    %5419 = vmatprep.subr.mxu0 0.0
    %5420 = vmatpush1.msra.mxu0 0.0
    %5421 = vmatprep.subr.mxu0 0.0
    %5422 = vmatpush1.msra.mxu0 0.0
    %5423 = vmatprep.subr.mxu0 0.0
    %5424 = vmatpush1.msra.mxu0 0.0
    %5425 = vmatprep.subr.mxu0 0.0
    %5426 = vmatpush1.msra.mxu0 0.0
    %5427 = vmatprep.subr.mxu0 0.0
    %5428 = vmatpush1.msra.mxu0 0.0
    %5429 = vmatprep.subr.mxu0 0.0
    %5430 = vmatpush1.msra.mxu0 0.0
    %5431 = vmatprep.subr.mxu0 0.0
    %5432 = vmatpush1.msra.mxu0 0.0
    %5433 = vmatprep.subr.mxu0 0.0
    %5434 = vmatpush1.msra.mxu0 0.0
    %5435 = vmatprep.subr.mxu0 0.0
    %5436 = vmatpush1.msra.mxu0 0.0
    %5437 = vmatprep.subr.mxu0 0.0
    %5438 = vmatpush1.msra.mxu0 0.0
    %5439 = vmatprep.subr.mxu0 0.0
    %5440 = vmatpush1.msra.mxu0 %v3961
    %5441 = vmatprep.subr.mxu0 0.0
    %5442 = vmatpush2.msra.mxu0 0.0
    %5443 = vmatprep.subr.mxu0 0.0
    %5444 = vmatpush2.msra.mxu0 0.0
    %5445 = vmatprep.subr.mxu0 0.0
    %5446 = vmatpush2.msra.mxu0 0.0
    %5447 = vmatprep.subr.mxu0 0.0
    %5448 = vmatpush2.msra.mxu0 0.0
    %5449 = vmatprep.subr.mxu0 0.0
    %5450 = vmatpush2.msra.mxu0 0.0
    %5451 = vmatprep.subr.mxu0 0.0
    %5452 = vmatpush2.msra.mxu0 0.0
    %5453 = vmatprep.subr.mxu0 0.0
    %5454 = vmatpush2.msra.mxu0 0.0
    %5455 = vmatprep.subr.mxu0 0.0
    %5456 = vmatpush2.msra.mxu0 0.0
    %5457 = vmatprep.subr.mxu0 0.0
    %5458 = vmatpush2.msra.mxu0 0.0
    %5459 = vmatprep.subr.mxu0 0.0
    %5460 = vmatpush2.msra.mxu0 0.0
    %5461 = vmatprep.subr.mxu0 0.0
    %5462 = vmatpush2.msra.mxu0 0.0
    %5463 = vmatprep.subr.mxu0 0.0
    %5464 = vmatpush2.msra.mxu0 0.0
    %5465 = vmatprep.subr.mxu0 0.0
    %5466 = vmatpush2.msra.mxu0 0.0
    %5467 = vmatprep.subr.mxu0 0.0
    %5468 = vmatpush2.msra.mxu0 0.0
    %5469 = vmatprep.subr.mxu0 0.0
    %5470 = vmatpush2.msra.mxu0 0.0
    %5471 = vmatprep.subr.mxu0 0.0
    %5472 = vmatpush2.msra.mxu0 0.0
    %5473 = vmatprep.mubr.f32.mxu0 0.0
    %5474 = vmatmul.mubr.f32.gmra.mxu0 %v5398
    %v5475 = vpop.f32.mrf.mxu0
    %v5476 = vadd.f32 0.0, %v5475
    %v5477 = vpop.f32.mrf.mxu0
    %5478 = vmatprep.mubr.f32.mxu0 0.0
    %5479 = vmatmul.mubr.f32.gmra.mxu0 %v5401
    %v5480 = vpop.f32.mrf.mxu0
    %v5481 = vadd.f32 0.0, %v5480
    %v5482 = vpop.f32.mrf.mxu0
    %5483 = vmatprep.mubr.f32.mxu0 0.0
    %5484 = vmatmul.mubr.f32.gmra.mxu0 %v5404
    %v5485 = vpop.f32.mrf.mxu0
    %v5486 = vadd.f32 0.0, %v5485
    %v5487 = vpop.f32.mrf.mxu0
    %5488 = vmatprep.mubr.f32.mxu0 0.0
    %5489 = vmatmul.mubr.f32.gmra.mxu0 %v5407
    %v5490 = vpop.f32.mrf.mxu0
    %v5491 = vadd.f32 0.0, %v5490
    %v5492 = vpop.f32.mrf.mxu0
    %5493 = vdwg.mxu0
    %v5494 = vadd.f32 %v4729, %v5476
    %v5495 = vadd.f32 %v4730, %v5481
    %v5496 = vadd.f32 %v4731, %v5486
    %v5497 = vadd.f32 %v4732, %v5491
    %5498 = vrot.lane.b32.xlu0 %v3941, 112
    %v5499 = vpop.permute.xlu0 %5498
    %5500 = vrot.lane.b32.xlu0 %v3941, 80
    %v5501 = vpop.permute.xlu0 %5500
    %v5502 = vsel %vm407, %v5499, 0
    %v5504 = vsel %vm407, %v5501, 0
    %5506 = vmatprep.subr.mxu0 0.0
    %5507 = vmatpush1.xpose.msra.mxu0 0.0
    %5508 = vmatprep.subr.mxu0 0.0
    %5509 = vmatpush1.xpose.msra.mxu0 0.0
    %5510 = vmatprep.subr.mxu0 0.0
    %5511 = vmatpush1.xpose.msra.mxu0 0.0
    %5512 = vmatprep.subr.mxu0 0.0
    %5513 = vmatpush1.xpose.msra.mxu0 0.0
    %5514 = vmatprep.subr.mxu0 0.0
    %5515 = vmatpush1.xpose.msra.mxu0 0.0
    %5516 = vmatprep.subr.mxu0 0.0
    %5517 = vmatpush1.xpose.msra.mxu0 0.0
    %5518 = vmatprep.subr.mxu0 0.0
    %5519 = vmatpush1.xpose.msra.mxu0 0.0
    %5520 = vmatprep.subr.mxu0 0.0
    %5521 = vmatpush1.xpose.msra.mxu0 0.0
    %5522 = vmatprep.subr.mxu0 0.0
    %5523 = vmatpush1.xpose.msra.mxu0 0.0
    %5524 = vmatprep.subr.mxu0 0.0
    %5525 = vmatpush1.xpose.msra.mxu0 0.0
    %5526 = vmatprep.subr.mxu0 0.0
    %5527 = vmatpush1.xpose.msra.mxu0 0.0
    %5528 = vmatprep.subr.mxu0 0.0
    %5529 = vmatpush1.xpose.msra.mxu0 0.0
    %5530 = vmatprep.subr.mxu0 0.0
    %5531 = vmatpush1.xpose.msra.mxu0 0.0
    %5532 = vmatprep.subr.mxu0 0.0
    %5533 = vmatpush1.xpose.msra.mxu0 0.0
    %5534 = vmatprep.subr.mxu0 0.0
    %5535 = vmatpush1.xpose.msra.mxu0 0.0
    %5536 = vmatprep.subr.mxu0 0.0
    %5537 = vmatpush1.xpose.msra.mxu0 %v5504
    %5538 = vmatprep.subr.mxu0 0.0
    %5539 = vmatpush2.xpose.msra.mxu0 0.0
    %5540 = vmatprep.subr.mxu0 0.0
    %5541 = vmatpush2.xpose.msra.mxu0 0.0
    %5542 = vmatprep.subr.mxu0 0.0
    %5543 = vmatpush2.xpose.msra.mxu0 0.0
    %5544 = vmatprep.subr.mxu0 0.0
    %5545 = vmatpush2.xpose.msra.mxu0 0.0
    %5546 = vmatprep.subr.mxu0 0.0
    %5547 = vmatpush2.xpose.msra.mxu0 0.0
    %5548 = vmatprep.subr.mxu0 0.0
    %5549 = vmatpush2.xpose.msra.mxu0 0.0
    %5550 = vmatprep.subr.mxu0 0.0
    %5551 = vmatpush2.xpose.msra.mxu0 0.0
    %5552 = vmatprep.subr.mxu0 0.0
    %5553 = vmatpush2.xpose.msra.mxu0 0.0
    %5554 = vmatprep.subr.mxu0 0.0
    %5555 = vmatpush2.xpose.msra.mxu0 0.0
    %5556 = vmatprep.subr.mxu0 0.0
    %5557 = vmatpush2.xpose.msra.mxu0 0.0
    %5558 = vmatprep.subr.mxu0 0.0
    %5559 = vmatpush2.xpose.msra.mxu0 0.0
    %5560 = vmatprep.subr.mxu0 0.0
    %5561 = vmatpush2.xpose.msra.mxu0 0.0
    %5562 = vmatprep.subr.mxu0 0.0
    %5563 = vmatpush2.xpose.msra.mxu0 0.0
    %5564 = vmatprep.subr.mxu0 0.0
    %5565 = vmatpush2.xpose.msra.mxu0 0.0
    %5566 = vmatprep.subr.mxu0 0.0
    %5567 = vmatpush2.xpose.msra.mxu0 0.0
    %5568 = vmatprep.subr.mxu0 0.0
    %5569 = vmatpush2.xpose.msra.mxu0 0.0
    %5570 = vmatprep.mubr.f32.mxu0 0.0
    %5571 = vmatmul.mubr.f32.gmra.mxu0 %v5502
    %v5572 = vpop.f32.mrf.mxu0
    %v5573 = vadd.f32 0.0, %v5572
    %v5574 = vpop.f32.mrf.mxu0
    %5575 = vdwg.mxu0
    %5576 = vrot.lane.b32.xlu0 %v3946, 112
    %v5577 = vpop.permute.xlu0 %5576
    %5578 = vrot.lane.b32.xlu0 %v3946, 80
    %v5579 = vpop.permute.xlu0 %5578
    %v5580 = vsel %vm407, %v5577, 0
    %v5582 = vsel %vm407, %v5579, 0
    %5584 = vmatprep.subr.mxu0 0.0
    %5585 = vmatpush1.xpose.msra.mxu0 0.0
    %5586 = vmatprep.subr.mxu0 0.0
    %5587 = vmatpush1.xpose.msra.mxu0 0.0
    %5588 = vmatprep.subr.mxu0 0.0
    %5589 = vmatpush1.xpose.msra.mxu0 0.0
    %5590 = vmatprep.subr.mxu0 0.0
    %5591 = vmatpush1.xpose.msra.mxu0 0.0
    %5592 = vmatprep.subr.mxu0 0.0
    %5593 = vmatpush1.xpose.msra.mxu0 0.0
    %5594 = vmatprep.subr.mxu0 0.0
    %5595 = vmatpush1.xpose.msra.mxu0 0.0
    %5596 = vmatprep.subr.mxu0 0.0
    %5597 = vmatpush1.xpose.msra.mxu0 0.0
    %5598 = vmatprep.subr.mxu0 0.0
    %5599 = vmatpush1.xpose.msra.mxu0 0.0
    %5600 = vmatprep.subr.mxu0 0.0
    %5601 = vmatpush1.xpose.msra.mxu0 0.0
    %5602 = vmatprep.subr.mxu0 0.0
    %5603 = vmatpush1.xpose.msra.mxu0 0.0
    %5604 = vmatprep.subr.mxu0 0.0
    %5605 = vmatpush1.xpose.msra.mxu0 0.0
    %5606 = vmatprep.subr.mxu0 0.0
    %5607 = vmatpush1.xpose.msra.mxu0 0.0
    %5608 = vmatprep.subr.mxu0 0.0
    %5609 = vmatpush1.xpose.msra.mxu0 0.0
    %5610 = vmatprep.subr.mxu0 0.0
    %5611 = vmatpush1.xpose.msra.mxu0 0.0
    %5612 = vmatprep.subr.mxu0 0.0
    %5613 = vmatpush1.xpose.msra.mxu0 0.0
    %5614 = vmatprep.subr.mxu0 0.0
    %5615 = vmatpush1.xpose.msra.mxu0 %v5582
    %5616 = vmatprep.subr.mxu0 0.0
    %5617 = vmatpush2.xpose.msra.mxu0 0.0
    %5618 = vmatprep.subr.mxu0 0.0
    %5619 = vmatpush2.xpose.msra.mxu0 0.0
    %5620 = vmatprep.subr.mxu0 0.0
    %5621 = vmatpush2.xpose.msra.mxu0 0.0
    %5622 = vmatprep.subr.mxu0 0.0
    %5623 = vmatpush2.xpose.msra.mxu0 0.0
    %5624 = vmatprep.subr.mxu0 0.0
    %5625 = vmatpush2.xpose.msra.mxu0 0.0
    %5626 = vmatprep.subr.mxu0 0.0
    %5627 = vmatpush2.xpose.msra.mxu0 0.0
    %5628 = vmatprep.subr.mxu0 0.0
    %5629 = vmatpush2.xpose.msra.mxu0 0.0
    %5630 = vmatprep.subr.mxu0 0.0
    %5631 = vmatpush2.xpose.msra.mxu0 0.0
    %5632 = vmatprep.subr.mxu0 0.0
    %5633 = vmatpush2.xpose.msra.mxu0 0.0
    %5634 = vmatprep.subr.mxu0 0.0
    %5635 = vmatpush2.xpose.msra.mxu0 0.0
    %5636 = vmatprep.subr.mxu0 0.0
    %5637 = vmatpush2.xpose.msra.mxu0 0.0
    %5638 = vmatprep.subr.mxu0 0.0
    %5639 = vmatpush2.xpose.msra.mxu0 0.0
    %5640 = vmatprep.subr.mxu0 0.0
    %5641 = vmatpush2.xpose.msra.mxu0 0.0
    %5642 = vmatprep.subr.mxu0 0.0
    %5643 = vmatpush2.xpose.msra.mxu0 0.0
    %5644 = vmatprep.subr.mxu0 0.0
    %5645 = vmatpush2.xpose.msra.mxu0 0.0
    %5646 = vmatprep.subr.mxu0 0.0
    %5647 = vmatpush2.xpose.msra.mxu0 0.0
    %5648 = vmatprep.mubr.f32.mxu0 0.0
    %5649 = vmatmul.mubr.f32.gmra.mxu0 %v5580
    %v5650 = vpop.f32.mrf.mxu0
    %v5651 = vadd.f32 0.0, %v5650
    %v5652 = vpop.f32.mrf.mxu0
    %5653 = vdwg.mxu0
    %5654 = vrot.lane.b32.xlu0 %v3951, 112
    %v5655 = vpop.permute.xlu0 %5654
    %5656 = vrot.lane.b32.xlu0 %v3951, 80
    %v5657 = vpop.permute.xlu0 %5656
    %v5658 = vsel %vm407, %v5655, 0
    %v5660 = vsel %vm407, %v5657, 0
    %5662 = vmatprep.subr.mxu0 0.0
    %5663 = vmatpush1.xpose.msra.mxu0 0.0
    %5664 = vmatprep.subr.mxu0 0.0
    %5665 = vmatpush1.xpose.msra.mxu0 0.0
    %5666 = vmatprep.subr.mxu0 0.0
    %5667 = vmatpush1.xpose.msra.mxu0 0.0
    %5668 = vmatprep.subr.mxu0 0.0
    %5669 = vmatpush1.xpose.msra.mxu0 0.0
    %5670 = vmatprep.subr.mxu0 0.0
    %5671 = vmatpush1.xpose.msra.mxu0 0.0
    %5672 = vmatprep.subr.mxu0 0.0
    %5673 = vmatpush1.xpose.msra.mxu0 0.0
    %5674 = vmatprep.subr.mxu0 0.0
    %5675 = vmatpush1.xpose.msra.mxu0 0.0
    %5676 = vmatprep.subr.mxu0 0.0
    %5677 = vmatpush1.xpose.msra.mxu0 0.0
    %5678 = vmatprep.subr.mxu0 0.0
    %5679 = vmatpush1.xpose.msra.mxu0 0.0
    %5680 = vmatprep.subr.mxu0 0.0
    %5681 = vmatpush1.xpose.msra.mxu0 0.0
    %5682 = vmatprep.subr.mxu0 0.0
    %5683 = vmatpush1.xpose.msra.mxu0 0.0
    %5684 = vmatprep.subr.mxu0 0.0
    %5685 = vmatpush1.xpose.msra.mxu0 0.0
    %5686 = vmatprep.subr.mxu0 0.0
    %5687 = vmatpush1.xpose.msra.mxu0 0.0
    %5688 = vmatprep.subr.mxu0 0.0
    %5689 = vmatpush1.xpose.msra.mxu0 0.0
    %5690 = vmatprep.subr.mxu0 0.0
    %5691 = vmatpush1.xpose.msra.mxu0 0.0
    %5692 = vmatprep.subr.mxu0 0.0
    %5693 = vmatpush1.xpose.msra.mxu0 %v5660
    %5694 = vmatprep.subr.mxu0 0.0
    %5695 = vmatpush2.xpose.msra.mxu0 0.0
    %5696 = vmatprep.subr.mxu0 0.0
    %5697 = vmatpush2.xpose.msra.mxu0 0.0
    %5698 = vmatprep.subr.mxu0 0.0
    %5699 = vmatpush2.xpose.msra.mxu0 0.0
    %5700 = vmatprep.subr.mxu0 0.0
    %5701 = vmatpush2.xpose.msra.mxu0 0.0
    %5702 = vmatprep.subr.mxu0 0.0
    %5703 = vmatpush2.xpose.msra.mxu0 0.0
    %5704 = vmatprep.subr.mxu0 0.0
    %5705 = vmatpush2.xpose.msra.mxu0 0.0
    %5706 = vmatprep.subr.mxu0 0.0
    %5707 = vmatpush2.xpose.msra.mxu0 0.0
    %5708 = vmatprep.subr.mxu0 0.0
    %5709 = vmatpush2.xpose.msra.mxu0 0.0
    %5710 = vmatprep.subr.mxu0 0.0
    %5711 = vmatpush2.xpose.msra.mxu0 0.0
    %5712 = vmatprep.subr.mxu0 0.0
    %5713 = vmatpush2.xpose.msra.mxu0 0.0
    %5714 = vmatprep.subr.mxu0 0.0
    %5715 = vmatpush2.xpose.msra.mxu0 0.0
    %5716 = vmatprep.subr.mxu0 0.0
    %5717 = vmatpush2.xpose.msra.mxu0 0.0
    %5718 = vmatprep.subr.mxu0 0.0
    %5719 = vmatpush2.xpose.msra.mxu0 0.0
    %5720 = vmatprep.subr.mxu0 0.0
    %5721 = vmatpush2.xpose.msra.mxu0 0.0
    %5722 = vmatprep.subr.mxu0 0.0
    %5723 = vmatpush2.xpose.msra.mxu0 0.0
    %5724 = vmatprep.subr.mxu0 0.0
    %5725 = vmatpush2.xpose.msra.mxu0 0.0
    %5726 = vmatprep.mubr.f32.mxu0 0.0
    %5727 = vmatmul.mubr.f32.gmra.mxu0 %v5658
    %v5728 = vpop.f32.mrf.mxu0
    %v5729 = vadd.f32 0.0, %v5728
    %v5730 = vpop.f32.mrf.mxu0
    %5731 = vdwg.mxu0
    %5732 = vrot.lane.b32.xlu0 %v3956, 112
    %v5733 = vpop.permute.xlu0 %5732
    %5734 = vrot.lane.b32.xlu0 %v3956, 80
    %v5735 = vpop.permute.xlu0 %5734
    %v5736 = vsel %vm407, %v5733, 0
    %v5738 = vsel %vm407, %v5735, 0
    %5740 = vmatprep.subr.mxu0 0.0
    %5741 = vmatpush1.xpose.msra.mxu0 0.0
    %5742 = vmatprep.subr.mxu0 0.0
    %5743 = vmatpush1.xpose.msra.mxu0 0.0
    %5744 = vmatprep.subr.mxu0 0.0
    %5745 = vmatpush1.xpose.msra.mxu0 0.0
    %5746 = vmatprep.subr.mxu0 0.0
    %5747 = vmatpush1.xpose.msra.mxu0 0.0
    %5748 = vmatprep.subr.mxu0 0.0
    %5749 = vmatpush1.xpose.msra.mxu0 0.0
    %5750 = vmatprep.subr.mxu0 0.0
    %5751 = vmatpush1.xpose.msra.mxu0 0.0
    %5752 = vmatprep.subr.mxu0 0.0
    %5753 = vmatpush1.xpose.msra.mxu0 0.0
    %5754 = vmatprep.subr.mxu0 0.0
    %5755 = vmatpush1.xpose.msra.mxu0 0.0
    %5756 = vmatprep.subr.mxu0 0.0
    %5757 = vmatpush1.xpose.msra.mxu0 0.0
    %5758 = vmatprep.subr.mxu0 0.0
    %5759 = vmatpush1.xpose.msra.mxu0 0.0
    %5760 = vmatprep.subr.mxu0 0.0
    %5761 = vmatpush1.xpose.msra.mxu0 0.0
    %5762 = vmatprep.subr.mxu0 0.0
    %5763 = vmatpush1.xpose.msra.mxu0 0.0
    %5764 = vmatprep.subr.mxu0 0.0
    %5765 = vmatpush1.xpose.msra.mxu0 0.0
    %5766 = vmatprep.subr.mxu0 0.0
    %5767 = vmatpush1.xpose.msra.mxu0 0.0
    %5768 = vmatprep.subr.mxu0 0.0
    %5769 = vmatpush1.xpose.msra.mxu0 0.0
    %5770 = vmatprep.subr.mxu0 0.0
    %5771 = vmatpush1.xpose.msra.mxu0 %v5738
    %5772 = vmatprep.subr.mxu0 0.0
    %5773 = vmatpush2.xpose.msra.mxu0 0.0
    %5774 = vmatprep.subr.mxu0 0.0
    %5775 = vmatpush2.xpose.msra.mxu0 0.0
    %5776 = vmatprep.subr.mxu0 0.0
    %5777 = vmatpush2.xpose.msra.mxu0 0.0
    %5778 = vmatprep.subr.mxu0 0.0
    %5779 = vmatpush2.xpose.msra.mxu0 0.0
    %5780 = vmatprep.subr.mxu0 0.0
    %5781 = vmatpush2.xpose.msra.mxu0 0.0
    %5782 = vmatprep.subr.mxu0 0.0
    %5783 = vmatpush2.xpose.msra.mxu0 0.0
    %5784 = vmatprep.subr.mxu0 0.0
    %5785 = vmatpush2.xpose.msra.mxu0 0.0
    %5786 = vmatprep.subr.mxu0 0.0
    %5787 = vmatpush2.xpose.msra.mxu0 0.0
    %5788 = vmatprep.subr.mxu0 0.0
    %5789 = vmatpush2.xpose.msra.mxu0 0.0
    %5790 = vmatprep.subr.mxu0 0.0
    %5791 = vmatpush2.xpose.msra.mxu0 0.0
    %5792 = vmatprep.subr.mxu0 0.0
    %5793 = vmatpush2.xpose.msra.mxu0 0.0
    %5794 = vmatprep.subr.mxu0 0.0
    %5795 = vmatpush2.xpose.msra.mxu0 0.0
    %5796 = vmatprep.subr.mxu0 0.0
    %5797 = vmatpush2.xpose.msra.mxu0 0.0
    %5798 = vmatprep.subr.mxu0 0.0
    %5799 = vmatpush2.xpose.msra.mxu0 0.0
    %5800 = vmatprep.subr.mxu0 0.0
    %5801 = vmatpush2.xpose.msra.mxu0 0.0
    %5802 = vmatprep.subr.mxu0 0.0
    %5803 = vmatpush2.xpose.msra.mxu0 0.0
    %5804 = vmatprep.mubr.f32.mxu0 0.0
    %5805 = vmatmul.mubr.f32.gmra.mxu0 %v5736
    %v5806 = vpop.f32.mrf.mxu0
    %v5807 = vadd.f32 0.0, %v5806
    %v5808 = vpop.f32.mrf.mxu0
    %5809 = vdwg.mxu0
    %v5810 = vmul.f32 %v5573, 0.35355338
    %v5811 = vmul.f32 %v5651, 0.35355338
    %v5812 = vmul.f32 %v5729, 0.35355338
    %v5813 = vmul.f32 %v5807, 0.35355338
    %v5814 = vsel %vm407, %v5810, -inf
    %5815 = vmax.xlane.f32.xlu0 %v5814
    %v5816 = vpop.xlane.xlu0 %5815
    %v5817 = vsel %vm407, %v5811, -inf
    %5818 = vmax.xlane.f32.xlu0 %v5817
    %v5819 = vpop.xlane.xlu0 %5818
    %v5820 = vsel %vm407, %v5812, -inf
    %5821 = vmax.xlane.f32.xlu0 %v5820
    %v5822 = vpop.xlane.xlu0 %5821
    %v5823 = vsel %vm407, %v5813, -inf
    %5824 = vmax.xlane.f32.xlu0 %v5823
    %v5825 = vpop.xlane.xlu0 %5824
    %v5826 = vsub.f32 %v5810, %v5816
    %v5827 = vsub.f32 %v5811, %v5819
    %v5828 = vsub.f32 %v5812, %v5822
    %v5829 = vsub.f32 %v5813, %v5825
    %v5830 = vmul.f32 %v5826, 1.442695
    %v5831 = vpow.pop %v5830
    %v5832 = vmul.f32 %v5827, 1.442695
    %v5833 = vpow.pop %v5832
    %v5834 = vmul.f32 %v5828, 1.442695
    %v5835 = vpow.pop %v5834
    %v5836 = vmul.f32 %v5829, 1.442695
    %v5837 = vpow.pop %v5836
    %v5838 = vsel %vm407, %v5831, 0.0
    %5839 = vadd.xlane.f32.xlu0 %v5838
    %v5840 = vpop.xlane.xlu0 %5839
    %v5841 = vsel %vm407, %v5833, 0.0
    %5842 = vadd.xlane.f32.xlu0 %v5841
    %v5843 = vpop.xlane.xlu0 %5842
    %v5844 = vsel %vm407, %v5835, 0.0
    %5845 = vadd.xlane.f32.xlu0 %v5844
    %v5846 = vpop.xlane.xlu0 %5845
    %v5847 = vsel %vm407, %v5837, 0.0
    %5848 = vadd.xlane.f32.xlu0 %v5847
    %v5849 = vpop.xlane.xlu0 %5848
    %v5850 = vrcp.pop %v5840
    %v5851 = vrcp.pop %v5843
    %v5852 = vrcp.pop %v5846
    %v5853 = vrcp.pop %v5849
    %v5854 = vmul.f32 %v5831, %v5850
    %v5855 = vmul.f32 %v5833, %v5851
    %v5856 = vmul.f32 %v5835, %v5852
    %v5857 = vmul.f32 %v5837, %v5853
    %5858 = vrot.lane.b32.xlu0 %v3941, 48
    %v5859 = vpop.permute.xlu0 %5858
    %v5862 = vsel %vm407, %v5854, 0
    %5864 = vmatprep.subr.mxu0 0.0
    %5865 = vmatpush1.msra.mxu0 0.0
    %5866 = vmatprep.subr.mxu0 0.0
    %5867 = vmatpush1.msra.mxu0 0.0
    %5868 = vmatprep.subr.mxu0 0.0
    %5869 = vmatpush1.msra.mxu0 0.0
    %5870 = vmatprep.subr.mxu0 0.0
    %5871 = vmatpush1.msra.mxu0 0.0
    %5872 = vmatprep.subr.mxu0 0.0
    %5873 = vmatpush1.msra.mxu0 0.0
    %5874 = vmatprep.subr.mxu0 0.0
    %5875 = vmatpush1.msra.mxu0 0.0
    %5876 = vmatprep.subr.mxu0 0.0
    %5877 = vmatpush1.msra.mxu0 0.0
    %5878 = vmatprep.subr.mxu0 0.0
    %5879 = vmatpush1.msra.mxu0 0.0
    %5880 = vmatprep.subr.mxu0 0.0
    %5881 = vmatpush1.msra.mxu0 0.0
    %5882 = vmatprep.subr.mxu0 0.0
    %5883 = vmatpush1.msra.mxu0 0.0
    %5884 = vmatprep.subr.mxu0 0.0
    %5885 = vmatpush1.msra.mxu0 0.0
    %5886 = vmatprep.subr.mxu0 0.0
    %5887 = vmatpush1.msra.mxu0 0.0
    %5888 = vmatprep.subr.mxu0 0.0
    %5889 = vmatpush1.msra.mxu0 0.0
    %5890 = vmatprep.subr.mxu0 0.0
    %5891 = vmatpush1.msra.mxu0 0.0
    %5892 = vmatprep.subr.mxu0 0.0
    %5893 = vmatpush1.msra.mxu0 0.0
    %5894 = vmatprep.subr.mxu0 0.0
    %5895 = vmatpush1.msra.mxu0 %v5859
    %5896 = vmatprep.subr.mxu0 0.0
    %5897 = vmatpush2.msra.mxu0 0.0
    %5898 = vmatprep.subr.mxu0 0.0
    %5899 = vmatpush2.msra.mxu0 0.0
    %5900 = vmatprep.subr.mxu0 0.0
    %5901 = vmatpush2.msra.mxu0 0.0
    %5902 = vmatprep.subr.mxu0 0.0
    %5903 = vmatpush2.msra.mxu0 0.0
    %5904 = vmatprep.subr.mxu0 0.0
    %5905 = vmatpush2.msra.mxu0 0.0
    %5906 = vmatprep.subr.mxu0 0.0
    %5907 = vmatpush2.msra.mxu0 0.0
    %5908 = vmatprep.subr.mxu0 0.0
    %5909 = vmatpush2.msra.mxu0 0.0
    %5910 = vmatprep.subr.mxu0 0.0
    %5911 = vmatpush2.msra.mxu0 0.0
    %5912 = vmatprep.subr.mxu0 0.0
    %5913 = vmatpush2.msra.mxu0 0.0
    %5914 = vmatprep.subr.mxu0 0.0
    %5915 = vmatpush2.msra.mxu0 0.0
    %5916 = vmatprep.subr.mxu0 0.0
    %5917 = vmatpush2.msra.mxu0 0.0
    %5918 = vmatprep.subr.mxu0 0.0
    %5919 = vmatpush2.msra.mxu0 0.0
    %5920 = vmatprep.subr.mxu0 0.0
    %5921 = vmatpush2.msra.mxu0 0.0
    %5922 = vmatprep.subr.mxu0 0.0
    %5923 = vmatpush2.msra.mxu0 0.0
    %5924 = vmatprep.subr.mxu0 0.0
    %5925 = vmatpush2.msra.mxu0 0.0
    %5926 = vmatprep.subr.mxu0 0.0
    %5927 = vmatpush2.msra.mxu0 0.0
    %5928 = vmatprep.mubr.f32.mxu0 0.0
    %5929 = vmatmul.mubr.f32.gmra.mxu0 %v5862
    %v5930 = vpop.f32.mrf.mxu0
    %v5931 = vadd.f32 0.0, %v5930
    %v5932 = vpop.f32.mrf.mxu0
    %5933 = vdwg.mxu0
    %5934 = vrot.lane.b32.xlu0 %v3946, 48
    %v5935 = vpop.permute.xlu0 %5934
    %v5938 = vsel %vm407, %v5855, 0
    %5940 = vmatprep.subr.mxu0 0.0
    %5941 = vmatpush1.msra.mxu0 0.0
    %5942 = vmatprep.subr.mxu0 0.0
    %5943 = vmatpush1.msra.mxu0 0.0
    %5944 = vmatprep.subr.mxu0 0.0
    %5945 = vmatpush1.msra.mxu0 0.0
    %5946 = vmatprep.subr.mxu0 0.0
    %5947 = vmatpush1.msra.mxu0 0.0
    %5948 = vmatprep.subr.mxu0 0.0
    %5949 = vmatpush1.msra.mxu0 0.0
    %5950 = vmatprep.subr.mxu0 0.0
    %5951 = vmatpush1.msra.mxu0 0.0
    %5952 = vmatprep.subr.mxu0 0.0
    %5953 = vmatpush1.msra.mxu0 0.0
    %5954 = vmatprep.subr.mxu0 0.0
    %5955 = vmatpush1.msra.mxu0 0.0
    %5956 = vmatprep.subr.mxu0 0.0
    %5957 = vmatpush1.msra.mxu0 0.0
    %5958 = vmatprep.subr.mxu0 0.0
    %5959 = vmatpush1.msra.mxu0 0.0
    %5960 = vmatprep.subr.mxu0 0.0
    %5961 = vmatpush1.msra.mxu0 0.0
    %5962 = vmatprep.subr.mxu0 0.0
    %5963 = vmatpush1.msra.mxu0 0.0
    %5964 = vmatprep.subr.mxu0 0.0
    %5965 = vmatpush1.msra.mxu0 0.0
    %5966 = vmatprep.subr.mxu0 0.0
    %5967 = vmatpush1.msra.mxu0 0.0
    %5968 = vmatprep.subr.mxu0 0.0
    %5969 = vmatpush1.msra.mxu0 0.0
    %5970 = vmatprep.subr.mxu0 0.0
    %5971 = vmatpush1.msra.mxu0 %v5935
    %5972 = vmatprep.subr.mxu0 0.0
    %5973 = vmatpush2.msra.mxu0 0.0
    %5974 = vmatprep.subr.mxu0 0.0
    %5975 = vmatpush2.msra.mxu0 0.0
    %5976 = vmatprep.subr.mxu0 0.0
    %5977 = vmatpush2.msra.mxu0 0.0
    %5978 = vmatprep.subr.mxu0 0.0
    %5979 = vmatpush2.msra.mxu0 0.0
    %5980 = vmatprep.subr.mxu0 0.0
    %5981 = vmatpush2.msra.mxu0 0.0
    %5982 = vmatprep.subr.mxu0 0.0
    %5983 = vmatpush2.msra.mxu0 0.0
    %5984 = vmatprep.subr.mxu0 0.0
    %5985 = vmatpush2.msra.mxu0 0.0
    %5986 = vmatprep.subr.mxu0 0.0
    %5987 = vmatpush2.msra.mxu0 0.0
    %5988 = vmatprep.subr.mxu0 0.0
    %5989 = vmatpush2.msra.mxu0 0.0
    %5990 = vmatprep.subr.mxu0 0.0
    %5991 = vmatpush2.msra.mxu0 0.0
    %5992 = vmatprep.subr.mxu0 0.0
    %5993 = vmatpush2.msra.mxu0 0.0
    %5994 = vmatprep.subr.mxu0 0.0
    %5995 = vmatpush2.msra.mxu0 0.0
    %5996 = vmatprep.subr.mxu0 0.0
    %5997 = vmatpush2.msra.mxu0 0.0
    %5998 = vmatprep.subr.mxu0 0.0
    %5999 = vmatpush2.msra.mxu0 0.0
    %6000 = vmatprep.subr.mxu0 0.0
    %6001 = vmatpush2.msra.mxu0 0.0
    %6002 = vmatprep.subr.mxu0 0.0
    %6003 = vmatpush2.msra.mxu0 0.0
    %6004 = vmatprep.mubr.f32.mxu0 0.0
    %6005 = vmatmul.mubr.f32.gmra.mxu0 %v5938
    %v6006 = vpop.f32.mrf.mxu0
    %v6007 = vadd.f32 0.0, %v6006
    %v6008 = vpop.f32.mrf.mxu0
    %6009 = vdwg.mxu0
    %6010 = vrot.lane.b32.xlu0 %v3951, 48
    %v6011 = vpop.permute.xlu0 %6010
    %v6014 = vsel %vm407, %v5856, 0
    %6016 = vmatprep.subr.mxu0 0.0
    %6017 = vmatpush1.msra.mxu0 0.0
    %6018 = vmatprep.subr.mxu0 0.0
    %6019 = vmatpush1.msra.mxu0 0.0
    %6020 = vmatprep.subr.mxu0 0.0
    %6021 = vmatpush1.msra.mxu0 0.0
    %6022 = vmatprep.subr.mxu0 0.0
    %6023 = vmatpush1.msra.mxu0 0.0
    %6024 = vmatprep.subr.mxu0 0.0
    %6025 = vmatpush1.msra.mxu0 0.0
    %6026 = vmatprep.subr.mxu0 0.0
    %6027 = vmatpush1.msra.mxu0 0.0
    %6028 = vmatprep.subr.mxu0 0.0
    %6029 = vmatpush1.msra.mxu0 0.0
    %6030 = vmatprep.subr.mxu0 0.0
    %6031 = vmatpush1.msra.mxu0 0.0
    %6032 = vmatprep.subr.mxu0 0.0
    %6033 = vmatpush1.msra.mxu0 0.0
    %6034 = vmatprep.subr.mxu0 0.0
    %6035 = vmatpush1.msra.mxu0 0.0
    %6036 = vmatprep.subr.mxu0 0.0
    %6037 = vmatpush1.msra.mxu0 0.0
    %6038 = vmatprep.subr.mxu0 0.0
    %6039 = vmatpush1.msra.mxu0 0.0
    %6040 = vmatprep.subr.mxu0 0.0
    %6041 = vmatpush1.msra.mxu0 0.0
    %6042 = vmatprep.subr.mxu0 0.0
    %6043 = vmatpush1.msra.mxu0 0.0
    %6044 = vmatprep.subr.mxu0 0.0
    %6045 = vmatpush1.msra.mxu0 0.0
    %6046 = vmatprep.subr.mxu0 0.0
    %6047 = vmatpush1.msra.mxu0 %v6011
    %6048 = vmatprep.subr.mxu0 0.0
    %6049 = vmatpush2.msra.mxu0 0.0
    %6050 = vmatprep.subr.mxu0 0.0
    %6051 = vmatpush2.msra.mxu0 0.0
    %6052 = vmatprep.subr.mxu0 0.0
    %6053 = vmatpush2.msra.mxu0 0.0
    %6054 = vmatprep.subr.mxu0 0.0
    %6055 = vmatpush2.msra.mxu0 0.0
    %6056 = vmatprep.subr.mxu0 0.0
    %6057 = vmatpush2.msra.mxu0 0.0
    %6058 = vmatprep.subr.mxu0 0.0
    %6059 = vmatpush2.msra.mxu0 0.0
    %6060 = vmatprep.subr.mxu0 0.0
    %6061 = vmatpush2.msra.mxu0 0.0
    %6062 = vmatprep.subr.mxu0 0.0
    %6063 = vmatpush2.msra.mxu0 0.0
    %6064 = vmatprep.subr.mxu0 0.0
    %6065 = vmatpush2.msra.mxu0 0.0
    %6066 = vmatprep.subr.mxu0 0.0
    %6067 = vmatpush2.msra.mxu0 0.0
    %6068 = vmatprep.subr.mxu0 0.0
    %6069 = vmatpush2.msra.mxu0 0.0
    %6070 = vmatprep.subr.mxu0 0.0
    %6071 = vmatpush2.msra.mxu0 0.0
    %6072 = vmatprep.subr.mxu0 0.0
    %6073 = vmatpush2.msra.mxu0 0.0
    %6074 = vmatprep.subr.mxu0 0.0
    %6075 = vmatpush2.msra.mxu0 0.0
    %6076 = vmatprep.subr.mxu0 0.0
    %6077 = vmatpush2.msra.mxu0 0.0
    %6078 = vmatprep.subr.mxu0 0.0
    %6079 = vmatpush2.msra.mxu0 0.0
    %6080 = vmatprep.mubr.f32.mxu0 0.0
    %6081 = vmatmul.mubr.f32.gmra.mxu0 %v6014
    %v6082 = vpop.f32.mrf.mxu0
    %v6083 = vadd.f32 0.0, %v6082
    %v6084 = vpop.f32.mrf.mxu0
    %6085 = vdwg.mxu0
    %6086 = vrot.lane.b32.xlu0 %v3956, 48
    %v6087 = vpop.permute.xlu0 %6086
    %v6090 = vsel %vm407, %v5857, 0
    %6092 = vmatprep.subr.mxu0 0.0
    %6093 = vmatpush1.msra.mxu0 0.0
    %6094 = vmatprep.subr.mxu0 0.0
    %6095 = vmatpush1.msra.mxu0 0.0
    %6096 = vmatprep.subr.mxu0 0.0
    %6097 = vmatpush1.msra.mxu0 0.0
    %6098 = vmatprep.subr.mxu0 0.0
    %6099 = vmatpush1.msra.mxu0 0.0
    %6100 = vmatprep.subr.mxu0 0.0
    %6101 = vmatpush1.msra.mxu0 0.0
    %6102 = vmatprep.subr.mxu0 0.0
    %6103 = vmatpush1.msra.mxu0 0.0
    %6104 = vmatprep.subr.mxu0 0.0
    %6105 = vmatpush1.msra.mxu0 0.0
    %6106 = vmatprep.subr.mxu0 0.0
    %6107 = vmatpush1.msra.mxu0 0.0
    %6108 = vmatprep.subr.mxu0 0.0
    %6109 = vmatpush1.msra.mxu0 0.0
    %6110 = vmatprep.subr.mxu0 0.0
    %6111 = vmatpush1.msra.mxu0 0.0
    %6112 = vmatprep.subr.mxu0 0.0
    %6113 = vmatpush1.msra.mxu0 0.0
    %6114 = vmatprep.subr.mxu0 0.0
    %6115 = vmatpush1.msra.mxu0 0.0
    %6116 = vmatprep.subr.mxu0 0.0
    %6117 = vmatpush1.msra.mxu0 0.0
    %6118 = vmatprep.subr.mxu0 0.0
    %6119 = vmatpush1.msra.mxu0 0.0
    %6120 = vmatprep.subr.mxu0 0.0
    %6121 = vmatpush1.msra.mxu0 0.0
    %6122 = vmatprep.subr.mxu0 0.0
    %6123 = vmatpush1.msra.mxu0 %v6087
    %6124 = vmatprep.subr.mxu0 0.0
    %6125 = vmatpush2.msra.mxu0 0.0
    %6126 = vmatprep.subr.mxu0 0.0
    %6127 = vmatpush2.msra.mxu0 0.0
    %6128 = vmatprep.subr.mxu0 0.0
    %6129 = vmatpush2.msra.mxu0 0.0
    %6130 = vmatprep.subr.mxu0 0.0
    %6131 = vmatpush2.msra.mxu0 0.0
    %6132 = vmatprep.subr.mxu0 0.0
    %6133 = vmatpush2.msra.mxu0 0.0
    %6134 = vmatprep.subr.mxu0 0.0
    %6135 = vmatpush2.msra.mxu0 0.0
    %6136 = vmatprep.subr.mxu0 0.0
    %6137 = vmatpush2.msra.mxu0 0.0
    %6138 = vmatprep.subr.mxu0 0.0
    %6139 = vmatpush2.msra.mxu0 0.0
    %6140 = vmatprep.subr.mxu0 0.0
    %6141 = vmatpush2.msra.mxu0 0.0
    %6142 = vmatprep.subr.mxu0 0.0
    %6143 = vmatpush2.msra.mxu0 0.0
    %6144 = vmatprep.subr.mxu0 0.0
    %6145 = vmatpush2.msra.mxu0 0.0
    %6146 = vmatprep.subr.mxu0 0.0
    %6147 = vmatpush2.msra.mxu0 0.0
    %6148 = vmatprep.subr.mxu0 0.0
    %6149 = vmatpush2.msra.mxu0 0.0
    %6150 = vmatprep.subr.mxu0 0.0
    %6151 = vmatpush2.msra.mxu0 0.0
    %6152 = vmatprep.subr.mxu0 0.0
    %6153 = vmatpush2.msra.mxu0 0.0
    %6154 = vmatprep.subr.mxu0 0.0
    %6155 = vmatpush2.msra.mxu0 0.0
    %6156 = vmatprep.mubr.f32.mxu0 0.0
    %6157 = vmatmul.mubr.f32.gmra.mxu0 %v6090
    %v6158 = vpop.f32.mrf.mxu0
    %v6159 = vadd.f32 0.0, %v6158
    %v6160 = vpop.f32.mrf.mxu0
    %6161 = vdwg.mxu0
    %v6163 = vsel %vm407, %v5931, 0
    %v6166 = vsel %vm407, %v6007, 0
    %v6169 = vsel %vm407, %v6083, 0
    %v6172 = vsel %vm407, %v6159, 0
    %6174 = vmatprep.subr.mxu0 0.0
    %6175 = vmatpush1.msra.mxu0 0.0
    %6176 = vmatprep.subr.mxu0 0.0
    %6177 = vmatpush1.msra.mxu0 0.0
    %6178 = vmatprep.subr.mxu0 0.0
    %6179 = vmatpush1.msra.mxu0 0.0
    %6180 = vmatprep.subr.mxu0 0.0
    %6181 = vmatpush1.msra.mxu0 0.0
    %6182 = vmatprep.subr.mxu0 0.0
    %6183 = vmatpush1.msra.mxu0 0.0
    %6184 = vmatprep.subr.mxu0 0.0
    %6185 = vmatpush1.msra.mxu0 0.0
    %6186 = vmatprep.subr.mxu0 0.0
    %6187 = vmatpush1.msra.mxu0 0.0
    %6188 = vmatprep.subr.mxu0 0.0
    %6189 = vmatpush1.msra.mxu0 0.0
    %6190 = vmatprep.subr.mxu0 0.0
    %6191 = vmatpush1.msra.mxu0 0.0
    %6192 = vmatprep.subr.mxu0 0.0
    %6193 = vmatpush1.msra.mxu0 0.0
    %6194 = vmatprep.subr.mxu0 0.0
    %6195 = vmatpush1.msra.mxu0 0.0
    %6196 = vmatprep.subr.mxu0 0.0
    %6197 = vmatpush1.msra.mxu0 0.0
    %6198 = vmatprep.subr.mxu0 0.0
    %6199 = vmatpush1.msra.mxu0 0.0
    %6200 = vmatprep.subr.mxu0 0.0
    %6201 = vmatpush1.msra.mxu0 0.0
    %6202 = vmatprep.subr.mxu0 0.0
    %6203 = vmatpush1.msra.mxu0 0.0
    %6204 = vmatprep.subr.mxu0 0.0
    %6205 = vmatpush1.msra.mxu0 %v3962
    %6206 = vmatprep.subr.mxu0 0.0
    %6207 = vmatpush2.msra.mxu0 0.0
    %6208 = vmatprep.subr.mxu0 0.0
    %6209 = vmatpush2.msra.mxu0 0.0
    %6210 = vmatprep.subr.mxu0 0.0
    %6211 = vmatpush2.msra.mxu0 0.0
    %6212 = vmatprep.subr.mxu0 0.0
    %6213 = vmatpush2.msra.mxu0 0.0
    %6214 = vmatprep.subr.mxu0 0.0
    %6215 = vmatpush2.msra.mxu0 0.0
    %6216 = vmatprep.subr.mxu0 0.0
    %6217 = vmatpush2.msra.mxu0 0.0
    %6218 = vmatprep.subr.mxu0 0.0
    %6219 = vmatpush2.msra.mxu0 0.0
    %6220 = vmatprep.subr.mxu0 0.0
    %6221 = vmatpush2.msra.mxu0 0.0
    %6222 = vmatprep.subr.mxu0 0.0
    %6223 = vmatpush2.msra.mxu0 0.0
    %6224 = vmatprep.subr.mxu0 0.0
    %6225 = vmatpush2.msra.mxu0 0.0
    %6226 = vmatprep.subr.mxu0 0.0
    %6227 = vmatpush2.msra.mxu0 0.0
    %6228 = vmatprep.subr.mxu0 0.0
    %6229 = vmatpush2.msra.mxu0 0.0
    %6230 = vmatprep.subr.mxu0 0.0
    %6231 = vmatpush2.msra.mxu0 0.0
    %6232 = vmatprep.subr.mxu0 0.0
    %6233 = vmatpush2.msra.mxu0 0.0
    %6234 = vmatprep.subr.mxu0 0.0
    %6235 = vmatpush2.msra.mxu0 0.0
    %6236 = vmatprep.subr.mxu0 0.0
    %6237 = vmatpush2.msra.mxu0 0.0
    %6238 = vmatprep.mubr.f32.mxu0 0.0
    %6239 = vmatmul.mubr.f32.gmra.mxu0 %v6163
    %v6240 = vpop.f32.mrf.mxu0
    %v6241 = vadd.f32 0.0, %v6240
    %v6242 = vpop.f32.mrf.mxu0
    %6243 = vmatprep.mubr.f32.mxu0 0.0
    %6244 = vmatmul.mubr.f32.gmra.mxu0 %v6166
    %v6245 = vpop.f32.mrf.mxu0
    %v6246 = vadd.f32 0.0, %v6245
    %v6247 = vpop.f32.mrf.mxu0
    %6248 = vmatprep.mubr.f32.mxu0 0.0
    %6249 = vmatmul.mubr.f32.gmra.mxu0 %v6169
    %v6250 = vpop.f32.mrf.mxu0
    %v6251 = vadd.f32 0.0, %v6250
    %v6252 = vpop.f32.mrf.mxu0
    %6253 = vmatprep.mubr.f32.mxu0 0.0
    %6254 = vmatmul.mubr.f32.gmra.mxu0 %v6172
    %v6255 = vpop.f32.mrf.mxu0
    %v6256 = vadd.f32 0.0, %v6255
    %v6257 = vpop.f32.mrf.mxu0
    %6258 = vdwg.mxu0
    %v6259 = vadd.f32 %v5494, %v6241
    %v6260 = vadd.f32 %v5495, %v6246
    %v6261 = vadd.f32 %v5496, %v6251
    %v6262 = vadd.f32 %v5497, %v6256
    %6263 = vrot.lane.b32.xlu0 %v3941, 104
    %v6264 = vpop.permute.xlu0 %6263
    %6265 = vrot.lane.b32.xlu0 %v3941, 72
    %v6266 = vpop.permute.xlu0 %6265
    %v6267 = vsel %vm407, %v6264, 0
    %v6269 = vsel %vm407, %v6266, 0
    %6271 = vmatprep.subr.mxu0 0.0
    %6272 = vmatpush1.xpose.msra.mxu0 0.0
    %6273 = vmatprep.subr.mxu0 0.0
    %6274 = vmatpush1.xpose.msra.mxu0 0.0
    %6275 = vmatprep.subr.mxu0 0.0
    %6276 = vmatpush1.xpose.msra.mxu0 0.0
    %6277 = vmatprep.subr.mxu0 0.0
    %6278 = vmatpush1.xpose.msra.mxu0 0.0
    %6279 = vmatprep.subr.mxu0 0.0
    %6280 = vmatpush1.xpose.msra.mxu0 0.0
    %6281 = vmatprep.subr.mxu0 0.0
    %6282 = vmatpush1.xpose.msra.mxu0 0.0
    %6283 = vmatprep.subr.mxu0 0.0
    %6284 = vmatpush1.xpose.msra.mxu0 0.0
    %6285 = vmatprep.subr.mxu0 0.0
    %6286 = vmatpush1.xpose.msra.mxu0 0.0
    %6287 = vmatprep.subr.mxu0 0.0
    %6288 = vmatpush1.xpose.msra.mxu0 0.0
    %6289 = vmatprep.subr.mxu0 0.0
    %6290 = vmatpush1.xpose.msra.mxu0 0.0
    %6291 = vmatprep.subr.mxu0 0.0
    %6292 = vmatpush1.xpose.msra.mxu0 0.0
    %6293 = vmatprep.subr.mxu0 0.0
    %6294 = vmatpush1.xpose.msra.mxu0 0.0
    %6295 = vmatprep.subr.mxu0 0.0
    %6296 = vmatpush1.xpose.msra.mxu0 0.0
    %6297 = vmatprep.subr.mxu0 0.0
    %6298 = vmatpush1.xpose.msra.mxu0 0.0
    %6299 = vmatprep.subr.mxu0 0.0
    %6300 = vmatpush1.xpose.msra.mxu0 0.0
    %6301 = vmatprep.subr.mxu0 0.0
    %6302 = vmatpush1.xpose.msra.mxu0 %v6269
    %6303 = vmatprep.subr.mxu0 0.0
    %6304 = vmatpush2.xpose.msra.mxu0 0.0
    %6305 = vmatprep.subr.mxu0 0.0
    %6306 = vmatpush2.xpose.msra.mxu0 0.0
    %6307 = vmatprep.subr.mxu0 0.0
    %6308 = vmatpush2.xpose.msra.mxu0 0.0
    %6309 = vmatprep.subr.mxu0 0.0
    %6310 = vmatpush2.xpose.msra.mxu0 0.0
    %6311 = vmatprep.subr.mxu0 0.0
    %6312 = vmatpush2.xpose.msra.mxu0 0.0
    %6313 = vmatprep.subr.mxu0 0.0
    %6314 = vmatpush2.xpose.msra.mxu0 0.0
    %6315 = vmatprep.subr.mxu0 0.0
    %6316 = vmatpush2.xpose.msra.mxu0 0.0
    %6317 = vmatprep.subr.mxu0 0.0
    %6318 = vmatpush2.xpose.msra.mxu0 0.0
    %6319 = vmatprep.subr.mxu0 0.0
    %6320 = vmatpush2.xpose.msra.mxu0 0.0
    %6321 = vmatprep.subr.mxu0 0.0
    %6322 = vmatpush2.xpose.msra.mxu0 0.0
    %6323 = vmatprep.subr.mxu0 0.0
    %6324 = vmatpush2.xpose.msra.mxu0 0.0
    %6325 = vmatprep.subr.mxu0 0.0
    %6326 = vmatpush2.xpose.msra.mxu0 0.0
    %6327 = vmatprep.subr.mxu0 0.0
    %6328 = vmatpush2.xpose.msra.mxu0 0.0
    %6329 = vmatprep.subr.mxu0 0.0
    %6330 = vmatpush2.xpose.msra.mxu0 0.0
    %6331 = vmatprep.subr.mxu0 0.0
    %6332 = vmatpush2.xpose.msra.mxu0 0.0
    %6333 = vmatprep.subr.mxu0 0.0
    %6334 = vmatpush2.xpose.msra.mxu0 0.0
    %6335 = vmatprep.mubr.f32.mxu0 0.0
    %6336 = vmatmul.mubr.f32.gmra.mxu0 %v6267
    %v6337 = vpop.f32.mrf.mxu0
    %v6338 = vadd.f32 0.0, %v6337
    %v6339 = vpop.f32.mrf.mxu0
    %6340 = vdwg.mxu0
    %6341 = vrot.lane.b32.xlu0 %v3946, 104
    %v6342 = vpop.permute.xlu0 %6341
    %6343 = vrot.lane.b32.xlu0 %v3946, 72
    %v6344 = vpop.permute.xlu0 %6343
    %v6345 = vsel %vm407, %v6342, 0
    %v6347 = vsel %vm407, %v6344, 0
    %6349 = vmatprep.subr.mxu0 0.0
    %6350 = vmatpush1.xpose.msra.mxu0 0.0
    %6351 = vmatprep.subr.mxu0 0.0
    %6352 = vmatpush1.xpose.msra.mxu0 0.0
    %6353 = vmatprep.subr.mxu0 0.0
    %6354 = vmatpush1.xpose.msra.mxu0 0.0
    %6355 = vmatprep.subr.mxu0 0.0
    %6356 = vmatpush1.xpose.msra.mxu0 0.0
    %6357 = vmatprep.subr.mxu0 0.0
    %6358 = vmatpush1.xpose.msra.mxu0 0.0
    %6359 = vmatprep.subr.mxu0 0.0
    %6360 = vmatpush1.xpose.msra.mxu0 0.0
    %6361 = vmatprep.subr.mxu0 0.0
    %6362 = vmatpush1.xpose.msra.mxu0 0.0
    %6363 = vmatprep.subr.mxu0 0.0
    %6364 = vmatpush1.xpose.msra.mxu0 0.0
    %6365 = vmatprep.subr.mxu0 0.0
    %6366 = vmatpush1.xpose.msra.mxu0 0.0
    %6367 = vmatprep.subr.mxu0 0.0
    %6368 = vmatpush1.xpose.msra.mxu0 0.0
    %6369 = vmatprep.subr.mxu0 0.0
    %6370 = vmatpush1.xpose.msra.mxu0 0.0
    %6371 = vmatprep.subr.mxu0 0.0
    %6372 = vmatpush1.xpose.msra.mxu0 0.0
    %6373 = vmatprep.subr.mxu0 0.0
    %6374 = vmatpush1.xpose.msra.mxu0 0.0
    %6375 = vmatprep.subr.mxu0 0.0
    %6376 = vmatpush1.xpose.msra.mxu0 0.0
    %6377 = vmatprep.subr.mxu0 0.0
    %6378 = vmatpush1.xpose.msra.mxu0 0.0
    %6379 = vmatprep.subr.mxu0 0.0
    %6380 = vmatpush1.xpose.msra.mxu0 %v6347
    %6381 = vmatprep.subr.mxu0 0.0
    %6382 = vmatpush2.xpose.msra.mxu0 0.0
    %6383 = vmatprep.subr.mxu0 0.0
    %6384 = vmatpush2.xpose.msra.mxu0 0.0
    %6385 = vmatprep.subr.mxu0 0.0
    %6386 = vmatpush2.xpose.msra.mxu0 0.0
    %6387 = vmatprep.subr.mxu0 0.0
    %6388 = vmatpush2.xpose.msra.mxu0 0.0
    %6389 = vmatprep.subr.mxu0 0.0
    %6390 = vmatpush2.xpose.msra.mxu0 0.0
    %6391 = vmatprep.subr.mxu0 0.0
    %6392 = vmatpush2.xpose.msra.mxu0 0.0
    %6393 = vmatprep.subr.mxu0 0.0
    %6394 = vmatpush2.xpose.msra.mxu0 0.0
    %6395 = vmatprep.subr.mxu0 0.0
    %6396 = vmatpush2.xpose.msra.mxu0 0.0
    %6397 = vmatprep.subr.mxu0 0.0
    %6398 = vmatpush2.xpose.msra.mxu0 0.0
    %6399 = vmatprep.subr.mxu0 0.0
    %6400 = vmatpush2.xpose.msra.mxu0 0.0
    %6401 = vmatprep.subr.mxu0 0.0
    %6402 = vmatpush2.xpose.msra.mxu0 0.0
    %6403 = vmatprep.subr.mxu0 0.0
    %6404 = vmatpush2.xpose.msra.mxu0 0.0
    %6405 = vmatprep.subr.mxu0 0.0
    %6406 = vmatpush2.xpose.msra.mxu0 0.0
    %6407 = vmatprep.subr.mxu0 0.0
    %6408 = vmatpush2.xpose.msra.mxu0 0.0
    %6409 = vmatprep.subr.mxu0 0.0
    %6410 = vmatpush2.xpose.msra.mxu0 0.0
    %6411 = vmatprep.subr.mxu0 0.0
    %6412 = vmatpush2.xpose.msra.mxu0 0.0
    %6413 = vmatprep.mubr.f32.mxu0 0.0
    %6414 = vmatmul.mubr.f32.gmra.mxu0 %v6345
    %v6415 = vpop.f32.mrf.mxu0
    %v6416 = vadd.f32 0.0, %v6415
    %v6417 = vpop.f32.mrf.mxu0
    %6418 = vdwg.mxu0
    %6419 = vrot.lane.b32.xlu0 %v3951, 104
    %v6420 = vpop.permute.xlu0 %6419
    %6421 = vrot.lane.b32.xlu0 %v3951, 72
    %v6422 = vpop.permute.xlu0 %6421
    %v6423 = vsel %vm407, %v6420, 0
    %v6425 = vsel %vm407, %v6422, 0
    %6427 = vmatprep.subr.mxu0 0.0
    %6428 = vmatpush1.xpose.msra.mxu0 0.0
    %6429 = vmatprep.subr.mxu0 0.0
    %6430 = vmatpush1.xpose.msra.mxu0 0.0
    %6431 = vmatprep.subr.mxu0 0.0
    %6432 = vmatpush1.xpose.msra.mxu0 0.0
    %6433 = vmatprep.subr.mxu0 0.0
    %6434 = vmatpush1.xpose.msra.mxu0 0.0
    %6435 = vmatprep.subr.mxu0 0.0
    %6436 = vmatpush1.xpose.msra.mxu0 0.0
    %6437 = vmatprep.subr.mxu0 0.0
    %6438 = vmatpush1.xpose.msra.mxu0 0.0
    %6439 = vmatprep.subr.mxu0 0.0
    %6440 = vmatpush1.xpose.msra.mxu0 0.0
    %6441 = vmatprep.subr.mxu0 0.0
    %6442 = vmatpush1.xpose.msra.mxu0 0.0
    %6443 = vmatprep.subr.mxu0 0.0
    %6444 = vmatpush1.xpose.msra.mxu0 0.0
    %6445 = vmatprep.subr.mxu0 0.0
    %6446 = vmatpush1.xpose.msra.mxu0 0.0
    %6447 = vmatprep.subr.mxu0 0.0
    %6448 = vmatpush1.xpose.msra.mxu0 0.0
    %6449 = vmatprep.subr.mxu0 0.0
    %6450 = vmatpush1.xpose.msra.mxu0 0.0
    %6451 = vmatprep.subr.mxu0 0.0
    %6452 = vmatpush1.xpose.msra.mxu0 0.0
    %6453 = vmatprep.subr.mxu0 0.0
    %6454 = vmatpush1.xpose.msra.mxu0 0.0
    %6455 = vmatprep.subr.mxu0 0.0
    %6456 = vmatpush1.xpose.msra.mxu0 0.0
    %6457 = vmatprep.subr.mxu0 0.0
    %6458 = vmatpush1.xpose.msra.mxu0 %v6425
    %6459 = vmatprep.subr.mxu0 0.0
    %6460 = vmatpush2.xpose.msra.mxu0 0.0
    %6461 = vmatprep.subr.mxu0 0.0
    %6462 = vmatpush2.xpose.msra.mxu0 0.0
    %6463 = vmatprep.subr.mxu0 0.0
    %6464 = vmatpush2.xpose.msra.mxu0 0.0
    %6465 = vmatprep.subr.mxu0 0.0
    %6466 = vmatpush2.xpose.msra.mxu0 0.0
    %6467 = vmatprep.subr.mxu0 0.0
    %6468 = vmatpush2.xpose.msra.mxu0 0.0
    %6469 = vmatprep.subr.mxu0 0.0
    %6470 = vmatpush2.xpose.msra.mxu0 0.0
    %6471 = vmatprep.subr.mxu0 0.0
    %6472 = vmatpush2.xpose.msra.mxu0 0.0
    %6473 = vmatprep.subr.mxu0 0.0
    %6474 = vmatpush2.xpose.msra.mxu0 0.0
    %6475 = vmatprep.subr.mxu0 0.0
    %6476 = vmatpush2.xpose.msra.mxu0 0.0
    %6477 = vmatprep.subr.mxu0 0.0
    %6478 = vmatpush2.xpose.msra.mxu0 0.0
    %6479 = vmatprep.subr.mxu0 0.0
    %6480 = vmatpush2.xpose.msra.mxu0 0.0
    %6481 = vmatprep.subr.mxu0 0.0
    %6482 = vmatpush2.xpose.msra.mxu0 0.0
    %6483 = vmatprep.subr.mxu0 0.0
    %6484 = vmatpush2.xpose.msra.mxu0 0.0
    %6485 = vmatprep.subr.mxu0 0.0
    %6486 = vmatpush2.xpose.msra.mxu0 0.0
    %6487 = vmatprep.subr.mxu0 0.0
    %6488 = vmatpush2.xpose.msra.mxu0 0.0
    %6489 = vmatprep.subr.mxu0 0.0
    %6490 = vmatpush2.xpose.msra.mxu0 0.0
    %6491 = vmatprep.mubr.f32.mxu0 0.0
    %6492 = vmatmul.mubr.f32.gmra.mxu0 %v6423
    %v6493 = vpop.f32.mrf.mxu0
    %v6494 = vadd.f32 0.0, %v6493
    %v6495 = vpop.f32.mrf.mxu0
    %6496 = vdwg.mxu0
    %6497 = vrot.lane.b32.xlu0 %v3956, 104
    %v6498 = vpop.permute.xlu0 %6497
    %6499 = vrot.lane.b32.xlu0 %v3956, 72
    %v6500 = vpop.permute.xlu0 %6499
    %v6501 = vsel %vm407, %v6498, 0
    %v6503 = vsel %vm407, %v6500, 0
    %6505 = vmatprep.subr.mxu0 0.0
    %6506 = vmatpush1.xpose.msra.mxu0 0.0
    %6507 = vmatprep.subr.mxu0 0.0
    %6508 = vmatpush1.xpose.msra.mxu0 0.0
    %6509 = vmatprep.subr.mxu0 0.0
    %6510 = vmatpush1.xpose.msra.mxu0 0.0
    %6511 = vmatprep.subr.mxu0 0.0
    %6512 = vmatpush1.xpose.msra.mxu0 0.0
    %6513 = vmatprep.subr.mxu0 0.0
    %6514 = vmatpush1.xpose.msra.mxu0 0.0
    %6515 = vmatprep.subr.mxu0 0.0
    %6516 = vmatpush1.xpose.msra.mxu0 0.0
    %6517 = vmatprep.subr.mxu0 0.0
    %6518 = vmatpush1.xpose.msra.mxu0 0.0
    %6519 = vmatprep.subr.mxu0 0.0
    %6520 = vmatpush1.xpose.msra.mxu0 0.0
    %6521 = vmatprep.subr.mxu0 0.0
    %6522 = vmatpush1.xpose.msra.mxu0 0.0
    %6523 = vmatprep.subr.mxu0 0.0
    %6524 = vmatpush1.xpose.msra.mxu0 0.0
    %6525 = vmatprep.subr.mxu0 0.0
    %6526 = vmatpush1.xpose.msra.mxu0 0.0
    %6527 = vmatprep.subr.mxu0 0.0
    %6528 = vmatpush1.xpose.msra.mxu0 0.0
    %6529 = vmatprep.subr.mxu0 0.0
    %6530 = vmatpush1.xpose.msra.mxu0 0.0
    %6531 = vmatprep.subr.mxu0 0.0
    %6532 = vmatpush1.xpose.msra.mxu0 0.0
    %6533 = vmatprep.subr.mxu0 0.0
    %6534 = vmatpush1.xpose.msra.mxu0 0.0
    %6535 = vmatprep.subr.mxu0 0.0
    %6536 = vmatpush1.xpose.msra.mxu0 %v6503
    %6537 = vmatprep.subr.mxu0 0.0
    %6538 = vmatpush2.xpose.msra.mxu0 0.0
    %6539 = vmatprep.subr.mxu0 0.0
    %6540 = vmatpush2.xpose.msra.mxu0 0.0
    %6541 = vmatprep.subr.mxu0 0.0
    %6542 = vmatpush2.xpose.msra.mxu0 0.0
    %6543 = vmatprep.subr.mxu0 0.0
    %6544 = vmatpush2.xpose.msra.mxu0 0.0
    %6545 = vmatprep.subr.mxu0 0.0
    %6546 = vmatpush2.xpose.msra.mxu0 0.0
    %6547 = vmatprep.subr.mxu0 0.0
    %6548 = vmatpush2.xpose.msra.mxu0 0.0
    %6549 = vmatprep.subr.mxu0 0.0
    %6550 = vmatpush2.xpose.msra.mxu0 0.0
    %6551 = vmatprep.subr.mxu0 0.0
    %6552 = vmatpush2.xpose.msra.mxu0 0.0
    %6553 = vmatprep.subr.mxu0 0.0
    %6554 = vmatpush2.xpose.msra.mxu0 0.0
    %6555 = vmatprep.subr.mxu0 0.0
    %6556 = vmatpush2.xpose.msra.mxu0 0.0
    %6557 = vmatprep.subr.mxu0 0.0
    %6558 = vmatpush2.xpose.msra.mxu0 0.0
    %6559 = vmatprep.subr.mxu0 0.0
    %6560 = vmatpush2.xpose.msra.mxu0 0.0
    %6561 = vmatprep.subr.mxu0 0.0
    %6562 = vmatpush2.xpose.msra.mxu0 0.0
    %6563 = vmatprep.subr.mxu0 0.0
    %6564 = vmatpush2.xpose.msra.mxu0 0.0
    %6565 = vmatprep.subr.mxu0 0.0
    %6566 = vmatpush2.xpose.msra.mxu0 0.0
    %6567 = vmatprep.subr.mxu0 0.0
    %6568 = vmatpush2.xpose.msra.mxu0 0.0
    %6569 = vmatprep.mubr.f32.mxu0 0.0
    %6570 = vmatmul.mubr.f32.gmra.mxu0 %v6501
    %v6571 = vpop.f32.mrf.mxu0
    %v6572 = vadd.f32 0.0, %v6571
    %v6573 = vpop.f32.mrf.mxu0
    %6574 = vdwg.mxu0
    %v6575 = vmul.f32 %v6338, 0.35355338
    %v6576 = vmul.f32 %v6416, 0.35355338
    %v6577 = vmul.f32 %v6494, 0.35355338
    %v6578 = vmul.f32 %v6572, 0.35355338
    %v6579 = vsel %vm407, %v6575, -inf
    %6580 = vmax.xlane.f32.xlu0 %v6579
    %v6581 = vpop.xlane.xlu0 %6580
    %v6582 = vsel %vm407, %v6576, -inf
    %6583 = vmax.xlane.f32.xlu0 %v6582
    %v6584 = vpop.xlane.xlu0 %6583
    %v6585 = vsel %vm407, %v6577, -inf
    %6586 = vmax.xlane.f32.xlu0 %v6585
    %v6587 = vpop.xlane.xlu0 %6586
    %v6588 = vsel %vm407, %v6578, -inf
    %6589 = vmax.xlane.f32.xlu0 %v6588
    %v6590 = vpop.xlane.xlu0 %6589
    %v6591 = vsub.f32 %v6575, %v6581
    %v6592 = vsub.f32 %v6576, %v6584
    %v6593 = vsub.f32 %v6577, %v6587
    %v6594 = vsub.f32 %v6578, %v6590
    %v6595 = vmul.f32 %v6591, 1.442695
    %v6596 = vpow.pop %v6595
    %v6597 = vmul.f32 %v6592, 1.442695
    %v6598 = vpow.pop %v6597
    %v6599 = vmul.f32 %v6593, 1.442695
    %v6600 = vpow.pop %v6599
    %v6601 = vmul.f32 %v6594, 1.442695
    %v6602 = vpow.pop %v6601
    %v6603 = vsel %vm407, %v6596, 0.0
    %6604 = vadd.xlane.f32.xlu0 %v6603
    %v6605 = vpop.xlane.xlu0 %6604
    %v6606 = vsel %vm407, %v6598, 0.0
    %6607 = vadd.xlane.f32.xlu0 %v6606
    %v6608 = vpop.xlane.xlu0 %6607
    %v6609 = vsel %vm407, %v6600, 0.0
    %6610 = vadd.xlane.f32.xlu0 %v6609
    %v6611 = vpop.xlane.xlu0 %6610
    %v6612 = vsel %vm407, %v6602, 0.0
    %6613 = vadd.xlane.f32.xlu0 %v6612
    %v6614 = vpop.xlane.xlu0 %6613
    %v6615 = vrcp.pop %v6605
    %v6616 = vrcp.pop %v6608
    %v6617 = vrcp.pop %v6611
    %v6618 = vrcp.pop %v6614
    %v6619 = vmul.f32 %v6596, %v6615
    %v6620 = vmul.f32 %v6598, %v6616
    %v6621 = vmul.f32 %v6600, %v6617
    %v6622 = vmul.f32 %v6602, %v6618
    %6623 = vrot.lane.b32.xlu0 %v3941, 40
    %v6624 = vpop.permute.xlu0 %6623
    %v6627 = vsel %vm407, %v6619, 0
    %6629 = vmatprep.subr.mxu0 0.0
    %6630 = vmatpush1.msra.mxu0 0.0
    %6631 = vmatprep.subr.mxu0 0.0
    %6632 = vmatpush1.msra.mxu0 0.0
    %6633 = vmatprep.subr.mxu0 0.0
    %6634 = vmatpush1.msra.mxu0 0.0
    %6635 = vmatprep.subr.mxu0 0.0
    %6636 = vmatpush1.msra.mxu0 0.0
    %6637 = vmatprep.subr.mxu0 0.0
    %6638 = vmatpush1.msra.mxu0 0.0
    %6639 = vmatprep.subr.mxu0 0.0
    %6640 = vmatpush1.msra.mxu0 0.0
    %6641 = vmatprep.subr.mxu0 0.0
    %6642 = vmatpush1.msra.mxu0 0.0
    %6643 = vmatprep.subr.mxu0 0.0
    %6644 = vmatpush1.msra.mxu0 0.0
    %6645 = vmatprep.subr.mxu0 0.0
    %6646 = vmatpush1.msra.mxu0 0.0
    %6647 = vmatprep.subr.mxu0 0.0
    %6648 = vmatpush1.msra.mxu0 0.0
    %6649 = vmatprep.subr.mxu0 0.0
    %6650 = vmatpush1.msra.mxu0 0.0
    %6651 = vmatprep.subr.mxu0 0.0
    %6652 = vmatpush1.msra.mxu0 0.0
    %6653 = vmatprep.subr.mxu0 0.0
    %6654 = vmatpush1.msra.mxu0 0.0
    %6655 = vmatprep.subr.mxu0 0.0
    %6656 = vmatpush1.msra.mxu0 0.0
    %6657 = vmatprep.subr.mxu0 0.0
    %6658 = vmatpush1.msra.mxu0 0.0
    %6659 = vmatprep.subr.mxu0 0.0
    %6660 = vmatpush1.msra.mxu0 %v6624
    %6661 = vmatprep.subr.mxu0 0.0
    %6662 = vmatpush2.msra.mxu0 0.0
    %6663 = vmatprep.subr.mxu0 0.0
    %6664 = vmatpush2.msra.mxu0 0.0
    %6665 = vmatprep.subr.mxu0 0.0
    %6666 = vmatpush2.msra.mxu0 0.0
    %6667 = vmatprep.subr.mxu0 0.0
    %6668 = vmatpush2.msra.mxu0 0.0
    %6669 = vmatprep.subr.mxu0 0.0
    %6670 = vmatpush2.msra.mxu0 0.0
    %6671 = vmatprep.subr.mxu0 0.0
    %6672 = vmatpush2.msra.mxu0 0.0
    %6673 = vmatprep.subr.mxu0 0.0
    %6674 = vmatpush2.msra.mxu0 0.0
    %6675 = vmatprep.subr.mxu0 0.0
    %6676 = vmatpush2.msra.mxu0 0.0
    %6677 = vmatprep.subr.mxu0 0.0
    %6678 = vmatpush2.msra.mxu0 0.0
    %6679 = vmatprep.subr.mxu0 0.0
    %6680 = vmatpush2.msra.mxu0 0.0
    %6681 = vmatprep.subr.mxu0 0.0
    %6682 = vmatpush2.msra.mxu0 0.0
    %6683 = vmatprep.subr.mxu0 0.0
    %6684 = vmatpush2.msra.mxu0 0.0
    %6685 = vmatprep.subr.mxu0 0.0
    %6686 = vmatpush2.msra.mxu0 0.0
    %6687 = vmatprep.subr.mxu0 0.0
    %6688 = vmatpush2.msra.mxu0 0.0
    %6689 = vmatprep.subr.mxu0 0.0
    %6690 = vmatpush2.msra.mxu0 0.0
    %6691 = vmatprep.subr.mxu0 0.0
    %6692 = vmatpush2.msra.mxu0 0.0
    %6693 = vmatprep.mubr.f32.mxu0 0.0
    %6694 = vmatmul.mubr.f32.gmra.mxu0 %v6627
    %v6695 = vpop.f32.mrf.mxu0
    %v6696 = vadd.f32 0.0, %v6695
    %v6697 = vpop.f32.mrf.mxu0
    %6698 = vdwg.mxu0
    %6699 = vrot.lane.b32.xlu0 %v3946, 40
    %v6700 = vpop.permute.xlu0 %6699
    %v6703 = vsel %vm407, %v6620, 0
    %6705 = vmatprep.subr.mxu0 0.0
    %6706 = vmatpush1.msra.mxu0 0.0
    %6707 = vmatprep.subr.mxu0 0.0
    %6708 = vmatpush1.msra.mxu0 0.0
    %6709 = vmatprep.subr.mxu0 0.0
    %6710 = vmatpush1.msra.mxu0 0.0
    %6711 = vmatprep.subr.mxu0 0.0
    %6712 = vmatpush1.msra.mxu0 0.0
    %6713 = vmatprep.subr.mxu0 0.0
    %6714 = vmatpush1.msra.mxu0 0.0
    %6715 = vmatprep.subr.mxu0 0.0
    %6716 = vmatpush1.msra.mxu0 0.0
    %6717 = vmatprep.subr.mxu0 0.0
    %6718 = vmatpush1.msra.mxu0 0.0
    %6719 = vmatprep.subr.mxu0 0.0
    %6720 = vmatpush1.msra.mxu0 0.0
    %6721 = vmatprep.subr.mxu0 0.0
    %6722 = vmatpush1.msra.mxu0 0.0
    %6723 = vmatprep.subr.mxu0 0.0
    %6724 = vmatpush1.msra.mxu0 0.0
    %6725 = vmatprep.subr.mxu0 0.0
    %6726 = vmatpush1.msra.mxu0 0.0
    %6727 = vmatprep.subr.mxu0 0.0
    %6728 = vmatpush1.msra.mxu0 0.0
    %6729 = vmatprep.subr.mxu0 0.0
    %6730 = vmatpush1.msra.mxu0 0.0
    %6731 = vmatprep.subr.mxu0 0.0
    %6732 = vmatpush1.msra.mxu0 0.0
    %6733 = vmatprep.subr.mxu0 0.0
    %6734 = vmatpush1.msra.mxu0 0.0
    %6735 = vmatprep.subr.mxu0 0.0
    %6736 = vmatpush1.msra.mxu0 %v6700
    %6737 = vmatprep.subr.mxu0 0.0
    %6738 = vmatpush2.msra.mxu0 0.0
    %6739 = vmatprep.subr.mxu0 0.0
    %6740 = vmatpush2.msra.mxu0 0.0
    %6741 = vmatprep.subr.mxu0 0.0
    %6742 = vmatpush2.msra.mxu0 0.0
    %6743 = vmatprep.subr.mxu0 0.0
    %6744 = vmatpush2.msra.mxu0 0.0
    %6745 = vmatprep.subr.mxu0 0.0
    %6746 = vmatpush2.msra.mxu0 0.0
    %6747 = vmatprep.subr.mxu0 0.0
    %6748 = vmatpush2.msra.mxu0 0.0
    %6749 = vmatprep.subr.mxu0 0.0
    %6750 = vmatpush2.msra.mxu0 0.0
    %6751 = vmatprep.subr.mxu0 0.0
    %6752 = vmatpush2.msra.mxu0 0.0
    %6753 = vmatprep.subr.mxu0 0.0
    %6754 = vmatpush2.msra.mxu0 0.0
    %6755 = vmatprep.subr.mxu0 0.0
    %6756 = vmatpush2.msra.mxu0 0.0
    %6757 = vmatprep.subr.mxu0 0.0
    %6758 = vmatpush2.msra.mxu0 0.0
    %6759 = vmatprep.subr.mxu0 0.0
    %6760 = vmatpush2.msra.mxu0 0.0
    %6761 = vmatprep.subr.mxu0 0.0
    %6762 = vmatpush2.msra.mxu0 0.0
    %6763 = vmatprep.subr.mxu0 0.0
    %6764 = vmatpush2.msra.mxu0 0.0
    %6765 = vmatprep.subr.mxu0 0.0
    %6766 = vmatpush2.msra.mxu0 0.0
    %6767 = vmatprep.subr.mxu0 0.0
    %6768 = vmatpush2.msra.mxu0 0.0
    %6769 = vmatprep.mubr.f32.mxu0 0.0
    %6770 = vmatmul.mubr.f32.gmra.mxu0 %v6703
    %v6771 = vpop.f32.mrf.mxu0
    %v6772 = vadd.f32 0.0, %v6771
    %v6773 = vpop.f32.mrf.mxu0
    %6774 = vdwg.mxu0
    %6775 = vrot.lane.b32.xlu0 %v3951, 40
    %v6776 = vpop.permute.xlu0 %6775
    %v6779 = vsel %vm407, %v6621, 0
    %6781 = vmatprep.subr.mxu0 0.0
    %6782 = vmatpush1.msra.mxu0 0.0
    %6783 = vmatprep.subr.mxu0 0.0
    %6784 = vmatpush1.msra.mxu0 0.0
    %6785 = vmatprep.subr.mxu0 0.0
    %6786 = vmatpush1.msra.mxu0 0.0
    %6787 = vmatprep.subr.mxu0 0.0
    %6788 = vmatpush1.msra.mxu0 0.0
    %6789 = vmatprep.subr.mxu0 0.0
    %6790 = vmatpush1.msra.mxu0 0.0
    %6791 = vmatprep.subr.mxu0 0.0
    %6792 = vmatpush1.msra.mxu0 0.0
    %6793 = vmatprep.subr.mxu0 0.0
    %6794 = vmatpush1.msra.mxu0 0.0
    %6795 = vmatprep.subr.mxu0 0.0
    %6796 = vmatpush1.msra.mxu0 0.0
    %6797 = vmatprep.subr.mxu0 0.0
    %6798 = vmatpush1.msra.mxu0 0.0
    %6799 = vmatprep.subr.mxu0 0.0
    %6800 = vmatpush1.msra.mxu0 0.0
    %6801 = vmatprep.subr.mxu0 0.0
    %6802 = vmatpush1.msra.mxu0 0.0
    %6803 = vmatprep.subr.mxu0 0.0
    %6804 = vmatpush1.msra.mxu0 0.0
    %6805 = vmatprep.subr.mxu0 0.0
    %6806 = vmatpush1.msra.mxu0 0.0
    %6807 = vmatprep.subr.mxu0 0.0
    %6808 = vmatpush1.msra.mxu0 0.0
    %6809 = vmatprep.subr.mxu0 0.0
    %6810 = vmatpush1.msra.mxu0 0.0
    %6811 = vmatprep.subr.mxu0 0.0
    %6812 = vmatpush1.msra.mxu0 %v6776
    %6813 = vmatprep.subr.mxu0 0.0
    %6814 = vmatpush2.msra.mxu0 0.0
    %6815 = vmatprep.subr.mxu0 0.0
    %6816 = vmatpush2.msra.mxu0 0.0
    %6817 = vmatprep.subr.mxu0 0.0
    %6818 = vmatpush2.msra.mxu0 0.0
    %6819 = vmatprep.subr.mxu0 0.0
    %6820 = vmatpush2.msra.mxu0 0.0
    %6821 = vmatprep.subr.mxu0 0.0
    %6822 = vmatpush2.msra.mxu0 0.0
    %6823 = vmatprep.subr.mxu0 0.0
    %6824 = vmatpush2.msra.mxu0 0.0
    %6825 = vmatprep.subr.mxu0 0.0
    %6826 = vmatpush2.msra.mxu0 0.0
    %6827 = vmatprep.subr.mxu0 0.0
    %6828 = vmatpush2.msra.mxu0 0.0
    %6829 = vmatprep.subr.mxu0 0.0
    %6830 = vmatpush2.msra.mxu0 0.0
    %6831 = vmatprep.subr.mxu0 0.0
    %6832 = vmatpush2.msra.mxu0 0.0
    %6833 = vmatprep.subr.mxu0 0.0
    %6834 = vmatpush2.msra.mxu0 0.0
    %6835 = vmatprep.subr.mxu0 0.0
    %6836 = vmatpush2.msra.mxu0 0.0
    %6837 = vmatprep.subr.mxu0 0.0
    %6838 = vmatpush2.msra.mxu0 0.0
    %6839 = vmatprep.subr.mxu0 0.0
    %6840 = vmatpush2.msra.mxu0 0.0
    %6841 = vmatprep.subr.mxu0 0.0
    %6842 = vmatpush2.msra.mxu0 0.0
    %6843 = vmatprep.subr.mxu0 0.0
    %6844 = vmatpush2.msra.mxu0 0.0
    %6845 = vmatprep.mubr.f32.mxu0 0.0
    %6846 = vmatmul.mubr.f32.gmra.mxu0 %v6779
    %v6847 = vpop.f32.mrf.mxu0
    %v6848 = vadd.f32 0.0, %v6847
    %v6849 = vpop.f32.mrf.mxu0
    %6850 = vdwg.mxu0
    %6851 = vrot.lane.b32.xlu0 %v3956, 40
    %v6852 = vpop.permute.xlu0 %6851
    %v6855 = vsel %vm407, %v6622, 0
    %6857 = vmatprep.subr.mxu0 0.0
    %6858 = vmatpush1.msra.mxu0 0.0
    %6859 = vmatprep.subr.mxu0 0.0
    %6860 = vmatpush1.msra.mxu0 0.0
    %6861 = vmatprep.subr.mxu0 0.0
    %6862 = vmatpush1.msra.mxu0 0.0
    %6863 = vmatprep.subr.mxu0 0.0
    %6864 = vmatpush1.msra.mxu0 0.0
    %6865 = vmatprep.subr.mxu0 0.0
    %6866 = vmatpush1.msra.mxu0 0.0
    %6867 = vmatprep.subr.mxu0 0.0
    %6868 = vmatpush1.msra.mxu0 0.0
    %6869 = vmatprep.subr.mxu0 0.0
    %6870 = vmatpush1.msra.mxu0 0.0
    %6871 = vmatprep.subr.mxu0 0.0
    %6872 = vmatpush1.msra.mxu0 0.0
    %6873 = vmatprep.subr.mxu0 0.0
    %6874 = vmatpush1.msra.mxu0 0.0
    %6875 = vmatprep.subr.mxu0 0.0
    %6876 = vmatpush1.msra.mxu0 0.0
    %6877 = vmatprep.subr.mxu0 0.0
    %6878 = vmatpush1.msra.mxu0 0.0
    %6879 = vmatprep.subr.mxu0 0.0
    %6880 = vmatpush1.msra.mxu0 0.0
    %6881 = vmatprep.subr.mxu0 0.0
    %6882 = vmatpush1.msra.mxu0 0.0
    %6883 = vmatprep.subr.mxu0 0.0
    %6884 = vmatpush1.msra.mxu0 0.0
    %6885 = vmatprep.subr.mxu0 0.0
    %6886 = vmatpush1.msra.mxu0 0.0
    %6887 = vmatprep.subr.mxu0 0.0
    %6888 = vmatpush1.msra.mxu0 %v6852
    %6889 = vmatprep.subr.mxu0 0.0
    %6890 = vmatpush2.msra.mxu0 0.0
    %6891 = vmatprep.subr.mxu0 0.0
    %6892 = vmatpush2.msra.mxu0 0.0
    %6893 = vmatprep.subr.mxu0 0.0
    %6894 = vmatpush2.msra.mxu0 0.0
    %6895 = vmatprep.subr.mxu0 0.0
    %6896 = vmatpush2.msra.mxu0 0.0
    %6897 = vmatprep.subr.mxu0 0.0
    %6898 = vmatpush2.msra.mxu0 0.0
    %6899 = vmatprep.subr.mxu0 0.0
    %6900 = vmatpush2.msra.mxu0 0.0
    %6901 = vmatprep.subr.mxu0 0.0
    %6902 = vmatpush2.msra.mxu0 0.0
    %6903 = vmatprep.subr.mxu0 0.0
    %6904 = vmatpush2.msra.mxu0 0.0
    %6905 = vmatprep.subr.mxu0 0.0
    %6906 = vmatpush2.msra.mxu0 0.0
    %6907 = vmatprep.subr.mxu0 0.0
    %6908 = vmatpush2.msra.mxu0 0.0
    %6909 = vmatprep.subr.mxu0 0.0
    %6910 = vmatpush2.msra.mxu0 0.0
    %6911 = vmatprep.subr.mxu0 0.0
    %6912 = vmatpush2.msra.mxu0 0.0
    %6913 = vmatprep.subr.mxu0 0.0
    %6914 = vmatpush2.msra.mxu0 0.0
    %6915 = vmatprep.subr.mxu0 0.0
    %6916 = vmatpush2.msra.mxu0 0.0
    %6917 = vmatprep.subr.mxu0 0.0
    %6918 = vmatpush2.msra.mxu0 0.0
    %6919 = vmatprep.subr.mxu0 0.0
    %6920 = vmatpush2.msra.mxu0 0.0
    %6921 = vmatprep.mubr.f32.mxu0 0.0
    %6922 = vmatmul.mubr.f32.gmra.mxu0 %v6855
    %v6923 = vpop.f32.mrf.mxu0
    %v6924 = vadd.f32 0.0, %v6923
    %v6925 = vpop.f32.mrf.mxu0
    %6926 = vdwg.mxu0
    %v6928 = vsel %vm407, %v6696, 0
    %v6931 = vsel %vm407, %v6772, 0
    %v6934 = vsel %vm407, %v6848, 0
    %v6937 = vsel %vm407, %v6924, 0
    %6939 = vmatprep.subr.mxu0 0.0
    %6940 = vmatpush1.msra.mxu0 0.0
    %6941 = vmatprep.subr.mxu0 0.0
    %6942 = vmatpush1.msra.mxu0 0.0
    %6943 = vmatprep.subr.mxu0 0.0
    %6944 = vmatpush1.msra.mxu0 0.0
    %6945 = vmatprep.subr.mxu0 0.0
    %6946 = vmatpush1.msra.mxu0 0.0
    %6947 = vmatprep.subr.mxu0 0.0
    %6948 = vmatpush1.msra.mxu0 0.0
    %6949 = vmatprep.subr.mxu0 0.0
    %6950 = vmatpush1.msra.mxu0 0.0
    %6951 = vmatprep.subr.mxu0 0.0
    %6952 = vmatpush1.msra.mxu0 0.0
    %6953 = vmatprep.subr.mxu0 0.0
    %6954 = vmatpush1.msra.mxu0 0.0
    %6955 = vmatprep.subr.mxu0 0.0
    %6956 = vmatpush1.msra.mxu0 0.0
    %6957 = vmatprep.subr.mxu0 0.0
    %6958 = vmatpush1.msra.mxu0 0.0
    %6959 = vmatprep.subr.mxu0 0.0
    %6960 = vmatpush1.msra.mxu0 0.0
    %6961 = vmatprep.subr.mxu0 0.0
    %6962 = vmatpush1.msra.mxu0 0.0
    %6963 = vmatprep.subr.mxu0 0.0
    %6964 = vmatpush1.msra.mxu0 0.0
    %6965 = vmatprep.subr.mxu0 0.0
    %6966 = vmatpush1.msra.mxu0 0.0
    %6967 = vmatprep.subr.mxu0 0.0
    %6968 = vmatpush1.msra.mxu0 0.0
    %6969 = vmatprep.subr.mxu0 0.0
    %6970 = vmatpush1.msra.mxu0 %v3963
    %6971 = vmatprep.subr.mxu0 0.0
    %6972 = vmatpush2.msra.mxu0 0.0
    %6973 = vmatprep.subr.mxu0 0.0
    %6974 = vmatpush2.msra.mxu0 0.0
    %6975 = vmatprep.subr.mxu0 0.0
    %6976 = vmatpush2.msra.mxu0 0.0
    %6977 = vmatprep.subr.mxu0 0.0
    %6978 = vmatpush2.msra.mxu0 0.0
    %6979 = vmatprep.subr.mxu0 0.0
    %6980 = vmatpush2.msra.mxu0 0.0
    %6981 = vmatprep.subr.mxu0 0.0
    %6982 = vmatpush2.msra.mxu0 0.0
    %6983 = vmatprep.subr.mxu0 0.0
    %6984 = vmatpush2.msra.mxu0 0.0
    %6985 = vmatprep.subr.mxu0 0.0
    %6986 = vmatpush2.msra.mxu0 0.0
    %6987 = vmatprep.subr.mxu0 0.0
    %6988 = vmatpush2.msra.mxu0 0.0
    %6989 = vmatprep.subr.mxu0 0.0
    %6990 = vmatpush2.msra.mxu0 0.0
    %6991 = vmatprep.subr.mxu0 0.0
    %6992 = vmatpush2.msra.mxu0 0.0
    %6993 = vmatprep.subr.mxu0 0.0
    %6994 = vmatpush2.msra.mxu0 0.0
    %6995 = vmatprep.subr.mxu0 0.0
    %6996 = vmatpush2.msra.mxu0 0.0
    %6997 = vmatprep.subr.mxu0 0.0
    %6998 = vmatpush2.msra.mxu0 0.0
    %6999 = vmatprep.subr.mxu0 0.0
    %7000 = vmatpush2.msra.mxu0 0.0
    %7001 = vmatprep.subr.mxu0 0.0
    %7002 = vmatpush2.msra.mxu0 0.0
    %7003 = vmatprep.mubr.f32.mxu0 0.0
    %7004 = vmatmul.mubr.f32.gmra.mxu0 %v6928
    %v7005 = vpop.f32.mrf.mxu0
    %v7006 = vadd.f32 0.0, %v7005
    %v7007 = vpop.f32.mrf.mxu0
    %7008 = vmatprep.mubr.f32.mxu0 0.0
    %7009 = vmatmul.mubr.f32.gmra.mxu0 %v6931
    %v7010 = vpop.f32.mrf.mxu0
    %v7011 = vadd.f32 0.0, %v7010
    %v7012 = vpop.f32.mrf.mxu0
    %7013 = vmatprep.mubr.f32.mxu0 0.0
    %7014 = vmatmul.mubr.f32.gmra.mxu0 %v6934
    %v7015 = vpop.f32.mrf.mxu0
    %v7016 = vadd.f32 0.0, %v7015
    %v7017 = vpop.f32.mrf.mxu0
    %7018 = vmatprep.mubr.f32.mxu0 0.0
    %7019 = vmatmul.mubr.f32.gmra.mxu0 %v6937
    %v7020 = vpop.f32.mrf.mxu0
    %v7021 = vadd.f32 0.0, %v7020
    %v7022 = vpop.f32.mrf.mxu0
    %7023 = vdwg.mxu0
    %v7024 = vadd.f32 %v6259, %v7006
    %v7025 = vadd.f32 %v6260, %v7011
    %v7026 = vadd.f32 %v6261, %v7016
    %v7027 = vadd.f32 %v6262, %v7021
    %v7028 = vadd.f32 %v3845, %v7024
    %v7029 = vadd.f32 %v3846, %v7025
    %v7030 = vadd.f32 %v3847, %v7026
    %v7031 = vadd.f32 %v3848, %v7027
    %s7032 = scalar_lea.vmem [#allocation10], 1
    %v7033 = vld [vmem:[%s7032] sm:$0x1]
    %s7034 = scalar_lea.vmem [#allocation11], 1
    %v7035 = vld [vmem:[%s7034] sm:$0x1]
    %v7036 = vsel %vm301, %v7028, 0.0
    %7037 = vadd.xlane.f32.xlu0 %v7036
    %v7038 = vpop.xlane.xlu0 %7037
    %v7039 = vsel %vm301, %v7029, 0.0
    %7040 = vadd.xlane.f32.xlu0 %v7039
    %v7041 = vpop.xlane.xlu0 %7040
    %v7042 = vsel %vm301, %v7030, 0.0
    %7043 = vadd.xlane.f32.xlu0 %v7042
    %v7044 = vpop.xlane.xlu0 %7043
    %v7045 = vsel %vm301, %v7031, 0.0
    %7046 = vadd.xlane.f32.xlu0 %v7045
    %v7047 = vpop.xlane.xlu0 %7046
    %v7048 = vmul.f32 %v7038, %v3485
    %v7049 = vmul.f32 %v7041, %v3485
    %v7050 = vmul.f32 %v7044, %v3485
    %v7051 = vmul.f32 %v7047, %v3485
    %v7052 = vsub.f32 %v7028, %v7048
    %v7053 = vsub.f32 %v7029, %v7049
    %v7054 = vsub.f32 %v7030, %v7050
    %v7055 = vsub.f32 %v7031, %v7051
    %v7056 = vmul.f32 %v7052, %v7052
    %v7057 = vmul.f32 %v7053, %v7053
    %v7058 = vmul.f32 %v7054, %v7054
    %v7059 = vmul.f32 %v7055, %v7055
    %v7060 = vsel %vm301, %v7056, 0.0
    %7061 = vadd.xlane.f32.xlu0 %v7060
    %v7062 = vpop.xlane.xlu0 %7061
    %v7063 = vsel %vm301, %v7057, 0.0
    %7064 = vadd.xlane.f32.xlu0 %v7063
    %v7065 = vpop.xlane.xlu0 %7064
    %v7066 = vsel %vm301, %v7058, 0.0
    %7067 = vadd.xlane.f32.xlu0 %v7066
    %v7068 = vpop.xlane.xlu0 %7067
    %v7069 = vsel %vm301, %v7059, 0.0
    %7070 = vadd.xlane.f32.xlu0 %v7069
    %v7071 = vpop.xlane.xlu0 %7070
    %v7072 = vmul.f32 %v7062, %v3485
    %v7073 = vmul.f32 %v7065, %v3485
    %v7074 = vmul.f32 %v7068, %v3485
    %v7075 = vmul.f32 %v7071, %v3485
    %v7076 = vadd.f32 %v7072, 1e-05
    %v7077 = vadd.f32 %v7073, 1e-05
    %v7078 = vadd.f32 %v7074, 1e-05
    %v7079 = vadd.f32 %v7075, 1e-05
    %v7080 = vrsqrt.pop %v7076
    %v7081 = vrsqrt.pop %v7077
    %v7082 = vrsqrt.pop %v7078
    %v7083 = vrsqrt.pop %v7079
    %v7084 = vmul.f32 %v7052, %v7080
    %v7085 = vmul.f32 %v7053, %v7081
    %v7086 = vmul.f32 %v7054, %v7082
    %v7087 = vmul.f32 %v7055, %v7083
    %v7089 = vlaneseq
    %v7090 = vshrl.u32 %v7089, 7
    %v7091 = vsub.s32 0, %v7090
    %v7092 = vrot.slane %v7033, %v7091
    %v7094 = vmul.f32 %v7084, %v7092
    %v7095 = vmul.f32 %v7085, %v7092
    %v7096 = vmul.f32 %v7086, %v7092
    %v7097 = vmul.f32 %v7087, %v7092
    %v7099 = vlaneseq
    %v7100 = vshrl.u32 %v7099, 7
    %v7101 = vsub.s32 0, %v7100
    %v7102 = vrot.slane %v7035, %v7101
    %v7104 = vadd.f32 %v7094, %v7102
    %v7105 = vadd.f32 %v7095, %v7102
    %v7106 = vadd.f32 %v7096, %v7102
    %v7107 = vadd.f32 %v7097, %v7102
    %s7108 = scalar_lea.vmem %s10, 32
    %v7109 = vld [vmem:[%s7108] sm:$0xff]
    %v7110 = vld [vmem:[%s7108 + $0x8] sm:$0xff]
    %v7111 = vld [vmem:[%s7108 + $0x10] sm:$0xff]
    %v7112 = vld [vmem:[%s7108 + $0x18] sm:$0xff]
    %s7113 = scalar_lea.vmem [#allocation13], 1
    %v7114 = vld [vmem:[%s7113] sm:$0x1]
    %v7116 = vlaneseq
    %v7117 = vshrl.u32 %v7116, 7
    %v7118 = vsub.s32 0, %v7117
    %v7119 = vrot.slane %v7114, %v7118
    %v7122 = vsel %vm301, %v7104, 0
    %v7125 = vsel %vm301, %v7105, 0
    %v7128 = vsel %vm301, %v7106, 0
    %v7131 = vsel %vm301, %v7107, 0
    %7133 = vmatprep.subr.mxu0 0.0
    %7134 = vmatpush1.msra.mxu0 0.0
    %7135 = vmatprep.subr.mxu0 0.0
    %7136 = vmatpush1.msra.mxu0 0.0
    %7137 = vmatprep.subr.mxu0 0.0
    %7138 = vmatpush1.msra.mxu0 0.0
    %7139 = vmatprep.subr.mxu0 0.0
    %7140 = vmatpush1.msra.mxu0 0.0
    %7141 = vmatprep.subr.mxu0 0.0
    %7142 = vmatpush1.msra.mxu0 0.0
    %7143 = vmatprep.subr.mxu0 0.0
    %7144 = vmatpush1.msra.mxu0 0.0
    %7145 = vmatprep.subr.mxu0 0.0
    %7146 = vmatpush1.msra.mxu0 0.0
    %7147 = vmatprep.subr.mxu0 0.0
    %7148 = vmatpush1.msra.mxu0 0.0
    %7149 = vmatprep.subr.mxu0 0.0
    %7150 = vmatpush1.msra.mxu0 0.0
    %7151 = vmatprep.subr.mxu0 0.0
    %7152 = vmatpush1.msra.mxu0 0.0
    %7153 = vmatprep.subr.mxu0 0.0
    %7154 = vmatpush1.msra.mxu0 0.0
    %7155 = vmatprep.subr.mxu0 0.0
    %7156 = vmatpush1.msra.mxu0 0.0
    %7157 = vmatprep.subr.mxu0 0.0
    %7158 = vmatpush1.msra.mxu0 %v7112
    %7159 = vmatprep.subr.mxu0 0.0
    %7160 = vmatpush1.msra.mxu0 %v7111
    %7161 = vmatprep.subr.mxu0 0.0
    %7162 = vmatpush1.msra.mxu0 %v7110
    %7163 = vmatprep.subr.mxu0 0.0
    %7164 = vmatpush1.msra.mxu0 %v7109
    %7165 = vmatprep.subr.mxu0 0.0
    %7166 = vmatpush2.msra.mxu0 0.0
    %7167 = vmatprep.subr.mxu0 0.0
    %7168 = vmatpush2.msra.mxu0 0.0
    %7169 = vmatprep.subr.mxu0 0.0
    %7170 = vmatpush2.msra.mxu0 0.0
    %7171 = vmatprep.subr.mxu0 0.0
    %7172 = vmatpush2.msra.mxu0 0.0
    %7173 = vmatprep.subr.mxu0 0.0
    %7174 = vmatpush2.msra.mxu0 0.0
    %7175 = vmatprep.subr.mxu0 0.0
    %7176 = vmatpush2.msra.mxu0 0.0
    %7177 = vmatprep.subr.mxu0 0.0
    %7178 = vmatpush2.msra.mxu0 0.0
    %7179 = vmatprep.subr.mxu0 0.0
    %7180 = vmatpush2.msra.mxu0 0.0
    %7181 = vmatprep.subr.mxu0 0.0
    %7182 = vmatpush2.msra.mxu0 0.0
    %7183 = vmatprep.subr.mxu0 0.0
    %7184 = vmatpush2.msra.mxu0 0.0
    %7185 = vmatprep.subr.mxu0 0.0
    %7186 = vmatpush2.msra.mxu0 0.0
    %7187 = vmatprep.subr.mxu0 0.0
    %7188 = vmatpush2.msra.mxu0 0.0
    %7189 = vmatprep.subr.mxu0 0.0
    %7190 = vmatpush2.msra.mxu0 0.0
    %7191 = vmatprep.subr.mxu0 0.0
    %7192 = vmatpush2.msra.mxu0 0.0
    %7193 = vmatprep.subr.mxu0 0.0
    %7194 = vmatpush2.msra.mxu0 0.0
    %7195 = vmatprep.subr.mxu0 0.0
    %7196 = vmatpush2.msra.mxu0 0.0
    %7197 = vmatprep.mubr.f32.mxu0 0.0
    %7198 = vmatmul.mubr.f32.gmra.mxu0 %v7122
    %v7199 = vpop.f32.mrf.mxu0
    %v7200 = vadd.f32 %v7119, %v7199
    %v7201 = vpop.f32.mrf.mxu0
    %7202 = vmatprep.mubr.f32.mxu0 0.0
    %7203 = vmatmul.mubr.f32.gmra.mxu0 %v7125
    %v7204 = vpop.f32.mrf.mxu0
    %v7205 = vadd.f32 %v7119, %v7204
    %v7206 = vpop.f32.mrf.mxu0
    %7207 = vmatprep.mubr.f32.mxu0 0.0
    %7208 = vmatmul.mubr.f32.gmra.mxu0 %v7128
    %v7209 = vpop.f32.mrf.mxu0
    %v7210 = vadd.f32 %v7119, %v7209
    %v7211 = vpop.f32.mrf.mxu0
    %7212 = vmatprep.mubr.f32.mxu0 0.0
    %7213 = vmatmul.mubr.f32.gmra.mxu0 %v7131
    %v7214 = vpop.f32.mrf.mxu0
    %v7215 = vadd.f32 %v7119, %v7214
    %v7216 = vpop.f32.mrf.mxu0
    %7217 = vdwg.mxu0
    %v7218 = vmax.f32 %v7200, 0.0
    %v7219 = vmax.f32 %v7205, 0.0
    %v7220 = vmax.f32 %v7210, 0.0
    %v7221 = vmax.f32 %v7215, 0.0
    %s7222 = scalar_lea.vmem %s12, 64
    %v7223 = vld [vmem:[%s7222] sm:$0xff]
    %v7224 = vld [vmem:[%s7222 + $0x8] sm:$0xff]
    %v7225 = vld [vmem:[%s7222 + $0x10] sm:$0xff]
    %v7226 = vld [vmem:[%s7222 + $0x18] sm:$0xff]
    %v7227 = vld [vmem:[%s7222 + $0x20] sm:$0xff]
    %v7228 = vld [vmem:[%s7222 + $0x28] sm:$0xff]
    %v7229 = vld [vmem:[%s7222 + $0x30] sm:$0xff]
    %v7230 = vld [vmem:[%s7222 + $0x38] sm:$0xff]
    %s7231 = scalar_lea.vmem [#allocation14], 1
    %v7232 = vld [vmem:[%s7231] sm:$0x1]
    %v7234 = vlaneseq
    %v7235 = vshrl.u32 %v7234, 7
    %v7236 = vsub.s32 0, %v7235
    %v7237 = vrot.slane %v7232, %v7236
    %v7240 = vsel %vm3673, %v7218, 0
    %v7243 = vsel %vm3673, %v7219, 0
    %v7246 = vsel %vm3673, %v7220, 0
    %v7249 = vsel %vm3673, %v7221, 0
    %7251 = vmatprep.subr.mxu0 0.0
    %7252 = vmatpush1.msra.mxu0 0.0
    %7253 = vmatprep.subr.mxu0 0.0
    %7254 = vmatpush1.msra.mxu0 0.0
    %7255 = vmatprep.subr.mxu0 0.0
    %7256 = vmatpush1.msra.mxu0 0.0
    %7257 = vmatprep.subr.mxu0 0.0
    %7258 = vmatpush1.msra.mxu0 0.0
    %7259 = vmatprep.subr.mxu0 0.0
    %7260 = vmatpush1.msra.mxu0 0.0
    %7261 = vmatprep.subr.mxu0 0.0
    %7262 = vmatpush1.msra.mxu0 0.0
    %7263 = vmatprep.subr.mxu0 0.0
    %7264 = vmatpush1.msra.mxu0 0.0
    %7265 = vmatprep.subr.mxu0 0.0
    %7266 = vmatpush1.msra.mxu0 0.0
    %7267 = vmatprep.subr.mxu0 0.0
    %7268 = vmatpush1.msra.mxu0 %v7230
    %7269 = vmatprep.subr.mxu0 0.0
    %7270 = vmatpush1.msra.mxu0 %v7229
    %7271 = vmatprep.subr.mxu0 0.0
    %7272 = vmatpush1.msra.mxu0 %v7228
    %7273 = vmatprep.subr.mxu0 0.0
    %7274 = vmatpush1.msra.mxu0 %v7227
    %7275 = vmatprep.subr.mxu0 0.0
    %7276 = vmatpush1.msra.mxu0 %v7226
    %7277 = vmatprep.subr.mxu0 0.0
    %7278 = vmatpush1.msra.mxu0 %v7225
    %7279 = vmatprep.subr.mxu0 0.0
    %7280 = vmatpush1.msra.mxu0 %v7224
    %7281 = vmatprep.subr.mxu0 0.0
    %7282 = vmatpush1.msra.mxu0 %v7223
    %7283 = vmatprep.subr.mxu0 0.0
    %7284 = vmatpush2.msra.mxu0 0.0
    %7285 = vmatprep.subr.mxu0 0.0
    %7286 = vmatpush2.msra.mxu0 0.0
    %7287 = vmatprep.subr.mxu0 0.0
    %7288 = vmatpush2.msra.mxu0 0.0
    %7289 = vmatprep.subr.mxu0 0.0
    %7290 = vmatpush2.msra.mxu0 0.0
    %7291 = vmatprep.subr.mxu0 0.0
    %7292 = vmatpush2.msra.mxu0 0.0
    %7293 = vmatprep.subr.mxu0 0.0
    %7294 = vmatpush2.msra.mxu0 0.0
    %7295 = vmatprep.subr.mxu0 0.0
    %7296 = vmatpush2.msra.mxu0 0.0
    %7297 = vmatprep.subr.mxu0 0.0
    %7298 = vmatpush2.msra.mxu0 0.0
    %7299 = vmatprep.subr.mxu0 0.0
    %7300 = vmatpush2.msra.mxu0 0.0
    %7301 = vmatprep.subr.mxu0 0.0
    %7302 = vmatpush2.msra.mxu0 0.0
    %7303 = vmatprep.subr.mxu0 0.0
    %7304 = vmatpush2.msra.mxu0 0.0
    %7305 = vmatprep.subr.mxu0 0.0
    %7306 = vmatpush2.msra.mxu0 0.0
    %7307 = vmatprep.subr.mxu0 0.0
    %7308 = vmatpush2.msra.mxu0 0.0
    %7309 = vmatprep.subr.mxu0 0.0
    %7310 = vmatpush2.msra.mxu0 0.0
    %7311 = vmatprep.subr.mxu0 0.0
    %7312 = vmatpush2.msra.mxu0 0.0
    %7313 = vmatprep.subr.mxu0 0.0
    %7314 = vmatpush2.msra.mxu0 0.0
    %7315 = vmatprep.mubr.f32.mxu0 0.0
    %7316 = vmatmul.mubr.f32.gmra.mxu0 %v7240
    %v7317 = vpop.f32.mrf.mxu0
    %v7318 = vadd.f32 %v7237, %v7317
    %v7319 = vpop.f32.mrf.mxu0
    %7320 = vmatprep.mubr.f32.mxu0 0.0
    %7321 = vmatmul.mubr.f32.gmra.mxu0 %v7243
    %v7322 = vpop.f32.mrf.mxu0
    %v7323 = vadd.f32 %v7237, %v7322
    %v7324 = vpop.f32.mrf.mxu0
    %7325 = vmatprep.mubr.f32.mxu0 0.0
    %7326 = vmatmul.mubr.f32.gmra.mxu0 %v7246
    %v7327 = vpop.f32.mrf.mxu0
    %v7328 = vadd.f32 %v7237, %v7327
    %v7329 = vpop.f32.mrf.mxu0
    %7330 = vmatprep.mubr.f32.mxu0 0.0
    %7331 = vmatmul.mubr.f32.gmra.mxu0 %v7249
    %v7332 = vpop.f32.mrf.mxu0
    %v7333 = vadd.f32 %v7237, %v7332
    %v7334 = vpop.f32.mrf.mxu0
    %7335 = vdwg.mxu0
    %v7336 = vadd.f32 %v7104, %v7318
    %v7337 = vadd.f32 %v7105, %v7323
    %v7338 = vadd.f32 %v7106, %v7328
    %v7339 = vadd.f32 %v7107, %v7333
    %s7340 = scalar_lea.vmem [#allocation16], 1
    %v7341 = vld [vmem:[%s7340] sm:$0x1]
    %s7342 = scalar_lea.vmem [#allocation17], 1
    %v7343 = vld [vmem:[%s7342] sm:$0x1]
    %v7344 = vsel %vm301, %v7336, 0.0
    %7345 = vadd.xlane.f32.xlu0 %v7344
    %v7346 = vpop.xlane.xlu0 %7345
    %v7347 = vsel %vm301, %v7337, 0.0
    %7348 = vadd.xlane.f32.xlu0 %v7347
    %v7349 = vpop.xlane.xlu0 %7348
    %v7350 = vsel %vm301, %v7338, 0.0
    %7351 = vadd.xlane.f32.xlu0 %v7350
    %v7352 = vpop.xlane.xlu0 %7351
    %v7353 = vsel %vm301, %v7339, 0.0
    %7354 = vadd.xlane.f32.xlu0 %v7353
    %v7355 = vpop.xlane.xlu0 %7354
    %v7356 = vmul.f32 %v7346, %v3485
    %v7357 = vmul.f32 %v7349, %v3485
    %v7358 = vmul.f32 %v7352, %v3485
    %v7359 = vmul.f32 %v7355, %v3485
    %v7360 = vsub.f32 %v7336, %v7356
    %v7361 = vsub.f32 %v7337, %v7357
    %v7362 = vsub.f32 %v7338, %v7358
    %v7363 = vsub.f32 %v7339, %v7359
    %v7364 = vmul.f32 %v7360, %v7360
    %v7365 = vmul.f32 %v7361, %v7361
    %v7366 = vmul.f32 %v7362, %v7362
    %v7367 = vmul.f32 %v7363, %v7363
    %v7368 = vsel %vm301, %v7364, 0.0
    %7369 = vadd.xlane.f32.xlu0 %v7368
    %v7370 = vpop.xlane.xlu0 %7369
    %v7371 = vsel %vm301, %v7365, 0.0
    %7372 = vadd.xlane.f32.xlu0 %v7371
    %v7373 = vpop.xlane.xlu0 %7372
    %v7374 = vsel %vm301, %v7366, 0.0
    %7375 = vadd.xlane.f32.xlu0 %v7374
    %v7376 = vpop.xlane.xlu0 %7375
    %v7377 = vsel %vm301, %v7367, 0.0
    %7378 = vadd.xlane.f32.xlu0 %v7377
    %v7379 = vpop.xlane.xlu0 %7378
    %v7380 = vmul.f32 %v7370, %v3485
    %v7381 = vmul.f32 %v7373, %v3485
    %v7382 = vmul.f32 %v7376, %v3485
    %v7383 = vmul.f32 %v7379, %v3485
    %v7384 = vadd.f32 %v7380, 1e-05
    %v7385 = vadd.f32 %v7381, 1e-05
    %v7386 = vadd.f32 %v7382, 1e-05
    %v7387 = vadd.f32 %v7383, 1e-05
    %v7388 = vrsqrt.pop %v7384
    %v7389 = vrsqrt.pop %v7385
    %v7390 = vrsqrt.pop %v7386
    %v7391 = vrsqrt.pop %v7387
    %v7392 = vmul.f32 %v7360, %v7388
    %v7393 = vmul.f32 %v7361, %v7389
    %v7394 = vmul.f32 %v7362, %v7390
    %v7395 = vmul.f32 %v7363, %v7391
    %v7397 = vlaneseq
    %v7398 = vshrl.u32 %v7397, 7
    %v7399 = vsub.s32 0, %v7398
    %v7400 = vrot.slane %v7341, %v7399
    %v7402 = vmul.f32 %v7392, %v7400
    %v7403 = vmul.f32 %v7393, %v7400
    %v7404 = vmul.f32 %v7394, %v7400
    %v7405 = vmul.f32 %v7395, %v7400
    %v7407 = vlaneseq
    %v7408 = vshrl.u32 %v7407, 7
    %v7409 = vsub.s32 0, %v7408
    %v7410 = vrot.slane %v7343, %v7409
    %v7412 = vadd.f32 %v7402, %v7410
    %v7413 = vadd.f32 %v7403, %v7410
    %v7414 = vadd.f32 %v7404, %v7410
    %v7415 = vadd.f32 %v7405, %v7410
    %v7416 = vadd.f32 %v7412, %v7414
    %v7417 = vadd.f32 %v7413, %v7415
    %v7418 = vmul.f32 %v7416, 0.5
    %v7419 = vmul.f32 %v7417, 0.5
    %v7420 = vld [vmem:[#allocation20] sm:$0x1]
    %v7421 = vld [vmem:[#allocation19] sm:$0xff]
    %v7422 = vld [vmem:[#allocation19 + $0x8] sm:$0xff]
    %v7423 = vld [vmem:[#allocation19 + $0x10] sm:$0xff]
    %v7424 = vld [vmem:[#allocation19 + $0x18] sm:$0xff]
    %v7427 = vrot.slane %v7419, 7
    %vm7428 = vcmask 1041409
    %v7429 = vsel %vm7428, %v7427, %v7418
    %v7430 = vsel %vm301, %v7429, 0
    %7432 = vmatprep.subr.mxu0 0.0
    %7433 = vmatpush1.msra.mxu0 0.0
    %7434 = vmatprep.subr.mxu0 0.0
    %7435 = vmatpush1.msra.mxu0 0.0
    %7436 = vmatprep.subr.mxu0 0.0
    %7437 = vmatpush1.msra.mxu0 0.0
    %7438 = vmatprep.subr.mxu0 0.0
    %7439 = vmatpush1.msra.mxu0 0.0
    %7440 = vmatprep.subr.mxu0 0.0
    %7441 = vmatpush1.msra.mxu0 0.0
    %7442 = vmatprep.subr.mxu0 0.0
    %7443 = vmatpush1.msra.mxu0 0.0
    %7444 = vmatprep.subr.mxu0 0.0
    %7445 = vmatpush1.msra.mxu0 0.0
    %7446 = vmatprep.subr.mxu0 0.0
    %7447 = vmatpush1.msra.mxu0 0.0
    %7448 = vmatprep.subr.mxu0 0.0
    %7449 = vmatpush1.msra.mxu0 0.0
    %7450 = vmatprep.subr.mxu0 0.0
    %7451 = vmatpush1.msra.mxu0 0.0
    %7452 = vmatprep.subr.mxu0 0.0
    %7453 = vmatpush1.msra.mxu0 0.0
    %7454 = vmatprep.subr.mxu0 0.0
    %7455 = vmatpush1.msra.mxu0 0.0
    %7456 = vmatprep.subr.mxu0 0.0
    %7457 = vmatpush1.msra.mxu0 %v7424
    %7458 = vmatprep.subr.mxu0 0.0
    %7459 = vmatpush1.msra.mxu0 %v7423
    %7460 = vmatprep.subr.mxu0 0.0
    %7461 = vmatpush1.msra.mxu0 %v7422
    %7462 = vmatprep.subr.mxu0 0.0
    %7463 = vmatpush1.msra.mxu0 %v7421
    %7464 = vmatprep.subr.mxu0 0.0
    %7465 = vmatpush2.msra.mxu0 0.0
    %7466 = vmatprep.subr.mxu0 0.0
    %7467 = vmatpush2.msra.mxu0 0.0
    %7468 = vmatprep.subr.mxu0 0.0
    %7469 = vmatpush2.msra.mxu0 0.0
    %7470 = vmatprep.subr.mxu0 0.0
    %7471 = vmatpush2.msra.mxu0 0.0
    %7472 = vmatprep.subr.mxu0 0.0
    %7473 = vmatpush2.msra.mxu0 0.0
    %7474 = vmatprep.subr.mxu0 0.0
    %7475 = vmatpush2.msra.mxu0 0.0
    %7476 = vmatprep.subr.mxu0 0.0
    %7477 = vmatpush2.msra.mxu0 0.0
    %7478 = vmatprep.subr.mxu0 0.0
    %7479 = vmatpush2.msra.mxu0 0.0
    %7480 = vmatprep.subr.mxu0 0.0
    %7481 = vmatpush2.msra.mxu0 0.0
    %7482 = vmatprep.subr.mxu0 0.0
    %7483 = vmatpush2.msra.mxu0 0.0
    %7484 = vmatprep.subr.mxu0 0.0
    %7485 = vmatpush2.msra.mxu0 0.0
    %7486 = vmatprep.subr.mxu0 0.0
    %7487 = vmatpush2.msra.mxu0 0.0
    %7488 = vmatprep.subr.mxu0 0.0
    %7489 = vmatpush2.msra.mxu0 0.0
    %7490 = vmatprep.subr.mxu0 0.0
    %7491 = vmatpush2.msra.mxu0 0.0
    %7492 = vmatprep.subr.mxu0 0.0
    %7493 = vmatpush2.msra.mxu0 0.0
    %7494 = vmatprep.subr.mxu0 0.0
    %7495 = vmatpush2.msra.mxu0 0.0
    %7496 = vmatprep.mubr.f32.mxu0 0.0
    %7497 = vmatmul.mubr.f32.gmra.mxu0 %v7430
    %v7498 = vpop.f32.mrf.mxu0
    %v7499 = vadd.f32 0.0, %v7498
    %v7500 = vpop.f32.mrf.mxu0
    %7501 = vdwg.mxu0
    %v7503 = vlaneseq
    %v7504 = vshrl.u32 %v7503, 7
    %v7505 = vsub.s32 0, %v7504
    %v7506 = vrot.slane %v7420, %v7505
    %v7508 = vadd.f32 %v7506, %v7499
    %s7509 = scalar_lea.vmem [#allocation19], 32
    %v7510 = vld [vmem:[%s7509] sm:$0xff]
    %v7511 = vld [vmem:[%s7509 + $0x8] sm:$0xff]
    %v7512 = vld [vmem:[%s7509 + $0x10] sm:$0xff]
    %v7513 = vld [vmem:[%s7509 + $0x18] sm:$0xff]
    %v7514 = vrot.slane %v7418, 1
    %v7515 = vsel %vm7428, %v7419, %v7514
    %v7516 = vsel %vm301, %v7515, 0
    %7518 = vmatprep.subr.mxu0 0.0
    %7519 = vmatpush1.msra.mxu0 0.0
    %7520 = vmatprep.subr.mxu0 0.0
    %7521 = vmatpush1.msra.mxu0 0.0
    %7522 = vmatprep.subr.mxu0 0.0
    %7523 = vmatpush1.msra.mxu0 0.0
    %7524 = vmatprep.subr.mxu0 0.0
    %7525 = vmatpush1.msra.mxu0 0.0
    %7526 = vmatprep.subr.mxu0 0.0
    %7527 = vmatpush1.msra.mxu0 0.0
    %7528 = vmatprep.subr.mxu0 0.0
    %7529 = vmatpush1.msra.mxu0 0.0
    %7530 = vmatprep.subr.mxu0 0.0
    %7531 = vmatpush1.msra.mxu0 0.0
    %7532 = vmatprep.subr.mxu0 0.0
    %7533 = vmatpush1.msra.mxu0 0.0
    %7534 = vmatprep.subr.mxu0 0.0
    %7535 = vmatpush1.msra.mxu0 0.0
    %7536 = vmatprep.subr.mxu0 0.0
    %7537 = vmatpush1.msra.mxu0 0.0
    %7538 = vmatprep.subr.mxu0 0.0
    %7539 = vmatpush1.msra.mxu0 0.0
    %7540 = vmatprep.subr.mxu0 0.0
    %7541 = vmatpush1.msra.mxu0 0.0
    %7542 = vmatprep.subr.mxu0 0.0
    %7543 = vmatpush1.msra.mxu0 %v7513
    %7544 = vmatprep.subr.mxu0 0.0
    %7545 = vmatpush1.msra.mxu0 %v7512
    %7546 = vmatprep.subr.mxu0 0.0
    %7547 = vmatpush1.msra.mxu0 %v7511
    %7548 = vmatprep.subr.mxu0 0.0
    %7549 = vmatpush1.msra.mxu0 %v7510
    %7550 = vmatprep.subr.mxu0 0.0
    %7551 = vmatpush2.msra.mxu0 0.0
    %7552 = vmatprep.subr.mxu0 0.0
    %7553 = vmatpush2.msra.mxu0 0.0
    %7554 = vmatprep.subr.mxu0 0.0
    %7555 = vmatpush2.msra.mxu0 0.0
    %7556 = vmatprep.subr.mxu0 0.0
    %7557 = vmatpush2.msra.mxu0 0.0
    %7558 = vmatprep.subr.mxu0 0.0
    %7559 = vmatpush2.msra.mxu0 0.0
    %7560 = vmatprep.subr.mxu0 0.0
    %7561 = vmatpush2.msra.mxu0 0.0
    %7562 = vmatprep.subr.mxu0 0.0
    %7563 = vmatpush2.msra.mxu0 0.0
    %7564 = vmatprep.subr.mxu0 0.0
    %7565 = vmatpush2.msra.mxu0 0.0
    %7566 = vmatprep.subr.mxu0 0.0
    %7567 = vmatpush2.msra.mxu0 0.0
    %7568 = vmatprep.subr.mxu0 0.0
    %7569 = vmatpush2.msra.mxu0 0.0
    %7570 = vmatprep.subr.mxu0 0.0
    %7571 = vmatpush2.msra.mxu0 0.0
    %7572 = vmatprep.subr.mxu0 0.0
    %7573 = vmatpush2.msra.mxu0 0.0
    %7574 = vmatprep.subr.mxu0 0.0
    %7575 = vmatpush2.msra.mxu0 0.0
    %7576 = vmatprep.subr.mxu0 0.0
    %7577 = vmatpush2.msra.mxu0 0.0
    %7578 = vmatprep.subr.mxu0 0.0
    %7579 = vmatpush2.msra.mxu0 0.0
    %7580 = vmatprep.subr.mxu0 0.0
    %7581 = vmatpush2.msra.mxu0 0.0
    %7582 = vmatprep.mubr.f32.mxu0 0.0
    %7583 = vmatmul.mubr.f32.gmra.mxu0 %v7516
    %v7584 = vpop.f32.mrf.mxu0
    %v7585 = vadd.f32 0.0, %v7584
    %v7586 = vpop.f32.mrf.mxu0
    %7587 = vdwg.mxu0
    %v7588 = vadd.f32 %v7508, %v7585
    %s7589 = scalar_lea.vmem [#allocation19], 64
    %v7590 = vld [vmem:[%s7589] sm:$0xff]
    %v7591 = vld [vmem:[%s7589 + $0x8] sm:$0xff]
    %v7592 = vld [vmem:[%s7589 + $0x10] sm:$0xff]
    %v7593 = vld [vmem:[%s7589 + $0x18] sm:$0xff]
    %v7594 = vrot.slane %v7418, 2
    %v7595 = vrot.slane %v7419, 1
    %v7596 = vsel %vm7428, %v7595, %v7594
    %v7597 = vsel %vm301, %v7596, 0
    %7599 = vmatprep.subr.mxu0 0.0
    %7600 = vmatpush1.msra.mxu0 0.0
    %7601 = vmatprep.subr.mxu0 0.0
    %7602 = vmatpush1.msra.mxu0 0.0
    %7603 = vmatprep.subr.mxu0 0.0
    %7604 = vmatpush1.msra.mxu0 0.0
    %7605 = vmatprep.subr.mxu0 0.0
    %7606 = vmatpush1.msra.mxu0 0.0
    %7607 = vmatprep.subr.mxu0 0.0
    %7608 = vmatpush1.msra.mxu0 0.0
    %7609 = vmatprep.subr.mxu0 0.0
    %7610 = vmatpush1.msra.mxu0 0.0
    %7611 = vmatprep.subr.mxu0 0.0
    %7612 = vmatpush1.msra.mxu0 0.0
    %7613 = vmatprep.subr.mxu0 0.0
    %7614 = vmatpush1.msra.mxu0 0.0
    %7615 = vmatprep.subr.mxu0 0.0
    %7616 = vmatpush1.msra.mxu0 0.0
    %7617 = vmatprep.subr.mxu0 0.0
    %7618 = vmatpush1.msra.mxu0 0.0
    %7619 = vmatprep.subr.mxu0 0.0
    %7620 = vmatpush1.msra.mxu0 0.0
    %7621 = vmatprep.subr.mxu0 0.0
    %7622 = vmatpush1.msra.mxu0 0.0
    %7623 = vmatprep.subr.mxu0 0.0
    %7624 = vmatpush1.msra.mxu0 %v7593
    %7625 = vmatprep.subr.mxu0 0.0
    %7626 = vmatpush1.msra.mxu0 %v7592
    %7627 = vmatprep.subr.mxu0 0.0
    %7628 = vmatpush1.msra.mxu0 %v7591
    %7629 = vmatprep.subr.mxu0 0.0
    %7630 = vmatpush1.msra.mxu0 %v7590
    %7631 = vmatprep.subr.mxu0 0.0
    %7632 = vmatpush2.msra.mxu0 0.0
    %7633 = vmatprep.subr.mxu0 0.0
    %7634 = vmatpush2.msra.mxu0 0.0
    %7635 = vmatprep.subr.mxu0 0.0
    %7636 = vmatpush2.msra.mxu0 0.0
    %7637 = vmatprep.subr.mxu0 0.0
    %7638 = vmatpush2.msra.mxu0 0.0
    %7639 = vmatprep.subr.mxu0 0.0
    %7640 = vmatpush2.msra.mxu0 0.0
    %7641 = vmatprep.subr.mxu0 0.0
    %7642 = vmatpush2.msra.mxu0 0.0
    %7643 = vmatprep.subr.mxu0 0.0
    %7644 = vmatpush2.msra.mxu0 0.0
    %7645 = vmatprep.subr.mxu0 0.0
    %7646 = vmatpush2.msra.mxu0 0.0
    %7647 = vmatprep.subr.mxu0 0.0
    %7648 = vmatpush2.msra.mxu0 0.0
    %7649 = vmatprep.subr.mxu0 0.0
    %7650 = vmatpush2.msra.mxu0 0.0
    %7651 = vmatprep.subr.mxu0 0.0
    %7652 = vmatpush2.msra.mxu0 0.0
    %7653 = vmatprep.subr.mxu0 0.0
    %7654 = vmatpush2.msra.mxu0 0.0
    %7655 = vmatprep.subr.mxu0 0.0
    %7656 = vmatpush2.msra.mxu0 0.0
    %7657 = vmatprep.subr.mxu0 0.0
    %7658 = vmatpush2.msra.mxu0 0.0
    %7659 = vmatprep.subr.mxu0 0.0
    %7660 = vmatpush2.msra.mxu0 0.0
    %7661 = vmatprep.subr.mxu0 0.0
    %7662 = vmatpush2.msra.mxu0 0.0
    %7663 = vmatprep.mubr.f32.mxu0 0.0
    %7664 = vmatmul.mubr.f32.gmra.mxu0 %v7597
    %v7665 = vpop.f32.mrf.mxu0
    %v7666 = vadd.f32 0.0, %v7665
    %v7667 = vpop.f32.mrf.mxu0
    %7668 = vdwg.mxu0
    %v7669 = vadd.f32 %v7588, %v7666
    %s7670 = scalar_lea.vmem [#allocation19], 96
    %v7671 = vld [vmem:[%s7670] sm:$0xff]
    %v7672 = vld [vmem:[%s7670 + $0x8] sm:$0xff]
    %v7673 = vld [vmem:[%s7670 + $0x10] sm:$0xff]
    %v7674 = vld [vmem:[%s7670 + $0x18] sm:$0xff]
    %v7675 = vrot.slane %v7418, 3
    %v7676 = vrot.slane %v7419, 2
    %v7677 = vsel %vm7428, %v7676, %v7675
    %v7678 = vsel %vm301, %v7677, 0
    %7680 = vmatprep.subr.mxu0 0.0
    %7681 = vmatpush1.msra.mxu0 0.0
    %7682 = vmatprep.subr.mxu0 0.0
    %7683 = vmatpush1.msra.mxu0 0.0
    %7684 = vmatprep.subr.mxu0 0.0
    %7685 = vmatpush1.msra.mxu0 0.0
    %7686 = vmatprep.subr.mxu0 0.0
    %7687 = vmatpush1.msra.mxu0 0.0
    %7688 = vmatprep.subr.mxu0 0.0
    %7689 = vmatpush1.msra.mxu0 0.0
    %7690 = vmatprep.subr.mxu0 0.0
    %7691 = vmatpush1.msra.mxu0 0.0
    %7692 = vmatprep.subr.mxu0 0.0
    %7693 = vmatpush1.msra.mxu0 0.0
    %7694 = vmatprep.subr.mxu0 0.0
    %7695 = vmatpush1.msra.mxu0 0.0
    %7696 = vmatprep.subr.mxu0 0.0
    %7697 = vmatpush1.msra.mxu0 0.0
    %7698 = vmatprep.subr.mxu0 0.0
    %7699 = vmatpush1.msra.mxu0 0.0
    %7700 = vmatprep.subr.mxu0 0.0
    %7701 = vmatpush1.msra.mxu0 0.0
    %7702 = vmatprep.subr.mxu0 0.0
    %7703 = vmatpush1.msra.mxu0 0.0
    %7704 = vmatprep.subr.mxu0 0.0
    %7705 = vmatpush1.msra.mxu0 %v7674
    %7706 = vmatprep.subr.mxu0 0.0
    %7707 = vmatpush1.msra.mxu0 %v7673
    %7708 = vmatprep.subr.mxu0 0.0
    %7709 = vmatpush1.msra.mxu0 %v7672
    %7710 = vmatprep.subr.mxu0 0.0
    %7711 = vmatpush1.msra.mxu0 %v7671
    %7712 = vmatprep.subr.mxu0 0.0
    %7713 = vmatpush2.msra.mxu0 0.0
    %7714 = vmatprep.subr.mxu0 0.0
    %7715 = vmatpush2.msra.mxu0 0.0
    %7716 = vmatprep.subr.mxu0 0.0
    %7717 = vmatpush2.msra.mxu0 0.0
    %7718 = vmatprep.subr.mxu0 0.0
    %7719 = vmatpush2.msra.mxu0 0.0
    %7720 = vmatprep.subr.mxu0 0.0
    %7721 = vmatpush2.msra.mxu0 0.0
    %7722 = vmatprep.subr.mxu0 0.0
    %7723 = vmatpush2.msra.mxu0 0.0
    %7724 = vmatprep.subr.mxu0 0.0
    %7725 = vmatpush2.msra.mxu0 0.0
    %7726 = vmatprep.subr.mxu0 0.0
    %7727 = vmatpush2.msra.mxu0 0.0
    %7728 = vmatprep.subr.mxu0 0.0
    %7729 = vmatpush2.msra.mxu0 0.0
    %7730 = vmatprep.subr.mxu0 0.0
    %7731 = vmatpush2.msra.mxu0 0.0
    %7732 = vmatprep.subr.mxu0 0.0
    %7733 = vmatpush2.msra.mxu0 0.0
    %7734 = vmatprep.subr.mxu0 0.0
    %7735 = vmatpush2.msra.mxu0 0.0
    %7736 = vmatprep.subr.mxu0 0.0
    %7737 = vmatpush2.msra.mxu0 0.0
    %7738 = vmatprep.subr.mxu0 0.0
    %7739 = vmatpush2.msra.mxu0 0.0
    %7740 = vmatprep.subr.mxu0 0.0
    %7741 = vmatpush2.msra.mxu0 0.0
    %7742 = vmatprep.subr.mxu0 0.0
    %7743 = vmatpush2.msra.mxu0 0.0
    %7744 = vmatprep.mubr.f32.mxu0 0.0
    %7745 = vmatmul.mubr.f32.gmra.mxu0 %v7678
    %v7746 = vpop.f32.mrf.mxu0
    %v7747 = vadd.f32 0.0, %v7746
    %v7748 = vpop.f32.mrf.mxu0
    %7749 = vdwg.mxu0
    %v7750 = vadd.f32 %v7669, %v7747
    %s7751 = scalar_lea.vmem [#allocation19], 128
    %v7752 = vld [vmem:[%s7751] sm:$0xff]
    %v7753 = vld [vmem:[%s7751 + $0x8] sm:$0xff]
    %v7754 = vld [vmem:[%s7751 + $0x10] sm:$0xff]
    %v7755 = vld [vmem:[%s7751 + $0x18] sm:$0xff]
    %v7756 = vrot.slane %v7418, 4
    %v7757 = vrot.slane %v7419, 3
    %v7758 = vsel %vm7428, %v7757, %v7756
    %v7759 = vsel %vm301, %v7758, 0
    %7761 = vmatprep.subr.mxu0 0.0
    %7762 = vmatpush1.msra.mxu0 0.0
    %7763 = vmatprep.subr.mxu0 0.0
    %7764 = vmatpush1.msra.mxu0 0.0
    %7765 = vmatprep.subr.mxu0 0.0
    %7766 = vmatpush1.msra.mxu0 0.0
    %7767 = vmatprep.subr.mxu0 0.0
    %7768 = vmatpush1.msra.mxu0 0.0
    %7769 = vmatprep.subr.mxu0 0.0
    %7770 = vmatpush1.msra.mxu0 0.0
    %7771 = vmatprep.subr.mxu0 0.0
    %7772 = vmatpush1.msra.mxu0 0.0
    %7773 = vmatprep.subr.mxu0 0.0
    %7774 = vmatpush1.msra.mxu0 0.0
    %7775 = vmatprep.subr.mxu0 0.0
    %7776 = vmatpush1.msra.mxu0 0.0
    %7777 = vmatprep.subr.mxu0 0.0
    %7778 = vmatpush1.msra.mxu0 0.0
    %7779 = vmatprep.subr.mxu0 0.0
    %7780 = vmatpush1.msra.mxu0 0.0
    %7781 = vmatprep.subr.mxu0 0.0
    %7782 = vmatpush1.msra.mxu0 0.0
    %7783 = vmatprep.subr.mxu0 0.0
    %7784 = vmatpush1.msra.mxu0 0.0
    %7785 = vmatprep.subr.mxu0 0.0
    %7786 = vmatpush1.msra.mxu0 %v7755
    %7787 = vmatprep.subr.mxu0 0.0
    %7788 = vmatpush1.msra.mxu0 %v7754
    %7789 = vmatprep.subr.mxu0 0.0
    %7790 = vmatpush1.msra.mxu0 %v7753
    %7791 = vmatprep.subr.mxu0 0.0
    %7792 = vmatpush1.msra.mxu0 %v7752
    %7793 = vmatprep.subr.mxu0 0.0
    %7794 = vmatpush2.msra.mxu0 0.0
    %7795 = vmatprep.subr.mxu0 0.0
    %7796 = vmatpush2.msra.mxu0 0.0
    %7797 = vmatprep.subr.mxu0 0.0
    %7798 = vmatpush2.msra.mxu0 0.0
    %7799 = vmatprep.subr.mxu0 0.0
    %7800 = vmatpush2.msra.mxu0 0.0
    %7801 = vmatprep.subr.mxu0 0.0
    %7802 = vmatpush2.msra.mxu0 0.0
    %7803 = vmatprep.subr.mxu0 0.0
    %7804 = vmatpush2.msra.mxu0 0.0
    %7805 = vmatprep.subr.mxu0 0.0
    %7806 = vmatpush2.msra.mxu0 0.0
    %7807 = vmatprep.subr.mxu0 0.0
    %7808 = vmatpush2.msra.mxu0 0.0
    %7809 = vmatprep.subr.mxu0 0.0
    %7810 = vmatpush2.msra.mxu0 0.0
    %7811 = vmatprep.subr.mxu0 0.0
    %7812 = vmatpush2.msra.mxu0 0.0
    %7813 = vmatprep.subr.mxu0 0.0
    %7814 = vmatpush2.msra.mxu0 0.0
    %7815 = vmatprep.subr.mxu0 0.0
    %7816 = vmatpush2.msra.mxu0 0.0
    %7817 = vmatprep.subr.mxu0 0.0
    %7818 = vmatpush2.msra.mxu0 0.0
    %7819 = vmatprep.subr.mxu0 0.0
    %7820 = vmatpush2.msra.mxu0 0.0
    %7821 = vmatprep.subr.mxu0 0.0
    %7822 = vmatpush2.msra.mxu0 0.0
    %7823 = vmatprep.subr.mxu0 0.0
    %7824 = vmatpush2.msra.mxu0 0.0
    %7825 = vmatprep.mubr.f32.mxu0 0.0
    %7826 = vmatmul.mubr.f32.gmra.mxu0 %v7759
    %v7827 = vpop.f32.mrf.mxu0
    %v7828 = vadd.f32 0.0, %v7827
    %v7829 = vpop.f32.mrf.mxu0
    %7830 = vdwg.mxu0
    %v7831 = vadd.f32 %v7750, %v7828
    %s7832 = scalar_lea.vmem [#allocation19], 160
    %v7833 = vld [vmem:[%s7832] sm:$0xff]
    %v7834 = vld [vmem:[%s7832 + $0x8] sm:$0xff]
    %v7835 = vld [vmem:[%s7832 + $0x10] sm:$0xff]
    %v7836 = vld [vmem:[%s7832 + $0x18] sm:$0xff]
    %v7837 = vrot.slane %v7418, 5
    %v7838 = vrot.slane %v7419, 4
    %v7839 = vsel %vm7428, %v7838, %v7837
    %v7840 = vsel %vm301, %v7839, 0
    %7842 = vmatprep.subr.mxu0 0.0
    %7843 = vmatpush1.msra.mxu0 0.0
    %7844 = vmatprep.subr.mxu0 0.0
    %7845 = vmatpush1.msra.mxu0 0.0
    %7846 = vmatprep.subr.mxu0 0.0
    %7847 = vmatpush1.msra.mxu0 0.0
    %7848 = vmatprep.subr.mxu0 0.0
    %7849 = vmatpush1.msra.mxu0 0.0
    %7850 = vmatprep.subr.mxu0 0.0
    %7851 = vmatpush1.msra.mxu0 0.0
    %7852 = vmatprep.subr.mxu0 0.0
    %7853 = vmatpush1.msra.mxu0 0.0
    %7854 = vmatprep.subr.mxu0 0.0
    %7855 = vmatpush1.msra.mxu0 0.0
    %7856 = vmatprep.subr.mxu0 0.0
    %7857 = vmatpush1.msra.mxu0 0.0
    %7858 = vmatprep.subr.mxu0 0.0
    %7859 = vmatpush1.msra.mxu0 0.0
    %7860 = vmatprep.subr.mxu0 0.0
    %7861 = vmatpush1.msra.mxu0 0.0
    %7862 = vmatprep.subr.mxu0 0.0
    %7863 = vmatpush1.msra.mxu0 0.0
    %7864 = vmatprep.subr.mxu0 0.0
    %7865 = vmatpush1.msra.mxu0 0.0
    %7866 = vmatprep.subr.mxu0 0.0
    %7867 = vmatpush1.msra.mxu0 %v7836
    %7868 = vmatprep.subr.mxu0 0.0
    %7869 = vmatpush1.msra.mxu0 %v7835
    %7870 = vmatprep.subr.mxu0 0.0
    %7871 = vmatpush1.msra.mxu0 %v7834
    %7872 = vmatprep.subr.mxu0 0.0
    %7873 = vmatpush1.msra.mxu0 %v7833
    %7874 = vmatprep.subr.mxu0 0.0
    %7875 = vmatpush2.msra.mxu0 0.0
    %7876 = vmatprep.subr.mxu0 0.0
    %7877 = vmatpush2.msra.mxu0 0.0
    %7878 = vmatprep.subr.mxu0 0.0
    %7879 = vmatpush2.msra.mxu0 0.0
    %7880 = vmatprep.subr.mxu0 0.0
    %7881 = vmatpush2.msra.mxu0 0.0
    %7882 = vmatprep.subr.mxu0 0.0
    %7883 = vmatpush2.msra.mxu0 0.0
    %7884 = vmatprep.subr.mxu0 0.0
    %7885 = vmatpush2.msra.mxu0 0.0
    %7886 = vmatprep.subr.mxu0 0.0
    %7887 = vmatpush2.msra.mxu0 0.0
    %7888 = vmatprep.subr.mxu0 0.0
    %7889 = vmatpush2.msra.mxu0 0.0
    %7890 = vmatprep.subr.mxu0 0.0
    %7891 = vmatpush2.msra.mxu0 0.0
    %7892 = vmatprep.subr.mxu0 0.0
    %7893 = vmatpush2.msra.mxu0 0.0
    %7894 = vmatprep.subr.mxu0 0.0
    %7895 = vmatpush2.msra.mxu0 0.0
    %7896 = vmatprep.subr.mxu0 0.0
    %7897 = vmatpush2.msra.mxu0 0.0
    %7898 = vmatprep.subr.mxu0 0.0
    %7899 = vmatpush2.msra.mxu0 0.0
    %7900 = vmatprep.subr.mxu0 0.0
    %7901 = vmatpush2.msra.mxu0 0.0
    %7902 = vmatprep.subr.mxu0 0.0
    %7903 = vmatpush2.msra.mxu0 0.0
    %7904 = vmatprep.subr.mxu0 0.0
    %7905 = vmatpush2.msra.mxu0 0.0
    %7906 = vmatprep.mubr.f32.mxu0 0.0
    %7907 = vmatmul.mubr.f32.gmra.mxu0 %v7840
    %v7908 = vpop.f32.mrf.mxu0
    %v7909 = vadd.f32 0.0, %v7908
    %v7910 = vpop.f32.mrf.mxu0
    %7911 = vdwg.mxu0
    %v7912 = vadd.f32 %v7831, %v7909
    %s7913 = scalar_lea.vmem [#allocation19], 192
    %v7914 = vld [vmem:[%s7913] sm:$0xff]
    %v7915 = vld [vmem:[%s7913 + $0x8] sm:$0xff]
    %v7916 = vld [vmem:[%s7913 + $0x10] sm:$0xff]
    %v7917 = vld [vmem:[%s7913 + $0x18] sm:$0xff]
    %v7918 = vrot.slane %v7418, 6
    %v7919 = vrot.slane %v7419, 5
    %v7920 = vsel %vm7428, %v7919, %v7918
    %v7921 = vsel %vm301, %v7920, 0
    %7923 = vmatprep.subr.mxu0 0.0
    %7924 = vmatpush1.msra.mxu0 0.0
    %7925 = vmatprep.subr.mxu0 0.0
    %7926 = vmatpush1.msra.mxu0 0.0
    %7927 = vmatprep.subr.mxu0 0.0
    %7928 = vmatpush1.msra.mxu0 0.0
    %7929 = vmatprep.subr.mxu0 0.0
    %7930 = vmatpush1.msra.mxu0 0.0
    %7931 = vmatprep.subr.mxu0 0.0
    %7932 = vmatpush1.msra.mxu0 0.0
    %7933 = vmatprep.subr.mxu0 0.0
    %7934 = vmatpush1.msra.mxu0 0.0
    %7935 = vmatprep.subr.mxu0 0.0
    %7936 = vmatpush1.msra.mxu0 0.0
    %7937 = vmatprep.subr.mxu0 0.0
    %7938 = vmatpush1.msra.mxu0 0.0
    %7939 = vmatprep.subr.mxu0 0.0
    %7940 = vmatpush1.msra.mxu0 0.0
    %7941 = vmatprep.subr.mxu0 0.0
    %7942 = vmatpush1.msra.mxu0 0.0
    %7943 = vmatprep.subr.mxu0 0.0
    %7944 = vmatpush1.msra.mxu0 0.0
    %7945 = vmatprep.subr.mxu0 0.0
    %7946 = vmatpush1.msra.mxu0 0.0
    %7947 = vmatprep.subr.mxu0 0.0
    %7948 = vmatpush1.msra.mxu0 %v7917
    %7949 = vmatprep.subr.mxu0 0.0
    %7950 = vmatpush1.msra.mxu0 %v7916
    %7951 = vmatprep.subr.mxu0 0.0
    %7952 = vmatpush1.msra.mxu0 %v7915
    %7953 = vmatprep.subr.mxu0 0.0
    %7954 = vmatpush1.msra.mxu0 %v7914
    %7955 = vmatprep.subr.mxu0 0.0
    %7956 = vmatpush2.msra.mxu0 0.0
    %7957 = vmatprep.subr.mxu0 0.0
    %7958 = vmatpush2.msra.mxu0 0.0
    %7959 = vmatprep.subr.mxu0 0.0
    %7960 = vmatpush2.msra.mxu0 0.0
    %7961 = vmatprep.subr.mxu0 0.0
    %7962 = vmatpush2.msra.mxu0 0.0
    %7963 = vmatprep.subr.mxu0 0.0
    %7964 = vmatpush2.msra.mxu0 0.0
    %7965 = vmatprep.subr.mxu0 0.0
    %7966 = vmatpush2.msra.mxu0 0.0
    %7967 = vmatprep.subr.mxu0 0.0
    %7968 = vmatpush2.msra.mxu0 0.0
    %7969 = vmatprep.subr.mxu0 0.0
    %7970 = vmatpush2.msra.mxu0 0.0
    %7971 = vmatprep.subr.mxu0 0.0
    %7972 = vmatpush2.msra.mxu0 0.0
    %7973 = vmatprep.subr.mxu0 0.0
    %7974 = vmatpush2.msra.mxu0 0.0
    %7975 = vmatprep.subr.mxu0 0.0
    %7976 = vmatpush2.msra.mxu0 0.0
    %7977 = vmatprep.subr.mxu0 0.0
    %7978 = vmatpush2.msra.mxu0 0.0
    %7979 = vmatprep.subr.mxu0 0.0
    %7980 = vmatpush2.msra.mxu0 0.0
    %7981 = vmatprep.subr.mxu0 0.0
    %7982 = vmatpush2.msra.mxu0 0.0
    %7983 = vmatprep.subr.mxu0 0.0
    %7984 = vmatpush2.msra.mxu0 0.0
    %7985 = vmatprep.subr.mxu0 0.0
    %7986 = vmatpush2.msra.mxu0 0.0
    %7987 = vmatprep.mubr.f32.mxu0 0.0
    %7988 = vmatmul.mubr.f32.gmra.mxu0 %v7921
    %v7989 = vpop.f32.mrf.mxu0
    %v7990 = vadd.f32 0.0, %v7989
    %v7991 = vpop.f32.mrf.mxu0
    %7992 = vdwg.mxu0
    %v7993 = vadd.f32 %v7912, %v7990
    %s7994 = scalar_lea.vmem [#allocation19], 224
    %v7995 = vld [vmem:[%s7994] sm:$0xff]
    %v7996 = vld [vmem:[%s7994 + $0x8] sm:$0xff]
    %v7997 = vld [vmem:[%s7994 + $0x10] sm:$0xff]
    %v7998 = vld [vmem:[%s7994 + $0x18] sm:$0xff]
    %v7999 = vrot.slane %v7418, 7
    %v8000 = vrot.slane %v7419, 6
    %v8001 = vsel %vm7428, %v8000, %v7999
    %v8002 = vsel %vm301, %v8001, 0
    %8004 = vmatprep.subr.mxu0 0.0
    %8005 = vmatpush1.msra.mxu0 0.0
    %8006 = vmatprep.subr.mxu0 0.0
    %8007 = vmatpush1.msra.mxu0 0.0
    %8008 = vmatprep.subr.mxu0 0.0
    %8009 = vmatpush1.msra.mxu0 0.0
    %8010 = vmatprep.subr.mxu0 0.0
    %8011 = vmatpush1.msra.mxu0 0.0
    %8012 = vmatprep.subr.mxu0 0.0
    %8013 = vmatpush1.msra.mxu0 0.0
    %8014 = vmatprep.subr.mxu0 0.0
    %8015 = vmatpush1.msra.mxu0 0.0
    %8016 = vmatprep.subr.mxu0 0.0
    %8017 = vmatpush1.msra.mxu0 0.0
    %8018 = vmatprep.subr.mxu0 0.0
    %8019 = vmatpush1.msra.mxu0 0.0
    %8020 = vmatprep.subr.mxu0 0.0
    %8021 = vmatpush1.msra.mxu0 0.0
    %8022 = vmatprep.subr.mxu0 0.0
    %8023 = vmatpush1.msra.mxu0 0.0
    %8024 = vmatprep.subr.mxu0 0.0
    %8025 = vmatpush1.msra.mxu0 0.0
    %8026 = vmatprep.subr.mxu0 0.0
    %8027 = vmatpush1.msra.mxu0 0.0
    %8028 = vmatprep.subr.mxu0 0.0
    %8029 = vmatpush1.msra.mxu0 %v7998
    %8030 = vmatprep.subr.mxu0 0.0
    %8031 = vmatpush1.msra.mxu0 %v7997
    %8032 = vmatprep.subr.mxu0 0.0
    %8033 = vmatpush1.msra.mxu0 %v7996
    %8034 = vmatprep.subr.mxu0 0.0
    %8035 = vmatpush1.msra.mxu0 %v7995
    %8036 = vmatprep.subr.mxu0 0.0
    %8037 = vmatpush2.msra.mxu0 0.0
    %8038 = vmatprep.subr.mxu0 0.0
    %8039 = vmatpush2.msra.mxu0 0.0
    %8040 = vmatprep.subr.mxu0 0.0
    %8041 = vmatpush2.msra.mxu0 0.0
    %8042 = vmatprep.subr.mxu0 0.0
    %8043 = vmatpush2.msra.mxu0 0.0
    %8044 = vmatprep.subr.mxu0 0.0
    %8045 = vmatpush2.msra.mxu0 0.0
    %8046 = vmatprep.subr.mxu0 0.0
    %8047 = vmatpush2.msra.mxu0 0.0
    %8048 = vmatprep.subr.mxu0 0.0
    %8049 = vmatpush2.msra.mxu0 0.0
    %8050 = vmatprep.subr.mxu0 0.0
    %8051 = vmatpush2.msra.mxu0 0.0
    %8052 = vmatprep.subr.mxu0 0.0
    %8053 = vmatpush2.msra.mxu0 0.0
    %8054 = vmatprep.subr.mxu0 0.0
    %8055 = vmatpush2.msra.mxu0 0.0
    %8056 = vmatprep.subr.mxu0 0.0
    %8057 = vmatpush2.msra.mxu0 0.0
    %8058 = vmatprep.subr.mxu0 0.0
    %8059 = vmatpush2.msra.mxu0 0.0
    %8060 = vmatprep.subr.mxu0 0.0
    %8061 = vmatpush2.msra.mxu0 0.0
    %8062 = vmatprep.subr.mxu0 0.0
    %8063 = vmatpush2.msra.mxu0 0.0
    %8064 = vmatprep.subr.mxu0 0.0
    %8065 = vmatpush2.msra.mxu0 0.0
    %8066 = vmatprep.subr.mxu0 0.0
    %8067 = vmatpush2.msra.mxu0 0.0
    %8068 = vmatprep.mubr.f32.mxu0 0.0
    %8069 = vmatmul.mubr.f32.gmra.mxu0 %v8002
    %v8070 = vpop.f32.mrf.mxu0
    %v8071 = vadd.f32 0.0, %v8070
    %v8072 = vpop.f32.mrf.mxu0
    %8073 = vdwg.mxu0
    %v8074 = vadd.f32 %v7993, %v8071
    %v8075 = vmax.f32 %v8074, 0.0
    %v8076 = vld [vmem:[%s18] sm:$0xff]
    %v8077 = vld [vmem:[%s18 + $0x8] sm:$0xff]
    %v8078 = vld [vmem:[%s18 + $0x10] sm:$0xff]
    %v8079 = vld [vmem:[%s18 + $0x18] sm:$0xff]
    %v8080 = vld [vmem:[#allocation22] sm:$0x1]
    %v8082 = vlaneseq
    %v8083 = vshrl.u32 %v8082, 7
    %v8084 = vsub.s32 0, %v8083
    %v8085 = vrot.slane %v8080, %v8084
    %v8088 = vsel %vm301, %v8075, 0
    %8090 = vmatprep.subr.mxu0 0.0
    %8091 = vmatpush1.msra.mxu0 0.0
    %8092 = vmatprep.subr.mxu0 0.0
    %8093 = vmatpush1.msra.mxu0 0.0
    %8094 = vmatprep.subr.mxu0 0.0
    %8095 = vmatpush1.msra.mxu0 0.0
    %8096 = vmatprep.subr.mxu0 0.0
    %8097 = vmatpush1.msra.mxu0 0.0
    %8098 = vmatprep.subr.mxu0 0.0
    %8099 = vmatpush1.msra.mxu0 0.0
    %8100 = vmatprep.subr.mxu0 0.0
    %8101 = vmatpush1.msra.mxu0 0.0
    %8102 = vmatprep.subr.mxu0 0.0
    %8103 = vmatpush1.msra.mxu0 0.0
    %8104 = vmatprep.subr.mxu0 0.0
    %8105 = vmatpush1.msra.mxu0 0.0
    %8106 = vmatprep.subr.mxu0 0.0
    %8107 = vmatpush1.msra.mxu0 0.0
    %8108 = vmatprep.subr.mxu0 0.0
    %8109 = vmatpush1.msra.mxu0 0.0
    %8110 = vmatprep.subr.mxu0 0.0
    %8111 = vmatpush1.msra.mxu0 0.0
    %8112 = vmatprep.subr.mxu0 0.0
    %8113 = vmatpush1.msra.mxu0 0.0
    %8114 = vmatprep.subr.mxu0 0.0
    %8115 = vmatpush1.msra.mxu0 %v8079
    %8116 = vmatprep.subr.mxu0 0.0
    %8117 = vmatpush1.msra.mxu0 %v8078
    %8118 = vmatprep.subr.mxu0 0.0
    %8119 = vmatpush1.msra.mxu0 %v8077
    %8120 = vmatprep.subr.mxu0 0.0
    %8121 = vmatpush1.msra.mxu0 %v8076
    %8122 = vmatprep.subr.mxu0 0.0
    %8123 = vmatpush2.msra.mxu0 0.0
    %8124 = vmatprep.subr.mxu0 0.0
    %8125 = vmatpush2.msra.mxu0 0.0
    %8126 = vmatprep.subr.mxu0 0.0
    %8127 = vmatpush2.msra.mxu0 0.0
    %8128 = vmatprep.subr.mxu0 0.0
    %8129 = vmatpush2.msra.mxu0 0.0
    %8130 = vmatprep.subr.mxu0 0.0
    %8131 = vmatpush2.msra.mxu0 0.0
    %8132 = vmatprep.subr.mxu0 0.0
    %8133 = vmatpush2.msra.mxu0 0.0
    %8134 = vmatprep.subr.mxu0 0.0
    %8135 = vmatpush2.msra.mxu0 0.0
    %8136 = vmatprep.subr.mxu0 0.0
    %8137 = vmatpush2.msra.mxu0 0.0
    %8138 = vmatprep.subr.mxu0 0.0
    %8139 = vmatpush2.msra.mxu0 0.0
    %8140 = vmatprep.subr.mxu0 0.0
    %8141 = vmatpush2.msra.mxu0 0.0
    %8142 = vmatprep.subr.mxu0 0.0
    %8143 = vmatpush2.msra.mxu0 0.0
    %8144 = vmatprep.subr.mxu0 0.0
    %8145 = vmatpush2.msra.mxu0 0.0
    %8146 = vmatprep.subr.mxu0 0.0
    %8147 = vmatpush2.msra.mxu0 0.0
    %8148 = vmatprep.subr.mxu0 0.0
    %8149 = vmatpush2.msra.mxu0 0.0
    %8150 = vmatprep.subr.mxu0 0.0
    %8151 = vmatpush2.msra.mxu0 0.0
    %8152 = vmatprep.subr.mxu0 0.0
    %8153 = vmatpush2.msra.mxu0 0.0
    %8154 = vmatprep.mubr.f32.mxu0 0.0
    %8155 = vmatmul.mubr.f32.gmra.mxu0 %v8088
    %v8156 = vpop.f32.mrf.mxu0
    %v8157 = vadd.f32 %v8085, %v8156
    %v8158 = vpop.f32.mrf.mxu0
    %8159 = vdwg.mxu0
    %8160 = vst [vmem:[#allocation23] sm:$0x3] %v8157
    // Predicated region
    $region134: #{transformer_forward.1} parent=1 // pred_check
      _
    $region135: #{transformer_forward.1} parent=1 // pred_check_branch
      %8162 = sbr.rel (0) target = $region137
    $region136: #{transformer_forward.1} parent=1 // pred_region
      %s8164 = ssub.s32 32, 32
      %8165 = vsyncadd [#allocation4], %s8164
      %s8167 = sshll.u32 [#allocation23], 4
      %s8168 = int_to_ptr.vmem [resolvable:$true] %s8167
      %8170 = dma.vmem_to_hbm [thread:$0]  %s8168, 32, %s20, [#allocation4]
    $region137: #{transformer_forward.1} parent=1 // pred_fallthru
      _
    // Predicated region
    $region138: #{transformer_forward.1} parent=1 // pred_check
      _
    $region139: #{transformer_forward.1} parent=1 // pred_check_branch
      %8172 = sbr.rel (0) target = $region141
    $region140: #{transformer_forward.1} parent=1 // pred_region
      %8173 = dma.done [#allocation4], 32
    $region141: #{transformer_forward.1} parent=1 // pred_fallthru
      _
    %8174 = vsyncpa [#allocation3], 1
    %8175 = vsyncpa [#allocation6], 1
    %8176 = vsyncpa [#allocation9], 1
    %8177 = vsyncpa [#allocation12], 1
    %8178 = vsyncpa [#allocation15], 1
    %8179 = vsyncpa [#allocation18], 1
    %8180 = vsyncpa [#allocation21], 1
    %8181 = vsyncpa [#allocation4], 1

</llo_original>
